<compile_context>
chip_gen: v6e
topology: v6e:2x2x1
jax: 0.10.0
libtpu: 0.0.40
codegen_flags: <defaults>
</compile_context>

<pallas_src>
import functools

import jax
import jax.numpy as jnp
from jax.experimental import pallas as pl
from jax.experimental.pallas import tpu as pltpu

# ---------------- scaled-down config (bart-base analog) ----------------
GRAPH_DIM = 128      # graph_embedding_dim (matches playground: 128)
ENC_HIDDEN = 256     # custom encoder hidden (512 in playground)
D_MODEL = 128        # bart d_model (768 in bart-base)
N_HEADS = 4          # (12)
D_HEAD = D_MODEL // N_HEADS
D_FF = 256           # (3072)
VOCAB = 128          # (50265)
MAX_POS = 32
POS_OFFSET = 2       # BART learned-positional-embedding offset
N_ENC_LAYERS = 1
N_DEC_LAYERS = 1
EPS = 1e-5

_SLAB_WIDTHS = (128, 256, 384)


# ---------------- parameter packing (host side, trace time) ----------------
def _pack_params(params, s_enc, s_dec):
    """Pack every parameter into 3 slabs grouped by column width.

    Returns ((p128, p256, p384), layout) where layout[name] = (slab_id,
    row_start, valid_rows).  Every entry is padded to an 8-row boundary so all
    in-kernel slices start sublane-aligned.
    """
    slab_id = {w: i for i, w in enumerate(_SLAB_WIDTHS)}
    entries = {w: [] for w in _SLAB_WIDTHS}
    offsets = {w: 0 for w in _SLAB_WIDTHS}
    layout = {}

    def add(name, arr):
        arr = jnp.asarray(arr, jnp.float32)
        if arr.ndim == 1:
            arr = arr.reshape(1, -1)
        r, c = arr.shape
        pad = (-r) % 8
        if pad:
            arr = jnp.concatenate([arr, jnp.zeros((pad, c), jnp.float32)], axis=0)
        layout[name] = (slab_id[c], offsets[c], r)
        entries[c].append(arr)
        offsets[c] += r + pad

    ce = params["custom_encoder"]
    add("ce_fc1_w", ce["fc1_w"]); add("ce_fc1_b", ce["fc1_b"])
    add("ce_fc2_w", ce["fc2_w"]); add("ce_fc2_b", ce["fc2_b"])

    add("shared_embed", params["shared_embed"])
    # positional embeddings pre-sliced on host (no misaligned slice in-kernel)
    add("enc_pos", params["enc_pos_embed"][POS_OFFSET:POS_OFFSET + s_enc])
    add("dec_pos", params["dec_pos_embed"][POS_OFFSET:POS_OFFSET + s_dec])
    add("enc_ln_emb_g", params["enc_ln_emb_g"])
    add("enc_ln_emb_b", params["enc_ln_emb_b"])
    add("dec_ln_emb_g", params["dec_ln_emb_g"])
    add("dec_ln_emb_b", params["dec_ln_emb_b"])
    add("final_logits_bias", params["final_logits_bias"])

    for li, lp in enumerate(params["enc_layers"]):
        pre = f"enc{li}_"
        sa = lp["self_attn"]
        add(pre + "qkv_w", sa["qkv_w"]); add(pre + "qkv_b", sa["qkv_b"])
        add(pre + "o_w", sa["o_w"]); add(pre + "o_b", sa["o_b"])
        add(pre + "self_ln_g", lp["self_ln_g"]); add(pre + "self_ln_b", lp["self_ln_b"])
        add(pre + "fc1_w", lp["fc1_w"]); add(pre + "fc1_b", lp["fc1_b"])
        add(pre + "fc2_w", lp["fc2_w"]); add(pre + "fc2_b", lp["fc2_b"])
        add(pre + "final_ln_g", lp["final_ln_g"]); add(pre + "final_ln_b", lp["final_ln_b"])

    for li, lp in enumerate(params["dec_layers"]):
        pre = f"dec{li}_"
        sa = lp["self_attn"]
        add(pre + "self_qkv_w", sa["qkv_w"]); add(pre + "self_qkv_b", sa["qkv_b"])
        add(pre + "self_o_w", sa["o_w"]); add(pre + "self_o_b", sa["o_b"])
        add(pre + "self_ln_g", lp["self_ln_g"]); add(pre + "self_ln_b", lp["self_ln_b"])
        ca = lp["cross_attn"]
        add(pre + "cross_q_w", ca["q_w"]); add(pre + "cross_q_b", ca["q_b"])
        add(pre + "cross_kv_w", ca["kv_w"]); add(pre + "cross_kv_b", ca["kv_b"])
        add(pre + "cross_o_w", ca["o_w"]); add(pre + "cross_o_b", ca["o_b"])
        add(pre + "cross_ln_g", lp["cross_ln_g"]); add(pre + "cross_ln_b", lp["cross_ln_b"])
        add(pre + "fc1_w", lp["fc1_w"]); add(pre + "fc1_b", lp["fc1_b"])
        add(pre + "fc2_w", lp["fc2_w"]); add(pre + "fc2_b", lp["fc2_b"])
        add(pre + "final_ln_g", lp["final_ln_g"]); add(pre + "final_ln_b", lp["final_ln_b"])

    slabs = tuple(jnp.concatenate(entries[w], axis=0) for w in _SLAB_WIDTHS)
    return slabs, layout


# ---------------- the single fused forward kernel ----------------
def _forward_kernel(layout, bt, s_enc, s_dec, n_enc, n_dec,
                    ids_ref, p128_ref, p256_ref, p384_ref, graph_ref,
                    logits_ref, enc_out_ref):
    slabs = (p128_ref, p256_ref, p384_ref)

    def get(name):
        sid, start, rows = layout[name]
        return slabs[sid][pl.ds(start, rows), :]

    def get_bf16(name):
        return get(name).astype(jnp.bfloat16)

    def dense(x, wn, bn, act=None):
        # MXU operands in bf16, accumulate f32; bias / activation math in f32.
        y = jnp.dot(x.astype(jnp.bfloat16), get_bf16(wn),
                    preferred_element_type=jnp.float32) + get(bn)
        if act == "relu":
            y = jnp.maximum(y, 0.0)
        elif act == "gelu":
            # TODO(synk): HF bart-base uses erf-GELU; tanh approximation here.
            y = jax.nn.gelu(y, approximate=True)
        return y

    def ln(x, gn, bn):
        mu = jnp.mean(x, axis=-1, keepdims=True)
        xc = x - mu
        var = jnp.mean(xc * xc, axis=-1, keepdims=True)
        return xc * jax.lax.rsqrt(var + EPS) * get(gn) + get(bn)

    def attn_one(q, k, v, ow_bf16, bias):
        """Multi-head attention for one batch element; out-projection folded per head."""
        out = None
        for h in range(N_HEADS):
            sl = slice(h * D_HEAD, (h + 1) * D_HEAD)
            qh = q[:, sl].astype(jnp.bfloat16)       # scale already folded into W_q
            kh = k[:, sl].astype(jnp.bfloat16)
            vh = v[:, sl].astype(jnp.bfloat16)
            s = jax.lax.dot_general(qh, kh, (((1,), (1,)), ((), ())),
                                    preferred_element_type=jnp.float32)
            if bias is not None:
                s = s + bias                         # hoisted causal mask bias
            s = s - jnp.max(s, axis=-1, keepdims=True)
            p = jnp.exp(s)
            p = p * pl.reciprocal(jnp.sum(p, axis=-1, keepdims=True), approx=True)
            ctx = jnp.dot(p.astype(jnp.bfloat16), vh,
                          preferred_element_type=jnp.float32)
            proj = jnp.dot(ctx.astype(jnp.bfloat16), ow_bf16[sl, :],
                           preferred_element_type=jnp.float32)
            out = proj if out is None else out + proj
        return out

    def self_attn(x_flat, seq, prefix, bias):
        qkv = dense(x_flat, prefix + "qkv_w", prefix + "qkv_b")   # [bt*seq, 3D]
        ow = get_bf16(prefix + "o_w")
        outs = []
        for bi in range(bt):
            r = slice(bi * seq, (bi + 1) * seq)
            q = qkv[r, 0:D_MODEL]
            k = qkv[r, D_MODEL:2 * D_MODEL]
            v = qkv[r, 2 * D_MODEL:3 * D_MODEL]
            outs.append(attn_one(q, k, v, ow, bias))
        return jnp.concatenate(outs, axis=0) + get(prefix + "o_b")

    def cross_attn(x_flat, mem_flat, prefix):
        q_flat = dense(x_flat, prefix + "q_w", prefix + "q_b")
        kv_flat = dense(mem_flat, prefix + "kv_w", prefix + "kv_b")
        ow = get_bf16(prefix + "o_w")
        outs = []
        for bi in range(bt):
            rq = slice(bi * s_dec, (bi + 1) * s_dec)
            rk = slice(bi * s_enc, (bi + 1) * s_enc)
            q = q_flat[rq, :]
            k = kv_flat[rk, 0:D_MODEL]
            v = kv_flat[rk, D_MODEL:2 * D_MODEL]
            outs.append(attn_one(q, k, v, ow, None))
        return jnp.concatenate(outs, axis=0) + get(prefix + "o_b")

    def ffn(x, prefix):
        hmid = dense(x, prefix + "fc1_w", prefix + "fc1_b", act="gelu")
        return dense(hmid, prefix + "fc2_w", prefix + "fc2_b")

    # ---- 1) Custom graph encoder: fc2(relu(fc1(x))) over the flattened batch ----
    x = graph_ref[...]                               # [bt*s_enc, GRAPH_DIM]
    h = dense(x, "ce_fc1_w", "ce_fc1_b", act="relu")
    h = dense(h, "ce_fc2_w", "ce_fc2_b")

    # ---- 2) BART encoder over inputs_embeds (embed_scale = 1.0 in bart-base) ----
    enc_pos = jnp.concatenate([get("enc_pos")] * bt, axis=0)     # [bt*s_enc, D]
    h = h + enc_pos
    h = ln(h, "enc_ln_emb_g", "enc_ln_emb_b")
    for li in range(n_enc):
        pre = f"enc{li}_"
        h = ln(h + self_attn(h, s_enc, pre, None),
               pre + "self_ln_g", pre + "self_ln_b")
        h = ln(h + ffn(h, pre), pre + "final_ln_g", pre + "final_ln_b")
    enc_out_ref[...] = h.astype(enc_out_ref.dtype)

    # ---- 3) BART decoder: token gather from SMEM ids (no one-hot matmul) ----
    emb_sid, emb_start, _ = layout["shared_embed"]
    base = pl.program_id(0) * bt
    rows = []
    for bi in range(bt):
        for t in range(s_dec):
            tok = ids_ref[base + bi, t]
            rows.append(slabs[emb_sid][pl.ds(emb_start + tok, 1), :])
    d = jnp.concatenate(rows, axis=0)                # [bt*s_dec, D] f32
    dec_pos = jnp.concatenate([get("dec_pos")] * bt, axis=0)
    d = d + dec_pos
    d = ln(d, "dec_ln_emb_g", "dec_ln_emb_b")

    # causal mask built ONCE (hoisted out of head / layer / batch loops)
    qi = jax.lax.broadcasted_iota(jnp.int32, (s_dec, s_dec), 0)
    kj = jax.lax.broadcasted_iota(jnp.int32, (s_dec, s_dec), 1)
    causal_bias = jnp.where(kj <= qi, 0.0, -1e9).astype(jnp.float32)

    for li in range(n_dec):
        pre = f"dec{li}_"
        d = ln(d + self_attn(d, s_dec, pre + "self_", causal_bias),
               pre + "self_ln_g", pre + "self_ln_b")
        d = ln(d + cross_attn(d, h, pre + "cross_"),
               pre + "cross_ln_g", pre + "cross_ln_b")
        d = ln(d + ffn(d, pre), pre + "final_ln_g", pre + "final_ln_b")

    # ---- 4) Tied LM head: contract against shared_embed (no materialized .T) ----
    emb = get_bf16("shared_embed")
    logits = jax.lax.dot_general(d.astype(jnp.bfloat16), emb,
                                 (((1,), (1,)), ((), ())),
                                 preferred_element_type=jnp.float32)
    logits_ref[...] = (logits + get("final_logits_bias")).astype(logits_ref.dtype)


# ---------------- host-side wrapper ----------------
def bart_with_custom_encoder(params, graph_embeddings, decoder_input_ids,
                             labels=None):
    b, s_enc, _ = graph_embeddings.shape
    s_dec = decoder_input_ids.shape[1]

    # Whole batch per grid step: dense layers see [B*S, D] rows on the MXU.
    # TODO(synk): at large batch, block the batch axis (multiple of 2 blocks for
    #             v7x CORE_PARALLEL sharding) with padded per-block row counts.
    bt = b
    grid = (b // bt,)

    slabs, layout = _pack_params(params, s_enc, s_dec)
    p128, p256, p384 = slabs
    graph2d = graph_embeddings.reshape(b * s_enc, GRAPH_DIM).astype(jnp.float32)
    ids = decoder_input_ids.astype(jnp.int32)        # -> SMEM via scalar prefetch

    grid_spec = pltpu.PrefetchScalarGridSpec(
        num_scalar_prefetch=1,
        grid=grid,
        in_specs=[
            pl.BlockSpec(p128.shape, lambda i, ids_ref: (0, 0)),
            pl.BlockSpec(p256.shape, lambda i, ids_ref: (0, 0)),
            pl.BlockSpec(p384.shape, lambda i, ids_ref: (0, 0)),
            pl.BlockSpec((bt * s_enc, GRAPH_DIM), lambda i, ids_ref: (i, 0)),
        ],
        out_specs=[
            pl.BlockSpec((bt * s_dec, VOCAB), lambda i, ids_ref: (i, 0)),
            pl.BlockSpec((bt * s_enc, D_MODEL), lambda i, ids_ref: (i, 0)),
        ],
    )

    logits2d, enc2d = pl.pallas_call(
        functools.partial(_forward_kernel, layout, bt, s_enc, s_dec,
                          N_ENC_LAYERS, N_DEC_LAYERS),
        grid_spec=grid_spec,
        out_shape=(jax.ShapeDtypeStruct((b * s_dec, VOCAB), jnp.float32),
                   jax.ShapeDtypeStruct((b * s_enc, D_MODEL), jnp.float32)),
        compiler_params=pltpu.CompilerParams(
            dimension_semantics=("parallel",)),
    )(ids, p128, p256, p384, graph2d)

    logits = logits2d.reshape(b, s_dec, VOCAB)
    enc_hidden = enc2d.reshape(b, s_enc, D_MODEL)
    # labels=None in the playground call => no loss term returned
    return {"logits": logits, "encoder_last_hidden_state": enc_hidden}


# ---------------- deterministic parameter init ----------------
def _linear(key, fan_in, fan_out, scale=0.02):
    w = scale * jax.random.normal(key, (fan_in, fan_out), jnp.float32)
    b = jnp.zeros((1, fan_out), jnp.float32)
    return w, b


def _self_attn_params(key):
    kq, kk, kv, ko = jax.random.split(key, 4)
    scale = D_HEAD ** -0.5
    qw, qb = _linear(kq, D_MODEL, D_MODEL)
    kw, kb = _linear(kk, D_MODEL, D_MODEL)
    vw, vb = _linear(kv, D_MODEL, D_MODEL)
    ow, ob = _linear(ko, D_MODEL, D_MODEL)
    # fold 1/sqrt(d_head) query scale into the Q columns (one-time weight transform)
    return {"qkv_w": jnp.concatenate([qw * scale, kw, vw], axis=1),
            "qkv_b": jnp.concatenate([qb * scale, kb, vb], axis=1),
            "o_w": ow, "o_b": ob}


def _cross_attn_params(key):
    kq, kk, kv, ko = jax.random.split(key, 4)
    scale = D_HEAD ** -0.5
    qw, qb = _linear(kq, D_MODEL, D_MODEL)
    kw, kb = _linear(kk, D_MODEL, D_MODEL)
    vw, vb = _linear(kv, D_MODEL, D_MODEL)
    ow, ob = _linear(ko, D_MODEL, D_MODEL)
    return {"q_w": qw * scale, "q_b": qb * scale,
            "kv_w": jnp.concatenate([kw, vw], axis=1),
            "kv_b": jnp.concatenate([kb, vb], axis=1),
            "o_w": ow, "o_b": ob}


def _enc_layer_params(key):
    ka, k1, k2 = jax.random.split(key, 3)
    f1w, f1b = _linear(k1, D_MODEL, D_FF)
    f2w, f2b = _linear(k2, D_FF, D_MODEL)
    return {
        "self_attn": _self_attn_params(ka),
        "self_ln_g": jnp.ones((1, D_MODEL), jnp.float32),
        "self_ln_b": jnp.zeros((1, D_MODEL), jnp.float32),
        "fc1_w": f1w, "fc1_b": f1b, "fc2_w": f2w, "fc2_b": f2b,
        "final_ln_g": jnp.ones((1, D_MODEL), jnp.float32),
        "final_ln_b": jnp.zeros((1, D_MODEL), jnp.float32),
    }


def _dec_layer_params(key):
    ka, kc, k1, k2 = jax.random.split(key, 4)
    f1w, f1b = _linear(k1, D_MODEL, D_FF)
    f2w, f2b = _linear(k2, D_FF, D_MODEL)
    return {
        "self_attn": _self_attn_params(ka),
        "self_ln_g": jnp.ones((1, D_MODEL), jnp.float32),
        "self_ln_b": jnp.zeros((1, D_MODEL), jnp.float32),
        "cross_attn": _cross_attn_params(kc),
        "cross_ln_g": jnp.ones((1, D_MODEL), jnp.float32),
        "cross_ln_b": jnp.zeros((1, D_MODEL), jnp.float32),
        "fc1_w": f1w, "fc1_b": f1b, "fc2_w": f2w, "fc2_b": f2b,
        "final_ln_g": jnp.ones((1, D_MODEL), jnp.float32),
        "final_ln_b": jnp.zeros((1, D_MODEL), jnp.float32),
    }


def init_params(key):
    keys = jax.random.split(key, 5 + N_ENC_LAYERS + N_DEC_LAYERS)
    fc1_w, fc1_b = _linear(keys[0], GRAPH_DIM, ENC_HIDDEN)
    fc2_w, fc2_b = _linear(keys[1], ENC_HIDDEN, D_MODEL)
    return {
        "custom_encoder": {"fc1_w": fc1_w, "fc1_b": fc1_b,
                           "fc2_w": fc2_w, "fc2_b": fc2_b},
        "shared_embed": 0.02 * jax.random.normal(
            keys[2], (VOCAB, D_MODEL), jnp.float32),
        "enc_pos_embed": 0.02 * jax.random.normal(
            keys[3], (MAX_POS + POS_OFFSET, D_MODEL), jnp.float32),
        "dec_pos_embed": 0.02 * jax.random.normal(
            keys[4], (MAX_POS + POS_OFFSET, D_MODEL), jnp.float32),
        "enc_ln_emb_g": jnp.ones((1, D_MODEL), jnp.float32),
        "enc_ln_emb_b": jnp.zeros((1, D_MODEL), jnp.float32),
        "dec_ln_emb_g": jnp.ones((1, D_MODEL), jnp.float32),
        "dec_ln_emb_b": jnp.zeros((1, D_MODEL), jnp.float32),
        "final_logits_bias": jnp.zeros((1, VOCAB), jnp.float32),
        "enc_layers": [_enc_layer_params(keys[5 + i])
                       for i in range(N_ENC_LAYERS)],
        "dec_layers": [_dec_layer_params(keys[5 + N_ENC_LAYERS + i])
                       for i in range(N_DEC_LAYERS)],
    }


if __name__ == "__main__":
    root = jax.random.PRNGKey(0)
    k_params, k_data = jax.random.split(root)
    params = init_params(k_params)

    # small analogs of the playground inputs
    graph_embeddings = jax.random.uniform(k_data, (2, 10, GRAPH_DIM),
                                          dtype=jnp.float32)
    decoder_input_ids = jnp.array([[0, 5, 7], [0, 9, 11]], dtype=jnp.int32)

    fwd = jax.jit(functools.partial(bart_with_custom_encoder, params))
    outputs = fwd(graph_embeddings, decoder_input_ids)
    jax.block_until_ready(outputs)

    assert outputs["logits"].shape == (2, 3, VOCAB)
    assert outputs["encoder_last_hidden_state"].shape == (2, 10, D_MODEL)
    assert bool(jnp.all(jnp.isfinite(outputs["logits"])))
    print("KERNEL_OK")
</pallas_src>

<mosaic_0001>
module attributes {stable_mosaic.version = 11 : i64} {
  func.func @_forward_kernel(%arg0: i32, %arg1: memref<2x3xi32, #tpu.memory_space<smem>>, %arg2: memref<1608x128xf32, #tpu.memory_space<vmem>>, %arg3: memref<544x256xf32, #tpu.memory_space<vmem>>, %arg4: memref<272x384xf32, #tpu.memory_space<vmem>>, %arg5: memref<20x128xf32, #tpu.memory_space<vmem>>, %arg6: memref<6x128xf32, #tpu.memory_space<vmem>>, %arg7: memref<20x128xf32, #tpu.memory_space<vmem>>) attributes {dimension_semantics = [#tpu.dimension_semantics<parallel>], iteration_bounds = array<i64: 1>, scalar_prefetch = 1 : i64, scratch_operands = 0 : i64, tpu.core_type = #tpu.core_type<tc>, window_params = [{pipeline_mode = #tpu.pipeline_mode<synchronous>, transform_indices = @transform_0, window_bounds = array<i64: 1608, 128>}, {pipeline_mode = #tpu.pipeline_mode<synchronous>, transform_indices = @transform_1, window_bounds = array<i64: 544, 256>}, {pipeline_mode = #tpu.pipeline_mode<synchronous>, transform_indices = @transform_2, window_bounds = array<i64: 272, 384>}, {transform_indices = @transform_3, window_bounds = array<i64: 20, 128>}, {transform_indices = @transform_4, window_bounds = array<i64: 6, 128>}, {transform_indices = @transform_5, window_bounds = array<i64: 20, 128>}]} {
    %c0 = arith.constant 0 : index
    %c0_0 = arith.constant 0 : index
    %0 = vector.load %arg5[%c0, %c0_0] : memref<20x128xf32, #tpu.memory_space<vmem>>, vector<20x128xf32>
    %1 = arith.truncf %0 : vector<20x128xf32> to vector<20x128xbf16>
    %c0_1 = arith.constant 0 : index
    %c0_2 = arith.constant 0 : index
    %2 = vector.load %arg3[%c0_1, %c0_2] : memref<544x256xf32, #tpu.memory_space<vmem>>, vector<128x256xf32>
    %3 = arith.truncf %2 : vector<128x256xf32> to vector<128x256xbf16>
    %cst = arith.constant dense<0.000000e+00> : vector<20x256xf32>
    %4 = tpu.matmul %1, %3, %cst {dimension_numbers = #tpu.dot_dimension_numbers<[1], [0], [0], [1], [0, 0, 1, 1], [], []>} : vector<20x128xbf16>, vector<128x256xbf16>, vector<20x256xf32> -> vector<20x256xf32>
    %c128 = arith.constant 128 : index
    %c0_3 = arith.constant 0 : index
    %5 = vector.load %arg3[%c128, %c0_3] : memref<544x256xf32, #tpu.memory_space<vmem>>, vector<1x256xf32>
    %6 = vector.broadcast %5 : vector<1x256xf32> to vector<20x256xf32>
    %7 = arith.addf %4, %6 : vector<20x256xf32>
    %cst_4 = arith.constant 0.000000e+00 : f32
    %8 = vector.broadcast %cst_4 : f32 to vector<20x256xf32>
    %9 = arith.maximumf %7, %8 : vector<20x256xf32>
    %10 = arith.truncf %9 : vector<20x256xf32> to vector<20x256xbf16>
    %c0_5 = arith.constant 0 : index
    %c0_6 = arith.constant 0 : index
    %11 = vector.load %arg2[%c0_5, %c0_6] : memref<1608x128xf32, #tpu.memory_space<vmem>>, vector<256x128xf32>
    %12 = arith.truncf %11 : vector<256x128xf32> to vector<256x128xbf16>
    %cst_7 = arith.constant dense<0.000000e+00> : vector<20x128xf32>
    %13 = tpu.matmul %10, %12, %cst_7 {dimension_numbers = #tpu.dot_dimension_numbers<[1], [0], [0], [1], [0, 0, 1, 1], [], []>} : vector<20x256xbf16>, vector<256x128xbf16>, vector<20x128xf32> -> vector<20x128xf32>
    %c256 = arith.constant 256 : index
    %c0_8 = arith.constant 0 : index
    %14 = vector.load %arg2[%c256, %c0_8] : memref<1608x128xf32, #tpu.memory_space<vmem>>, vector<1x128xf32>
    %15 = vector.broadcast %14 : vector<1x128xf32> to vector<20x128xf32>
    %16 = arith.addf %13, %15 : vector<20x128xf32>
    %c392 = arith.constant 392 : index
    %c0_9 = arith.constant 0 : index
    %17 = vector.load %arg2[%c392, %c0_9] : memref<1608x128xf32, #tpu.memory_space<vmem>>, vector<10x128xf32>
    %18 = tpu.concatenate %17, %17 in 0 : vector<10x128xf32>, vector<10x128xf32> -> vector<20x128xf32>
    %19 = arith.addf %16, %18 : vector<20x128xf32>
    %cst_10 = arith.constant dense<0.000000e+00> : vector<20xf32>
    %20 = vector.multi_reduction <add>, %19, %cst_10 [1] : vector<20x128xf32> to vector<20xf32>
    %21 = vector.shape_cast %20 : vector<20xf32> to vector<20x1xf32>
    %cst_11 = arith.constant 1.280000e+02 : f32
    %22 = vector.broadcast %cst_11 : f32 to vector<20x1xf32>
    %23 = arith.divf %21, %22 : vector<20x1xf32>
    %24 = vector.broadcast %23 : vector<20x1xf32> to vector<20x128xf32>
    %25 = arith.subf %19, %24 : vector<20x128xf32>
    %26 = arith.mulf %25, %25 : vector<20x128xf32>
    %cst_12 = arith.constant dense<0.000000e+00> : vector<20xf32>
    %27 = vector.multi_reduction <add>, %26, %cst_12 [1] : vector<20x128xf32> to vector<20xf32>
    %28 = vector.shape_cast %27 : vector<20xf32> to vector<20x1xf32>
    %cst_13 = arith.constant 1.280000e+02 : f32
    %29 = vector.broadcast %cst_13 : f32 to vector<20x1xf32>
    %30 = arith.divf %28, %29 : vector<20x1xf32>
    %cst_14 = arith.constant 9.99999974E-6 : f32
    %31 = vector.broadcast %cst_14 : f32 to vector<20x1xf32>
    %32 = arith.addf %30, %31 : vector<20x1xf32>
    %33 = math.rsqrt %32 : vector<20x1xf32>
    %34 = vector.broadcast %33 : vector<20x1xf32> to vector<20x128xf32>
    %35 = arith.mulf %25, %34 : vector<20x128xf32>
    %c416 = arith.constant 416 : index
    %c0_15 = arith.constant 0 : index
    %36 = vector.load %arg2[%c416, %c0_15] : memref<1608x128xf32, #tpu.memory_space<vmem>>, vector<1x128xf32>
    %37 = vector.broadcast %36 : vector<1x128xf32> to vector<20x128xf32>
    %38 = arith.mulf %35, %37 : vector<20x128xf32>
    %c424 = arith.constant 424 : index
    %c0_16 = arith.constant 0 : index
    %39 = vector.load %arg2[%c424, %c0_16] : memref<1608x128xf32, #tpu.memory_space<vmem>>, vector<1x128xf32>
    %40 = vector.broadcast %39 : vector<1x128xf32> to vector<20x128xf32>
    %41 = arith.addf %38, %40 : vector<20x128xf32>
    %42 = arith.truncf %41 : vector<20x128xf32> to vector<20x128xbf16>
    %c0_17 = arith.constant 0 : index
    %c0_18 = arith.constant 0 : index
    %43 = vector.load %arg4[%c0_17, %c0_18] : memref<272x384xf32, #tpu.memory_space<vmem>>, vector<128x384xf32>
    %44 = arith.truncf %43 : vector<128x384xf32> to vector<128x384xbf16>
    %cst_19 = arith.constant dense<0.000000e+00> : vector<20x384xf32>
    %45 = tpu.matmul %42, %44, %cst_19 {dimension_numbers = #tpu.dot_dimension_numbers<[1], [0], [0], [1], [0, 0, 1, 1], [], []>} : vector<20x128xbf16>, vector<128x384xbf16>, vector<20x384xf32> -> vector<20x384xf32>
    %c128_20 = arith.constant 128 : index
    %c0_21 = arith.constant 0 : index
    %46 = vector.load %arg4[%c128_20, %c0_21] : memref<272x384xf32, #tpu.memory_space<vmem>>, vector<1x384xf32>
    %47 = vector.broadcast %46 : vector<1x384xf32> to vector<20x384xf32>
    %48 = arith.addf %45, %47 : vector<20x384xf32>
    %c456 = arith.constant 456 : index
    %c0_22 = arith.constant 0 : index
    %49 = vector.load %arg2[%c456, %c0_22] : memref<1608x128xf32, #tpu.memory_space<vmem>>, vector<128x128xf32>
    %50 = arith.truncf %49 : vector<128x128xf32> to vector<128x128xbf16>
    %51 = vector.extract_strided_slice %48 {offsets = [0, 0], sizes = [10, 128], strides = [1, 1]} : vector<20x384xf32> to vector<10x128xf32>
    %52 = vector.extract_strided_slice %48 {offsets = [0, 128], sizes = [10, 128], strides = [1, 1]} : vector<20x384xf32> to vector<10x128xf32>
    %53 = vector.extract_strided_slice %48 {offsets = [0, 256], sizes = [10, 128], strides = [1, 1]} : vector<20x384xf32> to vector<10x128xf32>
    %54 = vector.extract_strided_slice %51 {offsets = [0, 0], sizes = [10, 32], strides = [1, 1]} : vector<10x128xf32> to vector<10x32xf32>
    %55 = arith.truncf %54 : vector<10x32xf32> to vector<10x32xbf16>
    %56 = vector.extract_strided_slice %52 {offsets = [0, 0], sizes = [10, 32], strides = [1, 1]} : vector<10x128xf32> to vector<10x32xf32>
    %57 = arith.truncf %56 : vector<10x32xf32> to vector<10x32xbf16>
    %58 = vector.extract_strided_slice %53 {offsets = [0, 0], sizes = [10, 32], strides = [1, 1]} : vector<10x128xf32> to vector<10x32xf32>
    %59 = arith.truncf %58 : vector<10x32xf32> to vector<10x32xbf16>
    %cst_23 = arith.constant dense<0.000000e+00> : vector<10x10xf32>
    %60 = tpu.matmul %55, %57, %cst_23 {dimension_numbers = #tpu.dot_dimension_numbers<[1], [1], [0], [0], [0, 0, 1, 0], [], []>} : vector<10x32xbf16>, vector<10x32xbf16>, vector<10x10xf32> -> vector<10x10xf32>
    %cst_24 = arith.constant dense<0xFF800000> : vector<10xf32>
    %61 = vector.multi_reduction <maximumf>, %60, %cst_24 [1] : vector<10x10xf32> to vector<10xf32>
    %62 = vector.shape_cast %61 : vector<10xf32> to vector<10x1xf32>
    %63 = vector.broadcast %62 : vector<10x1xf32> to vector<10x10xf32>
    %64 = arith.subf %60, %63 : vector<10x10xf32>
    %65 = math.exp %64 : vector<10x10xf32>
    %cst_25 = arith.constant dense<0.000000e+00> : vector<10xf32>
    %66 = vector.multi_reduction <add>, %65, %cst_25 [1] : vector<10x10xf32> to vector<10xf32>
    %67 = vector.shape_cast %66 : vector<10xf32> to vector<10x1xf32>
    %68 = tpu.reciprocal %67 {approx = true} : vector<10x1xf32> -> vector<10x1xf32>
    %69 = vector.broadcast %68 : vector<10x1xf32> to vector<10x10xf32>
    %70 = arith.mulf %65, %69 : vector<10x10xf32>
    %71 = arith.truncf %70 : vector<10x10xf32> to vector<10x10xbf16>
    %cst_26 = arith.constant dense<0.000000e+00> : vector<10x32xf32>
    %72 = tpu.matmul %71, %59, %cst_26 {dimension_numbers = #tpu.dot_dimension_numbers<[1], [0], [0], [1], [0, 0, 1, 1], [], []>} : vector<10x10xbf16>, vector<10x32xbf16>, vector<10x32xf32> -> vector<10x32xf32>
    %73 = arith.truncf %72 : vector<10x32xf32> to vector<10x32xbf16>
    %74 = vector.extract_strided_slice %50 {offsets = [0, 0], sizes = [32, 128], strides = [1, 1]} : vector<128x128xbf16> to vector<32x128xbf16>
    %cst_27 = arith.constant dense<0.000000e+00> : vector<10x128xf32>
    %75 = tpu.matmul %73, %74, %cst_27 {dimension_numbers = #tpu.dot_dimension_numbers<[1], [0], [0], [1], [0, 0, 1, 1], [], []>} : vector<10x32xbf16>, vector<32x128xbf16>, vector<10x128xf32> -> vector<10x128xf32>
    %76 = vector.extract_strided_slice %51 {offsets = [0, 32], sizes = [10, 32], strides = [1, 1]} : vector<10x128xf32> to vector<10x32xf32>
    %77 = arith.truncf %76 : vector<10x32xf32> to vector<10x32xbf16>
    %78 = vector.extract_strided_slice %52 {offsets = [0, 32], sizes = [10, 32], strides = [1, 1]} : vector<10x128xf32> to vector<10x32xf32>
    %79 = arith.truncf %78 : vector<10x32xf32> to vector<10x32xbf16>
    %80 = vector.extract_strided_slice %53 {offsets = [0, 32], sizes = [10, 32], strides = [1, 1]} : vector<10x128xf32> to vector<10x32xf32>
    %81 = arith.truncf %80 : vector<10x32xf32> to vector<10x32xbf16>
    %cst_28 = arith.constant dense<0.000000e+00> : vector<10x10xf32>
    %82 = tpu.matmul %77, %79, %cst_28 {dimension_numbers = #tpu.dot_dimension_numbers<[1], [1], [0], [0], [0, 0, 1, 0], [], []>} : vector<10x32xbf16>, vector<10x32xbf16>, vector<10x10xf32> -> vector<10x10xf32>
    %cst_29 = arith.constant dense<0xFF800000> : vector<10xf32>
    %83 = vector.multi_reduction <maximumf>, %82, %cst_29 [1] : vector<10x10xf32> to vector<10xf32>
    %84 = vector.shape_cast %83 : vector<10xf32> to vector<10x1xf32>
    %85 = vector.broadcast %84 : vector<10x1xf32> to vector<10x10xf32>
    %86 = arith.subf %82, %85 : vector<10x10xf32>
    %87 = math.exp %86 : vector<10x10xf32>
    %cst_30 = arith.constant dense<0.000000e+00> : vector<10xf32>
    %88 = vector.multi_reduction <add>, %87, %cst_30 [1] : vector<10x10xf32> to vector<10xf32>
    %89 = vector.shape_cast %88 : vector<10xf32> to vector<10x1xf32>
    %90 = tpu.reciprocal %89 {approx = true} : vector<10x1xf32> -> vector<10x1xf32>
    %91 = vector.broadcast %90 : vector<10x1xf32> to vector<10x10xf32>
    %92 = arith.mulf %87, %91 : vector<10x10xf32>
    %93 = arith.truncf %92 : vector<10x10xf32> to vector<10x10xbf16>
    %cst_31 = arith.constant dense<0.000000e+00> : vector<10x32xf32>
    %94 = tpu.matmul %93, %81, %cst_31 {dimension_numbers = #tpu.dot_dimension_numbers<[1], [0], [0], [1], [0, 0, 1, 1], [], []>} : vector<10x10xbf16>, vector<10x32xbf16>, vector<10x32xf32> -> vector<10x32xf32>
    %95 = arith.truncf %94 : vector<10x32xf32> to vector<10x32xbf16>
    %96 = vector.extract_strided_slice %50 {offsets = [32, 0], sizes = [32, 128], strides = [1, 1]} : vector<128x128xbf16> to vector<32x128xbf16>
    %cst_32 = arith.constant dense<0.000000e+00> : vector<10x128xf32>
    %97 = tpu.matmul %95, %96, %cst_32 {dimension_numbers = #tpu.dot_dimension_numbers<[1], [0], [0], [1], [0, 0, 1, 1], [], []>} : vector<10x32xbf16>, vector<32x128xbf16>, vector<10x128xf32> -> vector<10x128xf32>
    %98 = arith.addf %75, %97 : vector<10x128xf32>
    %99 = vector.extract_strided_slice %51 {offsets = [0, 64], sizes = [10, 32], strides = [1, 1]} : vector<10x128xf32> to vector<10x32xf32>
    %100 = arith.truncf %99 : vector<10x32xf32> to vector<10x32xbf16>
    %101 = vector.extract_strided_slice %52 {offsets = [0, 64], sizes = [10, 32], strides = [1, 1]} : vector<10x128xf32> to vector<10x32xf32>
    %102 = arith.truncf %101 : vector<10x32xf32> to vector<10x32xbf16>
    %103 = vector.extract_strided_slice %53 {offsets = [0, 64], sizes = [10, 32], strides = [1, 1]} : vector<10x128xf32> to vector<10x32xf32>
    %104 = arith.truncf %103 : vector<10x32xf32> to vector<10x32xbf16>
    %cst_33 = arith.constant dense<0.000000e+00> : vector<10x10xf32>
    %105 = tpu.matmul %100, %102, %cst_33 {dimension_numbers = #tpu.dot_dimension_numbers<[1], [1], [0], [0], [0, 0, 1, 0], [], []>} : vector<10x32xbf16>, vector<10x32xbf16>, vector<10x10xf32> -> vector<10x10xf32>
    %cst_34 = arith.constant dense<0xFF800000> : vector<10xf32>
    %106 = vector.multi_reduction <maximumf>, %105, %cst_34 [1] : vector<10x10xf32> to vector<10xf32>
    %107 = vector.shape_cast %106 : vector<10xf32> to vector<10x1xf32>
    %108 = vector.broadcast %107 : vector<10x1xf32> to vector<10x10xf32>
    %109 = arith.subf %105, %108 : vector<10x10xf32>
    %110 = math.exp %109 : vector<10x10xf32>
    %cst_35 = arith.constant dense<0.000000e+00> : vector<10xf32>
    %111 = vector.multi_reduction <add>, %110, %cst_35 [1] : vector<10x10xf32> to vector<10xf32>
    %112 = vector.shape_cast %111 : vector<10xf32> to vector<10x1xf32>
    %113 = tpu.reciprocal %112 {approx = true} : vector<10x1xf32> -> vector<10x1xf32>
    %114 = vector.broadcast %113 : vector<10x1xf32> to vector<10x10xf32>
    %115 = arith.mulf %110, %114 : vector<10x10xf32>
    %116 = arith.truncf %115 : vector<10x10xf32> to vector<10x10xbf16>
    %cst_36 = arith.constant dense<0.000000e+00> : vector<10x32xf32>
    %117 = tpu.matmul %116, %104, %cst_36 {dimension_numbers = #tpu.dot_dimension_numbers<[1], [0], [0], [1], [0, 0, 1, 1], [], []>} : vector<10x10xbf16>, vector<10x32xbf16>, vector<10x32xf32> -> vector<10x32xf32>
    %118 = arith.truncf %117 : vector<10x32xf32> to vector<10x32xbf16>
    %119 = vector.extract_strided_slice %50 {offsets = [64, 0], sizes = [32, 128], strides = [1, 1]} : vector<128x128xbf16> to vector<32x128xbf16>
    %cst_37 = arith.constant dense<0.000000e+00> : vector<10x128xf32>
    %120 = tpu.matmul %118, %119, %cst_37 {dimension_numbers = #tpu.dot_dimension_numbers<[1], [0], [0], [1], [0, 0, 1, 1], [], []>} : vector<10x32xbf16>, vector<32x128xbf16>, vector<10x128xf32> -> vector<10x128xf32>
    %121 = arith.addf %98, %120 : vector<10x128xf32>
    %122 = vector.extract_strided_slice %51 {offsets = [0, 96], sizes = [10, 32], strides = [1, 1]} : vector<10x128xf32> to vector<10x32xf32>
    %123 = arith.truncf %122 : vector<10x32xf32> to vector<10x32xbf16>
    %124 = vector.extract_strided_slice %52 {offsets = [0, 96], sizes = [10, 32], strides = [1, 1]} : vector<10x128xf32> to vector<10x32xf32>
    %125 = arith.truncf %124 : vector<10x32xf32> to vector<10x32xbf16>
    %126 = vector.extract_strided_slice %53 {offsets = [0, 96], sizes = [10, 32], strides = [1, 1]} : vector<10x128xf32> to vector<10x32xf32>
    %127 = arith.truncf %126 : vector<10x32xf32> to vector<10x32xbf16>
    %cst_38 = arith.constant dense<0.000000e+00> : vector<10x10xf32>
    %128 = tpu.matmul %123, %125, %cst_38 {dimension_numbers = #tpu.dot_dimension_numbers<[1], [1], [0], [0], [0, 0, 1, 0], [], []>} : vector<10x32xbf16>, vector<10x32xbf16>, vector<10x10xf32> -> vector<10x10xf32>
    %cst_39 = arith.constant dense<0xFF800000> : vector<10xf32>
    %129 = vector.multi_reduction <maximumf>, %128, %cst_39 [1] : vector<10x10xf32> to vector<10xf32>
    %130 = vector.shape_cast %129 : vector<10xf32> to vector<10x1xf32>
    %131 = vector.broadcast %130 : vector<10x1xf32> to vector<10x10xf32>
    %132 = arith.subf %128, %131 : vector<10x10xf32>
    %133 = math.exp %132 : vector<10x10xf32>
    %cst_40 = arith.constant dense<0.000000e+00> : vector<10xf32>
    %134 = vector.multi_reduction <add>, %133, %cst_40 [1] : vector<10x10xf32> to vector<10xf32>
    %135 = vector.shape_cast %134 : vector<10xf32> to vector<10x1xf32>
    %136 = tpu.reciprocal %135 {approx = true} : vector<10x1xf32> -> vector<10x1xf32>
    %137 = vector.broadcast %136 : vector<10x1xf32> to vector<10x10xf32>
    %138 = arith.mulf %133, %137 : vector<10x10xf32>
    %139 = arith.truncf %138 : vector<10x10xf32> to vector<10x10xbf16>
    %cst_41 = arith.constant dense<0.000000e+00> : vector<10x32xf32>
    %140 = tpu.matmul %139, %127, %cst_41 {dimension_numbers = #tpu.dot_dimension_numbers<[1], [0], [0], [1], [0, 0, 1, 1], [], []>} : vector<10x10xbf16>, vector<10x32xbf16>, vector<10x32xf32> -> vector<10x32xf32>
    %141 = arith.truncf %140 : vector<10x32xf32> to vector<10x32xbf16>
    %142 = vector.extract_strided_slice %50 {offsets = [96, 0], sizes = [32, 128], strides = [1, 1]} : vector<128x128xbf16> to vector<32x128xbf16>
    %cst_42 = arith.constant dense<0.000000e+00> : vector<10x128xf32>
    %143 = tpu.matmul %141, %142, %cst_42 {dimension_numbers = #tpu.dot_dimension_numbers<[1], [0], [0], [1], [0, 0, 1, 1], [], []>} : vector<10x32xbf16>, vector<32x128xbf16>, vector<10x128xf32> -> vector<10x128xf32>
    %144 = arith.addf %121, %143 : vector<10x128xf32>
    %145 = vector.extract_strided_slice %48 {offsets = [10, 0], sizes = [10, 128], strides = [1, 1]} : vector<20x384xf32> to vector<10x128xf32>
    %146 = vector.extract_strided_slice %48 {offsets = [10, 128], sizes = [10, 128], strides = [1, 1]} : vector<20x384xf32> to vector<10x128xf32>
    %147 = vector.extract_strided_slice %48 {offsets = [10, 256], sizes = [10, 128], strides = [1, 1]} : vector<20x384xf32> to vector<10x128xf32>
    %148 = vector.extract_strided_slice %145 {offsets = [0, 0], sizes = [10, 32], strides = [1, 1]} : vector<10x128xf32> to vector<10x32xf32>
    %149 = arith.truncf %148 : vector<10x32xf32> to vector<10x32xbf16>
    %150 = vector.extract_strided_slice %146 {offsets = [0, 0], sizes = [10, 32], strides = [1, 1]} : vector<10x128xf32> to vector<10x32xf32>
    %151 = arith.truncf %150 : vector<10x32xf32> to vector<10x32xbf16>
    %152 = vector.extract_strided_slice %147 {offsets = [0, 0], sizes = [10, 32], strides = [1, 1]} : vector<10x128xf32> to vector<10x32xf32>
    %153 = arith.truncf %152 : vector<10x32xf32> to vector<10x32xbf16>
    %cst_43 = arith.constant dense<0.000000e+00> : vector<10x10xf32>
    %154 = tpu.matmul %149, %151, %cst_43 {dimension_numbers = #tpu.dot_dimension_numbers<[1], [1], [0], [0], [0, 0, 1, 0], [], []>} : vector<10x32xbf16>, vector<10x32xbf16>, vector<10x10xf32> -> vector<10x10xf32>
    %cst_44 = arith.constant dense<0xFF800000> : vector<10xf32>
    %155 = vector.multi_reduction <maximumf>, %154, %cst_44 [1] : vector<10x10xf32> to vector<10xf32>
    %156 = vector.shape_cast %155 : vector<10xf32> to vector<10x1xf32>
    %157 = vector.broadcast %156 : vector<10x1xf32> to vector<10x10xf32>
    %158 = arith.subf %154, %157 : vector<10x10xf32>
    %159 = math.exp %158 : vector<10x10xf32>
    %cst_45 = arith.constant dense<0.000000e+00> : vector<10xf32>
    %160 = vector.multi_reduction <add>, %159, %cst_45 [1] : vector<10x10xf32> to vector<10xf32>
    %161 = vector.shape_cast %160 : vector<10xf32> to vector<10x1xf32>
    %162 = tpu.reciprocal %161 {approx = true} : vector<10x1xf32> -> vector<10x1xf32>
    %163 = vector.broadcast %162 : vector<10x1xf32> to vector<10x10xf32>
    %164 = arith.mulf %159, %163 : vector<10x10xf32>
    %165 = arith.truncf %164 : vector<10x10xf32> to vector<10x10xbf16>
    %cst_46 = arith.constant dense<0.000000e+00> : vector<10x32xf32>
    %166 = tpu.matmul %165, %153, %cst_46 {dimension_numbers = #tpu.dot_dimension_numbers<[1], [0], [0], [1], [0, 0, 1, 1], [], []>} : vector<10x10xbf16>, vector<10x32xbf16>, vector<10x32xf32> -> vector<10x32xf32>
    %167 = arith.truncf %166 : vector<10x32xf32> to vector<10x32xbf16>
    %168 = vector.extract_strided_slice %50 {offsets = [0, 0], sizes = [32, 128], strides = [1, 1]} : vector<128x128xbf16> to vector<32x128xbf16>
    %cst_47 = arith.constant dense<0.000000e+00> : vector<10x128xf32>
    %169 = tpu.matmul %167, %168, %cst_47 {dimension_numbers = #tpu.dot_dimension_numbers<[1], [0], [0], [1], [0, 0, 1, 1], [], []>} : vector<10x32xbf16>, vector<32x128xbf16>, vector<10x128xf32> -> vector<10x128xf32>
    %170 = vector.extract_strided_slice %145 {offsets = [0, 32], sizes = [10, 32], strides = [1, 1]} : vector<10x128xf32> to vector<10x32xf32>
    %171 = arith.truncf %170 : vector<10x32xf32> to vector<10x32xbf16>
    %172 = vector.extract_strided_slice %146 {offsets = [0, 32], sizes = [10, 32], strides = [1, 1]} : vector<10x128xf32> to vector<10x32xf32>
    %173 = arith.truncf %172 : vector<10x32xf32> to vector<10x32xbf16>
    %174 = vector.extract_strided_slice %147 {offsets = [0, 32], sizes = [10, 32], strides = [1, 1]} : vector<10x128xf32> to vector<10x32xf32>
    %175 = arith.truncf %174 : vector<10x32xf32> to vector<10x32xbf16>
    %cst_48 = arith.constant dense<0.000000e+00> : vector<10x10xf32>
    %176 = tpu.matmul %171, %173, %cst_48 {dimension_numbers = #tpu.dot_dimension_numbers<[1], [1], [0], [0], [0, 0, 1, 0], [], []>} : vector<10x32xbf16>, vector<10x32xbf16>, vector<10x10xf32> -> vector<10x10xf32>
    %cst_49 = arith.constant dense<0xFF800000> : vector<10xf32>
    %177 = vector.multi_reduction <maximumf>, %176, %cst_49 [1] : vector<10x10xf32> to vector<10xf32>
    %178 = vector.shape_cast %177 : vector<10xf32> to vector<10x1xf32>
    %179 = vector.broadcast %178 : vector<10x1xf32> to vector<10x10xf32>
    %180 = arith.subf %176, %179 : vector<10x10xf32>
    %181 = math.exp %180 : vector<10x10xf32>
    %cst_50 = arith.constant dense<0.000000e+00> : vector<10xf32>
    %182 = vector.multi_reduction <add>, %181, %cst_50 [1] : vector<10x10xf32> to vector<10xf32>
    %183 = vector.shape_cast %182 : vector<10xf32> to vector<10x1xf32>
    %184 = tpu.reciprocal %183 {approx = true} : vector<10x1xf32> -> vector<10x1xf32>
    %185 = vector.broadcast %184 : vector<10x1xf32> to vector<10x10xf32>
    %186 = arith.mulf %181, %185 : vector<10x10xf32>
    %187 = arith.truncf %186 : vector<10x10xf32> to vector<10x10xbf16>
    %cst_51 = arith.constant dense<0.000000e+00> : vector<10x32xf32>
    %188 = tpu.matmul %187, %175, %cst_51 {dimension_numbers = #tpu.dot_dimension_numbers<[1], [0], [0], [1], [0, 0, 1, 1], [], []>} : vector<10x10xbf16>, vector<10x32xbf16>, vector<10x32xf32> -> vector<10x32xf32>
    %189 = arith.truncf %188 : vector<10x32xf32> to vector<10x32xbf16>
    %190 = vector.extract_strided_slice %50 {offsets = [32, 0], sizes = [32, 128], strides = [1, 1]} : vector<128x128xbf16> to vector<32x128xbf16>
    %cst_52 = arith.constant dense<0.000000e+00> : vector<10x128xf32>
    %191 = tpu.matmul %189, %190, %cst_52 {dimension_numbers = #tpu.dot_dimension_numbers<[1], [0], [0], [1], [0, 0, 1, 1], [], []>} : vector<10x32xbf16>, vector<32x128xbf16>, vector<10x128xf32> -> vector<10x128xf32>
    %192 = arith.addf %169, %191 : vector<10x128xf32>
    %193 = vector.extract_strided_slice %145 {offsets = [0, 64], sizes = [10, 32], strides = [1, 1]} : vector<10x128xf32> to vector<10x32xf32>
    %194 = arith.truncf %193 : vector<10x32xf32> to vector<10x32xbf16>
    %195 = vector.extract_strided_slice %146 {offsets = [0, 64], sizes = [10, 32], strides = [1, 1]} : vector<10x128xf32> to vector<10x32xf32>
    %196 = arith.truncf %195 : vector<10x32xf32> to vector<10x32xbf16>
    %197 = vector.extract_strided_slice %147 {offsets = [0, 64], sizes = [10, 32], strides = [1, 1]} : vector<10x128xf32> to vector<10x32xf32>
    %198 = arith.truncf %197 : vector<10x32xf32> to vector<10x32xbf16>
    %cst_53 = arith.constant dense<0.000000e+00> : vector<10x10xf32>
    %199 = tpu.matmul %194, %196, %cst_53 {dimension_numbers = #tpu.dot_dimension_numbers<[1], [1], [0], [0], [0, 0, 1, 0], [], []>} : vector<10x32xbf16>, vector<10x32xbf16>, vector<10x10xf32> -> vector<10x10xf32>
    %cst_54 = arith.constant dense<0xFF800000> : vector<10xf32>
    %200 = vector.multi_reduction <maximumf>, %199, %cst_54 [1] : vector<10x10xf32> to vector<10xf32>
    %201 = vector.shape_cast %200 : vector<10xf32> to vector<10x1xf32>
    %202 = vector.broadcast %201 : vector<10x1xf32> to vector<10x10xf32>
    %203 = arith.subf %199, %202 : vector<10x10xf32>
    %204 = math.exp %203 : vector<10x10xf32>
    %cst_55 = arith.constant dense<0.000000e+00> : vector<10xf32>
    %205 = vector.multi_reduction <add>, %204, %cst_55 [1] : vector<10x10xf32> to vector<10xf32>
    %206 = vector.shape_cast %205 : vector<10xf32> to vector<10x1xf32>
    %207 = tpu.reciprocal %206 {approx = true} : vector<10x1xf32> -> vector<10x1xf32>
    %208 = vector.broadcast %207 : vector<10x1xf32> to vector<10x10xf32>
    %209 = arith.mulf %204, %208 : vector<10x10xf32>
    %210 = arith.truncf %209 : vector<10x10xf32> to vector<10x10xbf16>
    %cst_56 = arith.constant dense<0.000000e+00> : vector<10x32xf32>
    %211 = tpu.matmul %210, %198, %cst_56 {dimension_numbers = #tpu.dot_dimension_numbers<[1], [0], [0], [1], [0, 0, 1, 1], [], []>} : vector<10x10xbf16>, vector<10x32xbf16>, vector<10x32xf32> -> vector<10x32xf32>
    %212 = arith.truncf %211 : vector<10x32xf32> to vector<10x32xbf16>
    %213 = vector.extract_strided_slice %50 {offsets = [64, 0], sizes = [32, 128], strides = [1, 1]} : vector<128x128xbf16> to vector<32x128xbf16>
    %cst_57 = arith.constant dense<0.000000e+00> : vector<10x128xf32>
    %214 = tpu.matmul %212, %213, %cst_57 {dimension_numbers = #tpu.dot_dimension_numbers<[1], [0], [0], [1], [0, 0, 1, 1], [], []>} : vector<10x32xbf16>, vector<32x128xbf16>, vector<10x128xf32> -> vector<10x128xf32>
    %215 = arith.addf %192, %214 : vector<10x128xf32>
    %216 = vector.extract_strided_slice %145 {offsets = [0, 96], sizes = [10, 32], strides = [1, 1]} : vector<10x128xf32> to vector<10x32xf32>
    %217 = arith.truncf %216 : vector<10x32xf32> to vector<10x32xbf16>
    %218 = vector.extract_strided_slice %146 {offsets = [0, 96], sizes = [10, 32], strides = [1, 1]} : vector<10x128xf32> to vector<10x32xf32>
    %219 = arith.truncf %218 : vector<10x32xf32> to vector<10x32xbf16>
    %220 = vector.extract_strided_slice %147 {offsets = [0, 96], sizes = [10, 32], strides = [1, 1]} : vector<10x128xf32> to vector<10x32xf32>
    %221 = arith.truncf %220 : vector<10x32xf32> to vector<10x32xbf16>
    %cst_58 = arith.constant dense<0.000000e+00> : vector<10x10xf32>
    %222 = tpu.matmul %217, %219, %cst_58 {dimension_numbers = #tpu.dot_dimension_numbers<[1], [1], [0], [0], [0, 0, 1, 0], [], []>} : vector<10x32xbf16>, vector<10x32xbf16>, vector<10x10xf32> -> vector<10x10xf32>
    %cst_59 = arith.constant dense<0xFF800000> : vector<10xf32>
    %223 = vector.multi_reduction <maximumf>, %222, %cst_59 [1] : vector<10x10xf32> to vector<10xf32>
    %224 = vector.shape_cast %223 : vector<10xf32> to vector<10x1xf32>
    %225 = vector.broadcast %224 : vector<10x1xf32> to vector<10x10xf32>
    %226 = arith.subf %222, %225 : vector<10x10xf32>
    %227 = math.exp %226 : vector<10x10xf32>
    %cst_60 = arith.constant dense<0.000000e+00> : vector<10xf32>
    %228 = vector.multi_reduction <add>, %227, %cst_60 [1] : vector<10x10xf32> to vector<10xf32>
    %229 = vector.shape_cast %228 : vector<10xf32> to vector<10x1xf32>
    %230 = tpu.reciprocal %229 {approx = true} : vector<10x1xf32> -> vector<10x1xf32>
    %231 = vector.broadcast %230 : vector<10x1xf32> to vector<10x10xf32>
    %232 = arith.mulf %227, %231 : vector<10x10xf32>
    %233 = arith.truncf %232 : vector<10x10xf32> to vector<10x10xbf16>
    %cst_61 = arith.constant dense<0.000000e+00> : vector<10x32xf32>
    %234 = tpu.matmul %233, %221, %cst_61 {dimension_numbers = #tpu.dot_dimension_numbers<[1], [0], [0], [1], [0, 0, 1, 1], [], []>} : vector<10x10xbf16>, vector<10x32xbf16>, vector<10x32xf32> -> vector<10x32xf32>
    %235 = arith.truncf %234 : vector<10x32xf32> to vector<10x32xbf16>
    %236 = vector.extract_strided_slice %50 {offsets = [96, 0], sizes = [32, 128], strides = [1, 1]} : vector<128x128xbf16> to vector<32x128xbf16>
    %cst_62 = arith.constant dense<0.000000e+00> : vector<10x128xf32>
    %237 = tpu.matmul %235, %236, %cst_62 {dimension_numbers = #tpu.dot_dimension_numbers<[1], [0], [0], [1], [0, 0, 1, 1], [], []>} : vector<10x32xbf16>, vector<32x128xbf16>, vector<10x128xf32> -> vector<10x128xf32>
    %238 = arith.addf %215, %237 : vector<10x128xf32>
    %239 = tpu.concatenate %144, %238 in 0 : vector<10x128xf32>, vector<10x128xf32> -> vector<20x128xf32>
    %c584 = arith.constant 584 : index
    %c0_63 = arith.constant 0 : index
    %240 = vector.load %arg2[%c584, %c0_63] : memref<1608x128xf32, #tpu.memory_space<vmem>>, vector<1x128xf32>
    %241 = vector.broadcast %240 : vector<1x128xf32> to vector<20x128xf32>
    %242 = arith.addf %239, %241 : vector<20x128xf32>
    %243 = arith.addf %41, %242 : vector<20x128xf32>
    %cst_64 = arith.constant dense<0.000000e+00> : vector<20xf32>
    %244 = vector.multi_reduction <add>, %243, %cst_64 [1] : vector<20x128xf32> to vector<20xf32>
    %245 = vector.shape_cast %244 : vector<20xf32> to vector<20x1xf32>
    %cst_65 = arith.constant 1.280000e+02 : f32
    %246 = vector.broadcast %cst_65 : f32 to vector<20x1xf32>
    %247 = arith.divf %245, %246 : vector<20x1xf32>
    %248 = vector.broadcast %247 : vector<20x1xf32> to vector<20x128xf32>
    %249 = arith.subf %243, %248 : vector<20x128xf32>
    %250 = arith.mulf %249, %249 : vector<20x128xf32>
    %cst_66 = arith.constant dense<0.000000e+00> : vector<20xf32>
    %251 = vector.multi_reduction <add>, %250, %cst_66 [1] : vector<20x128xf32> to vector<20xf32>
    %252 = vector.shape_cast %251 : vector<20xf32> to vector<20x1xf32>
    %cst_67 = arith.constant 1.280000e+02 : f32
    %253 = vector.broadcast %cst_67 : f32 to vector<20x1xf32>
    %254 = arith.divf %252, %253 : vector<20x1xf32>
    %cst_68 = arith.constant 9.99999974E-6 : f32
    %255 = vector.broadcast %cst_68 : f32 to vector<20x1xf32>
    %256 = arith.addf %254, %255 : vector<20x1xf32>
    %257 = math.rsqrt %256 : vector<20x1xf32>
    %258 = vector.broadcast %257 : vector<20x1xf32> to vector<20x128xf32>
    %259 = arith.mulf %249, %258 : vector<20x128xf32>
    %c592 = arith.constant 592 : index
    %c0_69 = arith.constant 0 : index
    %260 = vector.load %arg2[%c592, %c0_69] : memref<1608x128xf32, #tpu.memory_space<vmem>>, vector<1x128xf32>
    %261 = vector.broadcast %260 : vector<1x128xf32> to vector<20x128xf32>
    %262 = arith.mulf %259, %261 : vector<20x128xf32>
    %c600 = arith.constant 600 : index
    %c0_70 = arith.constant 0 : index
    %263 = vector.load %arg2[%c600, %c0_70] : memref<1608x128xf32, #tpu.memory_space<vmem>>, vector<1x128xf32>
    %264 = vector.broadcast %263 : vector<1x128xf32> to vector<20x128xf32>
    %265 = arith.addf %262, %264 : vector<20x128xf32>
    %266 = arith.truncf %265 : vector<20x128xf32> to vector<20x128xbf16>
    %c136 = arith.constant 136 : index
    %c0_71 = arith.constant 0 : index
    %267 = vector.load %arg3[%c136, %c0_71] : memref<544x256xf32, #tpu.memory_space<vmem>>, vector<128x256xf32>
    %268 = arith.truncf %267 : vector<128x256xf32> to vector<128x256xbf16>
    %cst_72 = arith.constant dense<0.000000e+00> : vector<20x256xf32>
    %269 = tpu.matmul %266, %268, %cst_72 {dimension_numbers = #tpu.dot_dimension_numbers<[1], [0], [0], [1], [0, 0, 1, 1], [], []>} : vector<20x128xbf16>, vector<128x256xbf16>, vector<20x256xf32> -> vector<20x256xf32>
    %c264 = arith.constant 264 : index
    %c0_73 = arith.constant 0 : index
    %270 = vector.load %arg3[%c264, %c0_73] : memref<544x256xf32, #tpu.memory_space<vmem>>, vector<1x256xf32>
    %271 = vector.broadcast %270 : vector<1x256xf32> to vector<20x256xf32>
    %272 = arith.addf %269, %271 : vector<20x256xf32>
    %273 = arith.mulf %272, %272 : vector<20x256xf32>
    %274 = arith.mulf %272, %273 : vector<20x256xf32>
    %cst_74 = arith.constant 4.471500e-02 : f32
    %275 = vector.broadcast %cst_74 : f32 to vector<20x256xf32>
    %276 = arith.mulf %275, %274 : vector<20x256xf32>
    %277 = arith.addf %272, %276 : vector<20x256xf32>
    %cst_75 = arith.constant 0.797884583 : f32
    %278 = vector.broadcast %cst_75 : f32 to vector<20x256xf32>
    %279 = arith.mulf %278, %277 : vector<20x256xf32>
    %280 = math.tanh %279 : vector<20x256xf32>
    %cst_76 = arith.constant 1.000000e+00 : f32
    %281 = vector.broadcast %cst_76 : f32 to vector<20x256xf32>
    %282 = arith.addf %281, %280 : vector<20x256xf32>
    %cst_77 = arith.constant 5.000000e-01 : f32
    %283 = vector.broadcast %cst_77 : f32 to vector<20x256xf32>
    %284 = arith.mulf %283, %282 : vector<20x256xf32>
    %285 = arith.mulf %272, %284 : vector<20x256xf32>
    %286 = arith.truncf %285 : vector<20x256xf32> to vector<20x256xbf16>
    %c608 = arith.constant 608 : index
    %c0_78 = arith.constant 0 : index
    %287 = vector.load %arg2[%c608, %c0_78] : memref<1608x128xf32, #tpu.memory_space<vmem>>, vector<256x128xf32>
    %288 = arith.truncf %287 : vector<256x128xf32> to vector<256x128xbf16>
    %cst_79 = arith.constant dense<0.000000e+00> : vector<20x128xf32>
    %289 = tpu.matmul %286, %288, %cst_79 {dimension_numbers = #tpu.dot_dimension_numbers<[1], [0], [0], [1], [0, 0, 1, 1], [], []>} : vector<20x256xbf16>, vector<256x128xbf16>, vector<20x128xf32> -> vector<20x128xf32>
    %c864 = arith.constant 864 : index
    %c0_80 = arith.constant 0 : index
    %290 = vector.load %arg2[%c864, %c0_80] : memref<1608x128xf32, #tpu.memory_space<vmem>>, vector<1x128xf32>
    %291 = vector.broadcast %290 : vector<1x128xf32> to vector<20x128xf32>
    %292 = arith.addf %289, %291 : vector<20x128xf32>
    %293 = arith.addf %265, %292 : vector<20x128xf32>
    %cst_81 = arith.constant dense<0.000000e+00> : vector<20xf32>
    %294 = vector.multi_reduction <add>, %293, %cst_81 [1] : vector<20x128xf32> to vector<20xf32>
    %295 = vector.shape_cast %294 : vector<20xf32> to vector<20x1xf32>
    %cst_82 = arith.constant 1.280000e+02 : f32
    %296 = vector.broadcast %cst_82 : f32 to vector<20x1xf32>
    %297 = arith.divf %295, %296 : vector<20x1xf32>
    %298 = vector.broadcast %297 : vector<20x1xf32> to vector<20x128xf32>
    %299 = arith.subf %293, %298 : vector<20x128xf32>
    %300 = arith.mulf %299, %299 : vector<20x128xf32>
    %cst_83 = arith.constant dense<0.000000e+00> : vector<20xf32>
    %301 = vector.multi_reduction <add>, %300, %cst_83 [1] : vector<20x128xf32> to vector<20xf32>
    %302 = vector.shape_cast %301 : vector<20xf32> to vector<20x1xf32>
    %cst_84 = arith.constant 1.280000e+02 : f32
    %303 = vector.broadcast %cst_84 : f32 to vector<20x1xf32>
    %304 = arith.divf %302, %303 : vector<20x1xf32>
    %cst_85 = arith.constant 9.99999974E-6 : f32
    %305 = vector.broadcast %cst_85 : f32 to vector<20x1xf32>
    %306 = arith.addf %304, %305 : vector<20x1xf32>
    %307 = math.rsqrt %306 : vector<20x1xf32>
    %308 = vector.broadcast %307 : vector<20x1xf32> to vector<20x128xf32>
    %309 = arith.mulf %299, %308 : vector<20x128xf32>
    %c872 = arith.constant 872 : index
    %c0_86 = arith.constant 0 : index
    %310 = vector.load %arg2[%c872, %c0_86] : memref<1608x128xf32, #tpu.memory_space<vmem>>, vector<1x128xf32>
    %311 = vector.broadcast %310 : vector<1x128xf32> to vector<20x128xf32>
    %312 = arith.mulf %309, %311 : vector<20x128xf32>
    %c880 = arith.constant 880 : index
    %c0_87 = arith.constant 0 : index
    %313 = vector.load %arg2[%c880, %c0_87] : memref<1608x128xf32, #tpu.memory_space<vmem>>, vector<1x128xf32>
    %314 = vector.broadcast %313 : vector<1x128xf32> to vector<20x128xf32>
    %315 = arith.addf %312, %314 : vector<20x128xf32>
    %c0_88 = arith.constant 0 : index
    %c0_89 = arith.constant 0 : index
    %316 = vector.load %arg7[%c0_88, %c0_89] : memref<20x128xf32, #tpu.memory_space<vmem>>, vector<20x128xf32>
    tpu.vector_store %arg7[%c0_88, %c0_89], %315 {strides = array<i32>} : memref<20x128xf32, #tpu.memory_space<vmem>>, vector<20x128xf32>,
    %c2_i32 = arith.constant 2 : i32
    %317 = arith.muli %arg0, %c2_i32 : i32
    %c0_i32 = arith.constant 0 : i32
    %318 = arith.addi %317, %c0_i32 : i32
    %319 = arith.index_cast %318 : i32 to index
    %c0_90 = arith.constant 0 : index
    %320 = memref.load %arg1[%319, %c0_90] : memref<2x3xi32, #tpu.memory_space<smem>>
    %c264_i32 = arith.constant 264 : i32
    %321 = arith.addi %c264_i32, %320 : i32
    %322 = arith.index_cast %321 : i32 to index
    %c0_91 = arith.constant 0 : index
    %323 = vector.load %arg2[%322, %c0_91] : memref<1608x128xf32, #tpu.memory_space<vmem>>, vector<1x128xf32>
    %c0_i32_92 = arith.constant 0 : i32
    %324 = arith.addi %317, %c0_i32_92 : i32
    %325 = arith.index_cast %324 : i32 to index
    %c1 = arith.constant 1 : index
    %326 = memref.load %arg1[%325, %c1] : memref<2x3xi32, #tpu.memory_space<smem>>
    %c264_i32_93 = arith.constant 264 : i32
    %327 = arith.addi %c264_i32_93, %326 : i32
    %328 = arith.index_cast %327 : i32 to index
    %c0_94 = arith.constant 0 : index
    %329 = vector.load %arg2[%328, %c0_94] : memref<1608x128xf32, #tpu.memory_space<vmem>>, vector<1x128xf32>
    %c0_i32_95 = arith.constant 0 : i32
    %330 = arith.addi %317, %c0_i32_95 : i32
    %331 = arith.index_cast %330 : i32 to index
    %c2 = arith.constant 2 : index
    %332 = memref.load %arg1[%331, %c2] : memref<2x3xi32, #tpu.memory_space<smem>>
    %c264_i32_96 = arith.constant 264 : i32
    %333 = arith.addi %c264_i32_96, %332 : i32
    %334 = arith.index_cast %333 : i32 to index
    %c0_97 = arith.constant 0 : index
    %335 = vector.load %arg2[%334, %c0_97] : memref<1608x128xf32, #tpu.memory_space<vmem>>, vector<1x128xf32>
    %c1_i32 = arith.constant 1 : i32
    %336 = arith.addi %317, %c1_i32 : i32
    %337 = arith.index_cast %336 : i32 to index
    %c0_98 = arith.constant 0 : index
    %338 = memref.load %arg1[%337, %c0_98] : memref<2x3xi32, #tpu.memory_space<smem>>
    %c264_i32_99 = arith.constant 264 : i32
    %339 = arith.addi %c264_i32_99, %338 : i32
    %340 = arith.index_cast %339 : i32 to index
    %c0_100 = arith.constant 0 : index
    %341 = vector.load %arg2[%340, %c0_100] : memref<1608x128xf32, #tpu.memory_space<vmem>>, vector<1x128xf32>
    %c1_i32_101 = arith.constant 1 : i32
    %342 = arith.addi %317, %c1_i32_101 : i32
    %343 = arith.index_cast %342 : i32 to index
    %c1_102 = arith.constant 1 : index
    %344 = memref.load %arg1[%343, %c1_102] : memref<2x3xi32, #tpu.memory_space<smem>>
    %c264_i32_103 = arith.constant 264 : i32
    %345 = arith.addi %c264_i32_103, %344 : i32
    %346 = arith.index_cast %345 : i32 to index
    %c0_104 = arith.constant 0 : index
    %347 = vector.load %arg2[%346, %c0_104] : memref<1608x128xf32, #tpu.memory_space<vmem>>, vector<1x128xf32>
    %c1_i32_105 = arith.constant 1 : i32
    %348 = arith.addi %317, %c1_i32_105 : i32
    %349 = arith.index_cast %348 : i32 to index
    %c2_106 = arith.constant 2 : index
    %350 = memref.load %arg1[%349, %c2_106] : memref<2x3xi32, #tpu.memory_space<smem>>
    %c264_i32_107 = arith.constant 264 : i32
    %351 = arith.addi %c264_i32_107, %350 : i32
    %352 = arith.index_cast %351 : i32 to index
    %c0_108 = arith.constant 0 : index
    %353 = vector.load %arg2[%352, %c0_108] : memref<1608x128xf32, #tpu.memory_space<vmem>>, vector<1x128xf32>
    %354 = tpu.concatenate %323, %329, %335, %341, %347, %353 in 0 : vector<1x128xf32>, vector<1x128xf32>, vector<1x128xf32>, vector<1x128xf32>, vector<1x128xf32>, vector<1x128xf32> -> vector<6x128xf32>
    %c408 = arith.constant 408 : index
    %c0_109 = arith.constant 0 : index
    %355 = vector.load %arg2[%c408, %c0_109] : memref<1608x128xf32, #tpu.memory_space<vmem>>, vector<3x128xf32>
    %356 = tpu.concatenate %355, %355 in 0 : vector<3x128xf32>, vector<3x128xf32> -> vector<6x128xf32>
    %357 = arith.addf %354, %356 : vector<6x128xf32>
    %cst_110 = arith.constant dense<0.000000e+00> : vector<6xf32>
    %358 = vector.multi_reduction <add>, %357, %cst_110 [1] : vector<6x128xf32> to vector<6xf32>
    %359 = vector.shape_cast %358 : vector<6xf32> to vector<6x1xf32>
    %cst_111 = arith.constant 1.280000e+02 : f32
    %360 = vector.broadcast %cst_111 : f32 to vector<6x1xf32>
    %361 = arith.divf %359, %360 : vector<6x1xf32>
    %362 = vector.broadcast %361 : vector<6x1xf32> to vector<6x128xf32>
    %363 = arith.subf %357, %362 : vector<6x128xf32>
    %364 = arith.mulf %363, %363 : vector<6x128xf32>
    %cst_112 = arith.constant dense<0.000000e+00> : vector<6xf32>
    %365 = vector.multi_reduction <add>, %364, %cst_112 [1] : vector<6x128xf32> to vector<6xf32>
    %366 = vector.shape_cast %365 : vector<6xf32> to vector<6x1xf32>
    %cst_113 = arith.constant 1.280000e+02 : f32
    %367 = vector.broadcast %cst_113 : f32 to vector<6x1xf32>
    %368 = arith.divf %366, %367 : vector<6x1xf32>
    %cst_114 = arith.constant 9.99999974E-6 : f32
    %369 = vector.broadcast %cst_114 : f32 to vector<6x1xf32>
    %370 = arith.addf %368, %369 : vector<6x1xf32>
    %371 = math.rsqrt %370 : vector<6x1xf32>
    %372 = vector.broadcast %371 : vector<6x1xf32> to vector<6x128xf32>
    %373 = arith.mulf %363, %372 : vector<6x128xf32>
    %c432 = arith.constant 432 : index
    %c0_115 = arith.constant 0 : index
    %374 = vector.load %arg2[%c432, %c0_115] : memref<1608x128xf32, #tpu.memory_space<vmem>>, vector<1x128xf32>
    %375 = vector.broadcast %374 : vector<1x128xf32> to vector<6x128xf32>
    %376 = arith.mulf %373, %375 : vector<6x128xf32>
    %c440 = arith.constant 440 : index
    %c0_116 = arith.constant 0 : index
    %377 = vector.load %arg2[%c440, %c0_116] : memref<1608x128xf32, #tpu.memory_space<vmem>>, vector<1x128xf32>
    %378 = vector.broadcast %377 : vector<1x128xf32> to vector<6x128xf32>
    %379 = arith.addf %376, %378 : vector<6x128xf32>
    %380 = tpu.iota {dimensions = array<i32: 0>} : vector<3x3xi32>
    %381 = tpu.iota {dimensions = array<i32: 1>} : vector<3x3xi32>
    %382 = arith.cmpi sle, %381, %380 : vector<3x3xi32>
    %cst_117 = arith.constant 0.000000e+00 : f32
    %cst_118 = arith.constant -1.000000e+09 : f32
    %383 = vector.broadcast %cst_117 : f32 to vector<3x3xf32>
    %384 = vector.broadcast %cst_118 : f32 to vector<3x3xf32>
    %385 = arith.select %382, %383, %384 : vector<3x3xi1>, vector<3x3xf32>
    %386 = arith.truncf %379 : vector<6x128xf32> to vector<6x128xbf16>
    %c136_119 = arith.constant 136 : index
    %c0_120 = arith.constant 0 : index
    %387 = vector.load %arg4[%c136_119, %c0_120] : memref<272x384xf32, #tpu.memory_space<vmem>>, vector<128x384xf32>
    %388 = arith.truncf %387 : vector<128x384xf32> to vector<128x384xbf16>
    %cst_121 = arith.constant dense<0.000000e+00> : vector<6x384xf32>
    %389 = tpu.matmul %386, %388, %cst_121 {dimension_numbers = #tpu.dot_dimension_numbers<[1], [0], [0], [1], [0, 0, 1, 1], [], []>} : vector<6x128xbf16>, vector<128x384xbf16>, vector<6x384xf32> -> vector<6x384xf32>
    %c264_122 = arith.constant 264 : index
    %c0_123 = arith.constant 0 : index
    %390 = vector.load %arg4[%c264_122, %c0_123] : memref<272x384xf32, #tpu.memory_space<vmem>>, vector<1x384xf32>
    %391 = vector.broadcast %390 : vector<1x384xf32> to vector<6x384xf32>
    %392 = arith.addf %389, %391 : vector<6x384xf32>
    %c888 = arith.constant 888 : index
    %c0_124 = arith.constant 0 : index
    %393 = vector.load %arg2[%c888, %c0_124] : memref<1608x128xf32, #tpu.memory_space<vmem>>, vector<128x128xf32>
    %394 = arith.truncf %393 : vector<128x128xf32> to vector<128x128xbf16>
    %395 = vector.extract_strided_slice %392 {offsets = [0, 0], sizes = [3, 128], strides = [1, 1]} : vector<6x384xf32> to vector<3x128xf32>
    %396 = vector.extract_strided_slice %392 {offsets = [0, 128], sizes = [3, 128], strides = [1, 1]} : vector<6x384xf32> to vector<3x128xf32>
    %397 = vector.extract_strided_slice %392 {offsets = [0, 256], sizes = [3, 128], strides = [1, 1]} : vector<6x384xf32> to vector<3x128xf32>
    %398 = vector.extract_strided_slice %395 {offsets = [0, 0], sizes = [3, 32], strides = [1, 1]} : vector<3x128xf32> to vector<3x32xf32>
    %399 = arith.truncf %398 : vector<3x32xf32> to vector<3x32xbf16>
    %400 = vector.extract_strided_slice %396 {offsets = [0, 0], sizes = [3, 32], strides = [1, 1]} : vector<3x128xf32> to vector<3x32xf32>
    %401 = arith.truncf %400 : vector<3x32xf32> to vector<3x32xbf16>
    %402 = vector.extract_strided_slice %397 {offsets = [0, 0], sizes = [3, 32], strides = [1, 1]} : vector<3x128xf32> to vector<3x32xf32>
    %403 = arith.truncf %402 : vector<3x32xf32> to vector<3x32xbf16>
    %cst_125 = arith.constant dense<0.000000e+00> : vector<3x3xf32>
    %404 = tpu.matmul %399, %401, %cst_125 {dimension_numbers = #tpu.dot_dimension_numbers<[1], [1], [0], [0], [0, 0, 1, 0], [], []>} : vector<3x32xbf16>, vector<3x32xbf16>, vector<3x3xf32> -> vector<3x3xf32>
    %405 = arith.addf %404, %385 : vector<3x3xf32>
    %cst_126 = arith.constant dense<0xFF800000> : vector<3xf32>
    %406 = vector.multi_reduction <maximumf>, %405, %cst_126 [1] : vector<3x3xf32> to vector<3xf32>
    %407 = vector.shape_cast %406 : vector<3xf32> to vector<3x1xf32>
    %408 = vector.broadcast %407 : vector<3x1xf32> to vector<3x3xf32>
    %409 = arith.subf %405, %408 : vector<3x3xf32>
    %410 = math.exp %409 : vector<3x3xf32>
    %cst_127 = arith.constant dense<0.000000e+00> : vector<3xf32>
    %411 = vector.multi_reduction <add>, %410, %cst_127 [1] : vector<3x3xf32> to vector<3xf32>
    %412 = vector.shape_cast %411 : vector<3xf32> to vector<3x1xf32>
    %413 = tpu.reciprocal %412 {approx = true} : vector<3x1xf32> -> vector<3x1xf32>
    %414 = vector.broadcast %413 : vector<3x1xf32> to vector<3x3xf32>
    %415 = arith.mulf %410, %414 : vector<3x3xf32>
    %416 = arith.truncf %415 : vector<3x3xf32> to vector<3x3xbf16>
    %cst_128 = arith.constant dense<0.000000e+00> : vector<3x32xf32>
    %417 = tpu.matmul %416, %403, %cst_128 {dimension_numbers = #tpu.dot_dimension_numbers<[1], [0], [0], [1], [0, 0, 1, 1], [], []>} : vector<3x3xbf16>, vector<3x32xbf16>, vector<3x32xf32> -> vector<3x32xf32>
    %418 = arith.truncf %417 : vector<3x32xf32> to vector<3x32xbf16>
    %419 = vector.extract_strided_slice %394 {offsets = [0, 0], sizes = [32, 128], strides = [1, 1]} : vector<128x128xbf16> to vector<32x128xbf16>
    %cst_129 = arith.constant dense<0.000000e+00> : vector<3x128xf32>
    %420 = tpu.matmul %418, %419, %cst_129 {dimension_numbers = #tpu.dot_dimension_numbers<[1], [0], [0], [1], [0, 0, 1, 1], [], []>} : vector<3x32xbf16>, vector<32x128xbf16>, vector<3x128xf32> -> vector<3x128xf32>
    %421 = vector.extract_strided_slice %395 {offsets = [0, 32], sizes = [3, 32], strides = [1, 1]} : vector<3x128xf32> to vector<3x32xf32>
    %422 = arith.truncf %421 : vector<3x32xf32> to vector<3x32xbf16>
    %423 = vector.extract_strided_slice %396 {offsets = [0, 32], sizes = [3, 32], strides = [1, 1]} : vector<3x128xf32> to vector<3x32xf32>
    %424 = arith.truncf %423 : vector<3x32xf32> to vector<3x32xbf16>
    %425 = vector.extract_strided_slice %397 {offsets = [0, 32], sizes = [3, 32], strides = [1, 1]} : vector<3x128xf32> to vector<3x32xf32>
    %426 = arith.truncf %425 : vector<3x32xf32> to vector<3x32xbf16>
    %cst_130 = arith.constant dense<0.000000e+00> : vector<3x3xf32>
    %427 = tpu.matmul %422, %424, %cst_130 {dimension_numbers = #tpu.dot_dimension_numbers<[1], [1], [0], [0], [0, 0, 1, 0], [], []>} : vector<3x32xbf16>, vector<3x32xbf16>, vector<3x3xf32> -> vector<3x3xf32>
    %428 = arith.addf %427, %385 : vector<3x3xf32>
    %cst_131 = arith.constant dense<0xFF800000> : vector<3xf32>
    %429 = vector.multi_reduction <maximumf>, %428, %cst_131 [1] : vector<3x3xf32> to vector<3xf32>
    %430 = vector.shape_cast %429 : vector<3xf32> to vector<3x1xf32>
    %431 = vector.broadcast %430 : vector<3x1xf32> to vector<3x3xf32>
    %432 = arith.subf %428, %431 : vector<3x3xf32>
    %433 = math.exp %432 : vector<3x3xf32>
    %cst_132 = arith.constant dense<0.000000e+00> : vector<3xf32>
    %434 = vector.multi_reduction <add>, %433, %cst_132 [1] : vector<3x3xf32> to vector<3xf32>
    %435 = vector.shape_cast %434 : vector<3xf32> to vector<3x1xf32>
    %436 = tpu.reciprocal %435 {approx = true} : vector<3x1xf32> -> vector<3x1xf32>
    %437 = vector.broadcast %436 : vector<3x1xf32> to vector<3x3xf32>
    %438 = arith.mulf %433, %437 : vector<3x3xf32>
    %439 = arith.truncf %438 : vector<3x3xf32> to vector<3x3xbf16>
    %cst_133 = arith.constant dense<0.000000e+00> : vector<3x32xf32>
    %440 = tpu.matmul %439, %426, %cst_133 {dimension_numbers = #tpu.dot_dimension_numbers<[1], [0], [0], [1], [0, 0, 1, 1], [], []>} : vector<3x3xbf16>, vector<3x32xbf16>, vector<3x32xf32> -> vector<3x32xf32>
    %441 = arith.truncf %440 : vector<3x32xf32> to vector<3x32xbf16>
    %442 = vector.extract_strided_slice %394 {offsets = [32, 0], sizes = [32, 128], strides = [1, 1]} : vector<128x128xbf16> to vector<32x128xbf16>
    %cst_134 = arith.constant dense<0.000000e+00> : vector<3x128xf32>
    %443 = tpu.matmul %441, %442, %cst_134 {dimension_numbers = #tpu.dot_dimension_numbers<[1], [0], [0], [1], [0, 0, 1, 1], [], []>} : vector<3x32xbf16>, vector<32x128xbf16>, vector<3x128xf32> -> vector<3x128xf32>
    %444 = arith.addf %420, %443 : vector<3x128xf32>
    %445 = vector.extract_strided_slice %395 {offsets = [0, 64], sizes = [3, 32], strides = [1, 1]} : vector<3x128xf32> to vector<3x32xf32>
    %446 = arith.truncf %445 : vector<3x32xf32> to vector<3x32xbf16>
    %447 = vector.extract_strided_slice %396 {offsets = [0, 64], sizes = [3, 32], strides = [1, 1]} : vector<3x128xf32> to vector<3x32xf32>
    %448 = arith.truncf %447 : vector<3x32xf32> to vector<3x32xbf16>
    %449 = vector.extract_strided_slice %397 {offsets = [0, 64], sizes = [3, 32], strides = [1, 1]} : vector<3x128xf32> to vector<3x32xf32>
    %450 = arith.truncf %449 : vector<3x32xf32> to vector<3x32xbf16>
    %cst_135 = arith.constant dense<0.000000e+00> : vector<3x3xf32>
    %451 = tpu.matmul %446, %448, %cst_135 {dimension_numbers = #tpu.dot_dimension_numbers<[1], [1], [0], [0], [0, 0, 1, 0], [], []>} : vector<3x32xbf16>, vector<3x32xbf16>, vector<3x3xf32> -> vector<3x3xf32>
    %452 = arith.addf %451, %385 : vector<3x3xf32>
    %cst_136 = arith.constant dense<0xFF800000> : vector<3xf32>
    %453 = vector.multi_reduction <maximumf>, %452, %cst_136 [1] : vector<3x3xf32> to vector<3xf32>
    %454 = vector.shape_cast %453 : vector<3xf32> to vector<3x1xf32>
    %455 = vector.broadcast %454 : vector<3x1xf32> to vector<3x3xf32>
    %456 = arith.subf %452, %455 : vector<3x3xf32>
    %457 = math.exp %456 : vector<3x3xf32>
    %cst_137 = arith.constant dense<0.000000e+00> : vector<3xf32>
    %458 = vector.multi_reduction <add>, %457, %cst_137 [1] : vector<3x3xf32> to vector<3xf32>
    %459 = vector.shape_cast %458 : vector<3xf32> to vector<3x1xf32>
    %460 = tpu.reciprocal %459 {approx = true} : vector<3x1xf32> -> vector<3x1xf32>
    %461 = vector.broadcast %460 : vector<3x1xf32> to vector<3x3xf32>
    %462 = arith.mulf %457, %461 : vector<3x3xf32>
    %463 = arith.truncf %462 : vector<3x3xf32> to vector<3x3xbf16>
    %cst_138 = arith.constant dense<0.000000e+00> : vector<3x32xf32>
    %464 = tpu.matmul %463, %450, %cst_138 {dimension_numbers = #tpu.dot_dimension_numbers<[1], [0], [0], [1], [0, 0, 1, 1], [], []>} : vector<3x3xbf16>, vector<3x32xbf16>, vector<3x32xf32> -> vector<3x32xf32>
    %465 = arith.truncf %464 : vector<3x32xf32> to vector<3x32xbf16>
    %466 = vector.extract_strided_slice %394 {offsets = [64, 0], sizes = [32, 128], strides = [1, 1]} : vector<128x128xbf16> to vector<32x128xbf16>
    %cst_139 = arith.constant dense<0.000000e+00> : vector<3x128xf32>
    %467 = tpu.matmul %465, %466, %cst_139 {dimension_numbers = #tpu.dot_dimension_numbers<[1], [0], [0], [1], [0, 0, 1, 1], [], []>} : vector<3x32xbf16>, vector<32x128xbf16>, vector<3x128xf32> -> vector<3x128xf32>
    %468 = arith.addf %444, %467 : vector<3x128xf32>
    %469 = vector.extract_strided_slice %395 {offsets = [0, 96], sizes = [3, 32], strides = [1, 1]} : vector<3x128xf32> to vector<3x32xf32>
    %470 = arith.truncf %469 : vector<3x32xf32> to vector<3x32xbf16>
    %471 = vector.extract_strided_slice %396 {offsets = [0, 96], sizes = [3, 32], strides = [1, 1]} : vector<3x128xf32> to vector<3x32xf32>
    %472 = arith.truncf %471 : vector<3x32xf32> to vector<3x32xbf16>
    %473 = vector.extract_strided_slice %397 {offsets = [0, 96], sizes = [3, 32], strides = [1, 1]} : vector<3x128xf32> to vector<3x32xf32>
    %474 = arith.truncf %473 : vector<3x32xf32> to vector<3x32xbf16>
    %cst_140 = arith.constant dense<0.000000e+00> : vector<3x3xf32>
    %475 = tpu.matmul %470, %472, %cst_140 {dimension_numbers = #tpu.dot_dimension_numbers<[1], [1], [0], [0], [0, 0, 1, 0], [], []>} : vector<3x32xbf16>, vector<3x32xbf16>, vector<3x3xf32> -> vector<3x3xf32>
    %476 = arith.addf %475, %385 : vector<3x3xf32>
    %cst_141 = arith.constant dense<0xFF800000> : vector<3xf32>
    %477 = vector.multi_reduction <maximumf>, %476, %cst_141 [1] : vector<3x3xf32> to vector<3xf32>
    %478 = vector.shape_cast %477 : vector<3xf32> to vector<3x1xf32>
    %479 = vector.broadcast %478 : vector<3x1xf32> to vector<3x3xf32>
    %480 = arith.subf %476, %479 : vector<3x3xf32>
    %481 = math.exp %480 : vector<3x3xf32>
    %cst_142 = arith.constant dense<0.000000e+00> : vector<3xf32>
    %482 = vector.multi_reduction <add>, %481, %cst_142 [1] : vector<3x3xf32> to vector<3xf32>
    %483 = vector.shape_cast %482 : vector<3xf32> to vector<3x1xf32>
    %484 = tpu.reciprocal %483 {approx = true} : vector<3x1xf32> -> vector<3x1xf32>
    %485 = vector.broadcast %484 : vector<3x1xf32> to vector<3x3xf32>
    %486 = arith.mulf %481, %485 : vector<3x3xf32>
    %487 = arith.truncf %486 : vector<3x3xf32> to vector<3x3xbf16>
    %cst_143 = arith.constant dense<0.000000e+00> : vector<3x32xf32>
    %488 = tpu.matmul %487, %474, %cst_143 {dimension_numbers = #tpu.dot_dimension_numbers<[1], [0], [0], [1], [0, 0, 1, 1], [], []>} : vector<3x3xbf16>, vector<3x32xbf16>, vector<3x32xf32> -> vector<3x32xf32>
    %489 = arith.truncf %488 : vector<3x32xf32> to vector<3x32xbf16>
    %490 = vector.extract_strided_slice %394 {offsets = [96, 0], sizes = [32, 128], strides = [1, 1]} : vector<128x128xbf16> to vector<32x128xbf16>
    %cst_144 = arith.constant dense<0.000000e+00> : vector<3x128xf32>
    %491 = tpu.matmul %489, %490, %cst_144 {dimension_numbers = #tpu.dot_dimension_numbers<[1], [0], [0], [1], [0, 0, 1, 1], [], []>} : vector<3x32xbf16>, vector<32x128xbf16>, vector<3x128xf32> -> vector<3x128xf32>
    %492 = arith.addf %468, %491 : vector<3x128xf32>
    %493 = vector.extract_strided_slice %392 {offsets = [3, 0], sizes = [3, 128], strides = [1, 1]} : vector<6x384xf32> to vector<3x128xf32>
    %494 = vector.extract_strided_slice %392 {offsets = [3, 128], sizes = [3, 128], strides = [1, 1]} : vector<6x384xf32> to vector<3x128xf32>
    %495 = vector.extract_strided_slice %392 {offsets = [3, 256], sizes = [3, 128], strides = [1, 1]} : vector<6x384xf32> to vector<3x128xf32>
    %496 = vector.extract_strided_slice %493 {offsets = [0, 0], sizes = [3, 32], strides = [1, 1]} : vector<3x128xf32> to vector<3x32xf32>
    %497 = arith.truncf %496 : vector<3x32xf32> to vector<3x32xbf16>
    %498 = vector.extract_strided_slice %494 {offsets = [0, 0], sizes = [3, 32], strides = [1, 1]} : vector<3x128xf32> to vector<3x32xf32>
    %499 = arith.truncf %498 : vector<3x32xf32> to vector<3x32xbf16>
    %500 = vector.extract_strided_slice %495 {offsets = [0, 0], sizes = [3, 32], strides = [1, 1]} : vector<3x128xf32> to vector<3x32xf32>
    %501 = arith.truncf %500 : vector<3x32xf32> to vector<3x32xbf16>
    %cst_145 = arith.constant dense<0.000000e+00> : vector<3x3xf32>
    %502 = tpu.matmul %497, %499, %cst_145 {dimension_numbers = #tpu.dot_dimension_numbers<[1], [1], [0], [0], [0, 0, 1, 0], [], []>} : vector<3x32xbf16>, vector<3x32xbf16>, vector<3x3xf32> -> vector<3x3xf32>
    %503 = arith.addf %502, %385 : vector<3x3xf32>
    %cst_146 = arith.constant dense<0xFF800000> : vector<3xf32>
    %504 = vector.multi_reduction <maximumf>, %503, %cst_146 [1] : vector<3x3xf32> to vector<3xf32>
    %505 = vector.shape_cast %504 : vector<3xf32> to vector<3x1xf32>
    %506 = vector.broadcast %505 : vector<3x1xf32> to vector<3x3xf32>
    %507 = arith.subf %503, %506 : vector<3x3xf32>
    %508 = math.exp %507 : vector<3x3xf32>
    %cst_147 = arith.constant dense<0.000000e+00> : vector<3xf32>
    %509 = vector.multi_reduction <add>, %508, %cst_147 [1] : vector<3x3xf32> to vector<3xf32>
    %510 = vector.shape_cast %509 : vector<3xf32> to vector<3x1xf32>
    %511 = tpu.reciprocal %510 {approx = true} : vector<3x1xf32> -> vector<3x1xf32>
    %512 = vector.broadcast %511 : vector<3x1xf32> to vector<3x3xf32>
    %513 = arith.mulf %508, %512 : vector<3x3xf32>
    %514 = arith.truncf %513 : vector<3x3xf32> to vector<3x3xbf16>
    %cst_148 = arith.constant dense<0.000000e+00> : vector<3x32xf32>
    %515 = tpu.matmul %514, %501, %cst_148 {dimension_numbers = #tpu.dot_dimension_numbers<[1], [0], [0], [1], [0, 0, 1, 1], [], []>} : vector<3x3xbf16>, vector<3x32xbf16>, vector<3x32xf32> -> vector<3x32xf32>
    %516 = arith.truncf %515 : vector<3x32xf32> to vector<3x32xbf16>
    %517 = vector.extract_strided_slice %394 {offsets = [0, 0], sizes = [32, 128], strides = [1, 1]} : vector<128x128xbf16> to vector<32x128xbf16>
    %cst_149 = arith.constant dense<0.000000e+00> : vector<3x128xf32>
    %518 = tpu.matmul %516, %517, %cst_149 {dimension_numbers = #tpu.dot_dimension_numbers<[1], [0], [0], [1], [0, 0, 1, 1], [], []>} : vector<3x32xbf16>, vector<32x128xbf16>, vector<3x128xf32> -> vector<3x128xf32>
    %519 = vector.extract_strided_slice %493 {offsets = [0, 32], sizes = [3, 32], strides = [1, 1]} : vector<3x128xf32> to vector<3x32xf32>
    %520 = arith.truncf %519 : vector<3x32xf32> to vector<3x32xbf16>
    %521 = vector.extract_strided_slice %494 {offsets = [0, 32], sizes = [3, 32], strides = [1, 1]} : vector<3x128xf32> to vector<3x32xf32>
    %522 = arith.truncf %521 : vector<3x32xf32> to vector<3x32xbf16>
    %523 = vector.extract_strided_slice %495 {offsets = [0, 32], sizes = [3, 32], strides = [1, 1]} : vector<3x128xf32> to vector<3x32xf32>
    %524 = arith.truncf %523 : vector<3x32xf32> to vector<3x32xbf16>
    %cst_150 = arith.constant dense<0.000000e+00> : vector<3x3xf32>
    %525 = tpu.matmul %520, %522, %cst_150 {dimension_numbers = #tpu.dot_dimension_numbers<[1], [1], [0], [0], [0, 0, 1, 0], [], []>} : vector<3x32xbf16>, vector<3x32xbf16>, vector<3x3xf32> -> vector<3x3xf32>
    %526 = arith.addf %525, %385 : vector<3x3xf32>
    %cst_151 = arith.constant dense<0xFF800000> : vector<3xf32>
    %527 = vector.multi_reduction <maximumf>, %526, %cst_151 [1] : vector<3x3xf32> to vector<3xf32>
    %528 = vector.shape_cast %527 : vector<3xf32> to vector<3x1xf32>
    %529 = vector.broadcast %528 : vector<3x1xf32> to vector<3x3xf32>
    %530 = arith.subf %526, %529 : vector<3x3xf32>
    %531 = math.exp %530 : vector<3x3xf32>
    %cst_152 = arith.constant dense<0.000000e+00> : vector<3xf32>
    %532 = vector.multi_reduction <add>, %531, %cst_152 [1] : vector<3x3xf32> to vector<3xf32>
    %533 = vector.shape_cast %532 : vector<3xf32> to vector<3x1xf32>
    %534 = tpu.reciprocal %533 {approx = true} : vector<3x1xf32> -> vector<3x1xf32>
    %535 = vector.broadcast %534 : vector<3x1xf32> to vector<3x3xf32>
    %536 = arith.mulf %531, %535 : vector<3x3xf32>
    %537 = arith.truncf %536 : vector<3x3xf32> to vector<3x3xbf16>
    %cst_153 = arith.constant dense<0.000000e+00> : vector<3x32xf32>
    %538 = tpu.matmul %537, %524, %cst_153 {dimension_numbers = #tpu.dot_dimension_numbers<[1], [0], [0], [1], [0, 0, 1, 1], [], []>} : vector<3x3xbf16>, vector<3x32xbf16>, vector<3x32xf32> -> vector<3x32xf32>
    %539 = arith.truncf %538 : vector<3x32xf32> to vector<3x32xbf16>
    %540 = vector.extract_strided_slice %394 {offsets = [32, 0], sizes = [32, 128], strides = [1, 1]} : vector<128x128xbf16> to vector<32x128xbf16>
    %cst_154 = arith.constant dense<0.000000e+00> : vector<3x128xf32>
    %541 = tpu.matmul %539, %540, %cst_154 {dimension_numbers = #tpu.dot_dimension_numbers<[1], [0], [0], [1], [0, 0, 1, 1], [], []>} : vector<3x32xbf16>, vector<32x128xbf16>, vector<3x128xf32> -> vector<3x128xf32>
    %542 = arith.addf %518, %541 : vector<3x128xf32>
    %543 = vector.extract_strided_slice %493 {offsets = [0, 64], sizes = [3, 32], strides = [1, 1]} : vector<3x128xf32> to vector<3x32xf32>
    %544 = arith.truncf %543 : vector<3x32xf32> to vector<3x32xbf16>
    %545 = vector.extract_strided_slice %494 {offsets = [0, 64], sizes = [3, 32], strides = [1, 1]} : vector<3x128xf32> to vector<3x32xf32>
    %546 = arith.truncf %545 : vector<3x32xf32> to vector<3x32xbf16>
    %547 = vector.extract_strided_slice %495 {offsets = [0, 64], sizes = [3, 32], strides = [1, 1]} : vector<3x128xf32> to vector<3x32xf32>
    %548 = arith.truncf %547 : vector<3x32xf32> to vector<3x32xbf16>
    %cst_155 = arith.constant dense<0.000000e+00> : vector<3x3xf32>
    %549 = tpu.matmul %544, %546, %cst_155 {dimension_numbers = #tpu.dot_dimension_numbers<[1], [1], [0], [0], [0, 0, 1, 0], [], []>} : vector<3x32xbf16>, vector<3x32xbf16>, vector<3x3xf32> -> vector<3x3xf32>
    %550 = arith.addf %549, %385 : vector<3x3xf32>
    %cst_156 = arith.constant dense<0xFF800000> : vector<3xf32>
    %551 = vector.multi_reduction <maximumf>, %550, %cst_156 [1] : vector<3x3xf32> to vector<3xf32>
    %552 = vector.shape_cast %551 : vector<3xf32> to vector<3x1xf32>
    %553 = vector.broadcast %552 : vector<3x1xf32> to vector<3x3xf32>
    %554 = arith.subf %550, %553 : vector<3x3xf32>
    %555 = math.exp %554 : vector<3x3xf32>
    %cst_157 = arith.constant dense<0.000000e+00> : vector<3xf32>
    %556 = vector.multi_reduction <add>, %555, %cst_157 [1] : vector<3x3xf32> to vector<3xf32>
    %557 = vector.shape_cast %556 : vector<3xf32> to vector<3x1xf32>
    %558 = tpu.reciprocal %557 {approx = true} : vector<3x1xf32> -> vector<3x1xf32>
    %559 = vector.broadcast %558 : vector<3x1xf32> to vector<3x3xf32>
    %560 = arith.mulf %555, %559 : vector<3x3xf32>
    %561 = arith.truncf %560 : vector<3x3xf32> to vector<3x3xbf16>
    %cst_158 = arith.constant dense<0.000000e+00> : vector<3x32xf32>
    %562 = tpu.matmul %561, %548, %cst_158 {dimension_numbers = #tpu.dot_dimension_numbers<[1], [0], [0], [1], [0, 0, 1, 1], [], []>} : vector<3x3xbf16>, vector<3x32xbf16>, vector<3x32xf32> -> vector<3x32xf32>
    %563 = arith.truncf %562 : vector<3x32xf32> to vector<3x32xbf16>
    %564 = vector.extract_strided_slice %394 {offsets = [64, 0], sizes = [32, 128], strides = [1, 1]} : vector<128x128xbf16> to vector<32x128xbf16>
    %cst_159 = arith.constant dense<0.000000e+00> : vector<3x128xf32>
    %565 = tpu.matmul %563, %564, %cst_159 {dimension_numbers = #tpu.dot_dimension_numbers<[1], [0], [0], [1], [0, 0, 1, 1], [], []>} : vector<3x32xbf16>, vector<32x128xbf16>, vector<3x128xf32> -> vector<3x128xf32>
    %566 = arith.addf %542, %565 : vector<3x128xf32>
    %567 = vector.extract_strided_slice %493 {offsets = [0, 96], sizes = [3, 32], strides = [1, 1]} : vector<3x128xf32> to vector<3x32xf32>
    %568 = arith.truncf %567 : vector<3x32xf32> to vector<3x32xbf16>
    %569 = vector.extract_strided_slice %494 {offsets = [0, 96], sizes = [3, 32], strides = [1, 1]} : vector<3x128xf32> to vector<3x32xf32>
    %570 = arith.truncf %569 : vector<3x32xf32> to vector<3x32xbf16>
    %571 = vector.extract_strided_slice %495 {offsets = [0, 96], sizes = [3, 32], strides = [1, 1]} : vector<3x128xf32> to vector<3x32xf32>
    %572 = arith.truncf %571 : vector<3x32xf32> to vector<3x32xbf16>
    %cst_160 = arith.constant dense<0.000000e+00> : vector<3x3xf32>
    %573 = tpu.matmul %568, %570, %cst_160 {dimension_numbers = #tpu.dot_dimension_numbers<[1], [1], [0], [0], [0, 0, 1, 0], [], []>} : vector<3x32xbf16>, vector<3x32xbf16>, vector<3x3xf32> -> vector<3x3xf32>
    %574 = arith.addf %573, %385 : vector<3x3xf32>
    %cst_161 = arith.constant dense<0xFF800000> : vector<3xf32>
    %575 = vector.multi_reduction <maximumf>, %574, %cst_161 [1] : vector<3x3xf32> to vector<3xf32>
    %576 = vector.shape_cast %575 : vector<3xf32> to vector<3x1xf32>
    %577 = vector.broadcast %576 : vector<3x1xf32> to vector<3x3xf32>
    %578 = arith.subf %574, %577 : vector<3x3xf32>
    %579 = math.exp %578 : vector<3x3xf32>
    %cst_162 = arith.constant dense<0.000000e+00> : vector<3xf32>
    %580 = vector.multi_reduction <add>, %579, %cst_162 [1] : vector<3x3xf32> to vector<3xf32>
    %581 = vector.shape_cast %580 : vector<3xf32> to vector<3x1xf32>
    %582 = tpu.reciprocal %581 {approx = true} : vector<3x1xf32> -> vector<3x1xf32>
    %583 = vector.broadcast %582 : vector<3x1xf32> to vector<3x3xf32>
    %584 = arith.mulf %579, %583 : vector<3x3xf32>
    %585 = arith.truncf %584 : vector<3x3xf32> to vector<3x3xbf16>
    %cst_163 = arith.constant dense<0.000000e+00> : vector<3x32xf32>
    %586 = tpu.matmul %585, %572, %cst_163 {dimension_numbers = #tpu.dot_dimension_numbers<[1], [0], [0], [1], [0, 0, 1, 1], [], []>} : vector<3x3xbf16>, vector<3x32xbf16>, vector<3x32xf32> -> vector<3x32xf32>
    %587 = arith.truncf %586 : vector<3x32xf32> to vector<3x32xbf16>
    %588 = vector.extract_strided_slice %394 {offsets = [96, 0], sizes = [32, 128], strides = [1, 1]} : vector<128x128xbf16> to vector<32x128xbf16>
    %cst_164 = arith.constant dense<0.000000e+00> : vector<3x128xf32>
    %589 = tpu.matmul %587, %588, %cst_164 {dimension_numbers = #tpu.dot_dimension_numbers<[1], [0], [0], [1], [0, 0, 1, 1], [], []>} : vector<3x32xbf16>, vector<32x128xbf16>, vector<3x128xf32> -> vector<3x128xf32>
    %590 = arith.addf %566, %589 : vector<3x128xf32>
    %591 = tpu.concatenate %492, %590 in 0 : vector<3x128xf32>, vector<3x128xf32> -> vector<6x128xf32>
    %c1016 = arith.constant 1016 : index
    %c0_165 = arith.constant 0 : index
    %592 = vector.load %arg2[%c1016, %c0_165] : memref<1608x128xf32, #tpu.memory_space<vmem>>, vector<1x128xf32>
    %593 = vector.broadcast %592 : vector<1x128xf32> to vector<6x128xf32>
    %594 = arith.addf %591, %593 : vector<6x128xf32>
    %595 = arith.addf %379, %594 : vector<6x128xf32>
    %cst_166 = arith.constant dense<0.000000e+00> : vector<6xf32>
    %596 = vector.multi_reduction <add>, %595, %cst_166 [1] : vector<6x128xf32> to vector<6xf32>
    %597 = vector.shape_cast %596 : vector<6xf32> to vector<6x1xf32>
    %cst_167 = arith.constant 1.280000e+02 : f32
    %598 = vector.broadcast %cst_167 : f32 to vector<6x1xf32>
    %599 = arith.divf %597, %598 : vector<6x1xf32>
    %600 = vector.broadcast %599 : vector<6x1xf32> to vector<6x128xf32>
    %601 = arith.subf %595, %600 : vector<6x128xf32>
    %602 = arith.mulf %601, %601 : vector<6x128xf32>
    %cst_168 = arith.constant dense<0.000000e+00> : vector<6xf32>
    %603 = vector.multi_reduction <add>, %602, %cst_168 [1] : vector<6x128xf32> to vector<6xf32>
    %604 = vector.shape_cast %603 : vector<6xf32> to vector<6x1xf32>
    %cst_169 = arith.constant 1.280000e+02 : f32
    %605 = vector.broadcast %cst_169 : f32 to vector<6x1xf32>
    %606 = arith.divf %604, %605 : vector<6x1xf32>
    %cst_170 = arith.constant 9.99999974E-6 : f32
    %607 = vector.broadcast %cst_170 : f32 to vector<6x1xf32>
    %608 = arith.addf %606, %607 : vector<6x1xf32>
    %609 = math.rsqrt %608 : vector<6x1xf32>
    %610 = vector.broadcast %609 : vector<6x1xf32> to vector<6x128xf32>
    %611 = arith.mulf %601, %610 : vector<6x128xf32>
    %c1024 = arith.constant 1024 : index
    %c0_171 = arith.constant 0 : index
    %612 = vector.load %arg2[%c1024, %c0_171] : memref<1608x128xf32, #tpu.memory_space<vmem>>, vector<1x128xf32>
    %613 = vector.broadcast %612 : vector<1x128xf32> to vector<6x128xf32>
    %614 = arith.mulf %611, %613 : vector<6x128xf32>
    %c1032 = arith.constant 1032 : index
    %c0_172 = arith.constant 0 : index
    %615 = vector.load %arg2[%c1032, %c0_172] : memref<1608x128xf32, #tpu.memory_space<vmem>>, vector<1x128xf32>
    %616 = vector.broadcast %615 : vector<1x128xf32> to vector<6x128xf32>
    %617 = arith.addf %614, %616 : vector<6x128xf32>
    %618 = arith.truncf %617 : vector<6x128xf32> to vector<6x128xbf16>
    %c1040 = arith.constant 1040 : index
    %c0_173 = arith.constant 0 : index
    %619 = vector.load %arg2[%c1040, %c0_173] : memref<1608x128xf32, #tpu.memory_space<vmem>>, vector<128x128xf32>
    %620 = arith.truncf %619 : vector<128x128xf32> to vector<128x128xbf16>
    %cst_174 = arith.constant dense<0.000000e+00> : vector<6x128xf32>
    %621 = tpu.matmul %618, %620, %cst_174 {dimension_numbers = #tpu.dot_dimension_numbers<[1], [0], [0], [1], [0, 0, 1, 1], [], []>} : vector<6x128xbf16>, vector<128x128xbf16>, vector<6x128xf32> -> vector<6x128xf32>
    %c1168 = arith.constant 1168 : index
    %c0_175 = arith.constant 0 : index
    %622 = vector.load %arg2[%c1168, %c0_175] : memref<1608x128xf32, #tpu.memory_space<vmem>>, vector<1x128xf32>
    %623 = vector.broadcast %622 : vector<1x128xf32> to vector<6x128xf32>
    %624 = arith.addf %621, %623 : vector<6x128xf32>
    %625 = arith.truncf %315 : vector<20x128xf32> to vector<20x128xbf16>
    %c272 = arith.constant 272 : index
    %c0_176 = arith.constant 0 : index
    %626 = vector.load %arg3[%c272, %c0_176] : memref<544x256xf32, #tpu.memory_space<vmem>>, vector<128x256xf32>
    %627 = arith.truncf %626 : vector<128x256xf32> to vector<128x256xbf16>
    %cst_177 = arith.constant dense<0.000000e+00> : vector<20x256xf32>
    %628 = tpu.matmul %625, %627, %cst_177 {dimension_numbers = #tpu.dot_dimension_numbers<[1], [0], [0], [1], [0, 0, 1, 1], [], []>} : vector<20x128xbf16>, vector<128x256xbf16>, vector<20x256xf32> -> vector<20x256xf32>
    %c400 = arith.constant 400 : index
    %c0_178 = arith.constant 0 : index
    %629 = vector.load %arg3[%c400, %c0_178] : memref<544x256xf32, #tpu.memory_space<vmem>>, vector<1x256xf32>
    %630 = vector.broadcast %629 : vector<1x256xf32> to vector<20x256xf32>
    %631 = arith.addf %628, %630 : vector<20x256xf32>
    %c1176 = arith.constant 1176 : index
    %c0_179 = arith.constant 0 : index
    %632 = vector.load %arg2[%c1176, %c0_179] : memref<1608x128xf32, #tpu.memory_space<vmem>>, vector<128x128xf32>
    %633 = arith.truncf %632 : vector<128x128xf32> to vector<128x128xbf16>
    %634 = vector.extract_strided_slice %624 {offsets = [0, 0], sizes = [3, 128], strides = [1, 1]} : vector<6x128xf32> to vector<3x128xf32>
    %635 = vector.extract_strided_slice %631 {offsets = [0, 0], sizes = [10, 128], strides = [1, 1]} : vector<20x256xf32> to vector<10x128xf32>
    %636 = vector.extract_strided_slice %631 {offsets = [0, 128], sizes = [10, 128], strides = [1, 1]} : vector<20x256xf32> to vector<10x128xf32>
    %637 = vector.extract_strided_slice %634 {offsets = [0, 0], sizes = [3, 32], strides = [1, 1]} : vector<3x128xf32> to vector<3x32xf32>
    %638 = arith.truncf %637 : vector<3x32xf32> to vector<3x32xbf16>
    %639 = vector.extract_strided_slice %635 {offsets = [0, 0], sizes = [10, 32], strides = [1, 1]} : vector<10x128xf32> to vector<10x32xf32>
    %640 = arith.truncf %639 : vector<10x32xf32> to vector<10x32xbf16>
    %641 = vector.extract_strided_slice %636 {offsets = [0, 0], sizes = [10, 32], strides = [1, 1]} : vector<10x128xf32> to vector<10x32xf32>
    %642 = arith.truncf %641 : vector<10x32xf32> to vector<10x32xbf16>
    %cst_180 = arith.constant dense<0.000000e+00> : vector<3x10xf32>
    %643 = tpu.matmul %638, %640, %cst_180 {dimension_numbers = #tpu.dot_dimension_numbers<[1], [1], [0], [0], [0, 0, 1, 0], [], []>} : vector<3x32xbf16>, vector<10x32xbf16>, vector<3x10xf32> -> vector<3x10xf32>
    %cst_181 = arith.constant dense<0xFF800000> : vector<3xf32>
    %644 = vector.multi_reduction <maximumf>, %643, %cst_181 [1] : vector<3x10xf32> to vector<3xf32>
    %645 = vector.shape_cast %644 : vector<3xf32> to vector<3x1xf32>
    %646 = vector.broadcast %645 : vector<3x1xf32> to vector<3x10xf32>
    %647 = arith.subf %643, %646 : vector<3x10xf32>
    %648 = math.exp %647 : vector<3x10xf32>
    %cst_182 = arith.constant dense<0.000000e+00> : vector<3xf32>
    %649 = vector.multi_reduction <add>, %648, %cst_182 [1] : vector<3x10xf32> to vector<3xf32>
    %650 = vector.shape_cast %649 : vector<3xf32> to vector<3x1xf32>
    %651 = tpu.reciprocal %650 {approx = true} : vector<3x1xf32> -> vector<3x1xf32>
    %652 = vector.broadcast %651 : vector<3x1xf32> to vector<3x10xf32>
    %653 = arith.mulf %648, %652 : vector<3x10xf32>
    %654 = arith.truncf %653 : vector<3x10xf32> to vector<3x10xbf16>
    %cst_183 = arith.constant dense<0.000000e+00> : vector<3x32xf32>
    %655 = tpu.matmul %654, %642, %cst_183 {dimension_numbers = #tpu.dot_dimension_numbers<[1], [0], [0], [1], [0, 0, 1, 1], [], []>} : vector<3x10xbf16>, vector<10x32xbf16>, vector<3x32xf32> -> vector<3x32xf32>
    %656 = arith.truncf %655 : vector<3x32xf32> to vector<3x32xbf16>
    %657 = vector.extract_strided_slice %633 {offsets = [0, 0], sizes = [32, 128], strides = [1, 1]} : vector<128x128xbf16> to vector<32x128xbf16>
    %cst_184 = arith.constant dense<0.000000e+00> : vector<3x128xf32>
    %658 = tpu.matmul %656, %657, %cst_184 {dimension_numbers = #tpu.dot_dimension_numbers<[1], [0], [0], [1], [0, 0, 1, 1], [], []>} : vector<3x32xbf16>, vector<32x128xbf16>, vector<3x128xf32> -> vector<3x128xf32>
    %659 = vector.extract_strided_slice %634 {offsets = [0, 32], sizes = [3, 32], strides = [1, 1]} : vector<3x128xf32> to vector<3x32xf32>
    %660 = arith.truncf %659 : vector<3x32xf32> to vector<3x32xbf16>
    %661 = vector.extract_strided_slice %635 {offsets = [0, 32], sizes = [10, 32], strides = [1, 1]} : vector<10x128xf32> to vector<10x32xf32>
    %662 = arith.truncf %661 : vector<10x32xf32> to vector<10x32xbf16>
    %663 = vector.extract_strided_slice %636 {offsets = [0, 32], sizes = [10, 32], strides = [1, 1]} : vector<10x128xf32> to vector<10x32xf32>
    %664 = arith.truncf %663 : vector<10x32xf32> to vector<10x32xbf16>
    %cst_185 = arith.constant dense<0.000000e+00> : vector<3x10xf32>
    %665 = tpu.matmul %660, %662, %cst_185 {dimension_numbers = #tpu.dot_dimension_numbers<[1], [1], [0], [0], [0, 0, 1, 0], [], []>} : vector<3x32xbf16>, vector<10x32xbf16>, vector<3x10xf32> -> vector<3x10xf32>
    %cst_186 = arith.constant dense<0xFF800000> : vector<3xf32>
    %666 = vector.multi_reduction <maximumf>, %665, %cst_186 [1] : vector<3x10xf32> to vector<3xf32>
    %667 = vector.shape_cast %666 : vector<3xf32> to vector<3x1xf32>
    %668 = vector.broadcast %667 : vector<3x1xf32> to vector<3x10xf32>
    %669 = arith.subf %665, %668 : vector<3x10xf32>
    %670 = math.exp %669 : vector<3x10xf32>
    %cst_187 = arith.constant dense<0.000000e+00> : vector<3xf32>
    %671 = vector.multi_reduction <add>, %670, %cst_187 [1] : vector<3x10xf32> to vector<3xf32>
    %672 = vector.shape_cast %671 : vector<3xf32> to vector<3x1xf32>
    %673 = tpu.reciprocal %672 {approx = true} : vector<3x1xf32> -> vector<3x1xf32>
    %674 = vector.broadcast %673 : vector<3x1xf32> to vector<3x10xf32>
    %675 = arith.mulf %670, %674 : vector<3x10xf32>
    %676 = arith.truncf %675 : vector<3x10xf32> to vector<3x10xbf16>
    %cst_188 = arith.constant dense<0.000000e+00> : vector<3x32xf32>
    %677 = tpu.matmul %676, %664, %cst_188 {dimension_numbers = #tpu.dot_dimension_numbers<[1], [0], [0], [1], [0, 0, 1, 1], [], []>} : vector<3x10xbf16>, vector<10x32xbf16>, vector<3x32xf32> -> vector<3x32xf32>
    %678 = arith.truncf %677 : vector<3x32xf32> to vector<3x32xbf16>
    %679 = vector.extract_strided_slice %633 {offsets = [32, 0], sizes = [32, 128], strides = [1, 1]} : vector<128x128xbf16> to vector<32x128xbf16>
    %cst_189 = arith.constant dense<0.000000e+00> : vector<3x128xf32>
    %680 = tpu.matmul %678, %679, %cst_189 {dimension_numbers = #tpu.dot_dimension_numbers<[1], [0], [0], [1], [0, 0, 1, 1], [], []>} : vector<3x32xbf16>, vector<32x128xbf16>, vector<3x128xf32> -> vector<3x128xf32>
    %681 = arith.addf %658, %680 : vector<3x128xf32>
    %682 = vector.extract_strided_slice %634 {offsets = [0, 64], sizes = [3, 32], strides = [1, 1]} : vector<3x128xf32> to vector<3x32xf32>
    %683 = arith.truncf %682 : vector<3x32xf32> to vector<3x32xbf16>
    %684 = vector.extract_strided_slice %635 {offsets = [0, 64], sizes = [10, 32], strides = [1, 1]} : vector<10x128xf32> to vector<10x32xf32>
    %685 = arith.truncf %684 : vector<10x32xf32> to vector<10x32xbf16>
    %686 = vector.extract_strided_slice %636 {offsets = [0, 64], sizes = [10, 32], strides = [1, 1]} : vector<10x128xf32> to vector<10x32xf32>
    %687 = arith.truncf %686 : vector<10x32xf32> to vector<10x32xbf16>
    %cst_190 = arith.constant dense<0.000000e+00> : vector<3x10xf32>
    %688 = tpu.matmul %683, %685, %cst_190 {dimension_numbers = #tpu.dot_dimension_numbers<[1], [1], [0], [0], [0, 0, 1, 0], [], []>} : vector<3x32xbf16>, vector<10x32xbf16>, vector<3x10xf32> -> vector<3x10xf32>
    %cst_191 = arith.constant dense<0xFF800000> : vector<3xf32>
    %689 = vector.multi_reduction <maximumf>, %688, %cst_191 [1] : vector<3x10xf32> to vector<3xf32>
    %690 = vector.shape_cast %689 : vector<3xf32> to vector<3x1xf32>
    %691 = vector.broadcast %690 : vector<3x1xf32> to vector<3x10xf32>
    %692 = arith.subf %688, %691 : vector<3x10xf32>
    %693 = math.exp %692 : vector<3x10xf32>
    %cst_192 = arith.constant dense<0.000000e+00> : vector<3xf32>
    %694 = vector.multi_reduction <add>, %693, %cst_192 [1] : vector<3x10xf32> to vector<3xf32>
    %695 = vector.shape_cast %694 : vector<3xf32> to vector<3x1xf32>
    %696 = tpu.reciprocal %695 {approx = true} : vector<3x1xf32> -> vector<3x1xf32>
    %697 = vector.broadcast %696 : vector<3x1xf32> to vector<3x10xf32>
    %698 = arith.mulf %693, %697 : vector<3x10xf32>
    %699 = arith.truncf %698 : vector<3x10xf32> to vector<3x10xbf16>
    %cst_193 = arith.constant dense<0.000000e+00> : vector<3x32xf32>
    %700 = tpu.matmul %699, %687, %cst_193 {dimension_numbers = #tpu.dot_dimension_numbers<[1], [0], [0], [1], [0, 0, 1, 1], [], []>} : vector<3x10xbf16>, vector<10x32xbf16>, vector<3x32xf32> -> vector<3x32xf32>
    %701 = arith.truncf %700 : vector<3x32xf32> to vector<3x32xbf16>
    %702 = vector.extract_strided_slice %633 {offsets = [64, 0], sizes = [32, 128], strides = [1, 1]} : vector<128x128xbf16> to vector<32x128xbf16>
    %cst_194 = arith.constant dense<0.000000e+00> : vector<3x128xf32>
    %703 = tpu.matmul %701, %702, %cst_194 {dimension_numbers = #tpu.dot_dimension_numbers<[1], [0], [0], [1], [0, 0, 1, 1], [], []>} : vector<3x32xbf16>, vector<32x128xbf16>, vector<3x128xf32> -> vector<3x128xf32>
    %704 = arith.addf %681, %703 : vector<3x128xf32>
    %705 = vector.extract_strided_slice %634 {offsets = [0, 96], sizes = [3, 32], strides = [1, 1]} : vector<3x128xf32> to vector<3x32xf32>
    %706 = arith.truncf %705 : vector<3x32xf32> to vector<3x32xbf16>
    %707 = vector.extract_strided_slice %635 {offsets = [0, 96], sizes = [10, 32], strides = [1, 1]} : vector<10x128xf32> to vector<10x32xf32>
    %708 = arith.truncf %707 : vector<10x32xf32> to vector<10x32xbf16>
    %709 = vector.extract_strided_slice %636 {offsets = [0, 96], sizes = [10, 32], strides = [1, 1]} : vector<10x128xf32> to vector<10x32xf32>
    %710 = arith.truncf %709 : vector<10x32xf32> to vector<10x32xbf16>
    %cst_195 = arith.constant dense<0.000000e+00> : vector<3x10xf32>
    %711 = tpu.matmul %706, %708, %cst_195 {dimension_numbers = #tpu.dot_dimension_numbers<[1], [1], [0], [0], [0, 0, 1, 0], [], []>} : vector<3x32xbf16>, vector<10x32xbf16>, vector<3x10xf32> -> vector<3x10xf32>
    %cst_196 = arith.constant dense<0xFF800000> : vector<3xf32>
    %712 = vector.multi_reduction <maximumf>, %711, %cst_196 [1] : vector<3x10xf32> to vector<3xf32>
    %713 = vector.shape_cast %712 : vector<3xf32> to vector<3x1xf32>
    %714 = vector.broadcast %713 : vector<3x1xf32> to vector<3x10xf32>
    %715 = arith.subf %711, %714 : vector<3x10xf32>
    %716 = math.exp %715 : vector<3x10xf32>
    %cst_197 = arith.constant dense<0.000000e+00> : vector<3xf32>
    %717 = vector.multi_reduction <add>, %716, %cst_197 [1] : vector<3x10xf32> to vector<3xf32>
    %718 = vector.shape_cast %717 : vector<3xf32> to vector<3x1xf32>
    %719 = tpu.reciprocal %718 {approx = true} : vector<3x1xf32> -> vector<3x1xf32>
    %720 = vector.broadcast %719 : vector<3x1xf32> to vector<3x10xf32>
    %721 = arith.mulf %716, %720 : vector<3x10xf32>
    %722 = arith.truncf %721 : vector<3x10xf32> to vector<3x10xbf16>
    %cst_198 = arith.constant dense<0.000000e+00> : vector<3x32xf32>
    %723 = tpu.matmul %722, %710, %cst_198 {dimension_numbers = #tpu.dot_dimension_numbers<[1], [0], [0], [1], [0, 0, 1, 1], [], []>} : vector<3x10xbf16>, vector<10x32xbf16>, vector<3x32xf32> -> vector<3x32xf32>
    %724 = arith.truncf %723 : vector<3x32xf32> to vector<3x32xbf16>
    %725 = vector.extract_strided_slice %633 {offsets = [96, 0], sizes = [32, 128], strides = [1, 1]} : vector<128x128xbf16> to vector<32x128xbf16>
    %cst_199 = arith.constant dense<0.000000e+00> : vector<3x128xf32>
    %726 = tpu.matmul %724, %725, %cst_199 {dimension_numbers = #tpu.dot_dimension_numbers<[1], [0], [0], [1], [0, 0, 1, 1], [], []>} : vector<3x32xbf16>, vector<32x128xbf16>, vector<3x128xf32> -> vector<3x128xf32>
    %727 = arith.addf %704, %726 : vector<3x128xf32>
    %728 = vector.extract_strided_slice %624 {offsets = [3, 0], sizes = [3, 128], strides = [1, 1]} : vector<6x128xf32> to vector<3x128xf32>
    %729 = vector.extract_strided_slice %631 {offsets = [10, 0], sizes = [10, 128], strides = [1, 1]} : vector<20x256xf32> to vector<10x128xf32>
    %730 = vector.extract_strided_slice %631 {offsets = [10, 128], sizes = [10, 128], strides = [1, 1]} : vector<20x256xf32> to vector<10x128xf32>
    %731 = vector.extract_strided_slice %728 {offsets = [0, 0], sizes = [3, 32], strides = [1, 1]} : vector<3x128xf32> to vector<3x32xf32>
    %732 = arith.truncf %731 : vector<3x32xf32> to vector<3x32xbf16>
    %733 = vector.extract_strided_slice %729 {offsets = [0, 0], sizes = [10, 32], strides = [1, 1]} : vector<10x128xf32> to vector<10x32xf32>
    %734 = arith.truncf %733 : vector<10x32xf32> to vector<10x32xbf16>
    %735 = vector.extract_strided_slice %730 {offsets = [0, 0], sizes = [10, 32], strides = [1, 1]} : vector<10x128xf32> to vector<10x32xf32>
    %736 = arith.truncf %735 : vector<10x32xf32> to vector<10x32xbf16>
    %cst_200 = arith.constant dense<0.000000e+00> : vector<3x10xf32>
    %737 = tpu.matmul %732, %734, %cst_200 {dimension_numbers = #tpu.dot_dimension_numbers<[1], [1], [0], [0], [0, 0, 1, 0], [], []>} : vector<3x32xbf16>, vector<10x32xbf16>, vector<3x10xf32> -> vector<3x10xf32>
    %cst_201 = arith.constant dense<0xFF800000> : vector<3xf32>
    %738 = vector.multi_reduction <maximumf>, %737, %cst_201 [1] : vector<3x10xf32> to vector<3xf32>
    %739 = vector.shape_cast %738 : vector<3xf32> to vector<3x1xf32>
    %740 = vector.broadcast %739 : vector<3x1xf32> to vector<3x10xf32>
    %741 = arith.subf %737, %740 : vector<3x10xf32>
    %742 = math.exp %741 : vector<3x10xf32>
    %cst_202 = arith.constant dense<0.000000e+00> : vector<3xf32>
    %743 = vector.multi_reduction <add>, %742, %cst_202 [1] : vector<3x10xf32> to vector<3xf32>
    %744 = vector.shape_cast %743 : vector<3xf32> to vector<3x1xf32>
    %745 = tpu.reciprocal %744 {approx = true} : vector<3x1xf32> -> vector<3x1xf32>
    %746 = vector.broadcast %745 : vector<3x1xf32> to vector<3x10xf32>
    %747 = arith.mulf %742, %746 : vector<3x10xf32>
    %748 = arith.truncf %747 : vector<3x10xf32> to vector<3x10xbf16>
    %cst_203 = arith.constant dense<0.000000e+00> : vector<3x32xf32>
    %749 = tpu.matmul %748, %736, %cst_203 {dimension_numbers = #tpu.dot_dimension_numbers<[1], [0], [0], [1], [0, 0, 1, 1], [], []>} : vector<3x10xbf16>, vector<10x32xbf16>, vector<3x32xf32> -> vector<3x32xf32>
    %750 = arith.truncf %749 : vector<3x32xf32> to vector<3x32xbf16>
    %751 = vector.extract_strided_slice %633 {offsets = [0, 0], sizes = [32, 128], strides = [1, 1]} : vector<128x128xbf16> to vector<32x128xbf16>
    %cst_204 = arith.constant dense<0.000000e+00> : vector<3x128xf32>
    %752 = tpu.matmul %750, %751, %cst_204 {dimension_numbers = #tpu.dot_dimension_numbers<[1], [0], [0], [1], [0, 0, 1, 1], [], []>} : vector<3x32xbf16>, vector<32x128xbf16>, vector<3x128xf32> -> vector<3x128xf32>
    %753 = vector.extract_strided_slice %728 {offsets = [0, 32], sizes = [3, 32], strides = [1, 1]} : vector<3x128xf32> to vector<3x32xf32>
    %754 = arith.truncf %753 : vector<3x32xf32> to vector<3x32xbf16>
    %755 = vector.extract_strided_slice %729 {offsets = [0, 32], sizes = [10, 32], strides = [1, 1]} : vector<10x128xf32> to vector<10x32xf32>
    %756 = arith.truncf %755 : vector<10x32xf32> to vector<10x32xbf16>
    %757 = vector.extract_strided_slice %730 {offsets = [0, 32], sizes = [10, 32], strides = [1, 1]} : vector<10x128xf32> to vector<10x32xf32>
    %758 = arith.truncf %757 : vector<10x32xf32> to vector<10x32xbf16>
    %cst_205 = arith.constant dense<0.000000e+00> : vector<3x10xf32>
    %759 = tpu.matmul %754, %756, %cst_205 {dimension_numbers = #tpu.dot_dimension_numbers<[1], [1], [0], [0], [0, 0, 1, 0], [], []>} : vector<3x32xbf16>, vector<10x32xbf16>, vector<3x10xf32> -> vector<3x10xf32>
    %cst_206 = arith.constant dense<0xFF800000> : vector<3xf32>
    %760 = vector.multi_reduction <maximumf>, %759, %cst_206 [1] : vector<3x10xf32> to vector<3xf32>
    %761 = vector.shape_cast %760 : vector<3xf32> to vector<3x1xf32>
    %762 = vector.broadcast %761 : vector<3x1xf32> to vector<3x10xf32>
    %763 = arith.subf %759, %762 : vector<3x10xf32>
    %764 = math.exp %763 : vector<3x10xf32>
    %cst_207 = arith.constant dense<0.000000e+00> : vector<3xf32>
    %765 = vector.multi_reduction <add>, %764, %cst_207 [1] : vector<3x10xf32> to vector<3xf32>
    %766 = vector.shape_cast %765 : vector<3xf32> to vector<3x1xf32>
    %767 = tpu.reciprocal %766 {approx = true} : vector<3x1xf32> -> vector<3x1xf32>
    %768 = vector.broadcast %767 : vector<3x1xf32> to vector<3x10xf32>
    %769 = arith.mulf %764, %768 : vector<3x10xf32>
    %770 = arith.truncf %769 : vector<3x10xf32> to vector<3x10xbf16>
    %cst_208 = arith.constant dense<0.000000e+00> : vector<3x32xf32>
    %771 = tpu.matmul %770, %758, %cst_208 {dimension_numbers = #tpu.dot_dimension_numbers<[1], [0], [0], [1], [0, 0, 1, 1], [], []>} : vector<3x10xbf16>, vector<10x32xbf16>, vector<3x32xf32> -> vector<3x32xf32>
    %772 = arith.truncf %771 : vector<3x32xf32> to vector<3x32xbf16>
    %773 = vector.extract_strided_slice %633 {offsets = [32, 0], sizes = [32, 128], strides = [1, 1]} : vector<128x128xbf16> to vector<32x128xbf16>
    %cst_209 = arith.constant dense<0.000000e+00> : vector<3x128xf32>
    %774 = tpu.matmul %772, %773, %cst_209 {dimension_numbers = #tpu.dot_dimension_numbers<[1], [0], [0], [1], [0, 0, 1, 1], [], []>} : vector<3x32xbf16>, vector<32x128xbf16>, vector<3x128xf32> -> vector<3x128xf32>
    %775 = arith.addf %752, %774 : vector<3x128xf32>
    %776 = vector.extract_strided_slice %728 {offsets = [0, 64], sizes = [3, 32], strides = [1, 1]} : vector<3x128xf32> to vector<3x32xf32>
    %777 = arith.truncf %776 : vector<3x32xf32> to vector<3x32xbf16>
    %778 = vector.extract_strided_slice %729 {offsets = [0, 64], sizes = [10, 32], strides = [1, 1]} : vector<10x128xf32> to vector<10x32xf32>
    %779 = arith.truncf %778 : vector<10x32xf32> to vector<10x32xbf16>
    %780 = vector.extract_strided_slice %730 {offsets = [0, 64], sizes = [10, 32], strides = [1, 1]} : vector<10x128xf32> to vector<10x32xf32>
    %781 = arith.truncf %780 : vector<10x32xf32> to vector<10x32xbf16>
    %cst_210 = arith.constant dense<0.000000e+00> : vector<3x10xf32>
    %782 = tpu.matmul %777, %779, %cst_210 {dimension_numbers = #tpu.dot_dimension_numbers<[1], [1], [0], [0], [0, 0, 1, 0], [], []>} : vector<3x32xbf16>, vector<10x32xbf16>, vector<3x10xf32> -> vector<3x10xf32>
    %cst_211 = arith.constant dense<0xFF800000> : vector<3xf32>
    %783 = vector.multi_reduction <maximumf>, %782, %cst_211 [1] : vector<3x10xf32> to vector<3xf32>
    %784 = vector.shape_cast %783 : vector<3xf32> to vector<3x1xf32>
    %785 = vector.broadcast %784 : vector<3x1xf32> to vector<3x10xf32>
    %786 = arith.subf %782, %785 : vector<3x10xf32>
    %787 = math.exp %786 : vector<3x10xf32>
    %cst_212 = arith.constant dense<0.000000e+00> : vector<3xf32>
    %788 = vector.multi_reduction <add>, %787, %cst_212 [1] : vector<3x10xf32> to vector<3xf32>
    %789 = vector.shape_cast %788 : vector<3xf32> to vector<3x1xf32>
    %790 = tpu.reciprocal %789 {approx = true} : vector<3x1xf32> -> vector<3x1xf32>
    %791 = vector.broadcast %790 : vector<3x1xf32> to vector<3x10xf32>
    %792 = arith.mulf %787, %791 : vector<3x10xf32>
    %793 = arith.truncf %792 : vector<3x10xf32> to vector<3x10xbf16>
    %cst_213 = arith.constant dense<0.000000e+00> : vector<3x32xf32>
    %794 = tpu.matmul %793, %781, %cst_213 {dimension_numbers = #tpu.dot_dimension_numbers<[1], [0], [0], [1], [0, 0, 1, 1], [], []>} : vector<3x10xbf16>, vector<10x32xbf16>, vector<3x32xf32> -> vector<3x32xf32>
    %795 = arith.truncf %794 : vector<3x32xf32> to vector<3x32xbf16>
    %796 = vector.extract_strided_slice %633 {offsets = [64, 0], sizes = [32, 128], strides = [1, 1]} : vector<128x128xbf16> to vector<32x128xbf16>
    %cst_214 = arith.constant dense<0.000000e+00> : vector<3x128xf32>
    %797 = tpu.matmul %795, %796, %cst_214 {dimension_numbers = #tpu.dot_dimension_numbers<[1], [0], [0], [1], [0, 0, 1, 1], [], []>} : vector<3x32xbf16>, vector<32x128xbf16>, vector<3x128xf32> -> vector<3x128xf32>
    %798 = arith.addf %775, %797 : vector<3x128xf32>
    %799 = vector.extract_strided_slice %728 {offsets = [0, 96], sizes = [3, 32], strides = [1, 1]} : vector<3x128xf32> to vector<3x32xf32>
    %800 = arith.truncf %799 : vector<3x32xf32> to vector<3x32xbf16>
    %801 = vector.extract_strided_slice %729 {offsets = [0, 96], sizes = [10, 32], strides = [1, 1]} : vector<10x128xf32> to vector<10x32xf32>
    %802 = arith.truncf %801 : vector<10x32xf32> to vector<10x32xbf16>
    %803 = vector.extract_strided_slice %730 {offsets = [0, 96], sizes = [10, 32], strides = [1, 1]} : vector<10x128xf32> to vector<10x32xf32>
    %804 = arith.truncf %803 : vector<10x32xf32> to vector<10x32xbf16>
    %cst_215 = arith.constant dense<0.000000e+00> : vector<3x10xf32>
    %805 = tpu.matmul %800, %802, %cst_215 {dimension_numbers = #tpu.dot_dimension_numbers<[1], [1], [0], [0], [0, 0, 1, 0], [], []>} : vector<3x32xbf16>, vector<10x32xbf16>, vector<3x10xf32> -> vector<3x10xf32>
    %cst_216 = arith.constant dense<0xFF800000> : vector<3xf32>
    %806 = vector.multi_reduction <maximumf>, %805, %cst_216 [1] : vector<3x10xf32> to vector<3xf32>
    %807 = vector.shape_cast %806 : vector<3xf32> to vector<3x1xf32>
    %808 = vector.broadcast %807 : vector<3x1xf32> to vector<3x10xf32>
    %809 = arith.subf %805, %808 : vector<3x10xf32>
    %810 = math.exp %809 : vector<3x10xf32>
    %cst_217 = arith.constant dense<0.000000e+00> : vector<3xf32>
    %811 = vector.multi_reduction <add>, %810, %cst_217 [1] : vector<3x10xf32> to vector<3xf32>
    %812 = vector.shape_cast %811 : vector<3xf32> to vector<3x1xf32>
    %813 = tpu.reciprocal %812 {approx = true} : vector<3x1xf32> -> vector<3x1xf32>
    %814 = vector.broadcast %813 : vector<3x1xf32> to vector<3x10xf32>
    %815 = arith.mulf %810, %814 : vector<3x10xf32>
    %816 = arith.truncf %815 : vector<3x10xf32> to vector<3x10xbf16>
    %cst_218 = arith.constant dense<0.000000e+00> : vector<3x32xf32>
    %817 = tpu.matmul %816, %804, %cst_218 {dimension_numbers = #tpu.dot_dimension_numbers<[1], [0], [0], [1], [0, 0, 1, 1], [], []>} : vector<3x10xbf16>, vector<10x32xbf16>, vector<3x32xf32> -> vector<3x32xf32>
    %818 = arith.truncf %817 : vector<3x32xf32> to vector<3x32xbf16>
    %819 = vector.extract_strided_slice %633 {offsets = [96, 0], sizes = [32, 128], strides = [1, 1]} : vector<128x128xbf16> to vector<32x128xbf16>
    %cst_219 = arith.constant dense<0.000000e+00> : vector<3x128xf32>
    %820 = tpu.matmul %818, %819, %cst_219 {dimension_numbers = #tpu.dot_dimension_numbers<[1], [0], [0], [1], [0, 0, 1, 1], [], []>} : vector<3x32xbf16>, vector<32x128xbf16>, vector<3x128xf32> -> vector<3x128xf32>
    %821 = arith.addf %798, %820 : vector<3x128xf32>
    %822 = tpu.concatenate %727, %821 in 0 : vector<3x128xf32>, vector<3x128xf32> -> vector<6x128xf32>
    %c1304 = arith.constant 1304 : index
    %c0_220 = arith.constant 0 : index
    %823 = vector.load %arg2[%c1304, %c0_220] : memref<1608x128xf32, #tpu.memory_space<vmem>>, vector<1x128xf32>
    %824 = vector.broadcast %823 : vector<1x128xf32> to vector<6x128xf32>
    %825 = arith.addf %822, %824 : vector<6x128xf32>
    %826 = arith.addf %617, %825 : vector<6x128xf32>
    %cst_221 = arith.constant dense<0.000000e+00> : vector<6xf32>
    %827 = vector.multi_reduction <add>, %826, %cst_221 [1] : vector<6x128xf32> to vector<6xf32>
    %828 = vector.shape_cast %827 : vector<6xf32> to vector<6x1xf32>
    %cst_222 = arith.constant 1.280000e+02 : f32
    %829 = vector.broadcast %cst_222 : f32 to vector<6x1xf32>
    %830 = arith.divf %828, %829 : vector<6x1xf32>
    %831 = vector.broadcast %830 : vector<6x1xf32> to vector<6x128xf32>
    %832 = arith.subf %826, %831 : vector<6x128xf32>
    %833 = arith.mulf %832, %832 : vector<6x128xf32>
    %cst_223 = arith.constant dense<0.000000e+00> : vector<6xf32>
    %834 = vector.multi_reduction <add>, %833, %cst_223 [1] : vector<6x128xf32> to vector<6xf32>
    %835 = vector.shape_cast %834 : vector<6xf32> to vector<6x1xf32>
    %cst_224 = arith.constant 1.280000e+02 : f32
    %836 = vector.broadcast %cst_224 : f32 to vector<6x1xf32>
    %837 = arith.divf %835, %836 : vector<6x1xf32>
    %cst_225 = arith.constant 9.99999974E-6 : f32
    %838 = vector.broadcast %cst_225 : f32 to vector<6x1xf32>
    %839 = arith.addf %837, %838 : vector<6x1xf32>
    %840 = math.rsqrt %839 : vector<6x1xf32>
    %841 = vector.broadcast %840 : vector<6x1xf32> to vector<6x128xf32>
    %842 = arith.mulf %832, %841 : vector<6x128xf32>
    %c1312 = arith.constant 1312 : index
    %c0_226 = arith.constant 0 : index
    %843 = vector.load %arg2[%c1312, %c0_226] : memref<1608x128xf32, #tpu.memory_space<vmem>>, vector<1x128xf32>
    %844 = vector.broadcast %843 : vector<1x128xf32> to vector<6x128xf32>
    %845 = arith.mulf %842, %844 : vector<6x128xf32>
    %c1320 = arith.constant 1320 : index
    %c0_227 = arith.constant 0 : index
    %846 = vector.load %arg2[%c1320, %c0_227] : memref<1608x128xf32, #tpu.memory_space<vmem>>, vector<1x128xf32>
    %847 = vector.broadcast %846 : vector<1x128xf32> to vector<6x128xf32>
    %848 = arith.addf %845, %847 : vector<6x128xf32>
    %849 = arith.truncf %848 : vector<6x128xf32> to vector<6x128xbf16>
    %c408_228 = arith.constant 408 : index
    %c0_229 = arith.constant 0 : index
    %850 = vector.load %arg3[%c408_228, %c0_229] : memref<544x256xf32, #tpu.memory_space<vmem>>, vector<128x256xf32>
    %851 = arith.truncf %850 : vector<128x256xf32> to vector<128x256xbf16>
    %cst_230 = arith.constant dense<0.000000e+00> : vector<6x256xf32>
    %852 = tpu.matmul %849, %851, %cst_230 {dimension_numbers = #tpu.dot_dimension_numbers<[1], [0], [0], [1], [0, 0, 1, 1], [], []>} : vector<6x128xbf16>, vector<128x256xbf16>, vector<6x256xf32> -> vector<6x256xf32>
    %c536 = arith.constant 536 : index
    %c0_231 = arith.constant 0 : index
    %853 = vector.load %arg3[%c536, %c0_231] : memref<544x256xf32, #tpu.memory_space<vmem>>, vector<1x256xf32>
    %854 = vector.broadcast %853 : vector<1x256xf32> to vector<6x256xf32>
    %855 = arith.addf %852, %854 : vector<6x256xf32>
    %856 = arith.mulf %855, %855 : vector<6x256xf32>
    %857 = arith.mulf %855, %856 : vector<6x256xf32>
    %cst_232 = arith.constant 4.471500e-02 : f32
    %858 = vector.broadcast %cst_232 : f32 to vector<6x256xf32>
    %859 = arith.mulf %858, %857 : vector<6x256xf32>
    %860 = arith.addf %855, %859 : vector<6x256xf32>
    %cst_233 = arith.constant 0.797884583 : f32
    %861 = vector.broadcast %cst_233 : f32 to vector<6x256xf32>
    %862 = arith.mulf %861, %860 : vector<6x256xf32>
    %863 = math.tanh %862 : vector<6x256xf32>
    %cst_234 = arith.constant 1.000000e+00 : f32
    %864 = vector.broadcast %cst_234 : f32 to vector<6x256xf32>
    %865 = arith.addf %864, %863 : vector<6x256xf32>
    %cst_235 = arith.constant 5.000000e-01 : f32
    %866 = vector.broadcast %cst_235 : f32 to vector<6x256xf32>
    %867 = arith.mulf %866, %865 : vector<6x256xf32>
    %868 = arith.mulf %855, %867 : vector<6x256xf32>
    %869 = arith.truncf %868 : vector<6x256xf32> to vector<6x256xbf16>
    %c1328 = arith.constant 1328 : index
    %c0_236 = arith.constant 0 : index
    %870 = vector.load %arg2[%c1328, %c0_236] : memref<1608x128xf32, #tpu.memory_space<vmem>>, vector<256x128xf32>
    %871 = arith.truncf %870 : vector<256x128xf32> to vector<256x128xbf16>
    %cst_237 = arith.constant dense<0.000000e+00> : vector<6x128xf32>
    %872 = tpu.matmul %869, %871, %cst_237 {dimension_numbers = #tpu.dot_dimension_numbers<[1], [0], [0], [1], [0, 0, 1, 1], [], []>} : vector<6x256xbf16>, vector<256x128xbf16>, vector<6x128xf32> -> vector<6x128xf32>
    %c1584 = arith.constant 1584 : index
    %c0_238 = arith.constant 0 : index
    %873 = vector.load %arg2[%c1584, %c0_238] : memref<1608x128xf32, #tpu.memory_space<vmem>>, vector<1x128xf32>
    %874 = vector.broadcast %873 : vector<1x128xf32> to vector<6x128xf32>
    %875 = arith.addf %872, %874 : vector<6x128xf32>
    %876 = arith.addf %848, %875 : vector<6x128xf32>
    %cst_239 = arith.constant dense<0.000000e+00> : vector<6xf32>
    %877 = vector.multi_reduction <add>, %876, %cst_239 [1] : vector<6x128xf32> to vector<6xf32>
    %878 = vector.shape_cast %877 : vector<6xf32> to vector<6x1xf32>
    %cst_240 = arith.constant 1.280000e+02 : f32
    %879 = vector.broadcast %cst_240 : f32 to vector<6x1xf32>
    %880 = arith.divf %878, %879 : vector<6x1xf32>
    %881 = vector.broadcast %880 : vector<6x1xf32> to vector<6x128xf32>
    %882 = arith.subf %876, %881 : vector<6x128xf32>
    %883 = arith.mulf %882, %882 : vector<6x128xf32>
    %cst_241 = arith.constant dense<0.000000e+00> : vector<6xf32>
    %884 = vector.multi_reduction <add>, %883, %cst_241 [1] : vector<6x128xf32> to vector<6xf32>
    %885 = vector.shape_cast %884 : vector<6xf32> to vector<6x1xf32>
    %cst_242 = arith.constant 1.280000e+02 : f32
    %886 = vector.broadcast %cst_242 : f32 to vector<6x1xf32>
    %887 = arith.divf %885, %886 : vector<6x1xf32>
    %cst_243 = arith.constant 9.99999974E-6 : f32
    %888 = vector.broadcast %cst_243 : f32 to vector<6x1xf32>
    %889 = arith.addf %887, %888 : vector<6x1xf32>
    %890 = math.rsqrt %889 : vector<6x1xf32>
    %891 = vector.broadcast %890 : vector<6x1xf32> to vector<6x128xf32>
    %892 = arith.mulf %882, %891 : vector<6x128xf32>
    %c1592 = arith.constant 1592 : index
    %c0_244 = arith.constant 0 : index
    %893 = vector.load %arg2[%c1592, %c0_244] : memref<1608x128xf32, #tpu.memory_space<vmem>>, vector<1x128xf32>
    %894 = vector.broadcast %893 : vector<1x128xf32> to vector<6x128xf32>
    %895 = arith.mulf %892, %894 : vector<6x128xf32>
    %c1600 = arith.constant 1600 : index
    %c0_245 = arith.constant 0 : index
    %896 = vector.load %arg2[%c1600, %c0_245] : memref<1608x128xf32, #tpu.memory_space<vmem>>, vector<1x128xf32>
    %897 = vector.broadcast %896 : vector<1x128xf32> to vector<6x128xf32>
    %898 = arith.addf %895, %897 : vector<6x128xf32>
    %c264_246 = arith.constant 264 : index
    %c0_247 = arith.constant 0 : index
    %899 = vector.load %arg2[%c264_246, %c0_247] : memref<1608x128xf32, #tpu.memory_space<vmem>>, vector<128x128xf32>
    %900 = arith.truncf %899 : vector<128x128xf32> to vector<128x128xbf16>
    %901 = arith.truncf %898 : vector<6x128xf32> to vector<6x128xbf16>
    %cst_248 = arith.constant dense<0.000000e+00> : vector<6x128xf32>
    %902 = tpu.matmul %901, %900, %cst_248 {dimension_numbers = #tpu.dot_dimension_numbers<[1], [1], [0], [0], [0, 0, 1, 0], [], []>} : vector<6x128xbf16>, vector<128x128xbf16>, vector<6x128xf32> -> vector<6x128xf32>
    %c448 = arith.constant 448 : index
    %c0_249 = arith.constant 0 : index
    %903 = vector.load %arg2[%c448, %c0_249] : memref<1608x128xf32, #tpu.memory_space<vmem>>, vector<1x128xf32>
    %904 = vector.broadcast %903 : vector<1x128xf32> to vector<6x128xf32>
    %905 = arith.addf %902, %904 : vector<6x128xf32>
    %c0_250 = arith.constant 0 : index
    %c0_251 = arith.constant 0 : index
    %906 = vector.load %arg6[%c0_250, %c0_251] : memref<6x128xf32, #tpu.memory_space<vmem>>, vector<6x128xf32>
    tpu.vector_store %arg6[%c0_250, %c0_251], %905 {strides = array<i32>} : memref<6x128xf32, #tpu.memory_space<vmem>>, vector<6x128xf32>,
    return
  }
  func.func @transform_0(%arg0: i32, %arg1: memref<2x3xi32, #tpu.memory_space<smem>>) -> (i32, i32) {
    %c0_i32 = arith.constant 0 : i32
    %c0_i32_0 = arith.constant 0 : i32
    %c0_i32_1 = arith.constant 0 : i32
    return %c0_i32, %c0_i32_0 : i32, i32
  }
  func.func @transform_1(%arg0: i32, %arg1: memref<2x3xi32, #tpu.memory_space<smem>>) -> (i32, i32) {
    %c0_i32 = arith.constant 0 : i32
    %c0_i32_0 = arith.constant 0 : i32
    %c0_i32_1 = arith.constant 0 : i32
    return %c0_i32, %c0_i32_0 : i32, i32
  }
  func.func @transform_2(%arg0: i32, %arg1: memref<2x3xi32, #tpu.memory_space<smem>>) -> (i32, i32) {
    %c0_i32 = arith.constant 0 : i32
    %c0_i32_0 = arith.constant 0 : i32
    %c0_i32_1 = arith.constant 0 : i32
    return %c0_i32, %c0_i32_0 : i32, i32
  }
  func.func @transform_3(%arg0: i32, %arg1: memref<2x3xi32, #tpu.memory_space<smem>>) -> (i32, i32) {
    %c0_i32 = arith.constant 0 : i32
    %c0_i32_0 = arith.constant 0 : i32
    return %arg0, %c0_i32 : i32, i32
  }
  func.func @transform_4(%arg0: i32, %arg1: memref<2x3xi32, #tpu.memory_space<smem>>) -> (i32, i32) {
    %c0_i32 = arith.constant 0 : i32
    %c0_i32_0 = arith.constant 0 : i32
    return %arg0, %c0_i32 : i32, i32
  }
  func.func @transform_5(%arg0: i32, %arg1: memref<2x3xi32, #tpu.memory_space<smem>>) -> (i32, i32) {
    %c0_i32 = arith.constant 0 : i32
    %c0_i32_0 = arith.constant 0 : i32
    return %arg0, %c0_i32 : i32, i32
  }
}

</mosaic_0001>

<llo_original>
// kernel: bart_with_custom_encoder.1
$region0: #{bart_with_custom_encoder.1}
  #allocation0 [shape = 'u32[]', space=smem, size = 0x4, offset = 0x4, fixed_abs, tag = 'smem constant byte address 0x4 - core index']
  #allocation1 [shape = 'u32[144,128]{1,0:T(1,128)}', space=vmem, size = 0x12000, scoped, tag = 'internal scratch']
  #allocation2 [shape = 's32[1]{0}', space=sflag, size = 0x4, scoped, tag = 'scoped memory for bart_with_custom_encoder.1']
  #allocation3 [shape = 'u8[1024]{0}', space=smem, size = 0x400, scoped, tag = 'prefetched SMEM operand 0']
  %s0 = inlined_call_operand.vmem [shape: s32[2,3], index: 0, kind: input, shape index: {}]
  %s1 = inlined_call_operand.hbm [shape: f32[1608,128], index: 1, kind: input, shape index: {}]
  %s2 = inlined_call_operand.hbm [shape: f32[544,256], index: 2, kind: input, shape index: {}]
  %s3 = inlined_call_operand.hbm [shape: f32[272,384], index: 3, kind: input, shape index: {}]
  %s4 = inlined_call_operand.vmem [shape: f32[20,128], index: 4, kind: input, shape index: {}]
  %s5 = inlined_call_operand.vmem [shape: f32[6,128], index: 5, kind: output, shape index: {0}]
  %s6 = inlined_call_operand.vmem [shape: f32[20,128], index: 6, kind: output, shape index: {1}]
  %7 = xla_tuple %s5, %s6
  %s8 = sld [smem:[#allocation0]]
  $region46: #{bart_with_custom_encoder.1} parent=0
    _
  %s10 = ssub.s32 1, %s8
  %s11 = scalar_select 0, %s10, %s8
  %s12 = sshll.u32 %s0, 4
  %s13 = int_to_ptr.vmem [resolvable:$true] %s12
  %15 = dma.vmem_to_smem %s13, 32, [#allocation3], [#allocation2]
  %16 = dma.done [#allocation2], 32
  %17 = sfence
  $region1: #{bart_with_custom_encoder.1} parent=0
    #allocation4 [shape = 'u8[823296]{0}', space=vmem, size = 0xc9000, scoped, tag = 'input window, operand 1, single buffered']
    #allocation5 [shape = 's32[1]{0}', space=sflag, size = 0x4, scoped, tag = 'scoped memory for bart_with_custom_encoder.1']
    #allocation6 [shape = 'u8[557056]{0}', space=vmem, size = 0x88000, scoped, tag = 'input window, operand 2, single buffered']
    #allocation7 [shape = 's32[1]{0}', space=sflag, size = 0x4, scoped, tag = 'scoped memory for bart_with_custom_encoder.1']
    #allocation8 [shape = 'u8[417792]{0}', space=vmem, size = 0x66000, scoped, tag = 'input window, operand 3, single buffered']
    %18 = vsyncpa [#allocation5], 0
    %19 = vsyncpa [#allocation7], 0
    // Predicated region
    $region2: #{bart_with_custom_encoder.1} parent=1 // pred_check
      _
    $region3: #{bart_with_custom_encoder.1} parent=1 // pred_check_branch
      %21 = sbr.rel (0) target = $region5
    $region4: #{bart_with_custom_encoder.1} parent=1 // pred_region
      %s23 = ssub.s32 25728, 25728
      %24 = vsyncadd [#allocation5], %s23
      %s25 = sshll.u32 [#allocation4], 4
      %s26 = int_to_ptr.vmem [resolvable:$true] %s25
      %31 = dma.hbm_to_vmem [thread:$0]  %s1, 25728, %s26, [#allocation5], 128, 128, 8
    $region5: #{bart_with_custom_encoder.1} parent=1 // pred_fallthru
      _
    // Predicated region
    $region6: #{bart_with_custom_encoder.1} parent=1 // pred_check
      _
    $region7: #{bart_with_custom_encoder.1} parent=1 // pred_check_branch
      %33 = sbr.rel (0) target = $region9
    $region8: #{bart_with_custom_encoder.1} parent=1 // pred_region
      %s35 = ssub.s32 17408, 17408
      %36 = vsyncadd [#allocation7], %s35
      %s37 = sshll.u32 [#allocation6], 4
      %s38 = int_to_ptr.vmem [resolvable:$true] %s37
      %43 = dma.hbm_to_vmem [thread:$0]  %s2, 17408, %s38, [#allocation7], 256, 256, 16
    $region9: #{bart_with_custom_encoder.1} parent=1 // pred_fallthru
      _
    // Predicated region
    $region10: #{bart_with_custom_encoder.1} parent=1 // pred_check
      _
    $region11: #{bart_with_custom_encoder.1} parent=1 // pred_check_branch
      %45 = sbr.rel (0) target = $region13
    $region12: #{bart_with_custom_encoder.1} parent=1 // pred_region
      %s47 = ssub.s32 13056, 13056
      %48 = vsyncadd [#allocation7], %s47
      %s49 = sshll.u32 [#allocation8], 4
      %s50 = int_to_ptr.vmem [resolvable:$true] %s49
      %55 = dma.hbm_to_vmem [thread:$0]  %s3, 13056, %s50, [#allocation7], 384, 384, 24
    $region13: #{bart_with_custom_encoder.1} parent=1 // pred_fallthru
      _
    // Predicated region
    $region14: #{bart_with_custom_encoder.1} parent=1 // pred_check
      _
    $region15: #{bart_with_custom_encoder.1} parent=1 // pred_check_branch
      %57 = sbr.rel (0) target = $region17
    $region16: #{bart_with_custom_encoder.1} parent=1 // pred_region
      _
    $region17: #{bart_with_custom_encoder.1} parent=1 // pred_fallthru
      _
    // Predicated region
    $region18: #{bart_with_custom_encoder.1} parent=1 // pred_check
      _
    $region19: #{bart_with_custom_encoder.1} parent=1 // pred_check_branch
      %59 = sbr.rel (0) target = $region21
    $region20: #{bart_with_custom_encoder.1} parent=1 // pred_region
      %60 = dma.done [#allocation5], 25728
    $region21: #{bart_with_custom_encoder.1} parent=1 // pred_fallthru
      _
    // Predicated region
    $region22: #{bart_with_custom_encoder.1} parent=1 // pred_check
      _
    $region23: #{bart_with_custom_encoder.1} parent=1 // pred_check_branch
      %62 = sbr.rel (0) target = $region25
    $region24: #{bart_with_custom_encoder.1} parent=1 // pred_region
      %63 = dma.done [#allocation7], 17408
    $region25: #{bart_with_custom_encoder.1} parent=1 // pred_fallthru
      _
    // Predicated region
    $region26: #{bart_with_custom_encoder.1} parent=1 // pred_check
      _
    $region27: #{bart_with_custom_encoder.1} parent=1 // pred_check_branch
      %65 = sbr.rel (0) target = $region29
    $region28: #{bart_with_custom_encoder.1} parent=1 // pred_region
      %66 = dma.done [#allocation7], 13056
    $region29: #{bart_with_custom_encoder.1} parent=1 // pred_fallthru
      _
    %v68 = vld [vmem:[%s4] sm:$0xff]
    %v69 = vld [vmem:[%s4 + $0x8] sm:$0xff]
    %v70 = vld [vmem:[%s4 + $0x10] sm:$0xf]
    %v71 = vpack.c.bf16 %v69, %v68
    %v72 = vpack.c.bf16 %v70, %v70
    %v73 = vld [vmem:[#allocation6] sm:$0xff]
    %v74 = vld [vmem:[#allocation6 + $0x8] sm:$0xff]
    %v75 = vld [vmem:[#allocation6 + $0x10] sm:$0xff]
    %v76 = vld [vmem:[#allocation6 + $0x18] sm:$0xff]
    %v77 = vld [vmem:[#allocation6 + $0x20] sm:$0xff]
    %v78 = vld [vmem:[#allocation6 + $0x28] sm:$0xff]
    %v79 = vld [vmem:[#allocation6 + $0x30] sm:$0xff]
    %v80 = vld [vmem:[#allocation6 + $0x38] sm:$0xff]
    %v81 = vld [vmem:[#allocation6 + $0x40] sm:$0xff]
    %v82 = vld [vmem:[#allocation6 + $0x48] sm:$0xff]
    %v83 = vld [vmem:[#allocation6 + $0x50] sm:$0xff]
    %v84 = vld [vmem:[#allocation6 + $0x58] sm:$0xff]
    %v85 = vld [vmem:[#allocation6 + $0x60] sm:$0xff]
    %v86 = vld [vmem:[#allocation6 + $0x68] sm:$0xff]
    %v87 = vld [vmem:[#allocation6 + $0x70] sm:$0xff]
    %v88 = vld [vmem:[#allocation6 + $0x78] sm:$0xff]
    %v89 = vld [vmem:[#allocation6 + $0x80] sm:$0xff]
    %v90 = vld [vmem:[#allocation6 + $0x88] sm:$0xff]
    %v91 = vld [vmem:[#allocation6 + $0x90] sm:$0xff]
    %v92 = vld [vmem:[#allocation6 + $0x98] sm:$0xff]
    %v93 = vld [vmem:[#allocation6 + $0xa0] sm:$0xff]
    %v94 = vld [vmem:[#allocation6 + $0xa8] sm:$0xff]
    %v95 = vld [vmem:[#allocation6 + $0xb0] sm:$0xff]
    %v96 = vld [vmem:[#allocation6 + $0xb8] sm:$0xff]
    %v97 = vld [vmem:[#allocation6 + $0xc0] sm:$0xff]
    %v98 = vld [vmem:[#allocation6 + $0xc8] sm:$0xff]
    %v99 = vld [vmem:[#allocation6 + $0xd0] sm:$0xff]
    %v100 = vld [vmem:[#allocation6 + $0xd8] sm:$0xff]
    %v101 = vld [vmem:[#allocation6 + $0xe0] sm:$0xff]
    %v102 = vld [vmem:[#allocation6 + $0xe8] sm:$0xff]
    %v103 = vld [vmem:[#allocation6 + $0xf0] sm:$0xff]
    %v104 = vld [vmem:[#allocation6 + $0xf8] sm:$0xff]
    %v105 = vpack.c.bf16 %v75, %v73
    %v106 = vpack.c.bf16 %v76, %v74
    %v107 = vpack.c.bf16 %v79, %v77
    %v108 = vpack.c.bf16 %v80, %v78
    %v109 = vpack.c.bf16 %v83, %v81
    %v110 = vpack.c.bf16 %v84, %v82
    %v111 = vpack.c.bf16 %v87, %v85
    %v112 = vpack.c.bf16 %v88, %v86
    %v113 = vpack.c.bf16 %v91, %v89
    %v114 = vpack.c.bf16 %v92, %v90
    %v115 = vpack.c.bf16 %v95, %v93
    %v116 = vpack.c.bf16 %v96, %v94
    %v117 = vpack.c.bf16 %v99, %v97
    %v118 = vpack.c.bf16 %v100, %v98
    %v119 = vpack.c.bf16 %v103, %v101
    %v120 = vpack.c.bf16 %v104, %v102
    %s121 = scalar_lea.vmem [#allocation6], 256
    %v122 = vld [vmem:[%s121] ss:$8 sm:$0x3]
    %v124 = vlaneseq
    %v125 = vshrl.u32 %v124, 7
    %v126 = vsub.s32 0, %v125
    %v127 = vrot.slane %v122, %v126
    %v128 = vlaneseq
    %v129 = vshrl.u32 %v128, 7
    %v130 = vsub.s32 1, %v129
    %v131 = vrot.slane %v122, %v130
    %134 = vmatprep.subr.bf16.mxu0 %v120
    %135 = vmatpush1.bf16.msra.mxu0 %v119
    %136 = vmatprep.subr.bf16.mxu0 %v118
    %137 = vmatpush1.bf16.msra.mxu0 %v117
    %138 = vmatprep.subr.bf16.mxu0 %v116
    %139 = vmatpush1.bf16.msra.mxu0 %v115
    %140 = vmatprep.subr.bf16.mxu0 %v114
    %141 = vmatpush1.bf16.msra.mxu0 %v113
    %142 = vmatprep.subr.bf16.mxu0 %v112
    %143 = vmatpush1.bf16.msra.mxu0 %v111
    %144 = vmatprep.subr.bf16.mxu0 %v110
    %145 = vmatpush1.bf16.msra.mxu0 %v109
    %146 = vmatprep.subr.bf16.mxu0 %v108
    %147 = vmatpush1.bf16.msra.mxu0 %v107
    %148 = vmatprep.subr.bf16.mxu0 %v106
    %149 = vmatpush1.bf16.msra.mxu0 %v105
    %150 = vmatprep.subr.bf16.mxu0 0
    %151 = vmatpush2.bf16.msra.mxu0 0
    %152 = vmatprep.subr.bf16.mxu0 0
    %153 = vmatpush2.bf16.msra.mxu0 0
    %154 = vmatprep.subr.bf16.mxu0 0
    %155 = vmatpush2.bf16.msra.mxu0 0
    %156 = vmatprep.subr.bf16.mxu0 0
    %157 = vmatpush2.bf16.msra.mxu0 0
    %158 = vmatprep.subr.bf16.mxu0 0
    %159 = vmatpush2.bf16.msra.mxu0 0
    %160 = vmatprep.subr.bf16.mxu0 0
    %161 = vmatpush2.bf16.msra.mxu0 0
    %162 = vmatprep.subr.bf16.mxu0 0
    %163 = vmatpush2.bf16.msra.mxu0 0
    %164 = vmatprep.subr.bf16.mxu0 0
    %165 = vmatpush2.bf16.msra.mxu0 0
    %166 = vmatprep.mubr.bf16.mxu0 0
    %167 = vmatmul.mubr.bf16.gmra.mxu0 %v71
    %v168 = vpop.f32.mrf.mxu0
    %v169 = vadd.f32 %v127, %v168
    %v170 = vpop.f32.mrf.mxu0
    %v171 = vadd.f32 %v131, %v170
    %v172 = vpop.f32.mrf.mxu0
    %v173 = vadd.f32 %v127, %v172
    %v174 = vpop.f32.mrf.mxu0
    %v175 = vadd.f32 %v131, %v174
    %176 = vmatprep.mubr.bf16.mxu0 0
    %177 = vmatmul.mubr.bf16.gmra.mxu0 %v72
    %v178 = vpop.f32.mrf.mxu0
    %v179 = vadd.f32 %v127, %v178
    %v180 = vpop.f32.mrf.mxu0
    %v181 = vadd.f32 %v131, %v180
    %v182 = vpop.f32.mrf.mxu0
    %v183 = vpop.f32.mrf.mxu0
    %184 = vdwg.mxu0
    %v185 = vmax.f32 %v169, 0.0
    %v186 = vmax.f32 %v171, 0.0
    %v187 = vmax.f32 %v173, 0.0
    %v188 = vmax.f32 %v175, 0.0
    %v189 = vmax.f32 %v179, 0.0
    %v190 = vmax.f32 %v181, 0.0
    %v191 = vpack.c.bf16 %v187, %v185
    %v192 = vpack.c.bf16 %v188, %v186
    %v193 = vpack.c.bf16 %v189, %v189
    %v194 = vpack.c.bf16 %v190, %v190
    %v195 = vld [vmem:[#allocation4] sm:$0xff]
    %v196 = vld [vmem:[#allocation4 + $0x8] sm:$0xff]
    %v197 = vld [vmem:[#allocation4 + $0x10] sm:$0xff]
    %v198 = vld [vmem:[#allocation4 + $0x18] sm:$0xff]
    %v199 = vld [vmem:[#allocation4 + $0x20] sm:$0xff]
    %v200 = vld [vmem:[#allocation4 + $0x28] sm:$0xff]
    %v201 = vld [vmem:[#allocation4 + $0x30] sm:$0xff]
    %v202 = vld [vmem:[#allocation4 + $0x38] sm:$0xff]
    %v203 = vld [vmem:[#allocation4 + $0x40] sm:$0xff]
    %v204 = vld [vmem:[#allocation4 + $0x48] sm:$0xff]
    %v205 = vld [vmem:[#allocation4 + $0x50] sm:$0xff]
    %v206 = vld [vmem:[#allocation4 + $0x58] sm:$0xff]
    %v207 = vld [vmem:[#allocation4 + $0x60] sm:$0xff]
    %v208 = vld [vmem:[#allocation4 + $0x68] sm:$0xff]
    %v209 = vld [vmem:[#allocation4 + $0x70] sm:$0xff]
    %v210 = vld [vmem:[#allocation4 + $0x78] sm:$0xff]
    %v211 = vld [vmem:[#allocation4 + $0x80] sm:$0xff]
    %v212 = vld [vmem:[#allocation4 + $0x88] sm:$0xff]
    %v213 = vld [vmem:[#allocation4 + $0x90] sm:$0xff]
    %v214 = vld [vmem:[#allocation4 + $0x98] sm:$0xff]
    %v215 = vld [vmem:[#allocation4 + $0xa0] sm:$0xff]
    %v216 = vld [vmem:[#allocation4 + $0xa8] sm:$0xff]
    %v217 = vld [vmem:[#allocation4 + $0xb0] sm:$0xff]
    %v218 = vld [vmem:[#allocation4 + $0xb8] sm:$0xff]
    %v219 = vld [vmem:[#allocation4 + $0xc0] sm:$0xff]
    %v220 = vld [vmem:[#allocation4 + $0xc8] sm:$0xff]
    %v221 = vld [vmem:[#allocation4 + $0xd0] sm:$0xff]
    %v222 = vld [vmem:[#allocation4 + $0xd8] sm:$0xff]
    %v223 = vld [vmem:[#allocation4 + $0xe0] sm:$0xff]
    %v224 = vld [vmem:[#allocation4 + $0xe8] sm:$0xff]
    %v225 = vld [vmem:[#allocation4 + $0xf0] sm:$0xff]
    %v226 = vld [vmem:[#allocation4 + $0xf8] sm:$0xff]
    %v227 = vpack.c.bf16 %v196, %v195
    %v228 = vpack.c.bf16 %v198, %v197
    %v229 = vpack.c.bf16 %v200, %v199
    %v230 = vpack.c.bf16 %v202, %v201
    %v231 = vpack.c.bf16 %v204, %v203
    %v232 = vpack.c.bf16 %v206, %v205
    %v233 = vpack.c.bf16 %v208, %v207
    %v234 = vpack.c.bf16 %v210, %v209
    %v235 = vpack.c.bf16 %v212, %v211
    %v236 = vpack.c.bf16 %v214, %v213
    %v237 = vpack.c.bf16 %v216, %v215
    %v238 = vpack.c.bf16 %v218, %v217
    %v239 = vpack.c.bf16 %v220, %v219
    %v240 = vpack.c.bf16 %v222, %v221
    %v241 = vpack.c.bf16 %v224, %v223
    %v242 = vpack.c.bf16 %v226, %v225
    %v243 = vld [vmem:[#allocation4 + $0x100] sm:$0x1]
    %v244 = vlaneseq
    %v245 = vshrl.u32 %v244, 7
    %v246 = vsub.s32 0, %v245
    %v247 = vrot.slane %v243, %v246
    %248 = vmatprep.subr.bf16.mxu0 0
    %249 = vmatpush1.bf16.msra.mxu0 %v234
    %250 = vmatprep.subr.bf16.mxu0 0
    %251 = vmatpush1.bf16.msra.mxu0 %v233
    %252 = vmatprep.subr.bf16.mxu0 0
    %253 = vmatpush1.bf16.msra.mxu0 %v232
    %254 = vmatprep.subr.bf16.mxu0 0
    %255 = vmatpush1.bf16.msra.mxu0 %v231
    %256 = vmatprep.subr.bf16.mxu0 0
    %257 = vmatpush1.bf16.msra.mxu0 %v230
    %258 = vmatprep.subr.bf16.mxu0 0
    %259 = vmatpush1.bf16.msra.mxu0 %v229
    %260 = vmatprep.subr.bf16.mxu0 0
    %261 = vmatpush1.bf16.msra.mxu0 %v228
    %262 = vmatprep.subr.bf16.mxu0 0
    %263 = vmatpush1.bf16.msra.mxu0 %v227
    %264 = vmatprep.subr.bf16.mxu0 0
    %265 = vmatpush2.bf16.msra.mxu0 %v242
    %266 = vmatprep.subr.bf16.mxu0 0
    %267 = vmatpush2.bf16.msra.mxu0 %v241
    %268 = vmatprep.subr.bf16.mxu0 0
    %269 = vmatpush2.bf16.msra.mxu0 %v240
    %270 = vmatprep.subr.bf16.mxu0 0
    %271 = vmatpush2.bf16.msra.mxu0 %v239
    %272 = vmatprep.subr.bf16.mxu0 0
    %273 = vmatpush2.bf16.msra.mxu0 %v238
    %274 = vmatprep.subr.bf16.mxu0 0
    %275 = vmatpush2.bf16.msra.mxu0 %v237
    %276 = vmatprep.subr.bf16.mxu0 0
    %277 = vmatpush2.bf16.msra.mxu0 %v236
    %278 = vmatprep.subr.bf16.mxu0 0
    %279 = vmatpush2.bf16.msra.mxu0 %v235
    %280 = vmatprep.mubr.bf16.mxu0 %v192
    %281 = vmatmul.mubr.bf16.gmra.mxu0 %v191
    %v282 = vpop.f32.mrf.mxu0
    %v283 = vadd.f32 %v247, %v282
    %v284 = vpop.f32.mrf.mxu0
    %v285 = vpop.f32.mrf.mxu0
    %v286 = vadd.f32 %v247, %v285
    %v287 = vpop.f32.mrf.mxu0
    %288 = vmatprep.mubr.bf16.mxu0 %v194
    %289 = vmatmul.mubr.bf16.gmra.mxu0 %v193
    %v290 = vpop.f32.mrf.mxu0
    %v291 = vadd.f32 %v247, %v290
    %v292 = vpop.f32.mrf.mxu0
    %v293 = vpop.f32.mrf.mxu0
    %v294 = vpop.f32.mrf.mxu0
    %295 = vdwg.mxu0
    %v296 = vld [vmem:[#allocation4 + $0x188] sm:$0xff]
    %v297 = vld [vmem:[#allocation4 + $0x190] sm:$0x3]
    %vm300 = vcmask 1041408
    %v301 = vrot.slane %v296, 6
    %v302 = vrot.slane %v297, 6
    %v303 = vsel %vm300, %v301, %v302
    %v306 = vsel %vm300, %v297, %v301
    %v307 = vadd.f32 %v283, %v296
    %v308 = vadd.f32 %v286, %v306
    %v309 = vadd.f32 %v291, %v303
    %310 = vadd.xlane.f32.xlu0 %v307
    %v311 = vpop.xlane.xlu0 %310
    %312 = vadd.xlane.f32.xlu0 %v308
    %v313 = vpop.xlane.xlu0 %312
    %vm314 = vcmask 1043456
    %v315 = vsel %vm314, %v309, 0.0
    %316 = vadd.xlane.f32.xlu0 %v315
    %v317 = vpop.xlane.xlu0 %316
    %v318 = vrcp.pop 128.0
    %v319 = vmul.f32 %v311, %v318
    %v320 = vmul.f32 %v313, %v318
    %v321 = vmul.f32 %v317, %v318
    %v322 = vsub.f32 %v307, %v319
    %v323 = vsub.f32 %v308, %v320
    %v324 = vsub.f32 %v309, %v321
    %v325 = vmul.f32 %v322, %v322
    %v326 = vmul.f32 %v323, %v323
    %v327 = vmul.f32 %v324, %v324
    %328 = vadd.xlane.f32.xlu0 %v325
    %v329 = vpop.xlane.xlu0 %328
    %330 = vadd.xlane.f32.xlu0 %v326
    %v331 = vpop.xlane.xlu0 %330
    %v332 = vsel %vm314, %v327, 0.0
    %333 = vadd.xlane.f32.xlu0 %v332
    %v334 = vpop.xlane.xlu0 %333
    %v335 = vmul.f32 %v329, %v318
    %v336 = vmul.f32 %v331, %v318
    %v337 = vmul.f32 %v334, %v318
    %v338 = vadd.f32 %v335, 1e-05
    %v339 = vadd.f32 %v336, 1e-05
    %v340 = vadd.f32 %v337, 1e-05
    %v341 = vrsqrt.pop %v338
    %v342 = vrsqrt.pop %v339
    %v343 = vrsqrt.pop %v340
    %v344 = vmul.f32 %v322, %v341
    %v345 = vmul.f32 %v323, %v342
    %v346 = vmul.f32 %v324, %v343
    %v347 = vld [vmem:[#allocation4 + $0x1a0] sm:$0x1]
    %v348 = vlaneseq
    %v349 = vshrl.u32 %v348, 7
    %v350 = vsub.s32 0, %v349
    %v351 = vrot.slane %v347, %v350
    %v352 = vmul.f32 %v344, %v351
    %v353 = vmul.f32 %v345, %v351
    %v354 = vmul.f32 %v346, %v351
    %v355 = vld [vmem:[#allocation4 + $0x1a8] sm:$0x1]
    %v356 = vlaneseq
    %v357 = vshrl.u32 %v356, 7
    %v358 = vsub.s32 0, %v357
    %v359 = vrot.slane %v355, %v358
    %v360 = vadd.f32 %v352, %v359
    %v361 = vadd.f32 %v353, %v359
    %v362 = vadd.f32 %v354, %v359
    %v363 = vpack.c.bf16 %v361, %v360
    %v364 = vpack.c.bf16 %v362, %v362
    %v365 = vld [vmem:[#allocation8] sm:$0xff]
    %v366 = vld [vmem:[#allocation8 + $0x8] sm:$0xff]
    %v367 = vld [vmem:[#allocation8 + $0x10] sm:$0xff]
    %v368 = vld [vmem:[#allocation8 + $0x18] sm:$0xff]
    %v369 = vld [vmem:[#allocation8 + $0x20] sm:$0xff]
    %v370 = vld [vmem:[#allocation8 + $0x28] sm:$0xff]
    %v371 = vld [vmem:[#allocation8 + $0x30] sm:$0xff]
    %v372 = vld [vmem:[#allocation8 + $0x38] sm:$0xff]
    %v373 = vld [vmem:[#allocation8 + $0x40] sm:$0xff]
    %v374 = vld [vmem:[#allocation8 + $0x48] sm:$0xff]
    %v375 = vld [vmem:[#allocation8 + $0x50] sm:$0xff]
    %v376 = vld [vmem:[#allocation8 + $0x58] sm:$0xff]
    %v377 = vld [vmem:[#allocation8 + $0x60] sm:$0xff]
    %v378 = vld [vmem:[#allocation8 + $0x68] sm:$0xff]
    %v379 = vld [vmem:[#allocation8 + $0x70] sm:$0xff]
    %v380 = vld [vmem:[#allocation8 + $0x78] sm:$0xff]
    %v381 = vld [vmem:[#allocation8 + $0x80] sm:$0xff]
    %v382 = vld [vmem:[#allocation8 + $0x88] sm:$0xff]
    %v383 = vld [vmem:[#allocation8 + $0x90] sm:$0xff]
    %v384 = vld [vmem:[#allocation8 + $0x98] sm:$0xff]
    %v385 = vld [vmem:[#allocation8 + $0xa0] sm:$0xff]
    %v386 = vld [vmem:[#allocation8 + $0xa8] sm:$0xff]
    %v387 = vld [vmem:[#allocation8 + $0xb0] sm:$0xff]
    %v388 = vld [vmem:[#allocation8 + $0xb8] sm:$0xff]
    %v389 = vld [vmem:[#allocation8 + $0xc0] sm:$0xff]
    %v390 = vld [vmem:[#allocation8 + $0xc8] sm:$0xff]
    %v391 = vld [vmem:[#allocation8 + $0xd0] sm:$0xff]
    %v392 = vld [vmem:[#allocation8 + $0xd8] sm:$0xff]
    %v393 = vld [vmem:[#allocation8 + $0xe0] sm:$0xff]
    %v394 = vld [vmem:[#allocation8 + $0xe8] sm:$0xff]
    %v395 = vld [vmem:[#allocation8 + $0xf0] sm:$0xff]
    %v396 = vld [vmem:[#allocation8 + $0xf8] sm:$0xff]
    %v397 = vld [vmem:[#allocation8 + $0x100] sm:$0xff]
    %v398 = vld [vmem:[#allocation8 + $0x108] sm:$0xff]
    %v399 = vld [vmem:[#allocation8 + $0x110] sm:$0xff]
    %v400 = vld [vmem:[#allocation8 + $0x118] sm:$0xff]
    %v401 = vld [vmem:[#allocation8 + $0x120] sm:$0xff]
    %v402 = vld [vmem:[#allocation8 + $0x128] sm:$0xff]
    %v403 = vld [vmem:[#allocation8 + $0x130] sm:$0xff]
    %v404 = vld [vmem:[#allocation8 + $0x138] sm:$0xff]
    %v405 = vld [vmem:[#allocation8 + $0x140] sm:$0xff]
    %v406 = vld [vmem:[#allocation8 + $0x148] sm:$0xff]
    %v407 = vld [vmem:[#allocation8 + $0x150] sm:$0xff]
    %v408 = vld [vmem:[#allocation8 + $0x158] sm:$0xff]
    %v409 = vld [vmem:[#allocation8 + $0x160] sm:$0xff]
    %v410 = vld [vmem:[#allocation8 + $0x168] sm:$0xff]
    %v411 = vld [vmem:[#allocation8 + $0x170] sm:$0xff]
    %v412 = vld [vmem:[#allocation8 + $0x178] sm:$0xff]
    %v413 = vpack.c.bf16 %v368, %v365
    %v414 = vpack.c.bf16 %v369, %v366
    %v415 = vpack.c.bf16 %v370, %v367
    %v416 = vpack.c.bf16 %v374, %v371
    %v417 = vpack.c.bf16 %v375, %v372
    %v418 = vpack.c.bf16 %v376, %v373
    %v419 = vpack.c.bf16 %v380, %v377
    %v420 = vpack.c.bf16 %v381, %v378
    %v421 = vpack.c.bf16 %v382, %v379
    %v422 = vpack.c.bf16 %v386, %v383
    %v423 = vpack.c.bf16 %v387, %v384
    %v424 = vpack.c.bf16 %v388, %v385
    %v425 = vpack.c.bf16 %v392, %v389
    %v426 = vpack.c.bf16 %v393, %v390
    %v427 = vpack.c.bf16 %v394, %v391
    %v428 = vpack.c.bf16 %v398, %v395
    %v429 = vpack.c.bf16 %v399, %v396
    %v430 = vpack.c.bf16 %v400, %v397
    %v431 = vpack.c.bf16 %v404, %v401
    %v432 = vpack.c.bf16 %v405, %v402
    %v433 = vpack.c.bf16 %v406, %v403
    %v434 = vpack.c.bf16 %v410, %v407
    %v435 = vpack.c.bf16 %v411, %v408
    %v436 = vpack.c.bf16 %v412, %v409
    %s437 = scalar_lea.vmem [#allocation8], 384
    %v438 = vld [vmem:[%s437] ss:$8 sm:$0x7]
    %v440 = vlaneseq
    %v441 = vshrl.u32 %v440, 7
    %v442 = vsub.s32 0, %v441
    %v443 = vrot.slane %v438, %v442
    %v444 = vlaneseq
    %v445 = vshrl.u32 %v444, 7
    %v446 = vsub.s32 1, %v445
    %v447 = vrot.slane %v438, %v446
    %v448 = vlaneseq
    %v449 = vshrl.u32 %v448, 7
    %v450 = vsub.s32 2, %v449
    %v451 = vrot.slane %v438, %v450
    %455 = vmatprep.subr.bf16.mxu0 %v435
    %456 = vmatpush1.bf16.msra.mxu0 %v434
    %457 = vmatprep.subr.bf16.mxu0 %v432
    %458 = vmatpush1.bf16.msra.mxu0 %v431
    %459 = vmatprep.subr.bf16.mxu0 %v429
    %460 = vmatpush1.bf16.msra.mxu0 %v428
    %461 = vmatprep.subr.bf16.mxu0 %v426
    %462 = vmatpush1.bf16.msra.mxu0 %v425
    %463 = vmatprep.subr.bf16.mxu0 %v423
    %464 = vmatpush1.bf16.msra.mxu0 %v422
    %465 = vmatprep.subr.bf16.mxu0 %v420
    %466 = vmatpush1.bf16.msra.mxu0 %v419
    %467 = vmatprep.subr.bf16.mxu0 %v417
    %468 = vmatpush1.bf16.msra.mxu0 %v416
    %469 = vmatprep.subr.bf16.mxu0 %v414
    %470 = vmatpush1.bf16.msra.mxu0 %v413
    %471 = vmatprep.subr.bf16.mxu0 0
    %472 = vmatpush2.bf16.msra.mxu0 0
    %473 = vmatprep.subr.bf16.mxu0 0
    %474 = vmatpush2.bf16.msra.mxu0 0
    %475 = vmatprep.subr.bf16.mxu0 0
    %476 = vmatpush2.bf16.msra.mxu0 0
    %477 = vmatprep.subr.bf16.mxu0 0
    %478 = vmatpush2.bf16.msra.mxu0 0
    %479 = vmatprep.subr.bf16.mxu0 0
    %480 = vmatpush2.bf16.msra.mxu0 0
    %481 = vmatprep.subr.bf16.mxu0 0
    %482 = vmatpush2.bf16.msra.mxu0 0
    %483 = vmatprep.subr.bf16.mxu0 0
    %484 = vmatpush2.bf16.msra.mxu0 0
    %485 = vmatprep.subr.bf16.mxu0 0
    %486 = vmatpush2.bf16.msra.mxu0 0
    %487 = vmatprep.mubr.bf16.mxu0 0
    %488 = vmatmul.mubr.bf16.gmra.mxu0 %v363
    %v489 = vpop.f32.mrf.mxu0
    %v490 = vadd.f32 %v443, %v489
    %v491 = vpop.f32.mrf.mxu0
    %v492 = vadd.f32 %v447, %v491
    %v493 = vpop.f32.mrf.mxu0
    %v494 = vadd.f32 %v443, %v493
    %v495 = vpop.f32.mrf.mxu0
    %v496 = vadd.f32 %v447, %v495
    %497 = vmatprep.mubr.bf16.mxu0 0
    %498 = vmatmul.mubr.bf16.gmra.mxu0 %v364
    %v499 = vpop.f32.mrf.mxu0
    %v500 = vadd.f32 %v443, %v499
    %v501 = vpop.f32.mrf.mxu0
    %v502 = vadd.f32 %v447, %v501
    %v503 = vpop.f32.mrf.mxu0
    %v504 = vpop.f32.mrf.mxu0
    %505 = vdwg.mxu0
    %506 = vmatprep.subr.bf16.mxu0 0
    %507 = vmatpush1.bf16.msra.mxu0 %v436
    %508 = vmatprep.subr.bf16.mxu0 0
    %509 = vmatpush1.bf16.msra.mxu0 %v433
    %510 = vmatprep.subr.bf16.mxu0 0
    %511 = vmatpush1.bf16.msra.mxu0 %v430
    %512 = vmatprep.subr.bf16.mxu0 0
    %513 = vmatpush1.bf16.msra.mxu0 %v427
    %514 = vmatprep.subr.bf16.mxu0 0
    %515 = vmatpush1.bf16.msra.mxu0 %v424
    %516 = vmatprep.subr.bf16.mxu0 0
    %517 = vmatpush1.bf16.msra.mxu0 %v421
    %518 = vmatprep.subr.bf16.mxu0 0
    %519 = vmatpush1.bf16.msra.mxu0 %v418
    %520 = vmatprep.subr.bf16.mxu0 0
    %521 = vmatpush1.bf16.msra.mxu0 %v415
    %522 = vmatprep.subr.bf16.mxu0 0
    %523 = vmatpush2.bf16.msra.mxu0 0
    %524 = vmatprep.subr.bf16.mxu0 0
    %525 = vmatpush2.bf16.msra.mxu0 0
    %526 = vmatprep.subr.bf16.mxu0 0
    %527 = vmatpush2.bf16.msra.mxu0 0
    %528 = vmatprep.subr.bf16.mxu0 0
    %529 = vmatpush2.bf16.msra.mxu0 0
    %530 = vmatprep.subr.bf16.mxu0 0
    %531 = vmatpush2.bf16.msra.mxu0 0
    %532 = vmatprep.subr.bf16.mxu0 0
    %533 = vmatpush2.bf16.msra.mxu0 0
    %534 = vmatprep.subr.bf16.mxu0 0
    %535 = vmatpush2.bf16.msra.mxu0 0
    %536 = vmatprep.subr.bf16.mxu0 0
    %537 = vmatpush2.bf16.msra.mxu0 0
    %538 = vmatprep.mubr.bf16.mxu0 0
    %539 = vmatmul.mubr.bf16.gmra.mxu0 %v363
    %v540 = vpop.f32.mrf.mxu0
    %v541 = vadd.f32 %v451, %v540
    %v542 = vpop.f32.mrf.mxu0
    %v543 = vpop.f32.mrf.mxu0
    %v544 = vadd.f32 %v451, %v543
    %v545 = vpop.f32.mrf.mxu0
    %546 = vmatprep.mubr.bf16.mxu0 0
    %547 = vmatmul.mubr.bf16.gmra.mxu0 %v364
    %v548 = vpop.f32.mrf.mxu0
    %v549 = vadd.f32 %v451, %v548
    %v550 = vpop.f32.mrf.mxu0
    %v551 = vpop.f32.mrf.mxu0
    %v552 = vpop.f32.mrf.mxu0
    %553 = vdwg.mxu0
    %v554 = vld [vmem:[#allocation4 + $0x1c8] sm:$0xff]
    %v555 = vld [vmem:[#allocation4 + $0x1d0] sm:$0xff]
    %v556 = vld [vmem:[#allocation4 + $0x1d8] sm:$0xff]
    %v557 = vld [vmem:[#allocation4 + $0x1e0] sm:$0xff]
    %v558 = vld [vmem:[#allocation4 + $0x1e8] sm:$0xff]
    %v559 = vld [vmem:[#allocation4 + $0x1f0] sm:$0xff]
    %v560 = vld [vmem:[#allocation4 + $0x1f8] sm:$0xff]
    %v561 = vld [vmem:[#allocation4 + $0x200] sm:$0xff]
    %v562 = vld [vmem:[#allocation4 + $0x208] sm:$0xff]
    %v563 = vld [vmem:[#allocation4 + $0x210] sm:$0xff]
    %v564 = vld [vmem:[#allocation4 + $0x218] sm:$0xff]
    %v565 = vld [vmem:[#allocation4 + $0x220] sm:$0xff]
    %v566 = vld [vmem:[#allocation4 + $0x228] sm:$0xff]
    %v567 = vld [vmem:[#allocation4 + $0x230] sm:$0xff]
    %v568 = vld [vmem:[#allocation4 + $0x238] sm:$0xff]
    %v569 = vld [vmem:[#allocation4 + $0x240] sm:$0xff]
    %v570 = vpack.c.bf16 %v555, %v554
    %v571 = vpack.c.bf16 %v557, %v556
    %v572 = vpack.c.bf16 %v559, %v558
    %v573 = vpack.c.bf16 %v561, %v560
    %v574 = vpack.c.bf16 %v563, %v562
    %v575 = vpack.c.bf16 %v565, %v564
    %v576 = vpack.c.bf16 %v567, %v566
    %v577 = vpack.c.bf16 %v569, %v568
    %v578 = vpack.c.bf16 %v494, %v490
    %v579 = vpack.c.bf16 %v496, %v492
    %v580 = vpack.c.bf16 %v544, %v541
    %vm581 = vcmask 261120
    %v583 = vsel %vm581, %v578, 0
    %v586 = vsel %vm581, %v579, 0
    %588 = vmatprep.subr.bf16.mxu0 0
    %589 = vmatpush1.bf16.xpose.msra.mxu0 0
    %590 = vmatprep.subr.bf16.mxu0 0
    %591 = vmatpush1.bf16.xpose.msra.mxu0 0
    %592 = vmatprep.subr.bf16.mxu0 0
    %593 = vmatpush1.bf16.xpose.msra.mxu0 0
    %594 = vmatprep.subr.bf16.mxu0 0
    %595 = vmatpush1.bf16.xpose.msra.mxu0 0
    %596 = vmatprep.subr.bf16.mxu0 0
    %597 = vmatpush1.bf16.xpose.msra.mxu0 0
    %598 = vmatprep.subr.bf16.mxu0 0
    %599 = vmatpush1.bf16.xpose.msra.mxu0 0
    %600 = vmatprep.subr.bf16.mxu0 0
    %601 = vmatpush1.bf16.xpose.msra.mxu0 0
    %602 = vmatprep.subr.bf16.mxu0 0
    %603 = vmatpush1.bf16.xpose.msra.mxu0 %v586
    %604 = vmatprep.subr.bf16.mxu0 0
    %605 = vmatpush2.bf16.xpose.msra.mxu0 0
    %606 = vmatprep.subr.bf16.mxu0 0
    %607 = vmatpush2.bf16.xpose.msra.mxu0 0
    %608 = vmatprep.subr.bf16.mxu0 0
    %609 = vmatpush2.bf16.xpose.msra.mxu0 0
    %610 = vmatprep.subr.bf16.mxu0 0
    %611 = vmatpush2.bf16.xpose.msra.mxu0 0
    %612 = vmatprep.subr.bf16.mxu0 0
    %613 = vmatpush2.bf16.xpose.msra.mxu0 0
    %614 = vmatprep.subr.bf16.mxu0 0
    %615 = vmatpush2.bf16.xpose.msra.mxu0 0
    %616 = vmatprep.subr.bf16.mxu0 0
    %617 = vmatpush2.bf16.xpose.msra.mxu0 0
    %618 = vmatprep.subr.bf16.mxu0 0
    %619 = vmatpush2.bf16.xpose.msra.mxu0 0
    %620 = vmatprep.mubr.bf16.mxu0 0
    %621 = vmatmul.mubr.bf16.gmra.mxu0 %v583
    %v622 = vpop.f32.mrf.mxu0
    %v623 = vadd.f32 0.0, %v622
    %v624 = vpop.f32.mrf.mxu0
    %v625 = vpop.f32.mrf.mxu0
    %v626 = vadd.f32 0.0, %v625
    %v627 = vpop.f32.mrf.mxu0
    %628 = vdwg.mxu0
    %vm629 = vcmask 80896
    %v630 = vsel %vm629, %v623, -inf
    %631 = vmax.xlane.f32.xlu0 %v630
    %v632 = vpop.xlane.xlu0 %631
    %vm633 = vcmask 74752
    %v634 = vsel %vm633, %v626, -inf
    %635 = vmax.xlane.f32.xlu0 %v634
    %v636 = vpop.xlane.xlu0 %635
    %v637 = vsub.f32 %v623, %v632
    %v638 = vsub.f32 %v626, %v636
    %v639 = vmul.f32 %v637, 1.442695
    %v640 = vpow.pop %v639
    %v641 = vmul.f32 %v638, 1.442695
    %v642 = vpow.pop %v641
    %v643 = vsel %vm629, %v640, 0.0
    %644 = vadd.xlane.f32.xlu0 %v643
    %v645 = vpop.xlane.xlu0 %644
    %v646 = vsel %vm633, %v642, 0.0
    %647 = vadd.xlane.f32.xlu0 %v646
    %v648 = vpop.xlane.xlu0 %647
    %v649 = vrcp.pop %v645
    %v650 = vrcp.pop %v648
    %v651 = vmul.f32 %v640, %v649
    %v652 = vmul.f32 %v642, %v650
    %v653 = vpack.c.bf16 %v652, %v651
    %v655 = vsel %vm629, %v653, 0
    %vm657 = vcmask 1044480
    %v659 = vsel %vm657, %v580, 0
    %661 = vmatprep.subr.bf16.mxu0 0
    %662 = vmatpush1.bf16.msra.mxu0 0
    %663 = vmatprep.subr.bf16.mxu0 0
    %664 = vmatpush1.bf16.msra.mxu0 0
    %665 = vmatprep.subr.bf16.mxu0 0
    %666 = vmatpush1.bf16.msra.mxu0 0
    %667 = vmatprep.subr.bf16.mxu0 0
    %668 = vmatpush1.bf16.msra.mxu0 0
    %669 = vmatprep.subr.bf16.mxu0 0
    %670 = vmatpush1.bf16.msra.mxu0 0
    %671 = vmatprep.subr.bf16.mxu0 0
    %672 = vmatpush1.bf16.msra.mxu0 0
    %673 = vmatprep.subr.bf16.mxu0 0
    %674 = vmatpush1.bf16.msra.mxu0 0
    %675 = vmatprep.subr.bf16.mxu0 0
    %676 = vmatpush1.bf16.msra.mxu0 %v659
    %677 = vmatprep.subr.bf16.mxu0 0
    %678 = vmatpush2.bf16.msra.mxu0 0
    %679 = vmatprep.subr.bf16.mxu0 0
    %680 = vmatpush2.bf16.msra.mxu0 0
    %681 = vmatprep.subr.bf16.mxu0 0
    %682 = vmatpush2.bf16.msra.mxu0 0
    %683 = vmatprep.subr.bf16.mxu0 0
    %684 = vmatpush2.bf16.msra.mxu0 0
    %685 = vmatprep.subr.bf16.mxu0 0
    %686 = vmatpush2.bf16.msra.mxu0 0
    %687 = vmatprep.subr.bf16.mxu0 0
    %688 = vmatpush2.bf16.msra.mxu0 0
    %689 = vmatprep.subr.bf16.mxu0 0
    %690 = vmatpush2.bf16.msra.mxu0 0
    %691 = vmatprep.subr.bf16.mxu0 0
    %692 = vmatpush2.bf16.msra.mxu0 0
    %693 = vmatprep.mubr.bf16.mxu0 0
    %694 = vmatmul.mubr.bf16.gmra.mxu0 %v655
    %v695 = vpop.f32.mrf.mxu0
    %v696 = vadd.f32 0.0, %v695
    %v697 = vpop.f32.mrf.mxu0
    %v698 = vpop.f32.mrf.mxu0
    %v699 = vadd.f32 0.0, %v698
    %v700 = vpop.f32.mrf.mxu0
    %701 = vdwg.mxu0
    %v702 = vpack.c.bf16 %v699, %v696
    %704 = vrot.lane.b32.xlu0 %v578, 96
    %v705 = vpop.permute.xlu0 %704
    %707 = vrot.lane.b32.xlu0 %v579, 96
    %v708 = vpop.permute.xlu0 %707
    %v710 = vsel %vm581, %v705, 0
    %v713 = vsel %vm581, %v708, 0
    %715 = vmatprep.subr.bf16.mxu0 0
    %716 = vmatpush1.bf16.xpose.msra.mxu0 0
    %717 = vmatprep.subr.bf16.mxu0 0
    %718 = vmatpush1.bf16.xpose.msra.mxu0 0
    %719 = vmatprep.subr.bf16.mxu0 0
    %720 = vmatpush1.bf16.xpose.msra.mxu0 0
    %721 = vmatprep.subr.bf16.mxu0 0
    %722 = vmatpush1.bf16.xpose.msra.mxu0 0
    %723 = vmatprep.subr.bf16.mxu0 0
    %724 = vmatpush1.bf16.xpose.msra.mxu0 0
    %725 = vmatprep.subr.bf16.mxu0 0
    %726 = vmatpush1.bf16.xpose.msra.mxu0 0
    %727 = vmatprep.subr.bf16.mxu0 0
    %728 = vmatpush1.bf16.xpose.msra.mxu0 0
    %729 = vmatprep.subr.bf16.mxu0 0
    %730 = vmatpush1.bf16.xpose.msra.mxu0 %v713
    %731 = vmatprep.subr.bf16.mxu0 0
    %732 = vmatpush2.bf16.xpose.msra.mxu0 0
    %733 = vmatprep.subr.bf16.mxu0 0
    %734 = vmatpush2.bf16.xpose.msra.mxu0 0
    %735 = vmatprep.subr.bf16.mxu0 0
    %736 = vmatpush2.bf16.xpose.msra.mxu0 0
    %737 = vmatprep.subr.bf16.mxu0 0
    %738 = vmatpush2.bf16.xpose.msra.mxu0 0
    %739 = vmatprep.subr.bf16.mxu0 0
    %740 = vmatpush2.bf16.xpose.msra.mxu0 0
    %741 = vmatprep.subr.bf16.mxu0 0
    %742 = vmatpush2.bf16.xpose.msra.mxu0 0
    %743 = vmatprep.subr.bf16.mxu0 0
    %744 = vmatpush2.bf16.xpose.msra.mxu0 0
    %745 = vmatprep.subr.bf16.mxu0 0
    %746 = vmatpush2.bf16.xpose.msra.mxu0 0
    %747 = vmatprep.mubr.bf16.mxu0 0
    %748 = vmatmul.mubr.bf16.gmra.mxu0 %v710
    %v749 = vpop.f32.mrf.mxu0
    %v750 = vadd.f32 0.0, %v749
    %v751 = vpop.f32.mrf.mxu0
    %v752 = vpop.f32.mrf.mxu0
    %v753 = vadd.f32 0.0, %v752
    %v754 = vpop.f32.mrf.mxu0
    %755 = vdwg.mxu0
    %v756 = vsel %vm629, %v750, -inf
    %757 = vmax.xlane.f32.xlu0 %v756
    %v758 = vpop.xlane.xlu0 %757
    %v759 = vsel %vm633, %v753, -inf
    %760 = vmax.xlane.f32.xlu0 %v759
    %v761 = vpop.xlane.xlu0 %760
    %v762 = vsub.f32 %v750, %v758
    %v763 = vsub.f32 %v753, %v761
    %v764 = vmul.f32 %v762, 1.442695
    %v765 = vpow.pop %v764
    %v766 = vmul.f32 %v763, 1.442695
    %v767 = vpow.pop %v766
    %v768 = vsel %vm629, %v765, 0.0
    %769 = vadd.xlane.f32.xlu0 %v768
    %v770 = vpop.xlane.xlu0 %769
    %v771 = vsel %vm633, %v767, 0.0
    %772 = vadd.xlane.f32.xlu0 %v771
    %v773 = vpop.xlane.xlu0 %772
    %v774 = vrcp.pop %v770
    %v775 = vrcp.pop %v773
    %v776 = vmul.f32 %v765, %v774
    %v777 = vmul.f32 %v767, %v775
    %v778 = vpack.c.bf16 %v777, %v776
    %780 = vrot.lane.b32.xlu0 %v580, 96
    %v781 = vpop.permute.xlu0 %780
    %v783 = vsel %vm629, %v778, 0
    %v786 = vsel %vm657, %v781, 0
    %788 = vmatprep.subr.bf16.mxu0 0
    %789 = vmatpush1.bf16.msra.mxu0 0
    %790 = vmatprep.subr.bf16.mxu0 0
    %791 = vmatpush1.bf16.msra.mxu0 0
    %792 = vmatprep.subr.bf16.mxu0 0
    %793 = vmatpush1.bf16.msra.mxu0 0
    %794 = vmatprep.subr.bf16.mxu0 0
    %795 = vmatpush1.bf16.msra.mxu0 0
    %796 = vmatprep.subr.bf16.mxu0 0
    %797 = vmatpush1.bf16.msra.mxu0 0
    %798 = vmatprep.subr.bf16.mxu0 0
    %799 = vmatpush1.bf16.msra.mxu0 0
    %800 = vmatprep.subr.bf16.mxu0 0
    %801 = vmatpush1.bf16.msra.mxu0 0
    %802 = vmatprep.subr.bf16.mxu0 0
    %803 = vmatpush1.bf16.msra.mxu0 %v786
    %804 = vmatprep.subr.bf16.mxu0 0
    %805 = vmatpush2.bf16.msra.mxu0 0
    %806 = vmatprep.subr.bf16.mxu0 0
    %807 = vmatpush2.bf16.msra.mxu0 0
    %808 = vmatprep.subr.bf16.mxu0 0
    %809 = vmatpush2.bf16.msra.mxu0 0
    %810 = vmatprep.subr.bf16.mxu0 0
    %811 = vmatpush2.bf16.msra.mxu0 0
    %812 = vmatprep.subr.bf16.mxu0 0
    %813 = vmatpush2.bf16.msra.mxu0 0
    %814 = vmatprep.subr.bf16.mxu0 0
    %815 = vmatpush2.bf16.msra.mxu0 0
    %816 = vmatprep.subr.bf16.mxu0 0
    %817 = vmatpush2.bf16.msra.mxu0 0
    %818 = vmatprep.subr.bf16.mxu0 0
    %819 = vmatpush2.bf16.msra.mxu0 0
    %820 = vmatprep.mubr.bf16.mxu0 0
    %821 = vmatmul.mubr.bf16.gmra.mxu0 %v783
    %v822 = vpop.f32.mrf.mxu0
    %v823 = vadd.f32 0.0, %v822
    %v824 = vpop.f32.mrf.mxu0
    %v825 = vpop.f32.mrf.mxu0
    %v826 = vadd.f32 0.0, %v825
    %v827 = vpop.f32.mrf.mxu0
    %828 = vdwg.mxu0
    %v829 = vpack.c.bf16 %v826, %v823
    %v831 = vsel %vm581, %v829, 0
    %833 = vmatprep.subr.bf16.mxu0 0
    %834 = vmatpush1.bf16.msra.mxu0 0
    %835 = vmatprep.subr.bf16.mxu0 0
    %836 = vmatpush1.bf16.msra.mxu0 0
    %837 = vmatprep.subr.bf16.mxu0 0
    %838 = vmatpush1.bf16.msra.mxu0 0
    %839 = vmatprep.subr.bf16.mxu0 0
    %840 = vmatpush1.bf16.msra.mxu0 0
    %841 = vmatprep.subr.bf16.mxu0 0
    %842 = vmatpush1.bf16.msra.mxu0 0
    %843 = vmatprep.subr.bf16.mxu0 0
    %844 = vmatpush1.bf16.msra.mxu0 0
    %845 = vmatprep.subr.bf16.mxu0 0
    %846 = vmatpush1.bf16.msra.mxu0 %v573
    %847 = vmatprep.subr.bf16.mxu0 0
    %848 = vmatpush1.bf16.msra.mxu0 %v572
    %849 = vmatprep.subr.bf16.mxu0 0
    %850 = vmatpush2.bf16.msra.mxu0 0
    %851 = vmatprep.subr.bf16.mxu0 0
    %852 = vmatpush2.bf16.msra.mxu0 0
    %853 = vmatprep.subr.bf16.mxu0 0
    %854 = vmatpush2.bf16.msra.mxu0 0
    %855 = vmatprep.subr.bf16.mxu0 0
    %856 = vmatpush2.bf16.msra.mxu0 0
    %857 = vmatprep.subr.bf16.mxu0 0
    %858 = vmatpush2.bf16.msra.mxu0 0
    %859 = vmatprep.subr.bf16.mxu0 0
    %860 = vmatpush2.bf16.msra.mxu0 0
    %861 = vmatprep.subr.bf16.mxu0 0
    %862 = vmatpush2.bf16.msra.mxu0 0
    %863 = vmatprep.subr.bf16.mxu0 0
    %864 = vmatpush2.bf16.msra.mxu0 0
    %865 = vmatprep.mubr.bf16.mxu0 0
    %866 = vmatmul.mubr.bf16.gmra.mxu0 %v831
    %v867 = vpop.f32.mrf.mxu0
    %v868 = vadd.f32 0.0, %v867
    %v869 = vpop.f32.mrf.mxu0
    %v870 = vpop.f32.mrf.mxu0
    %v871 = vadd.f32 0.0, %v870
    %v872 = vpop.f32.mrf.mxu0
    %873 = vdwg.mxu0
    %v875 = vsel %vm581, %v702, 0
    %877 = vmatprep.subr.bf16.mxu0 0
    %878 = vmatpush1.bf16.msra.mxu0 0
    %879 = vmatprep.subr.bf16.mxu0 0
    %880 = vmatpush1.bf16.msra.mxu0 0
    %881 = vmatprep.subr.bf16.mxu0 0
    %882 = vmatpush1.bf16.msra.mxu0 0
    %883 = vmatprep.subr.bf16.mxu0 0
    %884 = vmatpush1.bf16.msra.mxu0 0
    %885 = vmatprep.subr.bf16.mxu0 0
    %886 = vmatpush1.bf16.msra.mxu0 0
    %887 = vmatprep.subr.bf16.mxu0 0
    %888 = vmatpush1.bf16.msra.mxu0 0
    %889 = vmatprep.subr.bf16.mxu0 0
    %890 = vmatpush1.bf16.msra.mxu0 %v571
    %891 = vmatprep.subr.bf16.mxu0 0
    %892 = vmatpush1.bf16.msra.mxu0 %v570
    %893 = vmatprep.subr.bf16.mxu0 0
    %894 = vmatpush2.bf16.msra.mxu0 0
    %895 = vmatprep.subr.bf16.mxu0 0
    %896 = vmatpush2.bf16.msra.mxu0 0
    %897 = vmatprep.subr.bf16.mxu0 0
    %898 = vmatpush2.bf16.msra.mxu0 0
    %899 = vmatprep.subr.bf16.mxu0 0
    %900 = vmatpush2.bf16.msra.mxu0 0
    %901 = vmatprep.subr.bf16.mxu0 0
    %902 = vmatpush2.bf16.msra.mxu0 0
    %903 = vmatprep.subr.bf16.mxu0 0
    %904 = vmatpush2.bf16.msra.mxu0 0
    %905 = vmatprep.subr.bf16.mxu0 0
    %906 = vmatpush2.bf16.msra.mxu0 0
    %907 = vmatprep.subr.bf16.mxu0 0
    %908 = vmatpush2.bf16.msra.mxu0 0
    %909 = vmatprep.mubr.bf16.mxu0 0
    %910 = vmatmul.mubr.bf16.gmra.mxu0 %v875
    %v911 = vpop.f32.mrf.mxu0
    %v912 = vadd.f32 %v868, %v911
    %v913 = vpop.f32.mrf.mxu0
    %v914 = vpop.f32.mrf.mxu0
    %v915 = vadd.f32 %v871, %v914
    %v916 = vpop.f32.mrf.mxu0
    %917 = vdwg.mxu0
    %918 = vrot.lane.b32.xlu0 %v578, 64
    %v919 = vpop.permute.xlu0 %918
    %920 = vrot.lane.b32.xlu0 %v579, 64
    %v921 = vpop.permute.xlu0 %920
    %v923 = vsel %vm581, %v919, 0
    %v926 = vsel %vm581, %v921, 0
    %928 = vmatprep.subr.bf16.mxu0 0
    %929 = vmatpush1.bf16.xpose.msra.mxu0 0
    %930 = vmatprep.subr.bf16.mxu0 0
    %931 = vmatpush1.bf16.xpose.msra.mxu0 0
    %932 = vmatprep.subr.bf16.mxu0 0
    %933 = vmatpush1.bf16.xpose.msra.mxu0 0
    %934 = vmatprep.subr.bf16.mxu0 0
    %935 = vmatpush1.bf16.xpose.msra.mxu0 0
    %936 = vmatprep.subr.bf16.mxu0 0
    %937 = vmatpush1.bf16.xpose.msra.mxu0 0
    %938 = vmatprep.subr.bf16.mxu0 0
    %939 = vmatpush1.bf16.xpose.msra.mxu0 0
    %940 = vmatprep.subr.bf16.mxu0 0
    %941 = vmatpush1.bf16.xpose.msra.mxu0 0
    %942 = vmatprep.subr.bf16.mxu0 0
    %943 = vmatpush1.bf16.xpose.msra.mxu0 %v926
    %944 = vmatprep.subr.bf16.mxu0 0
    %945 = vmatpush2.bf16.xpose.msra.mxu0 0
    %946 = vmatprep.subr.bf16.mxu0 0
    %947 = vmatpush2.bf16.xpose.msra.mxu0 0
    %948 = vmatprep.subr.bf16.mxu0 0
    %949 = vmatpush2.bf16.xpose.msra.mxu0 0
    %950 = vmatprep.subr.bf16.mxu0 0
    %951 = vmatpush2.bf16.xpose.msra.mxu0 0
    %952 = vmatprep.subr.bf16.mxu0 0
    %953 = vmatpush2.bf16.xpose.msra.mxu0 0
    %954 = vmatprep.subr.bf16.mxu0 0
    %955 = vmatpush2.bf16.xpose.msra.mxu0 0
    %956 = vmatprep.subr.bf16.mxu0 0
    %957 = vmatpush2.bf16.xpose.msra.mxu0 0
    %958 = vmatprep.subr.bf16.mxu0 0
    %959 = vmatpush2.bf16.xpose.msra.mxu0 0
    %960 = vmatprep.mubr.bf16.mxu0 0
    %961 = vmatmul.mubr.bf16.gmra.mxu0 %v923
    %v962 = vpop.f32.mrf.mxu0
    %v963 = vadd.f32 0.0, %v962
    %v964 = vpop.f32.mrf.mxu0
    %v965 = vpop.f32.mrf.mxu0
    %v966 = vadd.f32 0.0, %v965
    %v967 = vpop.f32.mrf.mxu0
    %968 = vdwg.mxu0
    %v969 = vsel %vm629, %v963, -inf
    %970 = vmax.xlane.f32.xlu0 %v969
    %v971 = vpop.xlane.xlu0 %970
    %v972 = vsel %vm633, %v966, -inf
    %973 = vmax.xlane.f32.xlu0 %v972
    %v974 = vpop.xlane.xlu0 %973
    %v975 = vsub.f32 %v963, %v971
    %v976 = vsub.f32 %v966, %v974
    %v977 = vmul.f32 %v975, 1.442695
    %v978 = vpow.pop %v977
    %v979 = vmul.f32 %v976, 1.442695
    %v980 = vpow.pop %v979
    %v981 = vsel %vm629, %v978, 0.0
    %982 = vadd.xlane.f32.xlu0 %v981
    %v983 = vpop.xlane.xlu0 %982
    %v984 = vsel %vm633, %v980, 0.0
    %985 = vadd.xlane.f32.xlu0 %v984
    %v986 = vpop.xlane.xlu0 %985
    %v987 = vrcp.pop %v983
    %v988 = vrcp.pop %v986
    %v989 = vmul.f32 %v978, %v987
    %v990 = vmul.f32 %v980, %v988
    %v991 = vpack.c.bf16 %v990, %v989
    %992 = vrot.lane.b32.xlu0 %v580, 64
    %v993 = vpop.permute.xlu0 %992
    %v995 = vsel %vm629, %v991, 0
    %v998 = vsel %vm657, %v993, 0
    %1000 = vmatprep.subr.bf16.mxu0 0
    %1001 = vmatpush1.bf16.msra.mxu0 0
    %1002 = vmatprep.subr.bf16.mxu0 0
    %1003 = vmatpush1.bf16.msra.mxu0 0
    %1004 = vmatprep.subr.bf16.mxu0 0
    %1005 = vmatpush1.bf16.msra.mxu0 0
    %1006 = vmatprep.subr.bf16.mxu0 0
    %1007 = vmatpush1.bf16.msra.mxu0 0
    %1008 = vmatprep.subr.bf16.mxu0 0
    %1009 = vmatpush1.bf16.msra.mxu0 0
    %1010 = vmatprep.subr.bf16.mxu0 0
    %1011 = vmatpush1.bf16.msra.mxu0 0
    %1012 = vmatprep.subr.bf16.mxu0 0
    %1013 = vmatpush1.bf16.msra.mxu0 0
    %1014 = vmatprep.subr.bf16.mxu0 0
    %1015 = vmatpush1.bf16.msra.mxu0 %v998
    %1016 = vmatprep.subr.bf16.mxu0 0
    %1017 = vmatpush2.bf16.msra.mxu0 0
    %1018 = vmatprep.subr.bf16.mxu0 0
    %1019 = vmatpush2.bf16.msra.mxu0 0
    %1020 = vmatprep.subr.bf16.mxu0 0
    %1021 = vmatpush2.bf16.msra.mxu0 0
    %1022 = vmatprep.subr.bf16.mxu0 0
    %1023 = vmatpush2.bf16.msra.mxu0 0
    %1024 = vmatprep.subr.bf16.mxu0 0
    %1025 = vmatpush2.bf16.msra.mxu0 0
    %1026 = vmatprep.subr.bf16.mxu0 0
    %1027 = vmatpush2.bf16.msra.mxu0 0
    %1028 = vmatprep.subr.bf16.mxu0 0
    %1029 = vmatpush2.bf16.msra.mxu0 0
    %1030 = vmatprep.subr.bf16.mxu0 0
    %1031 = vmatpush2.bf16.msra.mxu0 0
    %1032 = vmatprep.mubr.bf16.mxu0 0
    %1033 = vmatmul.mubr.bf16.gmra.mxu0 %v995
    %v1034 = vpop.f32.mrf.mxu0
    %v1035 = vadd.f32 0.0, %v1034
    %v1036 = vpop.f32.mrf.mxu0
    %v1037 = vpop.f32.mrf.mxu0
    %v1038 = vadd.f32 0.0, %v1037
    %v1039 = vpop.f32.mrf.mxu0
    %1040 = vdwg.mxu0
    %v1041 = vpack.c.bf16 %v1038, %v1035
    %v1043 = vsel %vm581, %v1041, 0
    %1045 = vmatprep.subr.bf16.mxu0 0
    %1046 = vmatpush1.bf16.msra.mxu0 0
    %1047 = vmatprep.subr.bf16.mxu0 0
    %1048 = vmatpush1.bf16.msra.mxu0 0
    %1049 = vmatprep.subr.bf16.mxu0 0
    %1050 = vmatpush1.bf16.msra.mxu0 0
    %1051 = vmatprep.subr.bf16.mxu0 0
    %1052 = vmatpush1.bf16.msra.mxu0 0
    %1053 = vmatprep.subr.bf16.mxu0 0
    %1054 = vmatpush1.bf16.msra.mxu0 0
    %1055 = vmatprep.subr.bf16.mxu0 0
    %1056 = vmatpush1.bf16.msra.mxu0 0
    %1057 = vmatprep.subr.bf16.mxu0 0
    %1058 = vmatpush1.bf16.msra.mxu0 %v575
    %1059 = vmatprep.subr.bf16.mxu0 0
    %1060 = vmatpush1.bf16.msra.mxu0 %v574
    %1061 = vmatprep.subr.bf16.mxu0 0
    %1062 = vmatpush2.bf16.msra.mxu0 0
    %1063 = vmatprep.subr.bf16.mxu0 0
    %1064 = vmatpush2.bf16.msra.mxu0 0
    %1065 = vmatprep.subr.bf16.mxu0 0
    %1066 = vmatpush2.bf16.msra.mxu0 0
    %1067 = vmatprep.subr.bf16.mxu0 0
    %1068 = vmatpush2.bf16.msra.mxu0 0
    %1069 = vmatprep.subr.bf16.mxu0 0
    %1070 = vmatpush2.bf16.msra.mxu0 0
    %1071 = vmatprep.subr.bf16.mxu0 0
    %1072 = vmatpush2.bf16.msra.mxu0 0
    %1073 = vmatprep.subr.bf16.mxu0 0
    %1074 = vmatpush2.bf16.msra.mxu0 0
    %1075 = vmatprep.subr.bf16.mxu0 0
    %1076 = vmatpush2.bf16.msra.mxu0 0
    %1077 = vmatprep.mubr.bf16.mxu0 0
    %1078 = vmatmul.mubr.bf16.gmra.mxu0 %v1043
    %v1079 = vpop.f32.mrf.mxu0
    %v1080 = vadd.f32 0.0, %v1079
    %v1081 = vpop.f32.mrf.mxu0
    %v1082 = vpop.f32.mrf.mxu0
    %v1083 = vadd.f32 0.0, %v1082
    %v1084 = vpop.f32.mrf.mxu0
    %1085 = vdwg.mxu0
    %v1086 = vadd.f32 %v912, %v1080
    %v1087 = vadd.f32 %v915, %v1083
    %1088 = vrot.lane.b32.xlu0 %v578, 32
    %v1089 = vpop.permute.xlu0 %1088
    %1090 = vrot.lane.b32.xlu0 %v579, 32
    %v1091 = vpop.permute.xlu0 %1090
    %v1093 = vsel %vm581, %v1089, 0
    %v1096 = vsel %vm581, %v1091, 0
    %1098 = vmatprep.subr.bf16.mxu0 0
    %1099 = vmatpush1.bf16.xpose.msra.mxu0 0
    %1100 = vmatprep.subr.bf16.mxu0 0
    %1101 = vmatpush1.bf16.xpose.msra.mxu0 0
    %1102 = vmatprep.subr.bf16.mxu0 0
    %1103 = vmatpush1.bf16.xpose.msra.mxu0 0
    %1104 = vmatprep.subr.bf16.mxu0 0
    %1105 = vmatpush1.bf16.xpose.msra.mxu0 0
    %1106 = vmatprep.subr.bf16.mxu0 0
    %1107 = vmatpush1.bf16.xpose.msra.mxu0 0
    %1108 = vmatprep.subr.bf16.mxu0 0
    %1109 = vmatpush1.bf16.xpose.msra.mxu0 0
    %1110 = vmatprep.subr.bf16.mxu0 0
    %1111 = vmatpush1.bf16.xpose.msra.mxu0 0
    %1112 = vmatprep.subr.bf16.mxu0 0
    %1113 = vmatpush1.bf16.xpose.msra.mxu0 %v1096
    %1114 = vmatprep.subr.bf16.mxu0 0
    %1115 = vmatpush2.bf16.xpose.msra.mxu0 0
    %1116 = vmatprep.subr.bf16.mxu0 0
    %1117 = vmatpush2.bf16.xpose.msra.mxu0 0
    %1118 = vmatprep.subr.bf16.mxu0 0
    %1119 = vmatpush2.bf16.xpose.msra.mxu0 0
    %1120 = vmatprep.subr.bf16.mxu0 0
    %1121 = vmatpush2.bf16.xpose.msra.mxu0 0
    %1122 = vmatprep.subr.bf16.mxu0 0
    %1123 = vmatpush2.bf16.xpose.msra.mxu0 0
    %1124 = vmatprep.subr.bf16.mxu0 0
    %1125 = vmatpush2.bf16.xpose.msra.mxu0 0
    %1126 = vmatprep.subr.bf16.mxu0 0
    %1127 = vmatpush2.bf16.xpose.msra.mxu0 0
    %1128 = vmatprep.subr.bf16.mxu0 0
    %1129 = vmatpush2.bf16.xpose.msra.mxu0 0
    %1130 = vmatprep.mubr.bf16.mxu0 0
    %1131 = vmatmul.mubr.bf16.gmra.mxu0 %v1093
    %v1132 = vpop.f32.mrf.mxu0
    %v1133 = vadd.f32 0.0, %v1132
    %v1134 = vpop.f32.mrf.mxu0
    %v1135 = vpop.f32.mrf.mxu0
    %v1136 = vadd.f32 0.0, %v1135
    %v1137 = vpop.f32.mrf.mxu0
    %1138 = vdwg.mxu0
    %v1139 = vsel %vm629, %v1133, -inf
    %1140 = vmax.xlane.f32.xlu0 %v1139
    %v1141 = vpop.xlane.xlu0 %1140
    %v1142 = vsel %vm633, %v1136, -inf
    %1143 = vmax.xlane.f32.xlu0 %v1142
    %v1144 = vpop.xlane.xlu0 %1143
    %v1145 = vsub.f32 %v1133, %v1141
    %v1146 = vsub.f32 %v1136, %v1144
    %v1147 = vmul.f32 %v1145, 1.442695
    %v1148 = vpow.pop %v1147
    %v1149 = vmul.f32 %v1146, 1.442695
    %v1150 = vpow.pop %v1149
    %v1151 = vsel %vm629, %v1148, 0.0
    %1152 = vadd.xlane.f32.xlu0 %v1151
    %v1153 = vpop.xlane.xlu0 %1152
    %v1154 = vsel %vm633, %v1150, 0.0
    %1155 = vadd.xlane.f32.xlu0 %v1154
    %v1156 = vpop.xlane.xlu0 %1155
    %v1157 = vrcp.pop %v1153
    %v1158 = vrcp.pop %v1156
    %v1159 = vmul.f32 %v1148, %v1157
    %v1160 = vmul.f32 %v1150, %v1158
    %v1161 = vpack.c.bf16 %v1160, %v1159
    %1162 = vrot.lane.b32.xlu0 %v580, 32
    %v1163 = vpop.permute.xlu0 %1162
    %v1165 = vsel %vm629, %v1161, 0
    %v1168 = vsel %vm657, %v1163, 0
    %1170 = vmatprep.subr.bf16.mxu0 0
    %1171 = vmatpush1.bf16.msra.mxu0 0
    %1172 = vmatprep.subr.bf16.mxu0 0
    %1173 = vmatpush1.bf16.msra.mxu0 0
    %1174 = vmatprep.subr.bf16.mxu0 0
    %1175 = vmatpush1.bf16.msra.mxu0 0
    %1176 = vmatprep.subr.bf16.mxu0 0
    %1177 = vmatpush1.bf16.msra.mxu0 0
    %1178 = vmatprep.subr.bf16.mxu0 0
    %1179 = vmatpush1.bf16.msra.mxu0 0
    %1180 = vmatprep.subr.bf16.mxu0 0
    %1181 = vmatpush1.bf16.msra.mxu0 0
    %1182 = vmatprep.subr.bf16.mxu0 0
    %1183 = vmatpush1.bf16.msra.mxu0 0
    %1184 = vmatprep.subr.bf16.mxu0 0
    %1185 = vmatpush1.bf16.msra.mxu0 %v1168
    %1186 = vmatprep.subr.bf16.mxu0 0
    %1187 = vmatpush2.bf16.msra.mxu0 0
    %1188 = vmatprep.subr.bf16.mxu0 0
    %1189 = vmatpush2.bf16.msra.mxu0 0
    %1190 = vmatprep.subr.bf16.mxu0 0
    %1191 = vmatpush2.bf16.msra.mxu0 0
    %1192 = vmatprep.subr.bf16.mxu0 0
    %1193 = vmatpush2.bf16.msra.mxu0 0
    %1194 = vmatprep.subr.bf16.mxu0 0
    %1195 = vmatpush2.bf16.msra.mxu0 0
    %1196 = vmatprep.subr.bf16.mxu0 0
    %1197 = vmatpush2.bf16.msra.mxu0 0
    %1198 = vmatprep.subr.bf16.mxu0 0
    %1199 = vmatpush2.bf16.msra.mxu0 0
    %1200 = vmatprep.subr.bf16.mxu0 0
    %1201 = vmatpush2.bf16.msra.mxu0 0
    %1202 = vmatprep.mubr.bf16.mxu0 0
    %1203 = vmatmul.mubr.bf16.gmra.mxu0 %v1165
    %v1204 = vpop.f32.mrf.mxu0
    %v1205 = vadd.f32 0.0, %v1204
    %v1206 = vpop.f32.mrf.mxu0
    %v1207 = vpop.f32.mrf.mxu0
    %v1208 = vadd.f32 0.0, %v1207
    %v1209 = vpop.f32.mrf.mxu0
    %1210 = vdwg.mxu0
    %v1211 = vpack.c.bf16 %v1208, %v1205
    %v1213 = vsel %vm581, %v1211, 0
    %1215 = vmatprep.subr.bf16.mxu0 0
    %1216 = vmatpush1.bf16.msra.mxu0 0
    %1217 = vmatprep.subr.bf16.mxu0 0
    %1218 = vmatpush1.bf16.msra.mxu0 0
    %1219 = vmatprep.subr.bf16.mxu0 0
    %1220 = vmatpush1.bf16.msra.mxu0 0
    %1221 = vmatprep.subr.bf16.mxu0 0
    %1222 = vmatpush1.bf16.msra.mxu0 0
    %1223 = vmatprep.subr.bf16.mxu0 0
    %1224 = vmatpush1.bf16.msra.mxu0 0
    %1225 = vmatprep.subr.bf16.mxu0 0
    %1226 = vmatpush1.bf16.msra.mxu0 0
    %1227 = vmatprep.subr.bf16.mxu0 0
    %1228 = vmatpush1.bf16.msra.mxu0 %v577
    %1229 = vmatprep.subr.bf16.mxu0 0
    %1230 = vmatpush1.bf16.msra.mxu0 %v576
    %1231 = vmatprep.subr.bf16.mxu0 0
    %1232 = vmatpush2.bf16.msra.mxu0 0
    %1233 = vmatprep.subr.bf16.mxu0 0
    %1234 = vmatpush2.bf16.msra.mxu0 0
    %1235 = vmatprep.subr.bf16.mxu0 0
    %1236 = vmatpush2.bf16.msra.mxu0 0
    %1237 = vmatprep.subr.bf16.mxu0 0
    %1238 = vmatpush2.bf16.msra.mxu0 0
    %1239 = vmatprep.subr.bf16.mxu0 0
    %1240 = vmatpush2.bf16.msra.mxu0 0
    %1241 = vmatprep.subr.bf16.mxu0 0
    %1242 = vmatpush2.bf16.msra.mxu0 0
    %1243 = vmatprep.subr.bf16.mxu0 0
    %1244 = vmatpush2.bf16.msra.mxu0 0
    %1245 = vmatprep.subr.bf16.mxu0 0
    %1246 = vmatpush2.bf16.msra.mxu0 0
    %1247 = vmatprep.mubr.bf16.mxu0 0
    %1248 = vmatmul.mubr.bf16.gmra.mxu0 %v1213
    %v1249 = vpop.f32.mrf.mxu0
    %v1250 = vadd.f32 0.0, %v1249
    %v1251 = vpop.f32.mrf.mxu0
    %v1252 = vpop.f32.mrf.mxu0
    %v1253 = vadd.f32 0.0, %v1252
    %v1254 = vpop.f32.mrf.mxu0
    %1255 = vdwg.mxu0
    %v1256 = vadd.f32 %v1086, %v1250
    %v1257 = vadd.f32 %v1087, %v1253
    %v1258 = vpack.c.bf16 %v500, %v494
    %v1259 = vpack.c.bf16 %v502, %v496
    %v1260 = vpack.c.bf16 %v549, %v544
    %v1262 = vrot.slane %v1258, 1
    %v1264 = vrot.slane %v1259, 1
    %v1266 = vsel %vm581, %v1262, 0
    %v1269 = vsel %vm581, %v1264, 0
    %1271 = vmatprep.subr.bf16.mxu0 0
    %1272 = vmatpush1.bf16.xpose.msra.mxu0 0
    %1273 = vmatprep.subr.bf16.mxu0 0
    %1274 = vmatpush1.bf16.xpose.msra.mxu0 0
    %1275 = vmatprep.subr.bf16.mxu0 0
    %1276 = vmatpush1.bf16.xpose.msra.mxu0 0
    %1277 = vmatprep.subr.bf16.mxu0 0
    %1278 = vmatpush1.bf16.xpose.msra.mxu0 0
    %1279 = vmatprep.subr.bf16.mxu0 0
    %1280 = vmatpush1.bf16.xpose.msra.mxu0 0
    %1281 = vmatprep.subr.bf16.mxu0 0
    %1282 = vmatpush1.bf16.xpose.msra.mxu0 0
    %1283 = vmatprep.subr.bf16.mxu0 0
    %1284 = vmatpush1.bf16.xpose.msra.mxu0 0
    %1285 = vmatprep.subr.bf16.mxu0 0
    %1286 = vmatpush1.bf16.xpose.msra.mxu0 %v1269
    %1287 = vmatprep.subr.bf16.mxu0 0
    %1288 = vmatpush2.bf16.xpose.msra.mxu0 0
    %1289 = vmatprep.subr.bf16.mxu0 0
    %1290 = vmatpush2.bf16.xpose.msra.mxu0 0
    %1291 = vmatprep.subr.bf16.mxu0 0
    %1292 = vmatpush2.bf16.xpose.msra.mxu0 0
    %1293 = vmatprep.subr.bf16.mxu0 0
    %1294 = vmatpush2.bf16.xpose.msra.mxu0 0
    %1295 = vmatprep.subr.bf16.mxu0 0
    %1296 = vmatpush2.bf16.xpose.msra.mxu0 0
    %1297 = vmatprep.subr.bf16.mxu0 0
    %1298 = vmatpush2.bf16.xpose.msra.mxu0 0
    %1299 = vmatprep.subr.bf16.mxu0 0
    %1300 = vmatpush2.bf16.xpose.msra.mxu0 0
    %1301 = vmatprep.subr.bf16.mxu0 0
    %1302 = vmatpush2.bf16.xpose.msra.mxu0 0
    %1303 = vmatprep.mubr.bf16.mxu0 0
    %1304 = vmatmul.mubr.bf16.gmra.mxu0 %v1266
    %v1305 = vpop.f32.mrf.mxu0
    %v1306 = vadd.f32 0.0, %v1305
    %v1307 = vpop.f32.mrf.mxu0
    %v1308 = vpop.f32.mrf.mxu0
    %v1309 = vadd.f32 0.0, %v1308
    %v1310 = vpop.f32.mrf.mxu0
    %1311 = vdwg.mxu0
    %v1312 = vsel %vm629, %v1306, -inf
    %1313 = vmax.xlane.f32.xlu0 %v1312
    %v1314 = vpop.xlane.xlu0 %1313
    %v1315 = vsel %vm633, %v1309, -inf
    %1316 = vmax.xlane.f32.xlu0 %v1315
    %v1317 = vpop.xlane.xlu0 %1316
    %v1318 = vsub.f32 %v1306, %v1314
    %v1319 = vsub.f32 %v1309, %v1317
    %v1320 = vmul.f32 %v1318, 1.442695
    %v1321 = vpow.pop %v1320
    %v1322 = vmul.f32 %v1319, 1.442695
    %v1323 = vpow.pop %v1322
    %v1324 = vsel %vm629, %v1321, 0.0
    %1325 = vadd.xlane.f32.xlu0 %v1324
    %v1326 = vpop.xlane.xlu0 %1325
    %v1327 = vsel %vm633, %v1323, 0.0
    %1328 = vadd.xlane.f32.xlu0 %v1327
    %v1329 = vpop.xlane.xlu0 %1328
    %v1330 = vrcp.pop %v1326
    %v1331 = vrcp.pop %v1329
    %v1332 = vmul.f32 %v1321, %v1330
    %v1333 = vmul.f32 %v1323, %v1331
    %v1334 = vpack.c.bf16 %v1333, %v1332
    %v1336 = vrot.slane %v1260, 1
    %v1338 = vsel %vm629, %v1334, 0
    %v1341 = vsel %vm657, %v1336, 0
    %1343 = vmatprep.subr.bf16.mxu0 0
    %1344 = vmatpush1.bf16.msra.mxu0 0
    %1345 = vmatprep.subr.bf16.mxu0 0
    %1346 = vmatpush1.bf16.msra.mxu0 0
    %1347 = vmatprep.subr.bf16.mxu0 0
    %1348 = vmatpush1.bf16.msra.mxu0 0
    %1349 = vmatprep.subr.bf16.mxu0 0
    %1350 = vmatpush1.bf16.msra.mxu0 0
    %1351 = vmatprep.subr.bf16.mxu0 0
    %1352 = vmatpush1.bf16.msra.mxu0 0
    %1353 = vmatprep.subr.bf16.mxu0 0
    %1354 = vmatpush1.bf16.msra.mxu0 0
    %1355 = vmatprep.subr.bf16.mxu0 0
    %1356 = vmatpush1.bf16.msra.mxu0 0
    %1357 = vmatprep.subr.bf16.mxu0 0
    %1358 = vmatpush1.bf16.msra.mxu0 %v1341
    %1359 = vmatprep.subr.bf16.mxu0 0
    %1360 = vmatpush2.bf16.msra.mxu0 0
    %1361 = vmatprep.subr.bf16.mxu0 0
    %1362 = vmatpush2.bf16.msra.mxu0 0
    %1363 = vmatprep.subr.bf16.mxu0 0
    %1364 = vmatpush2.bf16.msra.mxu0 0
    %1365 = vmatprep.subr.bf16.mxu0 0
    %1366 = vmatpush2.bf16.msra.mxu0 0
    %1367 = vmatprep.subr.bf16.mxu0 0
    %1368 = vmatpush2.bf16.msra.mxu0 0
    %1369 = vmatprep.subr.bf16.mxu0 0
    %1370 = vmatpush2.bf16.msra.mxu0 0
    %1371 = vmatprep.subr.bf16.mxu0 0
    %1372 = vmatpush2.bf16.msra.mxu0 0
    %1373 = vmatprep.subr.bf16.mxu0 0
    %1374 = vmatpush2.bf16.msra.mxu0 0
    %1375 = vmatprep.mubr.bf16.mxu0 0
    %1376 = vmatmul.mubr.bf16.gmra.mxu0 %v1338
    %v1377 = vpop.f32.mrf.mxu0
    %v1378 = vadd.f32 0.0, %v1377
    %v1379 = vpop.f32.mrf.mxu0
    %v1380 = vpop.f32.mrf.mxu0
    %v1381 = vadd.f32 0.0, %v1380
    %v1382 = vpop.f32.mrf.mxu0
    %1383 = vdwg.mxu0
    %v1384 = vpack.c.bf16 %v1381, %v1378
    %1385 = vrot.lane.b32.xlu0 %v1262, 96
    %v1386 = vpop.permute.xlu0 %1385
    %1387 = vrot.lane.b32.xlu0 %v1264, 96
    %v1388 = vpop.permute.xlu0 %1387
    %v1390 = vsel %vm581, %v1386, 0
    %v1393 = vsel %vm581, %v1388, 0
    %1395 = vmatprep.subr.bf16.mxu0 0
    %1396 = vmatpush1.bf16.xpose.msra.mxu0 0
    %1397 = vmatprep.subr.bf16.mxu0 0
    %1398 = vmatpush1.bf16.xpose.msra.mxu0 0
    %1399 = vmatprep.subr.bf16.mxu0 0
    %1400 = vmatpush1.bf16.xpose.msra.mxu0 0
    %1401 = vmatprep.subr.bf16.mxu0 0
    %1402 = vmatpush1.bf16.xpose.msra.mxu0 0
    %1403 = vmatprep.subr.bf16.mxu0 0
    %1404 = vmatpush1.bf16.xpose.msra.mxu0 0
    %1405 = vmatprep.subr.bf16.mxu0 0
    %1406 = vmatpush1.bf16.xpose.msra.mxu0 0
    %1407 = vmatprep.subr.bf16.mxu0 0
    %1408 = vmatpush1.bf16.xpose.msra.mxu0 0
    %1409 = vmatprep.subr.bf16.mxu0 0
    %1410 = vmatpush1.bf16.xpose.msra.mxu0 %v1393
    %1411 = vmatprep.subr.bf16.mxu0 0
    %1412 = vmatpush2.bf16.xpose.msra.mxu0 0
    %1413 = vmatprep.subr.bf16.mxu0 0
    %1414 = vmatpush2.bf16.xpose.msra.mxu0 0
    %1415 = vmatprep.subr.bf16.mxu0 0
    %1416 = vmatpush2.bf16.xpose.msra.mxu0 0
    %1417 = vmatprep.subr.bf16.mxu0 0
    %1418 = vmatpush2.bf16.xpose.msra.mxu0 0
    %1419 = vmatprep.subr.bf16.mxu0 0
    %1420 = vmatpush2.bf16.xpose.msra.mxu0 0
    %1421 = vmatprep.subr.bf16.mxu0 0
    %1422 = vmatpush2.bf16.xpose.msra.mxu0 0
    %1423 = vmatprep.subr.bf16.mxu0 0
    %1424 = vmatpush2.bf16.xpose.msra.mxu0 0
    %1425 = vmatprep.subr.bf16.mxu0 0
    %1426 = vmatpush2.bf16.xpose.msra.mxu0 0
    %1427 = vmatprep.mubr.bf16.mxu0 0
    %1428 = vmatmul.mubr.bf16.gmra.mxu0 %v1390
    %v1429 = vpop.f32.mrf.mxu0
    %v1430 = vadd.f32 0.0, %v1429
    %v1431 = vpop.f32.mrf.mxu0
    %v1432 = vpop.f32.mrf.mxu0
    %v1433 = vadd.f32 0.0, %v1432
    %v1434 = vpop.f32.mrf.mxu0
    %1435 = vdwg.mxu0
    %v1436 = vsel %vm629, %v1430, -inf
    %1437 = vmax.xlane.f32.xlu0 %v1436
    %v1438 = vpop.xlane.xlu0 %1437
    %v1439 = vsel %vm633, %v1433, -inf
    %1440 = vmax.xlane.f32.xlu0 %v1439
    %v1441 = vpop.xlane.xlu0 %1440
    %v1442 = vsub.f32 %v1430, %v1438
    %v1443 = vsub.f32 %v1433, %v1441
    %v1444 = vmul.f32 %v1442, 1.442695
    %v1445 = vpow.pop %v1444
    %v1446 = vmul.f32 %v1443, 1.442695
    %v1447 = vpow.pop %v1446
    %v1448 = vsel %vm629, %v1445, 0.0
    %1449 = vadd.xlane.f32.xlu0 %v1448
    %v1450 = vpop.xlane.xlu0 %1449
    %v1451 = vsel %vm633, %v1447, 0.0
    %1452 = vadd.xlane.f32.xlu0 %v1451
    %v1453 = vpop.xlane.xlu0 %1452
    %v1454 = vrcp.pop %v1450
    %v1455 = vrcp.pop %v1453
    %v1456 = vmul.f32 %v1445, %v1454
    %v1457 = vmul.f32 %v1447, %v1455
    %v1458 = vpack.c.bf16 %v1457, %v1456
    %1459 = vrot.lane.b32.xlu0 %v1336, 96
    %v1460 = vpop.permute.xlu0 %1459
    %v1462 = vsel %vm629, %v1458, 0
    %v1465 = vsel %vm657, %v1460, 0
    %1467 = vmatprep.subr.bf16.mxu0 0
    %1468 = vmatpush1.bf16.msra.mxu0 0
    %1469 = vmatprep.subr.bf16.mxu0 0
    %1470 = vmatpush1.bf16.msra.mxu0 0
    %1471 = vmatprep.subr.bf16.mxu0 0
    %1472 = vmatpush1.bf16.msra.mxu0 0
    %1473 = vmatprep.subr.bf16.mxu0 0
    %1474 = vmatpush1.bf16.msra.mxu0 0
    %1475 = vmatprep.subr.bf16.mxu0 0
    %1476 = vmatpush1.bf16.msra.mxu0 0
    %1477 = vmatprep.subr.bf16.mxu0 0
    %1478 = vmatpush1.bf16.msra.mxu0 0
    %1479 = vmatprep.subr.bf16.mxu0 0
    %1480 = vmatpush1.bf16.msra.mxu0 0
    %1481 = vmatprep.subr.bf16.mxu0 0
    %1482 = vmatpush1.bf16.msra.mxu0 %v1465
    %1483 = vmatprep.subr.bf16.mxu0 0
    %1484 = vmatpush2.bf16.msra.mxu0 0
    %1485 = vmatprep.subr.bf16.mxu0 0
    %1486 = vmatpush2.bf16.msra.mxu0 0
    %1487 = vmatprep.subr.bf16.mxu0 0
    %1488 = vmatpush2.bf16.msra.mxu0 0
    %1489 = vmatprep.subr.bf16.mxu0 0
    %1490 = vmatpush2.bf16.msra.mxu0 0
    %1491 = vmatprep.subr.bf16.mxu0 0
    %1492 = vmatpush2.bf16.msra.mxu0 0
    %1493 = vmatprep.subr.bf16.mxu0 0
    %1494 = vmatpush2.bf16.msra.mxu0 0
    %1495 = vmatprep.subr.bf16.mxu0 0
    %1496 = vmatpush2.bf16.msra.mxu0 0
    %1497 = vmatprep.subr.bf16.mxu0 0
    %1498 = vmatpush2.bf16.msra.mxu0 0
    %1499 = vmatprep.mubr.bf16.mxu0 0
    %1500 = vmatmul.mubr.bf16.gmra.mxu0 %v1462
    %v1501 = vpop.f32.mrf.mxu0
    %v1502 = vadd.f32 0.0, %v1501
    %v1503 = vpop.f32.mrf.mxu0
    %v1504 = vpop.f32.mrf.mxu0
    %v1505 = vadd.f32 0.0, %v1504
    %v1506 = vpop.f32.mrf.mxu0
    %1507 = vdwg.mxu0
    %v1508 = vpack.c.bf16 %v1505, %v1502
    %v1510 = vsel %vm581, %v1508, 0
    %1512 = vmatprep.subr.bf16.mxu0 0
    %1513 = vmatpush1.bf16.msra.mxu0 0
    %1514 = vmatprep.subr.bf16.mxu0 0
    %1515 = vmatpush1.bf16.msra.mxu0 0
    %1516 = vmatprep.subr.bf16.mxu0 0
    %1517 = vmatpush1.bf16.msra.mxu0 0
    %1518 = vmatprep.subr.bf16.mxu0 0
    %1519 = vmatpush1.bf16.msra.mxu0 0
    %1520 = vmatprep.subr.bf16.mxu0 0
    %1521 = vmatpush1.bf16.msra.mxu0 0
    %1522 = vmatprep.subr.bf16.mxu0 0
    %1523 = vmatpush1.bf16.msra.mxu0 0
    %1524 = vmatprep.subr.bf16.mxu0 0
    %1525 = vmatpush1.bf16.msra.mxu0 %v573
    %1526 = vmatprep.subr.bf16.mxu0 0
    %1527 = vmatpush1.bf16.msra.mxu0 %v572
    %1528 = vmatprep.subr.bf16.mxu0 0
    %1529 = vmatpush2.bf16.msra.mxu0 0
    %1530 = vmatprep.subr.bf16.mxu0 0
    %1531 = vmatpush2.bf16.msra.mxu0 0
    %1532 = vmatprep.subr.bf16.mxu0 0
    %1533 = vmatpush2.bf16.msra.mxu0 0
    %1534 = vmatprep.subr.bf16.mxu0 0
    %1535 = vmatpush2.bf16.msra.mxu0 0
    %1536 = vmatprep.subr.bf16.mxu0 0
    %1537 = vmatpush2.bf16.msra.mxu0 0
    %1538 = vmatprep.subr.bf16.mxu0 0
    %1539 = vmatpush2.bf16.msra.mxu0 0
    %1540 = vmatprep.subr.bf16.mxu0 0
    %1541 = vmatpush2.bf16.msra.mxu0 0
    %1542 = vmatprep.subr.bf16.mxu0 0
    %1543 = vmatpush2.bf16.msra.mxu0 0
    %1544 = vmatprep.mubr.bf16.mxu0 0
    %1545 = vmatmul.mubr.bf16.gmra.mxu0 %v1510
    %v1546 = vpop.f32.mrf.mxu0
    %v1547 = vadd.f32 0.0, %v1546
    %v1548 = vpop.f32.mrf.mxu0
    %v1549 = vpop.f32.mrf.mxu0
    %v1550 = vadd.f32 0.0, %v1549
    %v1551 = vpop.f32.mrf.mxu0
    %1552 = vdwg.mxu0
    %v1554 = vsel %vm581, %v1384, 0
    %1556 = vmatprep.subr.bf16.mxu0 0
    %1557 = vmatpush1.bf16.msra.mxu0 0
    %1558 = vmatprep.subr.bf16.mxu0 0
    %1559 = vmatpush1.bf16.msra.mxu0 0
    %1560 = vmatprep.subr.bf16.mxu0 0
    %1561 = vmatpush1.bf16.msra.mxu0 0
    %1562 = vmatprep.subr.bf16.mxu0 0
    %1563 = vmatpush1.bf16.msra.mxu0 0
    %1564 = vmatprep.subr.bf16.mxu0 0
    %1565 = vmatpush1.bf16.msra.mxu0 0
    %1566 = vmatprep.subr.bf16.mxu0 0
    %1567 = vmatpush1.bf16.msra.mxu0 0
    %1568 = vmatprep.subr.bf16.mxu0 0
    %1569 = vmatpush1.bf16.msra.mxu0 %v571
    %1570 = vmatprep.subr.bf16.mxu0 0
    %1571 = vmatpush1.bf16.msra.mxu0 %v570
    %1572 = vmatprep.subr.bf16.mxu0 0
    %1573 = vmatpush2.bf16.msra.mxu0 0
    %1574 = vmatprep.subr.bf16.mxu0 0
    %1575 = vmatpush2.bf16.msra.mxu0 0
    %1576 = vmatprep.subr.bf16.mxu0 0
    %1577 = vmatpush2.bf16.msra.mxu0 0
    %1578 = vmatprep.subr.bf16.mxu0 0
    %1579 = vmatpush2.bf16.msra.mxu0 0
    %1580 = vmatprep.subr.bf16.mxu0 0
    %1581 = vmatpush2.bf16.msra.mxu0 0
    %1582 = vmatprep.subr.bf16.mxu0 0
    %1583 = vmatpush2.bf16.msra.mxu0 0
    %1584 = vmatprep.subr.bf16.mxu0 0
    %1585 = vmatpush2.bf16.msra.mxu0 0
    %1586 = vmatprep.subr.bf16.mxu0 0
    %1587 = vmatpush2.bf16.msra.mxu0 0
    %1588 = vmatprep.mubr.bf16.mxu0 0
    %1589 = vmatmul.mubr.bf16.gmra.mxu0 %v1554
    %v1590 = vpop.f32.mrf.mxu0
    %v1591 = vadd.f32 %v1547, %v1590
    %v1592 = vpop.f32.mrf.mxu0
    %v1593 = vpop.f32.mrf.mxu0
    %v1594 = vadd.f32 %v1550, %v1593
    %v1595 = vpop.f32.mrf.mxu0
    %1596 = vdwg.mxu0
    %1597 = vrot.lane.b32.xlu0 %v1262, 64
    %v1598 = vpop.permute.xlu0 %1597
    %1599 = vrot.lane.b32.xlu0 %v1264, 64
    %v1600 = vpop.permute.xlu0 %1599
    %v1602 = vsel %vm581, %v1598, 0
    %v1605 = vsel %vm581, %v1600, 0
    %1607 = vmatprep.subr.bf16.mxu0 0
    %1608 = vmatpush1.bf16.xpose.msra.mxu0 0
    %1609 = vmatprep.subr.bf16.mxu0 0
    %1610 = vmatpush1.bf16.xpose.msra.mxu0 0
    %1611 = vmatprep.subr.bf16.mxu0 0
    %1612 = vmatpush1.bf16.xpose.msra.mxu0 0
    %1613 = vmatprep.subr.bf16.mxu0 0
    %1614 = vmatpush1.bf16.xpose.msra.mxu0 0
    %1615 = vmatprep.subr.bf16.mxu0 0
    %1616 = vmatpush1.bf16.xpose.msra.mxu0 0
    %1617 = vmatprep.subr.bf16.mxu0 0
    %1618 = vmatpush1.bf16.xpose.msra.mxu0 0
    %1619 = vmatprep.subr.bf16.mxu0 0
    %1620 = vmatpush1.bf16.xpose.msra.mxu0 0
    %1621 = vmatprep.subr.bf16.mxu0 0
    %1622 = vmatpush1.bf16.xpose.msra.mxu0 %v1605
    %1623 = vmatprep.subr.bf16.mxu0 0
    %1624 = vmatpush2.bf16.xpose.msra.mxu0 0
    %1625 = vmatprep.subr.bf16.mxu0 0
    %1626 = vmatpush2.bf16.xpose.msra.mxu0 0
    %1627 = vmatprep.subr.bf16.mxu0 0
    %1628 = vmatpush2.bf16.xpose.msra.mxu0 0
    %1629 = vmatprep.subr.bf16.mxu0 0
    %1630 = vmatpush2.bf16.xpose.msra.mxu0 0
    %1631 = vmatprep.subr.bf16.mxu0 0
    %1632 = vmatpush2.bf16.xpose.msra.mxu0 0
    %1633 = vmatprep.subr.bf16.mxu0 0
    %1634 = vmatpush2.bf16.xpose.msra.mxu0 0
    %1635 = vmatprep.subr.bf16.mxu0 0
    %1636 = vmatpush2.bf16.xpose.msra.mxu0 0
    %1637 = vmatprep.subr.bf16.mxu0 0
    %1638 = vmatpush2.bf16.xpose.msra.mxu0 0
    %1639 = vmatprep.mubr.bf16.mxu0 0
    %1640 = vmatmul.mubr.bf16.gmra.mxu0 %v1602
    %v1641 = vpop.f32.mrf.mxu0
    %v1642 = vadd.f32 0.0, %v1641
    %v1643 = vpop.f32.mrf.mxu0
    %v1644 = vpop.f32.mrf.mxu0
    %v1645 = vadd.f32 0.0, %v1644
    %v1646 = vpop.f32.mrf.mxu0
    %1647 = vdwg.mxu0
    %v1648 = vsel %vm629, %v1642, -inf
    %1649 = vmax.xlane.f32.xlu0 %v1648
    %v1650 = vpop.xlane.xlu0 %1649
    %v1651 = vsel %vm633, %v1645, -inf
    %1652 = vmax.xlane.f32.xlu0 %v1651
    %v1653 = vpop.xlane.xlu0 %1652
    %v1654 = vsub.f32 %v1642, %v1650
    %v1655 = vsub.f32 %v1645, %v1653
    %v1656 = vmul.f32 %v1654, 1.442695
    %v1657 = vpow.pop %v1656
    %v1658 = vmul.f32 %v1655, 1.442695
    %v1659 = vpow.pop %v1658
    %v1660 = vsel %vm629, %v1657, 0.0
    %1661 = vadd.xlane.f32.xlu0 %v1660
    %v1662 = vpop.xlane.xlu0 %1661
    %v1663 = vsel %vm633, %v1659, 0.0
    %1664 = vadd.xlane.f32.xlu0 %v1663
    %v1665 = vpop.xlane.xlu0 %1664
    %v1666 = vrcp.pop %v1662
    %v1667 = vrcp.pop %v1665
    %v1668 = vmul.f32 %v1657, %v1666
    %v1669 = vmul.f32 %v1659, %v1667
    %v1670 = vpack.c.bf16 %v1669, %v1668
    %1671 = vrot.lane.b32.xlu0 %v1336, 64
    %v1672 = vpop.permute.xlu0 %1671
    %v1674 = vsel %vm629, %v1670, 0
    %v1677 = vsel %vm657, %v1672, 0
    %1679 = vmatprep.subr.bf16.mxu0 0
    %1680 = vmatpush1.bf16.msra.mxu0 0
    %1681 = vmatprep.subr.bf16.mxu0 0
    %1682 = vmatpush1.bf16.msra.mxu0 0
    %1683 = vmatprep.subr.bf16.mxu0 0
    %1684 = vmatpush1.bf16.msra.mxu0 0
    %1685 = vmatprep.subr.bf16.mxu0 0
    %1686 = vmatpush1.bf16.msra.mxu0 0
    %1687 = vmatprep.subr.bf16.mxu0 0
    %1688 = vmatpush1.bf16.msra.mxu0 0
    %1689 = vmatprep.subr.bf16.mxu0 0
    %1690 = vmatpush1.bf16.msra.mxu0 0
    %1691 = vmatprep.subr.bf16.mxu0 0
    %1692 = vmatpush1.bf16.msra.mxu0 0
    %1693 = vmatprep.subr.bf16.mxu0 0
    %1694 = vmatpush1.bf16.msra.mxu0 %v1677
    %1695 = vmatprep.subr.bf16.mxu0 0
    %1696 = vmatpush2.bf16.msra.mxu0 0
    %1697 = vmatprep.subr.bf16.mxu0 0
    %1698 = vmatpush2.bf16.msra.mxu0 0
    %1699 = vmatprep.subr.bf16.mxu0 0
    %1700 = vmatpush2.bf16.msra.mxu0 0
    %1701 = vmatprep.subr.bf16.mxu0 0
    %1702 = vmatpush2.bf16.msra.mxu0 0
    %1703 = vmatprep.subr.bf16.mxu0 0
    %1704 = vmatpush2.bf16.msra.mxu0 0
    %1705 = vmatprep.subr.bf16.mxu0 0
    %1706 = vmatpush2.bf16.msra.mxu0 0
    %1707 = vmatprep.subr.bf16.mxu0 0
    %1708 = vmatpush2.bf16.msra.mxu0 0
    %1709 = vmatprep.subr.bf16.mxu0 0
    %1710 = vmatpush2.bf16.msra.mxu0 0
    %1711 = vmatprep.mubr.bf16.mxu0 0
    %1712 = vmatmul.mubr.bf16.gmra.mxu0 %v1674
    %v1713 = vpop.f32.mrf.mxu0
    %v1714 = vadd.f32 0.0, %v1713
    %v1715 = vpop.f32.mrf.mxu0
    %v1716 = vpop.f32.mrf.mxu0
    %v1717 = vadd.f32 0.0, %v1716
    %v1718 = vpop.f32.mrf.mxu0
    %1719 = vdwg.mxu0
    %v1720 = vpack.c.bf16 %v1717, %v1714
    %v1722 = vsel %vm581, %v1720, 0
    %1724 = vmatprep.subr.bf16.mxu0 0
    %1725 = vmatpush1.bf16.msra.mxu0 0
    %1726 = vmatprep.subr.bf16.mxu0 0
    %1727 = vmatpush1.bf16.msra.mxu0 0
    %1728 = vmatprep.subr.bf16.mxu0 0
    %1729 = vmatpush1.bf16.msra.mxu0 0
    %1730 = vmatprep.subr.bf16.mxu0 0
    %1731 = vmatpush1.bf16.msra.mxu0 0
    %1732 = vmatprep.subr.bf16.mxu0 0
    %1733 = vmatpush1.bf16.msra.mxu0 0
    %1734 = vmatprep.subr.bf16.mxu0 0
    %1735 = vmatpush1.bf16.msra.mxu0 0
    %1736 = vmatprep.subr.bf16.mxu0 0
    %1737 = vmatpush1.bf16.msra.mxu0 %v575
    %1738 = vmatprep.subr.bf16.mxu0 0
    %1739 = vmatpush1.bf16.msra.mxu0 %v574
    %1740 = vmatprep.subr.bf16.mxu0 0
    %1741 = vmatpush2.bf16.msra.mxu0 0
    %1742 = vmatprep.subr.bf16.mxu0 0
    %1743 = vmatpush2.bf16.msra.mxu0 0
    %1744 = vmatprep.subr.bf16.mxu0 0
    %1745 = vmatpush2.bf16.msra.mxu0 0
    %1746 = vmatprep.subr.bf16.mxu0 0
    %1747 = vmatpush2.bf16.msra.mxu0 0
    %1748 = vmatprep.subr.bf16.mxu0 0
    %1749 = vmatpush2.bf16.msra.mxu0 0
    %1750 = vmatprep.subr.bf16.mxu0 0
    %1751 = vmatpush2.bf16.msra.mxu0 0
    %1752 = vmatprep.subr.bf16.mxu0 0
    %1753 = vmatpush2.bf16.msra.mxu0 0
    %1754 = vmatprep.subr.bf16.mxu0 0
    %1755 = vmatpush2.bf16.msra.mxu0 0
    %1756 = vmatprep.mubr.bf16.mxu0 0
    %1757 = vmatmul.mubr.bf16.gmra.mxu0 %v1722
    %v1758 = vpop.f32.mrf.mxu0
    %v1759 = vadd.f32 0.0, %v1758
    %v1760 = vpop.f32.mrf.mxu0
    %v1761 = vpop.f32.mrf.mxu0
    %v1762 = vadd.f32 0.0, %v1761
    %v1763 = vpop.f32.mrf.mxu0
    %1764 = vdwg.mxu0
    %v1765 = vadd.f32 %v1591, %v1759
    %v1766 = vadd.f32 %v1594, %v1762
    %1767 = vrot.lane.b32.xlu0 %v1262, 32
    %v1768 = vpop.permute.xlu0 %1767
    %1769 = vrot.lane.b32.xlu0 %v1264, 32
    %v1770 = vpop.permute.xlu0 %1769
    %v1772 = vsel %vm581, %v1768, 0
    %v1775 = vsel %vm581, %v1770, 0
    %1777 = vmatprep.subr.bf16.mxu0 0
    %1778 = vmatpush1.bf16.xpose.msra.mxu0 0
    %1779 = vmatprep.subr.bf16.mxu0 0
    %1780 = vmatpush1.bf16.xpose.msra.mxu0 0
    %1781 = vmatprep.subr.bf16.mxu0 0
    %1782 = vmatpush1.bf16.xpose.msra.mxu0 0
    %1783 = vmatprep.subr.bf16.mxu0 0
    %1784 = vmatpush1.bf16.xpose.msra.mxu0 0
    %1785 = vmatprep.subr.bf16.mxu0 0
    %1786 = vmatpush1.bf16.xpose.msra.mxu0 0
    %1787 = vmatprep.subr.bf16.mxu0 0
    %1788 = vmatpush1.bf16.xpose.msra.mxu0 0
    %1789 = vmatprep.subr.bf16.mxu0 0
    %1790 = vmatpush1.bf16.xpose.msra.mxu0 0
    %1791 = vmatprep.subr.bf16.mxu0 0
    %1792 = vmatpush1.bf16.xpose.msra.mxu0 %v1775
    %1793 = vmatprep.subr.bf16.mxu0 0
    %1794 = vmatpush2.bf16.xpose.msra.mxu0 0
    %1795 = vmatprep.subr.bf16.mxu0 0
    %1796 = vmatpush2.bf16.xpose.msra.mxu0 0
    %1797 = vmatprep.subr.bf16.mxu0 0
    %1798 = vmatpush2.bf16.xpose.msra.mxu0 0
    %1799 = vmatprep.subr.bf16.mxu0 0
    %1800 = vmatpush2.bf16.xpose.msra.mxu0 0
    %1801 = vmatprep.subr.bf16.mxu0 0
    %1802 = vmatpush2.bf16.xpose.msra.mxu0 0
    %1803 = vmatprep.subr.bf16.mxu0 0
    %1804 = vmatpush2.bf16.xpose.msra.mxu0 0
    %1805 = vmatprep.subr.bf16.mxu0 0
    %1806 = vmatpush2.bf16.xpose.msra.mxu0 0
    %1807 = vmatprep.subr.bf16.mxu0 0
    %1808 = vmatpush2.bf16.xpose.msra.mxu0 0
    %1809 = vmatprep.mubr.bf16.mxu0 0
    %1810 = vmatmul.mubr.bf16.gmra.mxu0 %v1772
    %v1811 = vpop.f32.mrf.mxu0
    %v1812 = vadd.f32 0.0, %v1811
    %v1813 = vpop.f32.mrf.mxu0
    %v1814 = vpop.f32.mrf.mxu0
    %v1815 = vadd.f32 0.0, %v1814
    %v1816 = vpop.f32.mrf.mxu0
    %1817 = vdwg.mxu0
    %v1818 = vsel %vm629, %v1812, -inf
    %1819 = vmax.xlane.f32.xlu0 %v1818
    %v1820 = vpop.xlane.xlu0 %1819
    %v1821 = vsel %vm633, %v1815, -inf
    %1822 = vmax.xlane.f32.xlu0 %v1821
    %v1823 = vpop.xlane.xlu0 %1822
    %v1824 = vsub.f32 %v1812, %v1820
    %v1825 = vsub.f32 %v1815, %v1823
    %v1826 = vmul.f32 %v1824, 1.442695
    %v1827 = vpow.pop %v1826
    %v1828 = vmul.f32 %v1825, 1.442695
    %v1829 = vpow.pop %v1828
    %v1830 = vsel %vm629, %v1827, 0.0
    %1831 = vadd.xlane.f32.xlu0 %v1830
    %v1832 = vpop.xlane.xlu0 %1831
    %v1833 = vsel %vm633, %v1829, 0.0
    %1834 = vadd.xlane.f32.xlu0 %v1833
    %v1835 = vpop.xlane.xlu0 %1834
    %v1836 = vrcp.pop %v1832
    %v1837 = vrcp.pop %v1835
    %v1838 = vmul.f32 %v1827, %v1836
    %v1839 = vmul.f32 %v1829, %v1837
    %v1840 = vpack.c.bf16 %v1839, %v1838
    %1841 = vrot.lane.b32.xlu0 %v1336, 32
    %v1842 = vpop.permute.xlu0 %1841
    %v1844 = vsel %vm629, %v1840, 0
    %v1847 = vsel %vm657, %v1842, 0
    %1849 = vmatprep.subr.bf16.mxu0 0
    %1850 = vmatpush1.bf16.msra.mxu0 0
    %1851 = vmatprep.subr.bf16.mxu0 0
    %1852 = vmatpush1.bf16.msra.mxu0 0
    %1853 = vmatprep.subr.bf16.mxu0 0
    %1854 = vmatpush1.bf16.msra.mxu0 0
    %1855 = vmatprep.subr.bf16.mxu0 0
    %1856 = vmatpush1.bf16.msra.mxu0 0
    %1857 = vmatprep.subr.bf16.mxu0 0
    %1858 = vmatpush1.bf16.msra.mxu0 0
    %1859 = vmatprep.subr.bf16.mxu0 0
    %1860 = vmatpush1.bf16.msra.mxu0 0
    %1861 = vmatprep.subr.bf16.mxu0 0
    %1862 = vmatpush1.bf16.msra.mxu0 0
    %1863 = vmatprep.subr.bf16.mxu0 0
    %1864 = vmatpush1.bf16.msra.mxu0 %v1847
    %1865 = vmatprep.subr.bf16.mxu0 0
    %1866 = vmatpush2.bf16.msra.mxu0 0
    %1867 = vmatprep.subr.bf16.mxu0 0
    %1868 = vmatpush2.bf16.msra.mxu0 0
    %1869 = vmatprep.subr.bf16.mxu0 0
    %1870 = vmatpush2.bf16.msra.mxu0 0
    %1871 = vmatprep.subr.bf16.mxu0 0
    %1872 = vmatpush2.bf16.msra.mxu0 0
    %1873 = vmatprep.subr.bf16.mxu0 0
    %1874 = vmatpush2.bf16.msra.mxu0 0
    %1875 = vmatprep.subr.bf16.mxu0 0
    %1876 = vmatpush2.bf16.msra.mxu0 0
    %1877 = vmatprep.subr.bf16.mxu0 0
    %1878 = vmatpush2.bf16.msra.mxu0 0
    %1879 = vmatprep.subr.bf16.mxu0 0
    %1880 = vmatpush2.bf16.msra.mxu0 0
    %1881 = vmatprep.mubr.bf16.mxu0 0
    %1882 = vmatmul.mubr.bf16.gmra.mxu0 %v1844
    %v1883 = vpop.f32.mrf.mxu0
    %v1884 = vadd.f32 0.0, %v1883
    %v1885 = vpop.f32.mrf.mxu0
    %v1886 = vpop.f32.mrf.mxu0
    %v1887 = vadd.f32 0.0, %v1886
    %v1888 = vpop.f32.mrf.mxu0
    %1889 = vdwg.mxu0
    %v1890 = vpack.c.bf16 %v1887, %v1884
    %v1892 = vsel %vm581, %v1890, 0
    %1894 = vmatprep.subr.bf16.mxu0 0
    %1895 = vmatpush1.bf16.msra.mxu0 0
    %1896 = vmatprep.subr.bf16.mxu0 0
    %1897 = vmatpush1.bf16.msra.mxu0 0
    %1898 = vmatprep.subr.bf16.mxu0 0
    %1899 = vmatpush1.bf16.msra.mxu0 0
    %1900 = vmatprep.subr.bf16.mxu0 0
    %1901 = vmatpush1.bf16.msra.mxu0 0
    %1902 = vmatprep.subr.bf16.mxu0 0
    %1903 = vmatpush1.bf16.msra.mxu0 0
    %1904 = vmatprep.subr.bf16.mxu0 0
    %1905 = vmatpush1.bf16.msra.mxu0 0
    %1906 = vmatprep.subr.bf16.mxu0 0
    %1907 = vmatpush1.bf16.msra.mxu0 %v577
    %1908 = vmatprep.subr.bf16.mxu0 0
    %1909 = vmatpush1.bf16.msra.mxu0 %v576
    %1910 = vmatprep.subr.bf16.mxu0 0
    %1911 = vmatpush2.bf16.msra.mxu0 0
    %1912 = vmatprep.subr.bf16.mxu0 0
    %1913 = vmatpush2.bf16.msra.mxu0 0
    %1914 = vmatprep.subr.bf16.mxu0 0
    %1915 = vmatpush2.bf16.msra.mxu0 0
    %1916 = vmatprep.subr.bf16.mxu0 0
    %1917 = vmatpush2.bf16.msra.mxu0 0
    %1918 = vmatprep.subr.bf16.mxu0 0
    %1919 = vmatpush2.bf16.msra.mxu0 0
    %1920 = vmatprep.subr.bf16.mxu0 0
    %1921 = vmatpush2.bf16.msra.mxu0 0
    %1922 = vmatprep.subr.bf16.mxu0 0
    %1923 = vmatpush2.bf16.msra.mxu0 0
    %1924 = vmatprep.subr.bf16.mxu0 0
    %1925 = vmatpush2.bf16.msra.mxu0 0
    %1926 = vmatprep.mubr.bf16.mxu0 0
    %1927 = vmatmul.mubr.bf16.gmra.mxu0 %v1892
    %v1928 = vpop.f32.mrf.mxu0
    %v1929 = vadd.f32 0.0, %v1928
    %v1930 = vpop.f32.mrf.mxu0
    %v1931 = vpop.f32.mrf.mxu0
    %v1932 = vadd.f32 0.0, %v1931
    %v1933 = vpop.f32.mrf.mxu0
    %1934 = vdwg.mxu0
    %v1935 = vadd.f32 %v1765, %v1929
    %v1936 = vadd.f32 %v1766, %v1932
    %v1939 = vrot.slane %v1935, 6
    %v1940 = vrot.slane %v1936, 6
    %v1941 = vsel %vm300, %v1939, %v1940
    %v1944 = vsel %vm300, %v1257, %v1939
    %v1945 = vld [vmem:[#allocation4 + $0x248] sm:$0x1]
    %v1946 = vlaneseq
    %v1947 = vshrl.u32 %v1946, 7
    %v1948 = vsub.s32 0, %v1947
    %v1949 = vrot.slane %v1945, %v1948
    %v1950 = vadd.f32 %v1256, %v1949
    %v1951 = vadd.f32 %v1944, %v1949
    %v1952 = vadd.f32 %v1941, %v1949
    %v1953 = vadd.f32 %v360, %v1950
    %v1954 = vadd.f32 %v361, %v1951
    %v1955 = vadd.f32 %v362, %v1952
    %1956 = vadd.xlane.f32.xlu0 %v1953
    %v1957 = vpop.xlane.xlu0 %1956
    %1958 = vadd.xlane.f32.xlu0 %v1954
    %v1959 = vpop.xlane.xlu0 %1958
    %v1960 = vsel %vm314, %v1955, 0.0
    %1961 = vadd.xlane.f32.xlu0 %v1960
    %v1962 = vpop.xlane.xlu0 %1961
    %v1963 = vmul.f32 %v1957, %v318
    %v1964 = vmul.f32 %v1959, %v318
    %v1965 = vmul.f32 %v1962, %v318
    %v1966 = vsub.f32 %v1953, %v1963
    %v1967 = vsub.f32 %v1954, %v1964
    %v1968 = vsub.f32 %v1955, %v1965
    %v1969 = vmul.f32 %v1966, %v1966
    %v1970 = vmul.f32 %v1967, %v1967
    %v1971 = vmul.f32 %v1968, %v1968
    %1972 = vadd.xlane.f32.xlu0 %v1969
    %v1973 = vpop.xlane.xlu0 %1972
    %1974 = vadd.xlane.f32.xlu0 %v1970
    %v1975 = vpop.xlane.xlu0 %1974
    %v1976 = vsel %vm314, %v1971, 0.0
    %1977 = vadd.xlane.f32.xlu0 %v1976
    %v1978 = vpop.xlane.xlu0 %1977
    %v1979 = vmul.f32 %v1973, %v318
    %v1980 = vmul.f32 %v1975, %v318
    %v1981 = vmul.f32 %v1978, %v318
    %v1982 = vadd.f32 %v1979, 1e-05
    %v1983 = vadd.f32 %v1980, 1e-05
    %v1984 = vadd.f32 %v1981, 1e-05
    %v1985 = vrsqrt.pop %v1982
    %v1986 = vrsqrt.pop %v1983
    %v1987 = vrsqrt.pop %v1984
    %v1988 = vmul.f32 %v1966, %v1985
    %v1989 = vmul.f32 %v1967, %v1986
    %v1990 = vmul.f32 %v1968, %v1987
    %v1991 = vld [vmem:[#allocation4 + $0x250] sm:$0x1]
    %v1992 = vlaneseq
    %v1993 = vshrl.u32 %v1992, 7
    %v1994 = vsub.s32 0, %v1993
    %v1995 = vrot.slane %v1991, %v1994
    %v1996 = vmul.f32 %v1988, %v1995
    %v1997 = vmul.f32 %v1989, %v1995
    %v1998 = vmul.f32 %v1990, %v1995
    %v1999 = vld [vmem:[#allocation4 + $0x258] sm:$0x1]
    %v2000 = vlaneseq
    %v2001 = vshrl.u32 %v2000, 7
    %v2002 = vsub.s32 0, %v2001
    %v2003 = vrot.slane %v1999, %v2002
    %v2004 = vadd.f32 %v1996, %v2003
    %v2005 = vadd.f32 %v1997, %v2003
    %v2006 = vadd.f32 %v1998, %v2003
    %v2007 = vpack.c.bf16 %v2005, %v2004
    %v2008 = vpack.c.bf16 %v2006, %v2006
    %v2009 = vld [vmem:[#allocation6 + $0x110] sm:$0xff]
    %v2010 = vld [vmem:[#allocation6 + $0x118] sm:$0xff]
    %v2011 = vld [vmem:[#allocation6 + $0x120] sm:$0xff]
    %v2012 = vld [vmem:[#allocation6 + $0x128] sm:$0xff]
    %v2013 = vld [vmem:[#allocation6 + $0x130] sm:$0xff]
    %v2014 = vld [vmem:[#allocation6 + $0x138] sm:$0xff]
    %v2015 = vld [vmem:[#allocation6 + $0x140] sm:$0xff]
    %v2016 = vld [vmem:[#allocation6 + $0x148] sm:$0xff]
    %v2017 = vld [vmem:[#allocation6 + $0x150] sm:$0xff]
    %v2018 = vld [vmem:[#allocation6 + $0x158] sm:$0xff]
    %v2019 = vld [vmem:[#allocation6 + $0x160] sm:$0xff]
    %v2020 = vld [vmem:[#allocation6 + $0x168] sm:$0xff]
    %v2021 = vld [vmem:[#allocation6 + $0x170] sm:$0xff]
    %v2022 = vld [vmem:[#allocation6 + $0x178] sm:$0xff]
    %v2023 = vld [vmem:[#allocation6 + $0x180] sm:$0xff]
    %v2024 = vld [vmem:[#allocation6 + $0x188] sm:$0xff]
    %v2025 = vld [vmem:[#allocation6 + $0x190] sm:$0xff]
    %v2026 = vld [vmem:[#allocation6 + $0x198] sm:$0xff]
    %v2027 = vld [vmem:[#allocation6 + $0x1a0] sm:$0xff]
    %v2028 = vld [vmem:[#allocation6 + $0x1a8] sm:$0xff]
    %v2029 = vld [vmem:[#allocation6 + $0x1b0] sm:$0xff]
    %v2030 = vld [vmem:[#allocation6 + $0x1b8] sm:$0xff]
    %v2031 = vld [vmem:[#allocation6 + $0x1c0] sm:$0xff]
    %v2032 = vld [vmem:[#allocation6 + $0x1c8] sm:$0xff]
    %v2033 = vld [vmem:[#allocation6 + $0x1d0] sm:$0xff]
    %v2034 = vld [vmem:[#allocation6 + $0x1d8] sm:$0xff]
    %v2035 = vld [vmem:[#allocation6 + $0x1e0] sm:$0xff]
    %v2036 = vld [vmem:[#allocation6 + $0x1e8] sm:$0xff]
    %v2037 = vld [vmem:[#allocation6 + $0x1f0] sm:$0xff]
    %v2038 = vld [vmem:[#allocation6 + $0x1f8] sm:$0xff]
    %v2039 = vld [vmem:[#allocation6 + $0x200] sm:$0xff]
    %v2040 = vld [vmem:[#allocation6 + $0x208] sm:$0xff]
    %v2041 = vpack.c.bf16 %v2011, %v2009
    %v2042 = vpack.c.bf16 %v2012, %v2010
    %v2043 = vpack.c.bf16 %v2015, %v2013
    %v2044 = vpack.c.bf16 %v2016, %v2014
    %v2045 = vpack.c.bf16 %v2019, %v2017
    %v2046 = vpack.c.bf16 %v2020, %v2018
    %v2047 = vpack.c.bf16 %v2023, %v2021
    %v2048 = vpack.c.bf16 %v2024, %v2022
    %v2049 = vpack.c.bf16 %v2027, %v2025
    %v2050 = vpack.c.bf16 %v2028, %v2026
    %v2051 = vpack.c.bf16 %v2031, %v2029
    %v2052 = vpack.c.bf16 %v2032, %v2030
    %v2053 = vpack.c.bf16 %v2035, %v2033
    %v2054 = vpack.c.bf16 %v2036, %v2034
    %v2055 = vpack.c.bf16 %v2039, %v2037
    %v2056 = vpack.c.bf16 %v2040, %v2038
    %s2057 = scalar_lea.vmem [#allocation6], 528
    %v2058 = vld [vmem:[%s2057] ss:$8 sm:$0x3]
    %v2060 = vlaneseq
    %v2061 = vshrl.u32 %v2060, 7
    %v2062 = vsub.s32 0, %v2061
    %v2063 = vrot.slane %v2058, %v2062
    %v2064 = vlaneseq
    %v2065 = vshrl.u32 %v2064, 7
    %v2066 = vsub.s32 1, %v2065
    %v2067 = vrot.slane %v2058, %v2066
    %2070 = vmatprep.subr.bf16.mxu0 %v2056
    %2071 = vmatpush1.bf16.msra.mxu0 %v2055
    %2072 = vmatprep.subr.bf16.mxu0 %v2054
    %2073 = vmatpush1.bf16.msra.mxu0 %v2053
    %2074 = vmatprep.subr.bf16.mxu0 %v2052
    %2075 = vmatpush1.bf16.msra.mxu0 %v2051
    %2076 = vmatprep.subr.bf16.mxu0 %v2050
    %2077 = vmatpush1.bf16.msra.mxu0 %v2049
    %2078 = vmatprep.subr.bf16.mxu0 %v2048
    %2079 = vmatpush1.bf16.msra.mxu0 %v2047
    %2080 = vmatprep.subr.bf16.mxu0 %v2046
    %2081 = vmatpush1.bf16.msra.mxu0 %v2045
    %2082 = vmatprep.subr.bf16.mxu0 %v2044
    %2083 = vmatpush1.bf16.msra.mxu0 %v2043
    %2084 = vmatprep.subr.bf16.mxu0 %v2042
    %2085 = vmatpush1.bf16.msra.mxu0 %v2041
    %2086 = vmatprep.subr.bf16.mxu0 0
    %2087 = vmatpush2.bf16.msra.mxu0 0
    %2088 = vmatprep.subr.bf16.mxu0 0
    %2089 = vmatpush2.bf16.msra.mxu0 0
    %2090 = vmatprep.subr.bf16.mxu0 0
    %2091 = vmatpush2.bf16.msra.mxu0 0
    %2092 = vmatprep.subr.bf16.mxu0 0
    %2093 = vmatpush2.bf16.msra.mxu0 0
    %2094 = vmatprep.subr.bf16.mxu0 0
    %2095 = vmatpush2.bf16.msra.mxu0 0
    %2096 = vmatprep.subr.bf16.mxu0 0
    %2097 = vmatpush2.bf16.msra.mxu0 0
    %2098 = vmatprep.subr.bf16.mxu0 0
    %2099 = vmatpush2.bf16.msra.mxu0 0
    %2100 = vmatprep.subr.bf16.mxu0 0
    %2101 = vmatpush2.bf16.msra.mxu0 0
    %2102 = vmatprep.mubr.bf16.mxu0 0
    %2103 = vmatmul.mubr.bf16.gmra.mxu0 %v2007
    %v2104 = vpop.f32.mrf.mxu0
    %v2105 = vadd.f32 %v2063, %v2104
    %v2106 = vpop.f32.mrf.mxu0
    %v2107 = vadd.f32 %v2067, %v2106
    %v2108 = vpop.f32.mrf.mxu0
    %v2109 = vadd.f32 %v2063, %v2108
    %v2110 = vpop.f32.mrf.mxu0
    %v2111 = vadd.f32 %v2067, %v2110
    %2112 = vmatprep.mubr.bf16.mxu0 0
    %2113 = vmatmul.mubr.bf16.gmra.mxu0 %v2008
    %v2114 = vpop.f32.mrf.mxu0
    %v2115 = vadd.f32 %v2063, %v2114
    %v2116 = vpop.f32.mrf.mxu0
    %v2117 = vadd.f32 %v2067, %v2116
    %v2118 = vpop.f32.mrf.mxu0
    %v2119 = vpop.f32.mrf.mxu0
    %2120 = vdwg.mxu0
    %v2121 = vmul.f32 %v2105, %v2105
    %v2122 = vmul.f32 %v2107, %v2107
    %v2123 = vmul.f32 %v2109, %v2109
    %v2124 = vmul.f32 %v2111, %v2111
    %v2125 = vmul.f32 %v2115, %v2115
    %v2126 = vmul.f32 %v2117, %v2117
    %v2127 = vmul.f32 %v2105, %v2121
    %v2128 = vmul.f32 %v2107, %v2122
    %v2129 = vmul.f32 %v2109, %v2123
    %v2130 = vmul.f32 %v2111, %v2124
    %v2131 = vmul.f32 %v2115, %v2125
    %v2132 = vmul.f32 %v2117, %v2126
    %v2133 = vmul.f32 %v2127, 0.044715
    %v2134 = vmul.f32 %v2128, 0.044715
    %v2135 = vmul.f32 %v2129, 0.044715
    %v2136 = vmul.f32 %v2130, 0.044715
    %v2137 = vmul.f32 %v2131, 0.044715
    %v2138 = vmul.f32 %v2132, 0.044715
    %v2139 = vadd.f32 %v2105, %v2133
    %v2140 = vadd.f32 %v2107, %v2134
    %v2141 = vadd.f32 %v2109, %v2135
    %v2142 = vadd.f32 %v2111, %v2136
    %v2143 = vadd.f32 %v2115, %v2137
    %v2144 = vadd.f32 %v2117, %v2138
    %v2145 = vmul.f32 %v2139, 0.7978846
    %v2146 = vmul.f32 %v2140, 0.7978846
    %v2147 = vmul.f32 %v2141, 0.7978846
    %v2148 = vmul.f32 %v2142, 0.7978846
    %v2149 = vmul.f32 %v2143, 0.7978846
    %v2150 = vmul.f32 %v2144, 0.7978846
    %v2151 = vtanh.pop %v2145
    %v2152 = vtanh.pop %v2146
    %v2153 = vtanh.pop %v2147
    %v2154 = vtanh.pop %v2148
    %v2155 = vtanh.pop %v2149
    %v2156 = vtanh.pop %v2150
    %v2157 = vadd.f32 %v2151, 1.0
    %v2158 = vadd.f32 %v2152, 1.0
    %v2159 = vadd.f32 %v2153, 1.0
    %v2160 = vadd.f32 %v2154, 1.0
    %v2161 = vadd.f32 %v2155, 1.0
    %v2162 = vadd.f32 %v2156, 1.0
    %v2163 = vmul.f32 %v2157, 0.5
    %v2164 = vmul.f32 %v2158, 0.5
    %v2165 = vmul.f32 %v2159, 0.5
    %v2166 = vmul.f32 %v2160, 0.5
    %v2167 = vmul.f32 %v2161, 0.5
    %v2168 = vmul.f32 %v2162, 0.5
    %v2169 = vmul.f32 %v2105, %v2163
    %v2170 = vmul.f32 %v2107, %v2164
    %v2171 = vmul.f32 %v2109, %v2165
    %v2172 = vmul.f32 %v2111, %v2166
    %v2173 = vmul.f32 %v2115, %v2167
    %v2174 = vmul.f32 %v2117, %v2168
    %v2175 = vpack.c.bf16 %v2171, %v2169
    %v2176 = vpack.c.bf16 %v2172, %v2170
    %v2177 = vpack.c.bf16 %v2173, %v2173
    %v2178 = vpack.c.bf16 %v2174, %v2174
    %v2179 = vld [vmem:[#allocation4 + $0x260] sm:$0xff]
    %v2180 = vld [vmem:[#allocation4 + $0x268] sm:$0xff]
    %v2181 = vld [vmem:[#allocation4 + $0x270] sm:$0xff]
    %v2182 = vld [vmem:[#allocation4 + $0x278] sm:$0xff]
    %v2183 = vld [vmem:[#allocation4 + $0x280] sm:$0xff]
    %v2184 = vld [vmem:[#allocation4 + $0x288] sm:$0xff]
    %v2185 = vld [vmem:[#allocation4 + $0x290] sm:$0xff]
    %v2186 = vld [vmem:[#allocation4 + $0x298] sm:$0xff]
    %v2187 = vld [vmem:[#allocation4 + $0x2a0] sm:$0xff]
    %v2188 = vld [vmem:[#allocation4 + $0x2a8] sm:$0xff]
    %v2189 = vld [vmem:[#allocation4 + $0x2b0] sm:$0xff]
    %v2190 = vld [vmem:[#allocation4 + $0x2b8] sm:$0xff]
    %v2191 = vld [vmem:[#allocation4 + $0x2c0] sm:$0xff]
    %v2192 = vld [vmem:[#allocation4 + $0x2c8] sm:$0xff]
    %v2193 = vld [vmem:[#allocation4 + $0x2d0] sm:$0xff]
    %v2194 = vld [vmem:[#allocation4 + $0x2d8] sm:$0xff]
    %v2195 = vld [vmem:[#allocation4 + $0x2e0] sm:$0xff]
    %v2196 = vld [vmem:[#allocation4 + $0x2e8] sm:$0xff]
    %v2197 = vld [vmem:[#allocation4 + $0x2f0] sm:$0xff]
    %v2198 = vld [vmem:[#allocation4 + $0x2f8] sm:$0xff]
    %v2199 = vld [vmem:[#allocation4 + $0x300] sm:$0xff]
    %v2200 = vld [vmem:[#allocation4 + $0x308] sm:$0xff]
    %v2201 = vld [vmem:[#allocation4 + $0x310] sm:$0xff]
    %v2202 = vld [vmem:[#allocation4 + $0x318] sm:$0xff]
    %v2203 = vld [vmem:[#allocation4 + $0x320] sm:$0xff]
    %v2204 = vld [vmem:[#allocation4 + $0x328] sm:$0xff]
    %v2205 = vld [vmem:[#allocation4 + $0x330] sm:$0xff]
    %v2206 = vld [vmem:[#allocation4 + $0x338] sm:$0xff]
    %v2207 = vld [vmem:[#allocation4 + $0x340] sm:$0xff]
    %v2208 = vld [vmem:[#allocation4 + $0x348] sm:$0xff]
    %v2209 = vld [vmem:[#allocation4 + $0x350] sm:$0xff]
    %v2210 = vld [vmem:[#allocation4 + $0x358] sm:$0xff]
    %v2211 = vpack.c.bf16 %v2180, %v2179
    %v2212 = vpack.c.bf16 %v2182, %v2181
    %v2213 = vpack.c.bf16 %v2184, %v2183
    %v2214 = vpack.c.bf16 %v2186, %v2185
    %v2215 = vpack.c.bf16 %v2188, %v2187
    %v2216 = vpack.c.bf16 %v2190, %v2189
    %v2217 = vpack.c.bf16 %v2192, %v2191
    %v2218 = vpack.c.bf16 %v2194, %v2193
    %v2219 = vpack.c.bf16 %v2196, %v2195
    %v2220 = vpack.c.bf16 %v2198, %v2197
    %v2221 = vpack.c.bf16 %v2200, %v2199
    %v2222 = vpack.c.bf16 %v2202, %v2201
    %v2223 = vpack.c.bf16 %v2204, %v2203
    %v2224 = vpack.c.bf16 %v2206, %v2205
    %v2225 = vpack.c.bf16 %v2208, %v2207
    %v2226 = vpack.c.bf16 %v2210, %v2209
    %v2227 = vld [vmem:[#allocation4 + $0x360] sm:$0x1]
    %v2228 = vlaneseq
    %v2229 = vshrl.u32 %v2228, 7
    %v2230 = vsub.s32 0, %v2229
    %v2231 = vrot.slane %v2227, %v2230
    %2232 = vmatprep.subr.bf16.mxu0 0
    %2233 = vmatpush1.bf16.msra.mxu0 %v2218
    %2234 = vmatprep.subr.bf16.mxu0 0
    %2235 = vmatpush1.bf16.msra.mxu0 %v2217
    %2236 = vmatprep.subr.bf16.mxu0 0
    %2237 = vmatpush1.bf16.msra.mxu0 %v2216
    %2238 = vmatprep.subr.bf16.mxu0 0
    %2239 = vmatpush1.bf16.msra.mxu0 %v2215
    %2240 = vmatprep.subr.bf16.mxu0 0
    %2241 = vmatpush1.bf16.msra.mxu0 %v2214
    %2242 = vmatprep.subr.bf16.mxu0 0
    %2243 = vmatpush1.bf16.msra.mxu0 %v2213
    %2244 = vmatprep.subr.bf16.mxu0 0
    %2245 = vmatpush1.bf16.msra.mxu0 %v2212
    %2246 = vmatprep.subr.bf16.mxu0 0
    %2247 = vmatpush1.bf16.msra.mxu0 %v2211
    %2248 = vmatprep.subr.bf16.mxu0 0
    %2249 = vmatpush2.bf16.msra.mxu0 %v2226
    %2250 = vmatprep.subr.bf16.mxu0 0
    %2251 = vmatpush2.bf16.msra.mxu0 %v2225
    %2252 = vmatprep.subr.bf16.mxu0 0
    %2253 = vmatpush2.bf16.msra.mxu0 %v2224
    %2254 = vmatprep.subr.bf16.mxu0 0
    %2255 = vmatpush2.bf16.msra.mxu0 %v2223
    %2256 = vmatprep.subr.bf16.mxu0 0
    %2257 = vmatpush2.bf16.msra.mxu0 %v2222
    %2258 = vmatprep.subr.bf16.mxu0 0
    %2259 = vmatpush2.bf16.msra.mxu0 %v2221
    %2260 = vmatprep.subr.bf16.mxu0 0
    %2261 = vmatpush2.bf16.msra.mxu0 %v2220
    %2262 = vmatprep.subr.bf16.mxu0 0
    %2263 = vmatpush2.bf16.msra.mxu0 %v2219
    %2264 = vmatprep.mubr.bf16.mxu0 %v2176
    %2265 = vmatmul.mubr.bf16.gmra.mxu0 %v2175
    %v2266 = vpop.f32.mrf.mxu0
    %v2267 = vadd.f32 %v2231, %v2266
    %v2268 = vpop.f32.mrf.mxu0
    %v2269 = vpop.f32.mrf.mxu0
    %v2270 = vadd.f32 %v2231, %v2269
    %v2271 = vpop.f32.mrf.mxu0
    %2272 = vmatprep.mubr.bf16.mxu0 %v2178
    %2273 = vmatmul.mubr.bf16.gmra.mxu0 %v2177
    %v2274 = vpop.f32.mrf.mxu0
    %v2275 = vadd.f32 %v2231, %v2274
    %v2276 = vpop.f32.mrf.mxu0
    %v2277 = vpop.f32.mrf.mxu0
    %v2278 = vpop.f32.mrf.mxu0
    %2279 = vdwg.mxu0
    %v2280 = vadd.f32 %v2004, %v2267
    %v2281 = vadd.f32 %v2005, %v2270
    %v2282 = vadd.f32 %v2006, %v2275
    %2283 = vadd.xlane.f32.xlu0 %v2280
    %v2284 = vpop.xlane.xlu0 %2283
    %2285 = vadd.xlane.f32.xlu0 %v2281
    %v2286 = vpop.xlane.xlu0 %2285
    %v2287 = vsel %vm314, %v2282, 0.0
    %2288 = vadd.xlane.f32.xlu0 %v2287
    %v2289 = vpop.xlane.xlu0 %2288
    %v2290 = vmul.f32 %v2284, %v318
    %v2291 = vmul.f32 %v2286, %v318
    %v2292 = vmul.f32 %v2289, %v318
    %v2293 = vsub.f32 %v2280, %v2290
    %v2294 = vsub.f32 %v2281, %v2291
    %v2295 = vsub.f32 %v2282, %v2292
    %v2296 = vmul.f32 %v2293, %v2293
    %v2297 = vmul.f32 %v2294, %v2294
    %v2298 = vmul.f32 %v2295, %v2295
    %2299 = vadd.xlane.f32.xlu0 %v2296
    %v2300 = vpop.xlane.xlu0 %2299
    %2301 = vadd.xlane.f32.xlu0 %v2297
    %v2302 = vpop.xlane.xlu0 %2301
    %v2303 = vsel %vm314, %v2298, 0.0
    %2304 = vadd.xlane.f32.xlu0 %v2303
    %v2305 = vpop.xlane.xlu0 %2304
    %v2306 = vmul.f32 %v2300, %v318
    %v2307 = vmul.f32 %v2302, %v318
    %v2308 = vmul.f32 %v2305, %v318
    %v2309 = vadd.f32 %v2306, 1e-05
    %v2310 = vadd.f32 %v2307, 1e-05
    %v2311 = vadd.f32 %v2308, 1e-05
    %v2312 = vrsqrt.pop %v2309
    %v2313 = vrsqrt.pop %v2310
    %v2314 = vrsqrt.pop %v2311
    %v2315 = vmul.f32 %v2293, %v2312
    %v2316 = vmul.f32 %v2294, %v2313
    %v2317 = vmul.f32 %v2295, %v2314
    %v2318 = vld [vmem:[#allocation4 + $0x368] sm:$0x1]
    %v2319 = vlaneseq
    %v2320 = vshrl.u32 %v2319, 7
    %v2321 = vsub.s32 0, %v2320
    %v2322 = vrot.slane %v2318, %v2321
    %v2323 = vmul.f32 %v2315, %v2322
    %v2324 = vmul.f32 %v2316, %v2322
    %v2325 = vmul.f32 %v2317, %v2322
    %v2326 = vld [vmem:[#allocation4 + $0x370] sm:$0x1]
    %v2327 = vlaneseq
    %v2328 = vshrl.u32 %v2327, 7
    %v2329 = vsub.s32 0, %v2328
    %v2330 = vrot.slane %v2326, %v2329
    %v2331 = vadd.f32 %v2323, %v2330
    %v2332 = vadd.f32 %v2324, %v2330
    %v2333 = vadd.f32 %v2325, %v2330
    %2334 = vst [vmem:[%s6] sm:$0xff] %v2331
    %2335 = vst [vmem:[%s6 + $0x8] sm:$0xff] %v2332
    %2336 = vst [vmem:[%s6 + $0x10] sm:$0xf] %v2333
    %s2337 = smul.u32 0, 2
    %s2338 = smul.u32 %s2337, 128
    %s2339 = sld [smem:[#allocation3 + %s2338]]
    %s2340 = sadd.s32 %s2339, 264
    %s2341 = scalar_lea.vmem [#allocation4], %s2340
    %v2342 = vld [vmem:[%s2341] sm:$0x1]
    %s2343 = sadd.s32 %s2338, 1
    %s2344 = sld [smem:[#allocation3 + %s2343]]
    %s2345 = sadd.s32 %s2344, 264
    %s2346 = scalar_lea.vmem [#allocation4], %s2345
    %v2347 = vld [vmem:[%s2346] sm:$0x1]
    %s2348 = sadd.s32 %s2338, 2
    %s2349 = sld [smem:[#allocation3 + %s2348]]
    %s2350 = sadd.s32 %s2349, 264
    %s2351 = scalar_lea.vmem [#allocation4], %s2350
    %v2352 = vld [vmem:[%s2351] sm:$0x1]
    %s2353 = sadd.s32 %s2337, 1
    %s2354 = smul.u32 %s2353, 128
    %s2355 = sld [smem:[#allocation3 + %s2354]]
    %s2356 = sadd.s32 %s2355, 264
    %s2357 = scalar_lea.vmem [#allocation4], %s2356
    %v2358 = vld [vmem:[%s2357] sm:$0x1]
    %s2359 = sadd.s32 %s2354, 1
    %s2360 = sld [smem:[#allocation3 + %s2359]]
    %s2361 = sadd.s32 %s2360, 264
    %s2362 = scalar_lea.vmem [#allocation4], %s2361
    %v2363 = vld [vmem:[%s2362] sm:$0x1]
    %s2364 = sadd.s32 %s2354, 2
    %s2365 = sld [smem:[#allocation3 + %s2364]]
    %s2366 = sadd.s32 %s2365, 264
    %s2367 = scalar_lea.vmem [#allocation4], %s2366
    %v2368 = vld [vmem:[%s2367] sm:$0x1]
    %v2370 = vrot.slane %v2347, 7
    %v2373 = vrot.slane %v2352, 6
    %v2376 = vrot.slane %v2358, 5
    %v2379 = vrot.slane %v2363, 4
    %v2382 = vrot.slane %v2368, 3
    %vm2384 = vcmask 1040384
    %v2385 = vsel %vm2384, %v2342, %v2370
    %v2386 = vsel %vm300, %v2385, %v2373
    %vm2387 = vcmask 1042432
    %v2388 = vsel %vm2387, %v2386, %v2376
    %v2389 = vsel %vm314, %v2388, %v2379
    %v2390 = vsel %vm657, %v2389, %v2382
    %v2391 = vld [vmem:[#allocation4 + $0x198] sm:$0x7]
    %v2393 = vrot.slane %v2391, 5
    %v2395 = vsel %vm2387, %v2391, %v2393
    %v2396 = vadd.f32 %v2390, %v2395
    %vm2397 = vcmask 1045504
    %v2398 = vsel %vm2397, %v2396, 0.0
    %2399 = vadd.xlane.f32.xlu0 %v2398
    %v2400 = vpop.xlane.xlu0 %2399
    %v2401 = vmul.f32 %v2400, %v318
    %v2402 = vsub.f32 %v2396, %v2401
    %v2403 = vmul.f32 %v2402, %v2402
    %v2404 = vsel %vm2397, %v2403, 0.0
    %2405 = vadd.xlane.f32.xlu0 %v2404
    %v2406 = vpop.xlane.xlu0 %2405
    %v2407 = vmul.f32 %v2406, %v318
    %v2408 = vadd.f32 %v2407, 1e-05
    %v2409 = vrsqrt.pop %v2408
    %v2410 = vmul.f32 %v2402, %v2409
    %v2411 = vld [vmem:[#allocation4 + $0x1b0] sm:$0x1]
    %v2412 = vlaneseq
    %v2413 = vshrl.u32 %v2412, 7
    %v2414 = vsub.s32 0, %v2413
    %v2415 = vrot.slane %v2411, %v2414
    %v2416 = vmul.f32 %v2410, %v2415
    %v2417 = vld [vmem:[#allocation4 + $0x1b8] sm:$0x1]
    %v2418 = vlaneseq
    %v2419 = vshrl.u32 %v2418, 7
    %v2420 = vsub.s32 0, %v2419
    %v2421 = vrot.slane %v2417, %v2420
    %v2422 = vadd.f32 %v2416, %v2421
    %v2423 = vlaneseq
    %v2424 = vshrl.u32 %v2423, 7
    %v2425 = vlaneseq
    %v2426 = vand.u32 %v2425, 127
    %vm2427 = vcmp.le.s32.totalorder %v2426, %v2424
    %v2428 = vsel %vm2427, 0.0, -1e+09
    %v2429 = vpack.c.bf16 %v2422, %v2422
    %v2430 = vld [vmem:[#allocation8 + $0x198] sm:$0xff]
    %v2431 = vld [vmem:[#allocation8 + $0x1a0] sm:$0xff]
    %v2432 = vld [vmem:[#allocation8 + $0x1a8] sm:$0xff]
    %v2433 = vld [vmem:[#allocation8 + $0x1b0] sm:$0xff]
    %v2434 = vld [vmem:[#allocation8 + $0x1b8] sm:$0xff]
    %v2435 = vld [vmem:[#allocation8 + $0x1c0] sm:$0xff]
    %v2436 = vld [vmem:[#allocation8 + $0x1c8] sm:$0xff]
    %v2437 = vld [vmem:[#allocation8 + $0x1d0] sm:$0xff]
    %v2438 = vld [vmem:[#allocation8 + $0x1d8] sm:$0xff]
    %v2439 = vld [vmem:[#allocation8 + $0x1e0] sm:$0xff]
    %v2440 = vld [vmem:[#allocation8 + $0x1e8] sm:$0xff]
    %v2441 = vld [vmem:[#allocation8 + $0x1f0] sm:$0xff]
    %v2442 = vld [vmem:[#allocation8 + $0x1f8] sm:$0xff]
    %v2443 = vld [vmem:[#allocation8 + $0x200] sm:$0xff]
    %v2444 = vld [vmem:[#allocation8 + $0x208] sm:$0xff]
    %v2445 = vld [vmem:[#allocation8 + $0x210] sm:$0xff]
    %v2446 = vld [vmem:[#allocation8 + $0x218] sm:$0xff]
    %v2447 = vld [vmem:[#allocation8 + $0x220] sm:$0xff]
    %v2448 = vld [vmem:[#allocation8 + $0x228] sm:$0xff]
    %v2449 = vld [vmem:[#allocation8 + $0x230] sm:$0xff]
    %v2450 = vld [vmem:[#allocation8 + $0x238] sm:$0xff]
    %v2451 = vld [vmem:[#allocation8 + $0x240] sm:$0xff]
    %v2452 = vld [vmem:[#allocation8 + $0x248] sm:$0xff]
    %v2453 = vld [vmem:[#allocation8 + $0x250] sm:$0xff]
    %v2454 = vld [vmem:[#allocation8 + $0x258] sm:$0xff]
    %v2455 = vld [vmem:[#allocation8 + $0x260] sm:$0xff]
    %v2456 = vld [vmem:[#allocation8 + $0x268] sm:$0xff]
    %v2457 = vld [vmem:[#allocation8 + $0x270] sm:$0xff]
    %v2458 = vld [vmem:[#allocation8 + $0x278] sm:$0xff]
    %v2459 = vld [vmem:[#allocation8 + $0x280] sm:$0xff]
    %v2460 = vld [vmem:[#allocation8 + $0x288] sm:$0xff]
    %v2461 = vld [vmem:[#allocation8 + $0x290] sm:$0xff]
    %v2462 = vld [vmem:[#allocation8 + $0x298] sm:$0xff]
    %v2463 = vld [vmem:[#allocation8 + $0x2a0] sm:$0xff]
    %v2464 = vld [vmem:[#allocation8 + $0x2a8] sm:$0xff]
    %v2465 = vld [vmem:[#allocation8 + $0x2b0] sm:$0xff]
    %v2466 = vld [vmem:[#allocation8 + $0x2b8] sm:$0xff]
    %v2467 = vld [vmem:[#allocation8 + $0x2c0] sm:$0xff]
    %v2468 = vld [vmem:[#allocation8 + $0x2c8] sm:$0xff]
    %v2469 = vld [vmem:[#allocation8 + $0x2d0] sm:$0xff]
    %v2470 = vld [vmem:[#allocation8 + $0x2d8] sm:$0xff]
    %v2471 = vld [vmem:[#allocation8 + $0x2e0] sm:$0xff]
    %v2472 = vld [vmem:[#allocation8 + $0x2e8] sm:$0xff]
    %v2473 = vld [vmem:[#allocation8 + $0x2f0] sm:$0xff]
    %v2474 = vld [vmem:[#allocation8 + $0x2f8] sm:$0xff]
    %v2475 = vld [vmem:[#allocation8 + $0x300] sm:$0xff]
    %v2476 = vld [vmem:[#allocation8 + $0x308] sm:$0xff]
    %v2477 = vld [vmem:[#allocation8 + $0x310] sm:$0xff]
    %v2478 = vpack.c.bf16 %v2433, %v2430
    %v2479 = vpack.c.bf16 %v2434, %v2431
    %v2480 = vpack.c.bf16 %v2435, %v2432
    %v2481 = vpack.c.bf16 %v2439, %v2436
    %v2482 = vpack.c.bf16 %v2440, %v2437
    %v2483 = vpack.c.bf16 %v2441, %v2438
    %v2484 = vpack.c.bf16 %v2445, %v2442
    %v2485 = vpack.c.bf16 %v2446, %v2443
    %v2486 = vpack.c.bf16 %v2447, %v2444
    %v2487 = vpack.c.bf16 %v2451, %v2448
    %v2488 = vpack.c.bf16 %v2452, %v2449
    %v2489 = vpack.c.bf16 %v2453, %v2450
    %v2490 = vpack.c.bf16 %v2457, %v2454
    %v2491 = vpack.c.bf16 %v2458, %v2455
    %v2492 = vpack.c.bf16 %v2459, %v2456
    %v2493 = vpack.c.bf16 %v2463, %v2460
    %v2494 = vpack.c.bf16 %v2464, %v2461
    %v2495 = vpack.c.bf16 %v2465, %v2462
    %v2496 = vpack.c.bf16 %v2469, %v2466
    %v2497 = vpack.c.bf16 %v2470, %v2467
    %v2498 = vpack.c.bf16 %v2471, %v2468
    %v2499 = vpack.c.bf16 %v2475, %v2472
    %v2500 = vpack.c.bf16 %v2476, %v2473
    %v2501 = vpack.c.bf16 %v2477, %v2474
    %s2502 = scalar_lea.vmem [#allocation8], 792
    %v2503 = vld [vmem:[%s2502] ss:$8 sm:$0x7]
    %v2505 = vlaneseq
    %v2506 = vshrl.u32 %v2505, 7
    %v2507 = vsub.s32 0, %v2506
    %v2508 = vrot.slane %v2503, %v2507
    %v2509 = vlaneseq
    %v2510 = vshrl.u32 %v2509, 7
    %v2511 = vsub.s32 1, %v2510
    %v2512 = vrot.slane %v2503, %v2511
    %v2513 = vlaneseq
    %v2514 = vshrl.u32 %v2513, 7
    %v2515 = vsub.s32 2, %v2514
    %v2516 = vrot.slane %v2503, %v2515
    %2520 = vmatprep.subr.bf16.mxu0 %v2500
    %2521 = vmatpush1.bf16.msra.mxu0 %v2499
    %2522 = vmatprep.subr.bf16.mxu0 %v2497
    %2523 = vmatpush1.bf16.msra.mxu0 %v2496
    %2524 = vmatprep.subr.bf16.mxu0 %v2494
    %2525 = vmatpush1.bf16.msra.mxu0 %v2493
    %2526 = vmatprep.subr.bf16.mxu0 %v2491
    %2527 = vmatpush1.bf16.msra.mxu0 %v2490
    %2528 = vmatprep.subr.bf16.mxu0 %v2488
    %2529 = vmatpush1.bf16.msra.mxu0 %v2487
    %2530 = vmatprep.subr.bf16.mxu0 %v2485
    %2531 = vmatpush1.bf16.msra.mxu0 %v2484
    %2532 = vmatprep.subr.bf16.mxu0 %v2482
    %2533 = vmatpush1.bf16.msra.mxu0 %v2481
    %2534 = vmatprep.subr.bf16.mxu0 %v2479
    %2535 = vmatpush1.bf16.msra.mxu0 %v2478
    %2536 = vmatprep.subr.bf16.mxu0 0
    %2537 = vmatpush2.bf16.msra.mxu0 0
    %2538 = vmatprep.subr.bf16.mxu0 0
    %2539 = vmatpush2.bf16.msra.mxu0 0
    %2540 = vmatprep.subr.bf16.mxu0 0
    %2541 = vmatpush2.bf16.msra.mxu0 0
    %2542 = vmatprep.subr.bf16.mxu0 0
    %2543 = vmatpush2.bf16.msra.mxu0 0
    %2544 = vmatprep.subr.bf16.mxu0 0
    %2545 = vmatpush2.bf16.msra.mxu0 0
    %2546 = vmatprep.subr.bf16.mxu0 0
    %2547 = vmatpush2.bf16.msra.mxu0 0
    %2548 = vmatprep.subr.bf16.mxu0 0
    %2549 = vmatpush2.bf16.msra.mxu0 0
    %2550 = vmatprep.subr.bf16.mxu0 0
    %2551 = vmatpush2.bf16.msra.mxu0 0
    %2552 = vmatprep.mubr.bf16.mxu0 0
    %2553 = vmatmul.mubr.bf16.gmra.mxu0 %v2429
    %v2554 = vpop.f32.mrf.mxu0
    %v2555 = vadd.f32 %v2508, %v2554
    %v2556 = vpop.f32.mrf.mxu0
    %v2557 = vadd.f32 %v2512, %v2556
    %v2558 = vpop.f32.mrf.mxu0
    %v2559 = vpop.f32.mrf.mxu0
    %2560 = vdwg.mxu0
    %2561 = vmatprep.subr.bf16.mxu0 0
    %2562 = vmatpush1.bf16.msra.mxu0 %v2501
    %2563 = vmatprep.subr.bf16.mxu0 0
    %2564 = vmatpush1.bf16.msra.mxu0 %v2498
    %2565 = vmatprep.subr.bf16.mxu0 0
    %2566 = vmatpush1.bf16.msra.mxu0 %v2495
    %2567 = vmatprep.subr.bf16.mxu0 0
    %2568 = vmatpush1.bf16.msra.mxu0 %v2492
    %2569 = vmatprep.subr.bf16.mxu0 0
    %2570 = vmatpush1.bf16.msra.mxu0 %v2489
    %2571 = vmatprep.subr.bf16.mxu0 0
    %2572 = vmatpush1.bf16.msra.mxu0 %v2486
    %2573 = vmatprep.subr.bf16.mxu0 0
    %2574 = vmatpush1.bf16.msra.mxu0 %v2483
    %2575 = vmatprep.subr.bf16.mxu0 0
    %2576 = vmatpush1.bf16.msra.mxu0 %v2480
    %2577 = vmatprep.subr.bf16.mxu0 0
    %2578 = vmatpush2.bf16.msra.mxu0 0
    %2579 = vmatprep.subr.bf16.mxu0 0
    %2580 = vmatpush2.bf16.msra.mxu0 0
    %2581 = vmatprep.subr.bf16.mxu0 0
    %2582 = vmatpush2.bf16.msra.mxu0 0
    %2583 = vmatprep.subr.bf16.mxu0 0
    %2584 = vmatpush2.bf16.msra.mxu0 0
    %2585 = vmatprep.subr.bf16.mxu0 0
    %2586 = vmatpush2.bf16.msra.mxu0 0
    %2587 = vmatprep.subr.bf16.mxu0 0
    %2588 = vmatpush2.bf16.msra.mxu0 0
    %2589 = vmatprep.subr.bf16.mxu0 0
    %2590 = vmatpush2.bf16.msra.mxu0 0
    %2591 = vmatprep.subr.bf16.mxu0 0
    %2592 = vmatpush2.bf16.msra.mxu0 0
    %2593 = vmatprep.mubr.bf16.mxu0 0
    %2594 = vmatmul.mubr.bf16.gmra.mxu0 %v2429
    %v2595 = vpop.f32.mrf.mxu0
    %v2596 = vadd.f32 %v2516, %v2595
    %v2597 = vpop.f32.mrf.mxu0
    %v2598 = vpop.f32.mrf.mxu0
    %v2599 = vpop.f32.mrf.mxu0
    %2600 = vdwg.mxu0
    %v2601 = vld [vmem:[#allocation4 + $0x378] sm:$0xff]
    %v2602 = vld [vmem:[#allocation4 + $0x380] sm:$0xff]
    %v2603 = vld [vmem:[#allocation4 + $0x388] sm:$0xff]
    %v2604 = vld [vmem:[#allocation4 + $0x390] sm:$0xff]
    %v2605 = vld [vmem:[#allocation4 + $0x398] sm:$0xff]
    %v2606 = vld [vmem:[#allocation4 + $0x3a0] sm:$0xff]
    %v2607 = vld [vmem:[#allocation4 + $0x3a8] sm:$0xff]
    %v2608 = vld [vmem:[#allocation4 + $0x3b0] sm:$0xff]
    %v2609 = vld [vmem:[#allocation4 + $0x3b8] sm:$0xff]
    %v2610 = vld [vmem:[#allocation4 + $0x3c0] sm:$0xff]
    %v2611 = vld [vmem:[#allocation4 + $0x3c8] sm:$0xff]
    %v2612 = vld [vmem:[#allocation4 + $0x3d0] sm:$0xff]
    %v2613 = vld [vmem:[#allocation4 + $0x3d8] sm:$0xff]
    %v2614 = vld [vmem:[#allocation4 + $0x3e0] sm:$0xff]
    %v2615 = vld [vmem:[#allocation4 + $0x3e8] sm:$0xff]
    %v2616 = vld [vmem:[#allocation4 + $0x3f0] sm:$0xff]
    %v2617 = vpack.c.bf16 %v2602, %v2601
    %v2618 = vpack.c.bf16 %v2604, %v2603
    %v2619 = vpack.c.bf16 %v2606, %v2605
    %v2620 = vpack.c.bf16 %v2608, %v2607
    %v2621 = vpack.c.bf16 %v2610, %v2609
    %v2622 = vpack.c.bf16 %v2612, %v2611
    %v2623 = vpack.c.bf16 %v2614, %v2613
    %v2624 = vpack.c.bf16 %v2616, %v2615
    %v2625 = vpack.c.bf16 %v2555, %v2555
    %v2626 = vpack.c.bf16 %v2557, %v2557
    %v2627 = vpack.c.bf16 %v2596, %v2596
    %v2629 = vsel %vm581, %v2625, 0
    %v2632 = vsel %vm581, %v2626, 0
    %2634 = vmatprep.subr.bf16.mxu0 0
    %2635 = vmatpush1.bf16.xpose.msra.mxu0 0
    %2636 = vmatprep.subr.bf16.mxu0 0
    %2637 = vmatpush1.bf16.xpose.msra.mxu0 0
    %2638 = vmatprep.subr.bf16.mxu0 0
    %2639 = vmatpush1.bf16.xpose.msra.mxu0 0
    %2640 = vmatprep.subr.bf16.mxu0 0
    %2641 = vmatpush1.bf16.xpose.msra.mxu0 0
    %2642 = vmatprep.subr.bf16.mxu0 0
    %2643 = vmatpush1.bf16.xpose.msra.mxu0 0
    %2644 = vmatprep.subr.bf16.mxu0 0
    %2645 = vmatpush1.bf16.xpose.msra.mxu0 0
    %2646 = vmatprep.subr.bf16.mxu0 0
    %2647 = vmatpush1.bf16.xpose.msra.mxu0 0
    %2648 = vmatprep.subr.bf16.mxu0 0
    %2649 = vmatpush1.bf16.xpose.msra.mxu0 %v2632
    %2650 = vmatprep.subr.bf16.mxu0 0
    %2651 = vmatpush2.bf16.xpose.msra.mxu0 0
    %2652 = vmatprep.subr.bf16.mxu0 0
    %2653 = vmatpush2.bf16.xpose.msra.mxu0 0
    %2654 = vmatprep.subr.bf16.mxu0 0
    %2655 = vmatpush2.bf16.xpose.msra.mxu0 0
    %2656 = vmatprep.subr.bf16.mxu0 0
    %2657 = vmatpush2.bf16.xpose.msra.mxu0 0
    %2658 = vmatprep.subr.bf16.mxu0 0
    %2659 = vmatpush2.bf16.xpose.msra.mxu0 0
    %2660 = vmatprep.subr.bf16.mxu0 0
    %2661 = vmatpush2.bf16.xpose.msra.mxu0 0
    %2662 = vmatprep.subr.bf16.mxu0 0
    %2663 = vmatpush2.bf16.xpose.msra.mxu0 0
    %2664 = vmatprep.subr.bf16.mxu0 0
    %2665 = vmatpush2.bf16.xpose.msra.mxu0 0
    %2666 = vmatprep.mubr.bf16.mxu0 0
    %2667 = vmatmul.mubr.bf16.gmra.mxu0 %v2629
    %v2668 = vpop.f32.mrf.mxu0
    %v2669 = vadd.f32 %v2428, %v2668
    %v2670 = vpop.f32.mrf.mxu0
    %v2671 = vpop.f32.mrf.mxu0
    %v2672 = vpop.f32.mrf.mxu0
    %2673 = vdwg.mxu0
    %vm2674 = vcmask 18432
    %v2675 = vsel %vm2674, %v2669, -inf
    %2676 = vmax.xlane.f32.xlu0 %v2675
    %v2677 = vpop.xlane.xlu0 %2676
    %v2678 = vsub.f32 %v2669, %v2677
    %v2679 = vmul.f32 %v2678, 1.442695
    %v2680 = vpow.pop %v2679
    %v2681 = vsel %vm2674, %v2680, 0.0
    %2682 = vadd.xlane.f32.xlu0 %v2681
    %v2683 = vpop.xlane.xlu0 %2682
    %v2684 = vrcp.pop %v2683
    %v2685 = vmul.f32 %v2680, %v2684
    %v2686 = vpack.c.bf16 %v2685, %v2685
    %vm2687 = vcmask 23552
    %v2689 = vsel %vm2687, %v2686, 0
    %v2691 = vsel %vm2384, 4294967295, 65535
    %v2692 = vsel %vm300, %v2691, 0
    %v2694 = vand.u32 %v2627, %v2692
    %2696 = vmatprep.subr.bf16.mxu0 0
    %2697 = vmatpush1.bf16.msra.mxu0 0
    %2698 = vmatprep.subr.bf16.mxu0 0
    %2699 = vmatpush1.bf16.msra.mxu0 0
    %2700 = vmatprep.subr.bf16.mxu0 0
    %2701 = vmatpush1.bf16.msra.mxu0 0
    %2702 = vmatprep.subr.bf16.mxu0 0
    %2703 = vmatpush1.bf16.msra.mxu0 0
    %2704 = vmatprep.subr.bf16.mxu0 0
    %2705 = vmatpush1.bf16.msra.mxu0 0
    %2706 = vmatprep.subr.bf16.mxu0 0
    %2707 = vmatpush1.bf16.msra.mxu0 0
    %2708 = vmatprep.subr.bf16.mxu0 0
    %2709 = vmatpush1.bf16.msra.mxu0 0
    %2710 = vmatprep.subr.bf16.mxu0 0
    %2711 = vmatpush1.bf16.msra.mxu0 %v2694
    %2712 = vmatprep.subr.bf16.mxu0 0
    %2713 = vmatpush2.bf16.msra.mxu0 0
    %2714 = vmatprep.subr.bf16.mxu0 0
    %2715 = vmatpush2.bf16.msra.mxu0 0
    %2716 = vmatprep.subr.bf16.mxu0 0
    %2717 = vmatpush2.bf16.msra.mxu0 0
    %2718 = vmatprep.subr.bf16.mxu0 0
    %2719 = vmatpush2.bf16.msra.mxu0 0
    %2720 = vmatprep.subr.bf16.mxu0 0
    %2721 = vmatpush2.bf16.msra.mxu0 0
    %2722 = vmatprep.subr.bf16.mxu0 0
    %2723 = vmatpush2.bf16.msra.mxu0 0
    %2724 = vmatprep.subr.bf16.mxu0 0
    %2725 = vmatpush2.bf16.msra.mxu0 0
    %2726 = vmatprep.subr.bf16.mxu0 0
    %2727 = vmatpush2.bf16.msra.mxu0 0
    %2728 = vmatprep.mubr.bf16.mxu0 0
    %2729 = vmatmul.mubr.bf16.gmra.mxu0 %v2689
    %v2730 = vpop.f32.mrf.mxu0
    %v2731 = vadd.f32 0.0, %v2730
    %v2732 = vpop.f32.mrf.mxu0
    %v2733 = vpop.f32.mrf.mxu0
    %v2734 = vpop.f32.mrf.mxu0
    %2735 = vdwg.mxu0
    %v2736 = vpack.c.bf16 %v2731, %v2731
    %2738 = vrot.lane.b32.xlu0 %v2625, 96
    %v2739 = vpop.permute.xlu0 %2738
    %2741 = vrot.lane.b32.xlu0 %v2626, 96
    %v2742 = vpop.permute.xlu0 %2741
    %v2744 = vsel %vm581, %v2739, 0
    %v2747 = vsel %vm581, %v2742, 0
    %2749 = vmatprep.subr.bf16.mxu0 0
    %2750 = vmatpush1.bf16.xpose.msra.mxu0 0
    %2751 = vmatprep.subr.bf16.mxu0 0
    %2752 = vmatpush1.bf16.xpose.msra.mxu0 0
    %2753 = vmatprep.subr.bf16.mxu0 0
    %2754 = vmatpush1.bf16.xpose.msra.mxu0 0
    %2755 = vmatprep.subr.bf16.mxu0 0
    %2756 = vmatpush1.bf16.xpose.msra.mxu0 0
    %2757 = vmatprep.subr.bf16.mxu0 0
    %2758 = vmatpush1.bf16.xpose.msra.mxu0 0
    %2759 = vmatprep.subr.bf16.mxu0 0
    %2760 = vmatpush1.bf16.xpose.msra.mxu0 0
    %2761 = vmatprep.subr.bf16.mxu0 0
    %2762 = vmatpush1.bf16.xpose.msra.mxu0 0
    %2763 = vmatprep.subr.bf16.mxu0 0
    %2764 = vmatpush1.bf16.xpose.msra.mxu0 %v2747
    %2765 = vmatprep.subr.bf16.mxu0 0
    %2766 = vmatpush2.bf16.xpose.msra.mxu0 0
    %2767 = vmatprep.subr.bf16.mxu0 0
    %2768 = vmatpush2.bf16.xpose.msra.mxu0 0
    %2769 = vmatprep.subr.bf16.mxu0 0
    %2770 = vmatpush2.bf16.xpose.msra.mxu0 0
    %2771 = vmatprep.subr.bf16.mxu0 0
    %2772 = vmatpush2.bf16.xpose.msra.mxu0 0
    %2773 = vmatprep.subr.bf16.mxu0 0
    %2774 = vmatpush2.bf16.xpose.msra.mxu0 0
    %2775 = vmatprep.subr.bf16.mxu0 0
    %2776 = vmatpush2.bf16.xpose.msra.mxu0 0
    %2777 = vmatprep.subr.bf16.mxu0 0
    %2778 = vmatpush2.bf16.xpose.msra.mxu0 0
    %2779 = vmatprep.subr.bf16.mxu0 0
    %2780 = vmatpush2.bf16.xpose.msra.mxu0 0
    %2781 = vmatprep.mubr.bf16.mxu0 0
    %2782 = vmatmul.mubr.bf16.gmra.mxu0 %v2744
    %v2783 = vpop.f32.mrf.mxu0
    %v2784 = vadd.f32 %v2428, %v2783
    %v2785 = vpop.f32.mrf.mxu0
    %v2786 = vpop.f32.mrf.mxu0
    %v2787 = vpop.f32.mrf.mxu0
    %2788 = vdwg.mxu0
    %v2789 = vsel %vm2674, %v2784, -inf
    %2790 = vmax.xlane.f32.xlu0 %v2789
    %v2791 = vpop.xlane.xlu0 %2790
    %v2792 = vsub.f32 %v2784, %v2791
    %v2793 = vmul.f32 %v2792, 1.442695
    %v2794 = vpow.pop %v2793
    %v2795 = vsel %vm2674, %v2794, 0.0
    %2796 = vadd.xlane.f32.xlu0 %v2795
    %v2797 = vpop.xlane.xlu0 %2796
    %v2798 = vrcp.pop %v2797
    %v2799 = vmul.f32 %v2794, %v2798
    %v2800 = vpack.c.bf16 %v2799, %v2799
    %2802 = vrot.lane.b32.xlu0 %v2627, 96
    %v2803 = vpop.permute.xlu0 %2802
    %v2805 = vsel %vm2687, %v2800, 0
    %v2808 = vand.u32 %v2803, %v2692
    %2810 = vmatprep.subr.bf16.mxu0 0
    %2811 = vmatpush1.bf16.msra.mxu0 0
    %2812 = vmatprep.subr.bf16.mxu0 0
    %2813 = vmatpush1.bf16.msra.mxu0 0
    %2814 = vmatprep.subr.bf16.mxu0 0
    %2815 = vmatpush1.bf16.msra.mxu0 0
    %2816 = vmatprep.subr.bf16.mxu0 0
    %2817 = vmatpush1.bf16.msra.mxu0 0
    %2818 = vmatprep.subr.bf16.mxu0 0
    %2819 = vmatpush1.bf16.msra.mxu0 0
    %2820 = vmatprep.subr.bf16.mxu0 0
    %2821 = vmatpush1.bf16.msra.mxu0 0
    %2822 = vmatprep.subr.bf16.mxu0 0
    %2823 = vmatpush1.bf16.msra.mxu0 0
    %2824 = vmatprep.subr.bf16.mxu0 0
    %2825 = vmatpush1.bf16.msra.mxu0 %v2808
    %2826 = vmatprep.subr.bf16.mxu0 0
    %2827 = vmatpush2.bf16.msra.mxu0 0
    %2828 = vmatprep.subr.bf16.mxu0 0
    %2829 = vmatpush2.bf16.msra.mxu0 0
    %2830 = vmatprep.subr.bf16.mxu0 0
    %2831 = vmatpush2.bf16.msra.mxu0 0
    %2832 = vmatprep.subr.bf16.mxu0 0
    %2833 = vmatpush2.bf16.msra.mxu0 0
    %2834 = vmatprep.subr.bf16.mxu0 0
    %2835 = vmatpush2.bf16.msra.mxu0 0
    %2836 = vmatprep.subr.bf16.mxu0 0
    %2837 = vmatpush2.bf16.msra.mxu0 0
    %2838 = vmatprep.subr.bf16.mxu0 0
    %2839 = vmatpush2.bf16.msra.mxu0 0
    %2840 = vmatprep.subr.bf16.mxu0 0
    %2841 = vmatpush2.bf16.msra.mxu0 0
    %2842 = vmatprep.mubr.bf16.mxu0 0
    %2843 = vmatmul.mubr.bf16.gmra.mxu0 %v2805
    %v2844 = vpop.f32.mrf.mxu0
    %v2845 = vadd.f32 0.0, %v2844
    %v2846 = vpop.f32.mrf.mxu0
    %v2847 = vpop.f32.mrf.mxu0
    %v2848 = vpop.f32.mrf.mxu0
    %2849 = vdwg.mxu0
    %v2850 = vpack.c.bf16 %v2845, %v2845
    %v2852 = vsel %vm581, %v2850, 0
    %2854 = vmatprep.subr.bf16.mxu0 0
    %2855 = vmatpush1.bf16.msra.mxu0 0
    %2856 = vmatprep.subr.bf16.mxu0 0
    %2857 = vmatpush1.bf16.msra.mxu0 0
    %2858 = vmatprep.subr.bf16.mxu0 0
    %2859 = vmatpush1.bf16.msra.mxu0 0
    %2860 = vmatprep.subr.bf16.mxu0 0
    %2861 = vmatpush1.bf16.msra.mxu0 0
    %2862 = vmatprep.subr.bf16.mxu0 0
    %2863 = vmatpush1.bf16.msra.mxu0 0
    %2864 = vmatprep.subr.bf16.mxu0 0
    %2865 = vmatpush1.bf16.msra.mxu0 0
    %2866 = vmatprep.subr.bf16.mxu0 0
    %2867 = vmatpush1.bf16.msra.mxu0 %v2620
    %2868 = vmatprep.subr.bf16.mxu0 0
    %2869 = vmatpush1.bf16.msra.mxu0 %v2619
    %2870 = vmatprep.subr.bf16.mxu0 0
    %2871 = vmatpush2.bf16.msra.mxu0 0
    %2872 = vmatprep.subr.bf16.mxu0 0
    %2873 = vmatpush2.bf16.msra.mxu0 0
    %2874 = vmatprep.subr.bf16.mxu0 0
    %2875 = vmatpush2.bf16.msra.mxu0 0
    %2876 = vmatprep.subr.bf16.mxu0 0
    %2877 = vmatpush2.bf16.msra.mxu0 0
    %2878 = vmatprep.subr.bf16.mxu0 0
    %2879 = vmatpush2.bf16.msra.mxu0 0
    %2880 = vmatprep.subr.bf16.mxu0 0
    %2881 = vmatpush2.bf16.msra.mxu0 0
    %2882 = vmatprep.subr.bf16.mxu0 0
    %2883 = vmatpush2.bf16.msra.mxu0 0
    %2884 = vmatprep.subr.bf16.mxu0 0
    %2885 = vmatpush2.bf16.msra.mxu0 0
    %2886 = vmatprep.mubr.bf16.mxu0 0
    %2887 = vmatmul.mubr.bf16.gmra.mxu0 %v2852
    %v2888 = vpop.f32.mrf.mxu0
    %v2889 = vadd.f32 0.0, %v2888
    %v2890 = vpop.f32.mrf.mxu0
    %v2891 = vpop.f32.mrf.mxu0
    %v2892 = vpop.f32.mrf.mxu0
    %2893 = vdwg.mxu0
    %v2895 = vsel %vm581, %v2736, 0
    %2897 = vmatprep.subr.bf16.mxu0 0
    %2898 = vmatpush1.bf16.msra.mxu0 0
    %2899 = vmatprep.subr.bf16.mxu0 0
    %2900 = vmatpush1.bf16.msra.mxu0 0
    %2901 = vmatprep.subr.bf16.mxu0 0
    %2902 = vmatpush1.bf16.msra.mxu0 0
    %2903 = vmatprep.subr.bf16.mxu0 0
    %2904 = vmatpush1.bf16.msra.mxu0 0
    %2905 = vmatprep.subr.bf16.mxu0 0
    %2906 = vmatpush1.bf16.msra.mxu0 0
    %2907 = vmatprep.subr.bf16.mxu0 0
    %2908 = vmatpush1.bf16.msra.mxu0 0
    %2909 = vmatprep.subr.bf16.mxu0 0
    %2910 = vmatpush1.bf16.msra.mxu0 %v2618
    %2911 = vmatprep.subr.bf16.mxu0 0
    %2912 = vmatpush1.bf16.msra.mxu0 %v2617
    %2913 = vmatprep.subr.bf16.mxu0 0
    %2914 = vmatpush2.bf16.msra.mxu0 0
    %2915 = vmatprep.subr.bf16.mxu0 0
    %2916 = vmatpush2.bf16.msra.mxu0 0
    %2917 = vmatprep.subr.bf16.mxu0 0
    %2918 = vmatpush2.bf16.msra.mxu0 0
    %2919 = vmatprep.subr.bf16.mxu0 0
    %2920 = vmatpush2.bf16.msra.mxu0 0
    %2921 = vmatprep.subr.bf16.mxu0 0
    %2922 = vmatpush2.bf16.msra.mxu0 0
    %2923 = vmatprep.subr.bf16.mxu0 0
    %2924 = vmatpush2.bf16.msra.mxu0 0
    %2925 = vmatprep.subr.bf16.mxu0 0
    %2926 = vmatpush2.bf16.msra.mxu0 0
    %2927 = vmatprep.subr.bf16.mxu0 0
    %2928 = vmatpush2.bf16.msra.mxu0 0
    %2929 = vmatprep.mubr.bf16.mxu0 0
    %2930 = vmatmul.mubr.bf16.gmra.mxu0 %v2895
    %v2931 = vpop.f32.mrf.mxu0
    %v2932 = vadd.f32 %v2889, %v2931
    %v2933 = vpop.f32.mrf.mxu0
    %v2934 = vpop.f32.mrf.mxu0
    %v2935 = vpop.f32.mrf.mxu0
    %2936 = vdwg.mxu0
    %2937 = vrot.lane.b32.xlu0 %v2625, 64
    %v2938 = vpop.permute.xlu0 %2937
    %2939 = vrot.lane.b32.xlu0 %v2626, 64
    %v2940 = vpop.permute.xlu0 %2939
    %v2942 = vsel %vm581, %v2938, 0
    %v2945 = vsel %vm581, %v2940, 0
    %2947 = vmatprep.subr.bf16.mxu0 0
    %2948 = vmatpush1.bf16.xpose.msra.mxu0 0
    %2949 = vmatprep.subr.bf16.mxu0 0
    %2950 = vmatpush1.bf16.xpose.msra.mxu0 0
    %2951 = vmatprep.subr.bf16.mxu0 0
    %2952 = vmatpush1.bf16.xpose.msra.mxu0 0
    %2953 = vmatprep.subr.bf16.mxu0 0
    %2954 = vmatpush1.bf16.xpose.msra.mxu0 0
    %2955 = vmatprep.subr.bf16.mxu0 0
    %2956 = vmatpush1.bf16.xpose.msra.mxu0 0
    %2957 = vmatprep.subr.bf16.mxu0 0
    %2958 = vmatpush1.bf16.xpose.msra.mxu0 0
    %2959 = vmatprep.subr.bf16.mxu0 0
    %2960 = vmatpush1.bf16.xpose.msra.mxu0 0
    %2961 = vmatprep.subr.bf16.mxu0 0
    %2962 = vmatpush1.bf16.xpose.msra.mxu0 %v2945
    %2963 = vmatprep.subr.bf16.mxu0 0
    %2964 = vmatpush2.bf16.xpose.msra.mxu0 0
    %2965 = vmatprep.subr.bf16.mxu0 0
    %2966 = vmatpush2.bf16.xpose.msra.mxu0 0
    %2967 = vmatprep.subr.bf16.mxu0 0
    %2968 = vmatpush2.bf16.xpose.msra.mxu0 0
    %2969 = vmatprep.subr.bf16.mxu0 0
    %2970 = vmatpush2.bf16.xpose.msra.mxu0 0
    %2971 = vmatprep.subr.bf16.mxu0 0
    %2972 = vmatpush2.bf16.xpose.msra.mxu0 0
    %2973 = vmatprep.subr.bf16.mxu0 0
    %2974 = vmatpush2.bf16.xpose.msra.mxu0 0
    %2975 = vmatprep.subr.bf16.mxu0 0
    %2976 = vmatpush2.bf16.xpose.msra.mxu0 0
    %2977 = vmatprep.subr.bf16.mxu0 0
    %2978 = vmatpush2.bf16.xpose.msra.mxu0 0
    %2979 = vmatprep.mubr.bf16.mxu0 0
    %2980 = vmatmul.mubr.bf16.gmra.mxu0 %v2942
    %v2981 = vpop.f32.mrf.mxu0
    %v2982 = vadd.f32 %v2428, %v2981
    %v2983 = vpop.f32.mrf.mxu0
    %v2984 = vpop.f32.mrf.mxu0
    %v2985 = vpop.f32.mrf.mxu0
    %2986 = vdwg.mxu0
    %v2987 = vsel %vm2674, %v2982, -inf
    %2988 = vmax.xlane.f32.xlu0 %v2987
    %v2989 = vpop.xlane.xlu0 %2988
    %v2990 = vsub.f32 %v2982, %v2989
    %v2991 = vmul.f32 %v2990, 1.442695
    %v2992 = vpow.pop %v2991
    %v2993 = vsel %vm2674, %v2992, 0.0
    %2994 = vadd.xlane.f32.xlu0 %v2993
    %v2995 = vpop.xlane.xlu0 %2994
    %v2996 = vrcp.pop %v2995
    %v2997 = vmul.f32 %v2992, %v2996
    %v2998 = vpack.c.bf16 %v2997, %v2997
    %2999 = vrot.lane.b32.xlu0 %v2627, 64
    %v3000 = vpop.permute.xlu0 %2999
    %v3002 = vsel %vm2687, %v2998, 0
    %v3005 = vand.u32 %v3000, %v2692
    %3007 = vmatprep.subr.bf16.mxu0 0
    %3008 = vmatpush1.bf16.msra.mxu0 0
    %3009 = vmatprep.subr.bf16.mxu0 0
    %3010 = vmatpush1.bf16.msra.mxu0 0
    %3011 = vmatprep.subr.bf16.mxu0 0
    %3012 = vmatpush1.bf16.msra.mxu0 0
    %3013 = vmatprep.subr.bf16.mxu0 0
    %3014 = vmatpush1.bf16.msra.mxu0 0
    %3015 = vmatprep.subr.bf16.mxu0 0
    %3016 = vmatpush1.bf16.msra.mxu0 0
    %3017 = vmatprep.subr.bf16.mxu0 0
    %3018 = vmatpush1.bf16.msra.mxu0 0
    %3019 = vmatprep.subr.bf16.mxu0 0
    %3020 = vmatpush1.bf16.msra.mxu0 0
    %3021 = vmatprep.subr.bf16.mxu0 0
    %3022 = vmatpush1.bf16.msra.mxu0 %v3005
    %3023 = vmatprep.subr.bf16.mxu0 0
    %3024 = vmatpush2.bf16.msra.mxu0 0
    %3025 = vmatprep.subr.bf16.mxu0 0
    %3026 = vmatpush2.bf16.msra.mxu0 0
    %3027 = vmatprep.subr.bf16.mxu0 0
    %3028 = vmatpush2.bf16.msra.mxu0 0
    %3029 = vmatprep.subr.bf16.mxu0 0
    %3030 = vmatpush2.bf16.msra.mxu0 0
    %3031 = vmatprep.subr.bf16.mxu0 0
    %3032 = vmatpush2.bf16.msra.mxu0 0
    %3033 = vmatprep.subr.bf16.mxu0 0
    %3034 = vmatpush2.bf16.msra.mxu0 0
    %3035 = vmatprep.subr.bf16.mxu0 0
    %3036 = vmatpush2.bf16.msra.mxu0 0
    %3037 = vmatprep.subr.bf16.mxu0 0
    %3038 = vmatpush2.bf16.msra.mxu0 0
    %3039 = vmatprep.mubr.bf16.mxu0 0
    %3040 = vmatmul.mubr.bf16.gmra.mxu0 %v3002
    %v3041 = vpop.f32.mrf.mxu0
    %v3042 = vadd.f32 0.0, %v3041
    %v3043 = vpop.f32.mrf.mxu0
    %v3044 = vpop.f32.mrf.mxu0
    %v3045 = vpop.f32.mrf.mxu0
    %3046 = vdwg.mxu0
    %v3047 = vpack.c.bf16 %v3042, %v3042
    %v3049 = vsel %vm581, %v3047, 0
    %3051 = vmatprep.subr.bf16.mxu0 0
    %3052 = vmatpush1.bf16.msra.mxu0 0
    %3053 = vmatprep.subr.bf16.mxu0 0
    %3054 = vmatpush1.bf16.msra.mxu0 0
    %3055 = vmatprep.subr.bf16.mxu0 0
    %3056 = vmatpush1.bf16.msra.mxu0 0
    %3057 = vmatprep.subr.bf16.mxu0 0
    %3058 = vmatpush1.bf16.msra.mxu0 0
    %3059 = vmatprep.subr.bf16.mxu0 0
    %3060 = vmatpush1.bf16.msra.mxu0 0
    %3061 = vmatprep.subr.bf16.mxu0 0
    %3062 = vmatpush1.bf16.msra.mxu0 0
    %3063 = vmatprep.subr.bf16.mxu0 0
    %3064 = vmatpush1.bf16.msra.mxu0 %v2622
    %3065 = vmatprep.subr.bf16.mxu0 0
    %3066 = vmatpush1.bf16.msra.mxu0 %v2621
    %3067 = vmatprep.subr.bf16.mxu0 0
    %3068 = vmatpush2.bf16.msra.mxu0 0
    %3069 = vmatprep.subr.bf16.mxu0 0
    %3070 = vmatpush2.bf16.msra.mxu0 0
    %3071 = vmatprep.subr.bf16.mxu0 0
    %3072 = vmatpush2.bf16.msra.mxu0 0
    %3073 = vmatprep.subr.bf16.mxu0 0
    %3074 = vmatpush2.bf16.msra.mxu0 0
    %3075 = vmatprep.subr.bf16.mxu0 0
    %3076 = vmatpush2.bf16.msra.mxu0 0
    %3077 = vmatprep.subr.bf16.mxu0 0
    %3078 = vmatpush2.bf16.msra.mxu0 0
    %3079 = vmatprep.subr.bf16.mxu0 0
    %3080 = vmatpush2.bf16.msra.mxu0 0
    %3081 = vmatprep.subr.bf16.mxu0 0
    %3082 = vmatpush2.bf16.msra.mxu0 0
    %3083 = vmatprep.mubr.bf16.mxu0 0
    %3084 = vmatmul.mubr.bf16.gmra.mxu0 %v3049
    %v3085 = vpop.f32.mrf.mxu0
    %v3086 = vadd.f32 0.0, %v3085
    %v3087 = vpop.f32.mrf.mxu0
    %v3088 = vpop.f32.mrf.mxu0
    %v3089 = vpop.f32.mrf.mxu0
    %3090 = vdwg.mxu0
    %v3091 = vadd.f32 %v2932, %v3086
    %3092 = vrot.lane.b32.xlu0 %v2625, 32
    %v3093 = vpop.permute.xlu0 %3092
    %3094 = vrot.lane.b32.xlu0 %v2626, 32
    %v3095 = vpop.permute.xlu0 %3094
    %v3097 = vsel %vm581, %v3093, 0
    %v3100 = vsel %vm581, %v3095, 0
    %3102 = vmatprep.subr.bf16.mxu0 0
    %3103 = vmatpush1.bf16.xpose.msra.mxu0 0
    %3104 = vmatprep.subr.bf16.mxu0 0
    %3105 = vmatpush1.bf16.xpose.msra.mxu0 0
    %3106 = vmatprep.subr.bf16.mxu0 0
    %3107 = vmatpush1.bf16.xpose.msra.mxu0 0
    %3108 = vmatprep.subr.bf16.mxu0 0
    %3109 = vmatpush1.bf16.xpose.msra.mxu0 0
    %3110 = vmatprep.subr.bf16.mxu0 0
    %3111 = vmatpush1.bf16.xpose.msra.mxu0 0
    %3112 = vmatprep.subr.bf16.mxu0 0
    %3113 = vmatpush1.bf16.xpose.msra.mxu0 0
    %3114 = vmatprep.subr.bf16.mxu0 0
    %3115 = vmatpush1.bf16.xpose.msra.mxu0 0
    %3116 = vmatprep.subr.bf16.mxu0 0
    %3117 = vmatpush1.bf16.xpose.msra.mxu0 %v3100
    %3118 = vmatprep.subr.bf16.mxu0 0
    %3119 = vmatpush2.bf16.xpose.msra.mxu0 0
    %3120 = vmatprep.subr.bf16.mxu0 0
    %3121 = vmatpush2.bf16.xpose.msra.mxu0 0
    %3122 = vmatprep.subr.bf16.mxu0 0
    %3123 = vmatpush2.bf16.xpose.msra.mxu0 0
    %3124 = vmatprep.subr.bf16.mxu0 0
    %3125 = vmatpush2.bf16.xpose.msra.mxu0 0
    %3126 = vmatprep.subr.bf16.mxu0 0
    %3127 = vmatpush2.bf16.xpose.msra.mxu0 0
    %3128 = vmatprep.subr.bf16.mxu0 0
    %3129 = vmatpush2.bf16.xpose.msra.mxu0 0
    %3130 = vmatprep.subr.bf16.mxu0 0
    %3131 = vmatpush2.bf16.xpose.msra.mxu0 0
    %3132 = vmatprep.subr.bf16.mxu0 0
    %3133 = vmatpush2.bf16.xpose.msra.mxu0 0
    %3134 = vmatprep.mubr.bf16.mxu0 0
    %3135 = vmatmul.mubr.bf16.gmra.mxu0 %v3097
    %v3136 = vpop.f32.mrf.mxu0
    %v3137 = vadd.f32 %v2428, %v3136
    %v3138 = vpop.f32.mrf.mxu0
    %v3139 = vpop.f32.mrf.mxu0
    %v3140 = vpop.f32.mrf.mxu0
    %3141 = vdwg.mxu0
    %v3142 = vsel %vm2674, %v3137, -inf
    %3143 = vmax.xlane.f32.xlu0 %v3142
    %v3144 = vpop.xlane.xlu0 %3143
    %v3145 = vsub.f32 %v3137, %v3144
    %v3146 = vmul.f32 %v3145, 1.442695
    %v3147 = vpow.pop %v3146
    %v3148 = vsel %vm2674, %v3147, 0.0
    %3149 = vadd.xlane.f32.xlu0 %v3148
    %v3150 = vpop.xlane.xlu0 %3149
    %v3151 = vrcp.pop %v3150
    %v3152 = vmul.f32 %v3147, %v3151
    %v3153 = vpack.c.bf16 %v3152, %v3152
    %3154 = vrot.lane.b32.xlu0 %v2627, 32
    %v3155 = vpop.permute.xlu0 %3154
    %v3157 = vsel %vm2687, %v3153, 0
    %v3160 = vand.u32 %v3155, %v2692
    %3162 = vmatprep.subr.bf16.mxu0 0
    %3163 = vmatpush1.bf16.msra.mxu0 0
    %3164 = vmatprep.subr.bf16.mxu0 0
    %3165 = vmatpush1.bf16.msra.mxu0 0
    %3166 = vmatprep.subr.bf16.mxu0 0
    %3167 = vmatpush1.bf16.msra.mxu0 0
    %3168 = vmatprep.subr.bf16.mxu0 0
    %3169 = vmatpush1.bf16.msra.mxu0 0
    %3170 = vmatprep.subr.bf16.mxu0 0
    %3171 = vmatpush1.bf16.msra.mxu0 0
    %3172 = vmatprep.subr.bf16.mxu0 0
    %3173 = vmatpush1.bf16.msra.mxu0 0
    %3174 = vmatprep.subr.bf16.mxu0 0
    %3175 = vmatpush1.bf16.msra.mxu0 0
    %3176 = vmatprep.subr.bf16.mxu0 0
    %3177 = vmatpush1.bf16.msra.mxu0 %v3160
    %3178 = vmatprep.subr.bf16.mxu0 0
    %3179 = vmatpush2.bf16.msra.mxu0 0
    %3180 = vmatprep.subr.bf16.mxu0 0
    %3181 = vmatpush2.bf16.msra.mxu0 0
    %3182 = vmatprep.subr.bf16.mxu0 0
    %3183 = vmatpush2.bf16.msra.mxu0 0
    %3184 = vmatprep.subr.bf16.mxu0 0
    %3185 = vmatpush2.bf16.msra.mxu0 0
    %3186 = vmatprep.subr.bf16.mxu0 0
    %3187 = vmatpush2.bf16.msra.mxu0 0
    %3188 = vmatprep.subr.bf16.mxu0 0
    %3189 = vmatpush2.bf16.msra.mxu0 0
    %3190 = vmatprep.subr.bf16.mxu0 0
    %3191 = vmatpush2.bf16.msra.mxu0 0
    %3192 = vmatprep.subr.bf16.mxu0 0
    %3193 = vmatpush2.bf16.msra.mxu0 0
    %3194 = vmatprep.mubr.bf16.mxu0 0
    %3195 = vmatmul.mubr.bf16.gmra.mxu0 %v3157
    %v3196 = vpop.f32.mrf.mxu0
    %v3197 = vadd.f32 0.0, %v3196
    %v3198 = vpop.f32.mrf.mxu0
    %v3199 = vpop.f32.mrf.mxu0
    %v3200 = vpop.f32.mrf.mxu0
    %3201 = vdwg.mxu0
    %v3202 = vpack.c.bf16 %v3197, %v3197
    %v3204 = vsel %vm581, %v3202, 0
    %3206 = vmatprep.subr.bf16.mxu0 0
    %3207 = vmatpush1.bf16.msra.mxu0 0
    %3208 = vmatprep.subr.bf16.mxu0 0
    %3209 = vmatpush1.bf16.msra.mxu0 0
    %3210 = vmatprep.subr.bf16.mxu0 0
    %3211 = vmatpush1.bf16.msra.mxu0 0
    %3212 = vmatprep.subr.bf16.mxu0 0
    %3213 = vmatpush1.bf16.msra.mxu0 0
    %3214 = vmatprep.subr.bf16.mxu0 0
    %3215 = vmatpush1.bf16.msra.mxu0 0
    %3216 = vmatprep.subr.bf16.mxu0 0
    %3217 = vmatpush1.bf16.msra.mxu0 0
    %3218 = vmatprep.subr.bf16.mxu0 0
    %3219 = vmatpush1.bf16.msra.mxu0 %v2624
    %3220 = vmatprep.subr.bf16.mxu0 0
    %3221 = vmatpush1.bf16.msra.mxu0 %v2623
    %3222 = vmatprep.subr.bf16.mxu0 0
    %3223 = vmatpush2.bf16.msra.mxu0 0
    %3224 = vmatprep.subr.bf16.mxu0 0
    %3225 = vmatpush2.bf16.msra.mxu0 0
    %3226 = vmatprep.subr.bf16.mxu0 0
    %3227 = vmatpush2.bf16.msra.mxu0 0
    %3228 = vmatprep.subr.bf16.mxu0 0
    %3229 = vmatpush2.bf16.msra.mxu0 0
    %3230 = vmatprep.subr.bf16.mxu0 0
    %3231 = vmatpush2.bf16.msra.mxu0 0
    %3232 = vmatprep.subr.bf16.mxu0 0
    %3233 = vmatpush2.bf16.msra.mxu0 0
    %3234 = vmatprep.subr.bf16.mxu0 0
    %3235 = vmatpush2.bf16.msra.mxu0 0
    %3236 = vmatprep.subr.bf16.mxu0 0
    %3237 = vmatpush2.bf16.msra.mxu0 0
    %3238 = vmatprep.mubr.bf16.mxu0 0
    %3239 = vmatmul.mubr.bf16.gmra.mxu0 %v3204
    %v3240 = vpop.f32.mrf.mxu0
    %v3241 = vadd.f32 0.0, %v3240
    %v3242 = vpop.f32.mrf.mxu0
    %v3243 = vpop.f32.mrf.mxu0
    %v3244 = vpop.f32.mrf.mxu0
    %3245 = vdwg.mxu0
    %v3246 = vadd.f32 %v3091, %v3241
    %v3247 = vshrl.u32 %v2625, 16
    %v3249 = vrot.slane %v3247, 1
    %v3250 = vshll.u32 %v2625, 16
    %v3252 = vrot.slane %v3250, 2
    %v3253 = vor.u32 %v3249, %v3252
    %v3254 = vshrl.u32 %v2626, 16
    %v3256 = vrot.slane %v3254, 1
    %v3257 = vshll.u32 %v2626, 16
    %v3259 = vrot.slane %v3257, 2
    %v3260 = vor.u32 %v3256, %v3259
    %v3262 = vsel %vm581, %v3253, 0
    %v3265 = vsel %vm581, %v3260, 0
    %3267 = vmatprep.subr.bf16.mxu0 0
    %3268 = vmatpush1.bf16.xpose.msra.mxu0 0
    %3269 = vmatprep.subr.bf16.mxu0 0
    %3270 = vmatpush1.bf16.xpose.msra.mxu0 0
    %3271 = vmatprep.subr.bf16.mxu0 0
    %3272 = vmatpush1.bf16.xpose.msra.mxu0 0
    %3273 = vmatprep.subr.bf16.mxu0 0
    %3274 = vmatpush1.bf16.xpose.msra.mxu0 0
    %3275 = vmatprep.subr.bf16.mxu0 0
    %3276 = vmatpush1.bf16.xpose.msra.mxu0 0
    %3277 = vmatprep.subr.bf16.mxu0 0
    %3278 = vmatpush1.bf16.xpose.msra.mxu0 0
    %3279 = vmatprep.subr.bf16.mxu0 0
    %3280 = vmatpush1.bf16.xpose.msra.mxu0 0
    %3281 = vmatprep.subr.bf16.mxu0 0
    %3282 = vmatpush1.bf16.xpose.msra.mxu0 %v3265
    %3283 = vmatprep.subr.bf16.mxu0 0
    %3284 = vmatpush2.bf16.xpose.msra.mxu0 0
    %3285 = vmatprep.subr.bf16.mxu0 0
    %3286 = vmatpush2.bf16.xpose.msra.mxu0 0
    %3287 = vmatprep.subr.bf16.mxu0 0
    %3288 = vmatpush2.bf16.xpose.msra.mxu0 0
    %3289 = vmatprep.subr.bf16.mxu0 0
    %3290 = vmatpush2.bf16.xpose.msra.mxu0 0
    %3291 = vmatprep.subr.bf16.mxu0 0
    %3292 = vmatpush2.bf16.xpose.msra.mxu0 0
    %3293 = vmatprep.subr.bf16.mxu0 0
    %3294 = vmatpush2.bf16.xpose.msra.mxu0 0
    %3295 = vmatprep.subr.bf16.mxu0 0
    %3296 = vmatpush2.bf16.xpose.msra.mxu0 0
    %3297 = vmatprep.subr.bf16.mxu0 0
    %3298 = vmatpush2.bf16.xpose.msra.mxu0 0
    %3299 = vmatprep.mubr.bf16.mxu0 0
    %3300 = vmatmul.mubr.bf16.gmra.mxu0 %v3262
    %v3301 = vpop.f32.mrf.mxu0
    %v3302 = vadd.f32 %v2428, %v3301
    %v3303 = vpop.f32.mrf.mxu0
    %v3304 = vpop.f32.mrf.mxu0
    %v3305 = vpop.f32.mrf.mxu0
    %3306 = vdwg.mxu0
    %v3307 = vsel %vm2674, %v3302, -inf
    %3308 = vmax.xlane.f32.xlu0 %v3307
    %v3309 = vpop.xlane.xlu0 %3308
    %v3310 = vsub.f32 %v3302, %v3309
    %v3311 = vmul.f32 %v3310, 1.442695
    %v3312 = vpow.pop %v3311
    %v3313 = vsel %vm2674, %v3312, 0.0
    %3314 = vadd.xlane.f32.xlu0 %v3313
    %v3315 = vpop.xlane.xlu0 %3314
    %v3316 = vrcp.pop %v3315
    %v3317 = vmul.f32 %v3312, %v3316
    %v3318 = vpack.c.bf16 %v3317, %v3317
    %v3319 = vshrl.u32 %v2627, 16
    %v3321 = vrot.slane %v3319, 1
    %v3322 = vshll.u32 %v2627, 16
    %v3324 = vrot.slane %v3322, 2
    %v3325 = vor.u32 %v3321, %v3324
    %v3327 = vsel %vm2687, %v3318, 0
    %v3330 = vand.u32 %v3325, %v2692
    %3332 = vmatprep.subr.bf16.mxu0 0
    %3333 = vmatpush1.bf16.msra.mxu0 0
    %3334 = vmatprep.subr.bf16.mxu0 0
    %3335 = vmatpush1.bf16.msra.mxu0 0
    %3336 = vmatprep.subr.bf16.mxu0 0
    %3337 = vmatpush1.bf16.msra.mxu0 0
    %3338 = vmatprep.subr.bf16.mxu0 0
    %3339 = vmatpush1.bf16.msra.mxu0 0
    %3340 = vmatprep.subr.bf16.mxu0 0
    %3341 = vmatpush1.bf16.msra.mxu0 0
    %3342 = vmatprep.subr.bf16.mxu0 0
    %3343 = vmatpush1.bf16.msra.mxu0 0
    %3344 = vmatprep.subr.bf16.mxu0 0
    %3345 = vmatpush1.bf16.msra.mxu0 0
    %3346 = vmatprep.subr.bf16.mxu0 0
    %3347 = vmatpush1.bf16.msra.mxu0 %v3330
    %3348 = vmatprep.subr.bf16.mxu0 0
    %3349 = vmatpush2.bf16.msra.mxu0 0
    %3350 = vmatprep.subr.bf16.mxu0 0
    %3351 = vmatpush2.bf16.msra.mxu0 0
    %3352 = vmatprep.subr.bf16.mxu0 0
    %3353 = vmatpush2.bf16.msra.mxu0 0
    %3354 = vmatprep.subr.bf16.mxu0 0
    %3355 = vmatpush2.bf16.msra.mxu0 0
    %3356 = vmatprep.subr.bf16.mxu0 0
    %3357 = vmatpush2.bf16.msra.mxu0 0
    %3358 = vmatprep.subr.bf16.mxu0 0
    %3359 = vmatpush2.bf16.msra.mxu0 0
    %3360 = vmatprep.subr.bf16.mxu0 0
    %3361 = vmatpush2.bf16.msra.mxu0 0
    %3362 = vmatprep.subr.bf16.mxu0 0
    %3363 = vmatpush2.bf16.msra.mxu0 0
    %3364 = vmatprep.mubr.bf16.mxu0 0
    %3365 = vmatmul.mubr.bf16.gmra.mxu0 %v3327
    %v3366 = vpop.f32.mrf.mxu0
    %v3367 = vadd.f32 0.0, %v3366
    %v3368 = vpop.f32.mrf.mxu0
    %v3369 = vpop.f32.mrf.mxu0
    %v3370 = vpop.f32.mrf.mxu0
    %3371 = vdwg.mxu0
    %v3372 = vpack.c.bf16 %v3367, %v3367
    %3373 = vrot.lane.b32.xlu0 %v3253, 96
    %v3374 = vpop.permute.xlu0 %3373
    %3375 = vrot.lane.b32.xlu0 %v3260, 96
    %v3376 = vpop.permute.xlu0 %3375
    %v3378 = vsel %vm581, %v3374, 0
    %v3381 = vsel %vm581, %v3376, 0
    %3383 = vmatprep.subr.bf16.mxu0 0
    %3384 = vmatpush1.bf16.xpose.msra.mxu0 0
    %3385 = vmatprep.subr.bf16.mxu0 0
    %3386 = vmatpush1.bf16.xpose.msra.mxu0 0
    %3387 = vmatprep.subr.bf16.mxu0 0
    %3388 = vmatpush1.bf16.xpose.msra.mxu0 0
    %3389 = vmatprep.subr.bf16.mxu0 0
    %3390 = vmatpush1.bf16.xpose.msra.mxu0 0
    %3391 = vmatprep.subr.bf16.mxu0 0
    %3392 = vmatpush1.bf16.xpose.msra.mxu0 0
    %3393 = vmatprep.subr.bf16.mxu0 0
    %3394 = vmatpush1.bf16.xpose.msra.mxu0 0
    %3395 = vmatprep.subr.bf16.mxu0 0
    %3396 = vmatpush1.bf16.xpose.msra.mxu0 0
    %3397 = vmatprep.subr.bf16.mxu0 0
    %3398 = vmatpush1.bf16.xpose.msra.mxu0 %v3381
    %3399 = vmatprep.subr.bf16.mxu0 0
    %3400 = vmatpush2.bf16.xpose.msra.mxu0 0
    %3401 = vmatprep.subr.bf16.mxu0 0
    %3402 = vmatpush2.bf16.xpose.msra.mxu0 0
    %3403 = vmatprep.subr.bf16.mxu0 0
    %3404 = vmatpush2.bf16.xpose.msra.mxu0 0
    %3405 = vmatprep.subr.bf16.mxu0 0
    %3406 = vmatpush2.bf16.xpose.msra.mxu0 0
    %3407 = vmatprep.subr.bf16.mxu0 0
    %3408 = vmatpush2.bf16.xpose.msra.mxu0 0
    %3409 = vmatprep.subr.bf16.mxu0 0
    %3410 = vmatpush2.bf16.xpose.msra.mxu0 0
    %3411 = vmatprep.subr.bf16.mxu0 0
    %3412 = vmatpush2.bf16.xpose.msra.mxu0 0
    %3413 = vmatprep.subr.bf16.mxu0 0
    %3414 = vmatpush2.bf16.xpose.msra.mxu0 0
    %3415 = vmatprep.mubr.bf16.mxu0 0
    %3416 = vmatmul.mubr.bf16.gmra.mxu0 %v3378
    %v3417 = vpop.f32.mrf.mxu0
    %v3418 = vadd.f32 %v2428, %v3417
    %v3419 = vpop.f32.mrf.mxu0
    %v3420 = vpop.f32.mrf.mxu0
    %v3421 = vpop.f32.mrf.mxu0
    %3422 = vdwg.mxu0
    %v3423 = vsel %vm2674, %v3418, -inf
    %3424 = vmax.xlane.f32.xlu0 %v3423
    %v3425 = vpop.xlane.xlu0 %3424
    %v3426 = vsub.f32 %v3418, %v3425
    %v3427 = vmul.f32 %v3426, 1.442695
    %v3428 = vpow.pop %v3427
    %v3429 = vsel %vm2674, %v3428, 0.0
    %3430 = vadd.xlane.f32.xlu0 %v3429
    %v3431 = vpop.xlane.xlu0 %3430
    %v3432 = vrcp.pop %v3431
    %v3433 = vmul.f32 %v3428, %v3432
    %v3434 = vpack.c.bf16 %v3433, %v3433
    %3435 = vrot.lane.b32.xlu0 %v3325, 96
    %v3436 = vpop.permute.xlu0 %3435
    %v3438 = vsel %vm2687, %v3434, 0
    %v3441 = vand.u32 %v3436, %v2692
    %3443 = vmatprep.subr.bf16.mxu0 0
    %3444 = vmatpush1.bf16.msra.mxu0 0
    %3445 = vmatprep.subr.bf16.mxu0 0
    %3446 = vmatpush1.bf16.msra.mxu0 0
    %3447 = vmatprep.subr.bf16.mxu0 0
    %3448 = vmatpush1.bf16.msra.mxu0 0
    %3449 = vmatprep.subr.bf16.mxu0 0
    %3450 = vmatpush1.bf16.msra.mxu0 0
    %3451 = vmatprep.subr.bf16.mxu0 0
    %3452 = vmatpush1.bf16.msra.mxu0 0
    %3453 = vmatprep.subr.bf16.mxu0 0
    %3454 = vmatpush1.bf16.msra.mxu0 0
    %3455 = vmatprep.subr.bf16.mxu0 0
    %3456 = vmatpush1.bf16.msra.mxu0 0
    %3457 = vmatprep.subr.bf16.mxu0 0
    %3458 = vmatpush1.bf16.msra.mxu0 %v3441
    %3459 = vmatprep.subr.bf16.mxu0 0
    %3460 = vmatpush2.bf16.msra.mxu0 0
    %3461 = vmatprep.subr.bf16.mxu0 0
    %3462 = vmatpush2.bf16.msra.mxu0 0
    %3463 = vmatprep.subr.bf16.mxu0 0
    %3464 = vmatpush2.bf16.msra.mxu0 0
    %3465 = vmatprep.subr.bf16.mxu0 0
    %3466 = vmatpush2.bf16.msra.mxu0 0
    %3467 = vmatprep.subr.bf16.mxu0 0
    %3468 = vmatpush2.bf16.msra.mxu0 0
    %3469 = vmatprep.subr.bf16.mxu0 0
    %3470 = vmatpush2.bf16.msra.mxu0 0
    %3471 = vmatprep.subr.bf16.mxu0 0
    %3472 = vmatpush2.bf16.msra.mxu0 0
    %3473 = vmatprep.subr.bf16.mxu0 0
    %3474 = vmatpush2.bf16.msra.mxu0 0
    %3475 = vmatprep.mubr.bf16.mxu0 0
    %3476 = vmatmul.mubr.bf16.gmra.mxu0 %v3438
    %v3477 = vpop.f32.mrf.mxu0
    %v3478 = vadd.f32 0.0, %v3477
    %v3479 = vpop.f32.mrf.mxu0
    %v3480 = vpop.f32.mrf.mxu0
    %v3481 = vpop.f32.mrf.mxu0
    %3482 = vdwg.mxu0
    %v3483 = vpack.c.bf16 %v3478, %v3478
    %v3485 = vsel %vm581, %v3483, 0
    %3487 = vmatprep.subr.bf16.mxu0 0
    %3488 = vmatpush1.bf16.msra.mxu0 0
    %3489 = vmatprep.subr.bf16.mxu0 0
    %3490 = vmatpush1.bf16.msra.mxu0 0
    %3491 = vmatprep.subr.bf16.mxu0 0
    %3492 = vmatpush1.bf16.msra.mxu0 0
    %3493 = vmatprep.subr.bf16.mxu0 0
    %3494 = vmatpush1.bf16.msra.mxu0 0
    %3495 = vmatprep.subr.bf16.mxu0 0
    %3496 = vmatpush1.bf16.msra.mxu0 0
    %3497 = vmatprep.subr.bf16.mxu0 0
    %3498 = vmatpush1.bf16.msra.mxu0 0
    %3499 = vmatprep.subr.bf16.mxu0 0
    %3500 = vmatpush1.bf16.msra.mxu0 %v2620
    %3501 = vmatprep.subr.bf16.mxu0 0
    %3502 = vmatpush1.bf16.msra.mxu0 %v2619
    %3503 = vmatprep.subr.bf16.mxu0 0
    %3504 = vmatpush2.bf16.msra.mxu0 0
    %3505 = vmatprep.subr.bf16.mxu0 0
    %3506 = vmatpush2.bf16.msra.mxu0 0
    %3507 = vmatprep.subr.bf16.mxu0 0
    %3508 = vmatpush2.bf16.msra.mxu0 0
    %3509 = vmatprep.subr.bf16.mxu0 0
    %3510 = vmatpush2.bf16.msra.mxu0 0
    %3511 = vmatprep.subr.bf16.mxu0 0
    %3512 = vmatpush2.bf16.msra.mxu0 0
    %3513 = vmatprep.subr.bf16.mxu0 0
    %3514 = vmatpush2.bf16.msra.mxu0 0
    %3515 = vmatprep.subr.bf16.mxu0 0
    %3516 = vmatpush2.bf16.msra.mxu0 0
    %3517 = vmatprep.subr.bf16.mxu0 0
    %3518 = vmatpush2.bf16.msra.mxu0 0
    %3519 = vmatprep.mubr.bf16.mxu0 0
    %3520 = vmatmul.mubr.bf16.gmra.mxu0 %v3485
    %v3521 = vpop.f32.mrf.mxu0
    %v3522 = vadd.f32 0.0, %v3521
    %v3523 = vpop.f32.mrf.mxu0
    %v3524 = vpop.f32.mrf.mxu0
    %v3525 = vpop.f32.mrf.mxu0
    %3526 = vdwg.mxu0
    %v3528 = vsel %vm581, %v3372, 0
    %3530 = vmatprep.subr.bf16.mxu0 0
    %3531 = vmatpush1.bf16.msra.mxu0 0
    %3532 = vmatprep.subr.bf16.mxu0 0
    %3533 = vmatpush1.bf16.msra.mxu0 0
    %3534 = vmatprep.subr.bf16.mxu0 0
    %3535 = vmatpush1.bf16.msra.mxu0 0
    %3536 = vmatprep.subr.bf16.mxu0 0
    %3537 = vmatpush1.bf16.msra.mxu0 0
    %3538 = vmatprep.subr.bf16.mxu0 0
    %3539 = vmatpush1.bf16.msra.mxu0 0
    %3540 = vmatprep.subr.bf16.mxu0 0
    %3541 = vmatpush1.bf16.msra.mxu0 0
    %3542 = vmatprep.subr.bf16.mxu0 0
    %3543 = vmatpush1.bf16.msra.mxu0 %v2618
    %3544 = vmatprep.subr.bf16.mxu0 0
    %3545 = vmatpush1.bf16.msra.mxu0 %v2617
    %3546 = vmatprep.subr.bf16.mxu0 0
    %3547 = vmatpush2.bf16.msra.mxu0 0
    %3548 = vmatprep.subr.bf16.mxu0 0
    %3549 = vmatpush2.bf16.msra.mxu0 0
    %3550 = vmatprep.subr.bf16.mxu0 0
    %3551 = vmatpush2.bf16.msra.mxu0 0
    %3552 = vmatprep.subr.bf16.mxu0 0
    %3553 = vmatpush2.bf16.msra.mxu0 0
    %3554 = vmatprep.subr.bf16.mxu0 0
    %3555 = vmatpush2.bf16.msra.mxu0 0
    %3556 = vmatprep.subr.bf16.mxu0 0
    %3557 = vmatpush2.bf16.msra.mxu0 0
    %3558 = vmatprep.subr.bf16.mxu0 0
    %3559 = vmatpush2.bf16.msra.mxu0 0
    %3560 = vmatprep.subr.bf16.mxu0 0
    %3561 = vmatpush2.bf16.msra.mxu0 0
    %3562 = vmatprep.mubr.bf16.mxu0 0
    %3563 = vmatmul.mubr.bf16.gmra.mxu0 %v3528
    %v3564 = vpop.f32.mrf.mxu0
    %v3565 = vadd.f32 %v3522, %v3564
    %v3566 = vpop.f32.mrf.mxu0
    %v3567 = vpop.f32.mrf.mxu0
    %v3568 = vpop.f32.mrf.mxu0
    %3569 = vdwg.mxu0
    %3570 = vrot.lane.b32.xlu0 %v3253, 64
    %v3571 = vpop.permute.xlu0 %3570
    %3572 = vrot.lane.b32.xlu0 %v3260, 64
    %v3573 = vpop.permute.xlu0 %3572
    %v3575 = vsel %vm581, %v3571, 0
    %v3578 = vsel %vm581, %v3573, 0
    %3580 = vmatprep.subr.bf16.mxu0 0
    %3581 = vmatpush1.bf16.xpose.msra.mxu0 0
    %3582 = vmatprep.subr.bf16.mxu0 0
    %3583 = vmatpush1.bf16.xpose.msra.mxu0 0
    %3584 = vmatprep.subr.bf16.mxu0 0
    %3585 = vmatpush1.bf16.xpose.msra.mxu0 0
    %3586 = vmatprep.subr.bf16.mxu0 0
    %3587 = vmatpush1.bf16.xpose.msra.mxu0 0
    %3588 = vmatprep.subr.bf16.mxu0 0
    %3589 = vmatpush1.bf16.xpose.msra.mxu0 0
    %3590 = vmatprep.subr.bf16.mxu0 0
    %3591 = vmatpush1.bf16.xpose.msra.mxu0 0
    %3592 = vmatprep.subr.bf16.mxu0 0
    %3593 = vmatpush1.bf16.xpose.msra.mxu0 0
    %3594 = vmatprep.subr.bf16.mxu0 0
    %3595 = vmatpush1.bf16.xpose.msra.mxu0 %v3578
    %3596 = vmatprep.subr.bf16.mxu0 0
    %3597 = vmatpush2.bf16.xpose.msra.mxu0 0
    %3598 = vmatprep.subr.bf16.mxu0 0
    %3599 = vmatpush2.bf16.xpose.msra.mxu0 0
    %3600 = vmatprep.subr.bf16.mxu0 0
    %3601 = vmatpush2.bf16.xpose.msra.mxu0 0
    %3602 = vmatprep.subr.bf16.mxu0 0
    %3603 = vmatpush2.bf16.xpose.msra.mxu0 0
    %3604 = vmatprep.subr.bf16.mxu0 0
    %3605 = vmatpush2.bf16.xpose.msra.mxu0 0
    %3606 = vmatprep.subr.bf16.mxu0 0
    %3607 = vmatpush2.bf16.xpose.msra.mxu0 0
    %3608 = vmatprep.subr.bf16.mxu0 0
    %3609 = vmatpush2.bf16.xpose.msra.mxu0 0
    %3610 = vmatprep.subr.bf16.mxu0 0
    %3611 = vmatpush2.bf16.xpose.msra.mxu0 0
    %3612 = vmatprep.mubr.bf16.mxu0 0
    %3613 = vmatmul.mubr.bf16.gmra.mxu0 %v3575
    %v3614 = vpop.f32.mrf.mxu0
    %v3615 = vadd.f32 %v2428, %v3614
    %v3616 = vpop.f32.mrf.mxu0
    %v3617 = vpop.f32.mrf.mxu0
    %v3618 = vpop.f32.mrf.mxu0
    %3619 = vdwg.mxu0
    %v3620 = vsel %vm2674, %v3615, -inf
    %3621 = vmax.xlane.f32.xlu0 %v3620
    %v3622 = vpop.xlane.xlu0 %3621
    %v3623 = vsub.f32 %v3615, %v3622
    %v3624 = vmul.f32 %v3623, 1.442695
    %v3625 = vpow.pop %v3624
    %v3626 = vsel %vm2674, %v3625, 0.0
    %3627 = vadd.xlane.f32.xlu0 %v3626
    %v3628 = vpop.xlane.xlu0 %3627
    %v3629 = vrcp.pop %v3628
    %v3630 = vmul.f32 %v3625, %v3629
    %v3631 = vpack.c.bf16 %v3630, %v3630
    %3632 = vrot.lane.b32.xlu0 %v3325, 64
    %v3633 = vpop.permute.xlu0 %3632
    %v3635 = vsel %vm2687, %v3631, 0
    %v3638 = vand.u32 %v3633, %v2692
    %3640 = vmatprep.subr.bf16.mxu0 0
    %3641 = vmatpush1.bf16.msra.mxu0 0
    %3642 = vmatprep.subr.bf16.mxu0 0
    %3643 = vmatpush1.bf16.msra.mxu0 0
    %3644 = vmatprep.subr.bf16.mxu0 0
    %3645 = vmatpush1.bf16.msra.mxu0 0
    %3646 = vmatprep.subr.bf16.mxu0 0
    %3647 = vmatpush1.bf16.msra.mxu0 0
    %3648 = vmatprep.subr.bf16.mxu0 0
    %3649 = vmatpush1.bf16.msra.mxu0 0
    %3650 = vmatprep.subr.bf16.mxu0 0
    %3651 = vmatpush1.bf16.msra.mxu0 0
    %3652 = vmatprep.subr.bf16.mxu0 0
    %3653 = vmatpush1.bf16.msra.mxu0 0
    %3654 = vmatprep.subr.bf16.mxu0 0
    %3655 = vmatpush1.bf16.msra.mxu0 %v3638
    %3656 = vmatprep.subr.bf16.mxu0 0
    %3657 = vmatpush2.bf16.msra.mxu0 0
    %3658 = vmatprep.subr.bf16.mxu0 0
    %3659 = vmatpush2.bf16.msra.mxu0 0
    %3660 = vmatprep.subr.bf16.mxu0 0
    %3661 = vmatpush2.bf16.msra.mxu0 0
    %3662 = vmatprep.subr.bf16.mxu0 0
    %3663 = vmatpush2.bf16.msra.mxu0 0
    %3664 = vmatprep.subr.bf16.mxu0 0
    %3665 = vmatpush2.bf16.msra.mxu0 0
    %3666 = vmatprep.subr.bf16.mxu0 0
    %3667 = vmatpush2.bf16.msra.mxu0 0
    %3668 = vmatprep.subr.bf16.mxu0 0
    %3669 = vmatpush2.bf16.msra.mxu0 0
    %3670 = vmatprep.subr.bf16.mxu0 0
    %3671 = vmatpush2.bf16.msra.mxu0 0
    %3672 = vmatprep.mubr.bf16.mxu0 0
    %3673 = vmatmul.mubr.bf16.gmra.mxu0 %v3635
    %v3674 = vpop.f32.mrf.mxu0
    %v3675 = vadd.f32 0.0, %v3674
    %v3676 = vpop.f32.mrf.mxu0
    %v3677 = vpop.f32.mrf.mxu0
    %v3678 = vpop.f32.mrf.mxu0
    %3679 = vdwg.mxu0
    %v3680 = vpack.c.bf16 %v3675, %v3675
    %v3682 = vsel %vm581, %v3680, 0
    %3684 = vmatprep.subr.bf16.mxu0 0
    %3685 = vmatpush1.bf16.msra.mxu0 0
    %3686 = vmatprep.subr.bf16.mxu0 0
    %3687 = vmatpush1.bf16.msra.mxu0 0
    %3688 = vmatprep.subr.bf16.mxu0 0
    %3689 = vmatpush1.bf16.msra.mxu0 0
    %3690 = vmatprep.subr.bf16.mxu0 0
    %3691 = vmatpush1.bf16.msra.mxu0 0
    %3692 = vmatprep.subr.bf16.mxu0 0
    %3693 = vmatpush1.bf16.msra.mxu0 0
    %3694 = vmatprep.subr.bf16.mxu0 0
    %3695 = vmatpush1.bf16.msra.mxu0 0
    %3696 = vmatprep.subr.bf16.mxu0 0
    %3697 = vmatpush1.bf16.msra.mxu0 %v2622
    %3698 = vmatprep.subr.bf16.mxu0 0
    %3699 = vmatpush1.bf16.msra.mxu0 %v2621
    %3700 = vmatprep.subr.bf16.mxu0 0
    %3701 = vmatpush2.bf16.msra.mxu0 0
    %3702 = vmatprep.subr.bf16.mxu0 0
    %3703 = vmatpush2.bf16.msra.mxu0 0
    %3704 = vmatprep.subr.bf16.mxu0 0
    %3705 = vmatpush2.bf16.msra.mxu0 0
    %3706 = vmatprep.subr.bf16.mxu0 0
    %3707 = vmatpush2.bf16.msra.mxu0 0
    %3708 = vmatprep.subr.bf16.mxu0 0
    %3709 = vmatpush2.bf16.msra.mxu0 0
    %3710 = vmatprep.subr.bf16.mxu0 0
    %3711 = vmatpush2.bf16.msra.mxu0 0
    %3712 = vmatprep.subr.bf16.mxu0 0
    %3713 = vmatpush2.bf16.msra.mxu0 0
    %3714 = vmatprep.subr.bf16.mxu0 0
    %3715 = vmatpush2.bf16.msra.mxu0 0
    %3716 = vmatprep.mubr.bf16.mxu0 0
    %3717 = vmatmul.mubr.bf16.gmra.mxu0 %v3682
    %v3718 = vpop.f32.mrf.mxu0
    %v3719 = vadd.f32 0.0, %v3718
    %v3720 = vpop.f32.mrf.mxu0
    %v3721 = vpop.f32.mrf.mxu0
    %v3722 = vpop.f32.mrf.mxu0
    %3723 = vdwg.mxu0
    %v3724 = vadd.f32 %v3565, %v3719
    %3725 = vrot.lane.b32.xlu0 %v3253, 32
    %v3726 = vpop.permute.xlu0 %3725
    %3727 = vrot.lane.b32.xlu0 %v3260, 32
    %v3728 = vpop.permute.xlu0 %3727
    %v3730 = vsel %vm581, %v3726, 0
    %v3733 = vsel %vm581, %v3728, 0
    %3735 = vmatprep.subr.bf16.mxu0 0
    %3736 = vmatpush1.bf16.xpose.msra.mxu0 0
    %3737 = vmatprep.subr.bf16.mxu0 0
    %3738 = vmatpush1.bf16.xpose.msra.mxu0 0
    %3739 = vmatprep.subr.bf16.mxu0 0
    %3740 = vmatpush1.bf16.xpose.msra.mxu0 0
    %3741 = vmatprep.subr.bf16.mxu0 0
    %3742 = vmatpush1.bf16.xpose.msra.mxu0 0
    %3743 = vmatprep.subr.bf16.mxu0 0
    %3744 = vmatpush1.bf16.xpose.msra.mxu0 0
    %3745 = vmatprep.subr.bf16.mxu0 0
    %3746 = vmatpush1.bf16.xpose.msra.mxu0 0
    %3747 = vmatprep.subr.bf16.mxu0 0
    %3748 = vmatpush1.bf16.xpose.msra.mxu0 0
    %3749 = vmatprep.subr.bf16.mxu0 0
    %3750 = vmatpush1.bf16.xpose.msra.mxu0 %v3733
    %3751 = vmatprep.subr.bf16.mxu0 0
    %3752 = vmatpush2.bf16.xpose.msra.mxu0 0
    %3753 = vmatprep.subr.bf16.mxu0 0
    %3754 = vmatpush2.bf16.xpose.msra.mxu0 0
    %3755 = vmatprep.subr.bf16.mxu0 0
    %3756 = vmatpush2.bf16.xpose.msra.mxu0 0
    %3757 = vmatprep.subr.bf16.mxu0 0
    %3758 = vmatpush2.bf16.xpose.msra.mxu0 0
    %3759 = vmatprep.subr.bf16.mxu0 0
    %3760 = vmatpush2.bf16.xpose.msra.mxu0 0
    %3761 = vmatprep.subr.bf16.mxu0 0
    %3762 = vmatpush2.bf16.xpose.msra.mxu0 0
    %3763 = vmatprep.subr.bf16.mxu0 0
    %3764 = vmatpush2.bf16.xpose.msra.mxu0 0
    %3765 = vmatprep.subr.bf16.mxu0 0
    %3766 = vmatpush2.bf16.xpose.msra.mxu0 0
    %3767 = vmatprep.mubr.bf16.mxu0 0
    %3768 = vmatmul.mubr.bf16.gmra.mxu0 %v3730
    %v3769 = vpop.f32.mrf.mxu0
    %v3770 = vadd.f32 %v2428, %v3769
    %v3771 = vpop.f32.mrf.mxu0
    %v3772 = vpop.f32.mrf.mxu0
    %v3773 = vpop.f32.mrf.mxu0
    %3774 = vdwg.mxu0
    %v3775 = vsel %vm2674, %v3770, -inf
    %3776 = vmax.xlane.f32.xlu0 %v3775
    %v3777 = vpop.xlane.xlu0 %3776
    %v3778 = vsub.f32 %v3770, %v3777
    %v3779 = vmul.f32 %v3778, 1.442695
    %v3780 = vpow.pop %v3779
    %v3781 = vsel %vm2674, %v3780, 0.0
    %3782 = vadd.xlane.f32.xlu0 %v3781
    %v3783 = vpop.xlane.xlu0 %3782
    %v3784 = vrcp.pop %v3783
    %v3785 = vmul.f32 %v3780, %v3784
    %v3786 = vpack.c.bf16 %v3785, %v3785
    %3787 = vrot.lane.b32.xlu0 %v3325, 32
    %v3788 = vpop.permute.xlu0 %3787
    %v3790 = vsel %vm2687, %v3786, 0
    %v3793 = vand.u32 %v3788, %v2692
    %3795 = vmatprep.subr.bf16.mxu0 0
    %3796 = vmatpush1.bf16.msra.mxu0 0
    %3797 = vmatprep.subr.bf16.mxu0 0
    %3798 = vmatpush1.bf16.msra.mxu0 0
    %3799 = vmatprep.subr.bf16.mxu0 0
    %3800 = vmatpush1.bf16.msra.mxu0 0
    %3801 = vmatprep.subr.bf16.mxu0 0
    %3802 = vmatpush1.bf16.msra.mxu0 0
    %3803 = vmatprep.subr.bf16.mxu0 0
    %3804 = vmatpush1.bf16.msra.mxu0 0
    %3805 = vmatprep.subr.bf16.mxu0 0
    %3806 = vmatpush1.bf16.msra.mxu0 0
    %3807 = vmatprep.subr.bf16.mxu0 0
    %3808 = vmatpush1.bf16.msra.mxu0 0
    %3809 = vmatprep.subr.bf16.mxu0 0
    %3810 = vmatpush1.bf16.msra.mxu0 %v3793
    %3811 = vmatprep.subr.bf16.mxu0 0
    %3812 = vmatpush2.bf16.msra.mxu0 0
    %3813 = vmatprep.subr.bf16.mxu0 0
    %3814 = vmatpush2.bf16.msra.mxu0 0
    %3815 = vmatprep.subr.bf16.mxu0 0
    %3816 = vmatpush2.bf16.msra.mxu0 0
    %3817 = vmatprep.subr.bf16.mxu0 0
    %3818 = vmatpush2.bf16.msra.mxu0 0
    %3819 = vmatprep.subr.bf16.mxu0 0
    %3820 = vmatpush2.bf16.msra.mxu0 0
    %3821 = vmatprep.subr.bf16.mxu0 0
    %3822 = vmatpush2.bf16.msra.mxu0 0
    %3823 = vmatprep.subr.bf16.mxu0 0
    %3824 = vmatpush2.bf16.msra.mxu0 0
    %3825 = vmatprep.subr.bf16.mxu0 0
    %3826 = vmatpush2.bf16.msra.mxu0 0
    %3827 = vmatprep.mubr.bf16.mxu0 0
    %3828 = vmatmul.mubr.bf16.gmra.mxu0 %v3790
    %v3829 = vpop.f32.mrf.mxu0
    %v3830 = vadd.f32 0.0, %v3829
    %v3831 = vpop.f32.mrf.mxu0
    %v3832 = vpop.f32.mrf.mxu0
    %v3833 = vpop.f32.mrf.mxu0
    %3834 = vdwg.mxu0
    %v3835 = vpack.c.bf16 %v3830, %v3830
    %v3837 = vsel %vm581, %v3835, 0
    %3839 = vmatprep.subr.bf16.mxu0 0
    %3840 = vmatpush1.bf16.msra.mxu0 0
    %3841 = vmatprep.subr.bf16.mxu0 0
    %3842 = vmatpush1.bf16.msra.mxu0 0
    %3843 = vmatprep.subr.bf16.mxu0 0
    %3844 = vmatpush1.bf16.msra.mxu0 0
    %3845 = vmatprep.subr.bf16.mxu0 0
    %3846 = vmatpush1.bf16.msra.mxu0 0
    %3847 = vmatprep.subr.bf16.mxu0 0
    %3848 = vmatpush1.bf16.msra.mxu0 0
    %3849 = vmatprep.subr.bf16.mxu0 0
    %3850 = vmatpush1.bf16.msra.mxu0 0
    %3851 = vmatprep.subr.bf16.mxu0 0
    %3852 = vmatpush1.bf16.msra.mxu0 %v2624
    %3853 = vmatprep.subr.bf16.mxu0 0
    %3854 = vmatpush1.bf16.msra.mxu0 %v2623
    %3855 = vmatprep.subr.bf16.mxu0 0
    %3856 = vmatpush2.bf16.msra.mxu0 0
    %3857 = vmatprep.subr.bf16.mxu0 0
    %3858 = vmatpush2.bf16.msra.mxu0 0
    %3859 = vmatprep.subr.bf16.mxu0 0
    %3860 = vmatpush2.bf16.msra.mxu0 0
    %3861 = vmatprep.subr.bf16.mxu0 0
    %3862 = vmatpush2.bf16.msra.mxu0 0
    %3863 = vmatprep.subr.bf16.mxu0 0
    %3864 = vmatpush2.bf16.msra.mxu0 0
    %3865 = vmatprep.subr.bf16.mxu0 0
    %3866 = vmatpush2.bf16.msra.mxu0 0
    %3867 = vmatprep.subr.bf16.mxu0 0
    %3868 = vmatpush2.bf16.msra.mxu0 0
    %3869 = vmatprep.subr.bf16.mxu0 0
    %3870 = vmatpush2.bf16.msra.mxu0 0
    %3871 = vmatprep.mubr.bf16.mxu0 0
    %3872 = vmatmul.mubr.bf16.gmra.mxu0 %v3837
    %v3873 = vpop.f32.mrf.mxu0
    %v3874 = vadd.f32 0.0, %v3873
    %v3875 = vpop.f32.mrf.mxu0
    %v3876 = vpop.f32.mrf.mxu0
    %v3877 = vpop.f32.mrf.mxu0
    %3878 = vdwg.mxu0
    %v3879 = vadd.f32 %v3724, %v3874
    %v3881 = vrot.slane %v3879, 5
    %v3883 = vsel %vm2387, %v3246, %v3881
    %v3884 = vld [vmem:[#allocation4 + $0x3f8] sm:$0x1]
    %v3885 = vlaneseq
    %v3886 = vshrl.u32 %v3885, 7
    %v3887 = vsub.s32 0, %v3886
    %v3888 = vrot.slane %v3884, %v3887
    %v3889 = vadd.f32 %v3883, %v3888
    %v3890 = vadd.f32 %v2422, %v3889
    %v3891 = vsel %vm2397, %v3890, 0.0
    %3892 = vadd.xlane.f32.xlu0 %v3891
    %v3893 = vpop.xlane.xlu0 %3892
    %v3894 = vmul.f32 %v3893, %v318
    %v3895 = vsub.f32 %v3890, %v3894
    %v3896 = vmul.f32 %v3895, %v3895
    %v3897 = vsel %vm2397, %v3896, 0.0
    %3898 = vadd.xlane.f32.xlu0 %v3897
    %v3899 = vpop.xlane.xlu0 %3898
    %v3900 = vmul.f32 %v3899, %v318
    %v3901 = vadd.f32 %v3900, 1e-05
    %v3902 = vrsqrt.pop %v3901
    %v3903 = vmul.f32 %v3895, %v3902
    %v3904 = vld [vmem:[#allocation4 + $0x400] sm:$0x1]
    %v3905 = vlaneseq
    %v3906 = vshrl.u32 %v3905, 7
    %v3907 = vsub.s32 0, %v3906
    %v3908 = vrot.slane %v3904, %v3907
    %v3909 = vmul.f32 %v3903, %v3908
    %v3910 = vld [vmem:[#allocation4 + $0x408] sm:$0x1]
    %v3911 = vlaneseq
    %v3912 = vshrl.u32 %v3911, 7
    %v3913 = vsub.s32 0, %v3912
    %v3914 = vrot.slane %v3910, %v3913
    %v3915 = vadd.f32 %v3909, %v3914
    %v3916 = vpack.c.bf16 %v3915, %v3915
    %v3917 = vld [vmem:[#allocation4 + $0x410] sm:$0xff]
    %v3918 = vld [vmem:[#allocation4 + $0x418] sm:$0xff]
    %v3919 = vld [vmem:[#allocation4 + $0x420] sm:$0xff]
    %v3920 = vld [vmem:[#allocation4 + $0x428] sm:$0xff]
    %v3921 = vld [vmem:[#allocation4 + $0x430] sm:$0xff]
    %v3922 = vld [vmem:[#allocation4 + $0x438] sm:$0xff]
    %v3923 = vld [vmem:[#allocation4 + $0x440] sm:$0xff]
    %v3924 = vld [vmem:[#allocation4 + $0x448] sm:$0xff]
    %v3925 = vld [vmem:[#allocation4 + $0x450] sm:$0xff]
    %v3926 = vld [vmem:[#allocation4 + $0x458] sm:$0xff]
    %v3927 = vld [vmem:[#allocation4 + $0x460] sm:$0xff]
    %v3928 = vld [vmem:[#allocation4 + $0x468] sm:$0xff]
    %v3929 = vld [vmem:[#allocation4 + $0x470] sm:$0xff]
    %v3930 = vld [vmem:[#allocation4 + $0x478] sm:$0xff]
    %v3931 = vld [vmem:[#allocation4 + $0x480] sm:$0xff]
    %v3932 = vld [vmem:[#allocation4 + $0x488] sm:$0xff]
    %v3933 = vpack.c.bf16 %v3918, %v3917
    %v3934 = vpack.c.bf16 %v3920, %v3919
    %v3935 = vpack.c.bf16 %v3922, %v3921
    %v3936 = vpack.c.bf16 %v3924, %v3923
    %v3937 = vpack.c.bf16 %v3926, %v3925
    %v3938 = vpack.c.bf16 %v3928, %v3927
    %v3939 = vpack.c.bf16 %v3930, %v3929
    %v3940 = vpack.c.bf16 %v3932, %v3931
    %v3941 = vld [vmem:[#allocation4 + $0x490] sm:$0x1]
    %v3942 = vlaneseq
    %v3943 = vshrl.u32 %v3942, 7
    %v3944 = vsub.s32 0, %v3943
    %v3945 = vrot.slane %v3941, %v3944
    %3946 = vmatprep.subr.bf16.mxu0 0
    %3947 = vmatpush1.bf16.msra.mxu0 %v3940
    %3948 = vmatprep.subr.bf16.mxu0 0
    %3949 = vmatpush1.bf16.msra.mxu0 %v3939
    %3950 = vmatprep.subr.bf16.mxu0 0
    %3951 = vmatpush1.bf16.msra.mxu0 %v3938
    %3952 = vmatprep.subr.bf16.mxu0 0
    %3953 = vmatpush1.bf16.msra.mxu0 %v3937
    %3954 = vmatprep.subr.bf16.mxu0 0
    %3955 = vmatpush1.bf16.msra.mxu0 %v3936
    %3956 = vmatprep.subr.bf16.mxu0 0
    %3957 = vmatpush1.bf16.msra.mxu0 %v3935
    %3958 = vmatprep.subr.bf16.mxu0 0
    %3959 = vmatpush1.bf16.msra.mxu0 %v3934
    %3960 = vmatprep.subr.bf16.mxu0 0
    %3961 = vmatpush1.bf16.msra.mxu0 %v3933
    %3962 = vmatprep.subr.bf16.mxu0 0
    %3963 = vmatpush2.bf16.msra.mxu0 0
    %3964 = vmatprep.subr.bf16.mxu0 0
    %3965 = vmatpush2.bf16.msra.mxu0 0
    %3966 = vmatprep.subr.bf16.mxu0 0
    %3967 = vmatpush2.bf16.msra.mxu0 0
    %3968 = vmatprep.subr.bf16.mxu0 0
    %3969 = vmatpush2.bf16.msra.mxu0 0
    %3970 = vmatprep.subr.bf16.mxu0 0
    %3971 = vmatpush2.bf16.msra.mxu0 0
    %3972 = vmatprep.subr.bf16.mxu0 0
    %3973 = vmatpush2.bf16.msra.mxu0 0
    %3974 = vmatprep.subr.bf16.mxu0 0
    %3975 = vmatpush2.bf16.msra.mxu0 0
    %3976 = vmatprep.subr.bf16.mxu0 0
    %3977 = vmatpush2.bf16.msra.mxu0 0
    %3978 = vmatprep.mubr.bf16.mxu0 0
    %3979 = vmatmul.mubr.bf16.gmra.mxu0 %v3916
    %v3980 = vpop.f32.mrf.mxu0
    %v3981 = vadd.f32 %v3945, %v3980
    %v3982 = vpop.f32.mrf.mxu0
    %v3983 = vpop.f32.mrf.mxu0
    %v3984 = vpop.f32.mrf.mxu0
    %3985 = vdwg.mxu0
    %v3986 = vpack.c.bf16 %v2332, %v2331
    %v3987 = vpack.c.bf16 %v2333, %v2333
    %v3988 = vld [vmem:[#allocation6 + $0x220] sm:$0xff]
    %v3989 = vld [vmem:[#allocation6 + $0x228] sm:$0xff]
    %v3990 = vld [vmem:[#allocation6 + $0x230] sm:$0xff]
    %v3991 = vld [vmem:[#allocation6 + $0x238] sm:$0xff]
    %v3992 = vld [vmem:[#allocation6 + $0x240] sm:$0xff]
    %v3993 = vld [vmem:[#allocation6 + $0x248] sm:$0xff]
    %v3994 = vld [vmem:[#allocation6 + $0x250] sm:$0xff]
    %v3995 = vld [vmem:[#allocation6 + $0x258] sm:$0xff]
    %v3996 = vld [vmem:[#allocation6 + $0x260] sm:$0xff]
    %v3997 = vld [vmem:[#allocation6 + $0x268] sm:$0xff]
    %v3998 = vld [vmem:[#allocation6 + $0x270] sm:$0xff]
    %v3999 = vld [vmem:[#allocation6 + $0x278] sm:$0xff]
    %v4000 = vld [vmem:[#allocation6 + $0x280] sm:$0xff]
    %v4001 = vld [vmem:[#allocation6 + $0x288] sm:$0xff]
    %v4002 = vld [vmem:[#allocation6 + $0x290] sm:$0xff]
    %v4003 = vld [vmem:[#allocation6 + $0x298] sm:$0xff]
    %v4004 = vld [vmem:[#allocation6 + $0x2a0] sm:$0xff]
    %v4005 = vld [vmem:[#allocation6 + $0x2a8] sm:$0xff]
    %v4006 = vld [vmem:[#allocation6 + $0x2b0] sm:$0xff]
    %v4007 = vld [vmem:[#allocation6 + $0x2b8] sm:$0xff]
    %v4008 = vld [vmem:[#allocation6 + $0x2c0] sm:$0xff]
    %v4009 = vld [vmem:[#allocation6 + $0x2c8] sm:$0xff]
    %v4010 = vld [vmem:[#allocation6 + $0x2d0] sm:$0xff]
    %v4011 = vld [vmem:[#allocation6 + $0x2d8] sm:$0xff]
    %v4012 = vld [vmem:[#allocation6 + $0x2e0] sm:$0xff]
    %v4013 = vld [vmem:[#allocation6 + $0x2e8] sm:$0xff]
    %v4014 = vld [vmem:[#allocation6 + $0x2f0] sm:$0xff]
    %v4015 = vld [vmem:[#allocation6 + $0x2f8] sm:$0xff]
    %v4016 = vld [vmem:[#allocation6 + $0x300] sm:$0xff]
    %v4017 = vld [vmem:[#allocation6 + $0x308] sm:$0xff]
    %v4018 = vld [vmem:[#allocation6 + $0x310] sm:$0xff]
    %v4019 = vld [vmem:[#allocation6 + $0x318] sm:$0xff]
    %v4020 = vpack.c.bf16 %v3990, %v3988
    %v4021 = vpack.c.bf16 %v3991, %v3989
    %v4022 = vpack.c.bf16 %v3994, %v3992
    %v4023 = vpack.c.bf16 %v3995, %v3993
    %v4024 = vpack.c.bf16 %v3998, %v3996
    %v4025 = vpack.c.bf16 %v3999, %v3997
    %v4026 = vpack.c.bf16 %v4002, %v4000
    %v4027 = vpack.c.bf16 %v4003, %v4001
    %v4028 = vpack.c.bf16 %v4006, %v4004
    %v4029 = vpack.c.bf16 %v4007, %v4005
    %v4030 = vpack.c.bf16 %v4010, %v4008
    %v4031 = vpack.c.bf16 %v4011, %v4009
    %v4032 = vpack.c.bf16 %v4014, %v4012
    %v4033 = vpack.c.bf16 %v4015, %v4013
    %v4034 = vpack.c.bf16 %v4018, %v4016
    %v4035 = vpack.c.bf16 %v4019, %v4017
    %s4036 = scalar_lea.vmem [#allocation6], 800
    %v4037 = vld [vmem:[%s4036] ss:$8 sm:$0x3]
    %v4039 = vlaneseq
    %v4040 = vshrl.u32 %v4039, 7
    %v4041 = vsub.s32 0, %v4040
    %v4042 = vrot.slane %v4037, %v4041
    %v4043 = vlaneseq
    %v4044 = vshrl.u32 %v4043, 7
    %v4045 = vsub.s32 1, %v4044
    %v4046 = vrot.slane %v4037, %v4045
    %4049 = vmatprep.subr.bf16.mxu0 %v4035
    %4050 = vmatpush1.bf16.msra.mxu0 %v4034
    %4051 = vmatprep.subr.bf16.mxu0 %v4033
    %4052 = vmatpush1.bf16.msra.mxu0 %v4032
    %4053 = vmatprep.subr.bf16.mxu0 %v4031
    %4054 = vmatpush1.bf16.msra.mxu0 %v4030
    %4055 = vmatprep.subr.bf16.mxu0 %v4029
    %4056 = vmatpush1.bf16.msra.mxu0 %v4028
    %4057 = vmatprep.subr.bf16.mxu0 %v4027
    %4058 = vmatpush1.bf16.msra.mxu0 %v4026
    %4059 = vmatprep.subr.bf16.mxu0 %v4025
    %4060 = vmatpush1.bf16.msra.mxu0 %v4024
    %4061 = vmatprep.subr.bf16.mxu0 %v4023
    %4062 = vmatpush1.bf16.msra.mxu0 %v4022
    %4063 = vmatprep.subr.bf16.mxu0 %v4021
    %4064 = vmatpush1.bf16.msra.mxu0 %v4020
    %4065 = vmatprep.subr.bf16.mxu0 0
    %4066 = vmatpush2.bf16.msra.mxu0 0
    %4067 = vmatprep.subr.bf16.mxu0 0
    %4068 = vmatpush2.bf16.msra.mxu0 0
    %4069 = vmatprep.subr.bf16.mxu0 0
    %4070 = vmatpush2.bf16.msra.mxu0 0
    %4071 = vmatprep.subr.bf16.mxu0 0
    %4072 = vmatpush2.bf16.msra.mxu0 0
    %4073 = vmatprep.subr.bf16.mxu0 0
    %4074 = vmatpush2.bf16.msra.mxu0 0
    %4075 = vmatprep.subr.bf16.mxu0 0
    %4076 = vmatpush2.bf16.msra.mxu0 0
    %4077 = vmatprep.subr.bf16.mxu0 0
    %4078 = vmatpush2.bf16.msra.mxu0 0
    %4079 = vmatprep.subr.bf16.mxu0 0
    %4080 = vmatpush2.bf16.msra.mxu0 0
    %4081 = vmatprep.mubr.bf16.mxu0 0
    %4082 = vmatmul.mubr.bf16.gmra.mxu0 %v3986
    %v4083 = vpop.f32.mrf.mxu0
    %v4084 = vadd.f32 %v4042, %v4083
    %v4085 = vpop.f32.mrf.mxu0
    %v4086 = vadd.f32 %v4046, %v4085
    %v4087 = vpop.f32.mrf.mxu0
    %v4088 = vadd.f32 %v4042, %v4087
    %v4089 = vpop.f32.mrf.mxu0
    %v4090 = vadd.f32 %v4046, %v4089
    %4091 = vmatprep.mubr.bf16.mxu0 0
    %4092 = vmatmul.mubr.bf16.gmra.mxu0 %v3987
    %v4093 = vpop.f32.mrf.mxu0
    %v4094 = vadd.f32 %v4042, %v4093
    %v4095 = vpop.f32.mrf.mxu0
    %v4096 = vadd.f32 %v4046, %v4095
    %v4097 = vpop.f32.mrf.mxu0
    %v4098 = vpop.f32.mrf.mxu0
    %4099 = vdwg.mxu0
    %v4100 = vld [vmem:[#allocation4 + $0x498] sm:$0xff]
    %v4101 = vld [vmem:[#allocation4 + $0x4a0] sm:$0xff]
    %v4102 = vld [vmem:[#allocation4 + $0x4a8] sm:$0xff]
    %v4103 = vld [vmem:[#allocation4 + $0x4b0] sm:$0xff]
    %v4104 = vld [vmem:[#allocation4 + $0x4b8] sm:$0xff]
    %v4105 = vld [vmem:[#allocation4 + $0x4c0] sm:$0xff]
    %v4106 = vld [vmem:[#allocation4 + $0x4c8] sm:$0xff]
    %v4107 = vld [vmem:[#allocation4 + $0x4d0] sm:$0xff]
    %v4108 = vld [vmem:[#allocation4 + $0x4d8] sm:$0xff]
    %v4109 = vld [vmem:[#allocation4 + $0x4e0] sm:$0xff]
    %v4110 = vld [vmem:[#allocation4 + $0x4e8] sm:$0xff]
    %v4111 = vld [vmem:[#allocation4 + $0x4f0] sm:$0xff]
    %v4112 = vld [vmem:[#allocation4 + $0x4f8] sm:$0xff]
    %v4113 = vld [vmem:[#allocation4 + $0x500] sm:$0xff]
    %v4114 = vld [vmem:[#allocation4 + $0x508] sm:$0xff]
    %v4115 = vld [vmem:[#allocation4 + $0x510] sm:$0xff]
    %v4116 = vpack.c.bf16 %v4101, %v4100
    %v4117 = vpack.c.bf16 %v4103, %v4102
    %v4118 = vpack.c.bf16 %v4105, %v4104
    %v4119 = vpack.c.bf16 %v4107, %v4106
    %v4120 = vpack.c.bf16 %v4109, %v4108
    %v4121 = vpack.c.bf16 %v4111, %v4110
    %v4122 = vpack.c.bf16 %v4113, %v4112
    %v4123 = vpack.c.bf16 %v4115, %v4114
    %v4124 = vpack.c.bf16 %v3981, %v3981
    %v4125 = vpack.c.bf16 %v4088, %v4084
    %v4126 = vpack.c.bf16 %v4090, %v4086
    %v4128 = vsel %vm581, %v4124, 0
    %v4131 = vsel %vm581, %v4125, 0
    %4133 = vmatprep.subr.bf16.mxu0 0
    %4134 = vmatpush1.bf16.xpose.msra.mxu0 0
    %4135 = vmatprep.subr.bf16.mxu0 0
    %4136 = vmatpush1.bf16.xpose.msra.mxu0 0
    %4137 = vmatprep.subr.bf16.mxu0 0
    %4138 = vmatpush1.bf16.xpose.msra.mxu0 0
    %4139 = vmatprep.subr.bf16.mxu0 0
    %4140 = vmatpush1.bf16.xpose.msra.mxu0 0
    %4141 = vmatprep.subr.bf16.mxu0 0
    %4142 = vmatpush1.bf16.xpose.msra.mxu0 0
    %4143 = vmatprep.subr.bf16.mxu0 0
    %4144 = vmatpush1.bf16.xpose.msra.mxu0 0
    %4145 = vmatprep.subr.bf16.mxu0 0
    %4146 = vmatpush1.bf16.xpose.msra.mxu0 0
    %4147 = vmatprep.subr.bf16.mxu0 0
    %4148 = vmatpush1.bf16.xpose.msra.mxu0 %v4131
    %4149 = vmatprep.subr.bf16.mxu0 0
    %4150 = vmatpush2.bf16.xpose.msra.mxu0 0
    %4151 = vmatprep.subr.bf16.mxu0 0
    %4152 = vmatpush2.bf16.xpose.msra.mxu0 0
    %4153 = vmatprep.subr.bf16.mxu0 0
    %4154 = vmatpush2.bf16.xpose.msra.mxu0 0
    %4155 = vmatprep.subr.bf16.mxu0 0
    %4156 = vmatpush2.bf16.xpose.msra.mxu0 0
    %4157 = vmatprep.subr.bf16.mxu0 0
    %4158 = vmatpush2.bf16.xpose.msra.mxu0 0
    %4159 = vmatprep.subr.bf16.mxu0 0
    %4160 = vmatpush2.bf16.xpose.msra.mxu0 0
    %4161 = vmatprep.subr.bf16.mxu0 0
    %4162 = vmatpush2.bf16.xpose.msra.mxu0 0
    %4163 = vmatprep.subr.bf16.mxu0 0
    %4164 = vmatpush2.bf16.xpose.msra.mxu0 0
    %4165 = vmatprep.mubr.bf16.mxu0 0
    %4166 = vmatmul.mubr.bf16.gmra.mxu0 %v4128
    %v4167 = vpop.f32.mrf.mxu0
    %v4168 = vadd.f32 0.0, %v4167
    %v4169 = vpop.f32.mrf.mxu0
    %v4170 = vpop.f32.mrf.mxu0
    %v4171 = vpop.f32.mrf.mxu0
    %4172 = vdwg.mxu0
    %vm4173 = vcmask 75776
    %v4174 = vsel %vm4173, %v4168, -inf
    %4175 = vmax.xlane.f32.xlu0 %v4174
    %v4176 = vpop.xlane.xlu0 %4175
    %v4177 = vsub.f32 %v4168, %v4176
    %v4178 = vmul.f32 %v4177, 1.442695
    %v4179 = vpow.pop %v4178
    %v4180 = vsel %vm4173, %v4179, 0.0
    %4181 = vadd.xlane.f32.xlu0 %v4180
    %v4182 = vpop.xlane.xlu0 %4181
    %v4183 = vrcp.pop %v4182
    %v4184 = vmul.f32 %v4179, %v4183
    %v4185 = vpack.c.bf16 %v4184, %v4184
    %v4187 = vsel %vm629, %v4185, 0
    %v4190 = vsel %vm657, %v4126, 0
    %4192 = vmatprep.subr.bf16.mxu0 0
    %4193 = vmatpush1.bf16.msra.mxu0 0
    %4194 = vmatprep.subr.bf16.mxu0 0
    %4195 = vmatpush1.bf16.msra.mxu0 0
    %4196 = vmatprep.subr.bf16.mxu0 0
    %4197 = vmatpush1.bf16.msra.mxu0 0
    %4198 = vmatprep.subr.bf16.mxu0 0
    %4199 = vmatpush1.bf16.msra.mxu0 0
    %4200 = vmatprep.subr.bf16.mxu0 0
    %4201 = vmatpush1.bf16.msra.mxu0 0
    %4202 = vmatprep.subr.bf16.mxu0 0
    %4203 = vmatpush1.bf16.msra.mxu0 0
    %4204 = vmatprep.subr.bf16.mxu0 0
    %4205 = vmatpush1.bf16.msra.mxu0 0
    %4206 = vmatprep.subr.bf16.mxu0 0
    %4207 = vmatpush1.bf16.msra.mxu0 %v4190
    %4208 = vmatprep.subr.bf16.mxu0 0
    %4209 = vmatpush2.bf16.msra.mxu0 0
    %4210 = vmatprep.subr.bf16.mxu0 0
    %4211 = vmatpush2.bf16.msra.mxu0 0
    %4212 = vmatprep.subr.bf16.mxu0 0
    %4213 = vmatpush2.bf16.msra.mxu0 0
    %4214 = vmatprep.subr.bf16.mxu0 0
    %4215 = vmatpush2.bf16.msra.mxu0 0
    %4216 = vmatprep.subr.bf16.mxu0 0
    %4217 = vmatpush2.bf16.msra.mxu0 0
    %4218 = vmatprep.subr.bf16.mxu0 0
    %4219 = vmatpush2.bf16.msra.mxu0 0
    %4220 = vmatprep.subr.bf16.mxu0 0
    %4221 = vmatpush2.bf16.msra.mxu0 0
    %4222 = vmatprep.subr.bf16.mxu0 0
    %4223 = vmatpush2.bf16.msra.mxu0 0
    %4224 = vmatprep.mubr.bf16.mxu0 0
    %4225 = vmatmul.mubr.bf16.gmra.mxu0 %v4187
    %v4226 = vpop.f32.mrf.mxu0
    %v4227 = vadd.f32 0.0, %v4226
    %v4228 = vpop.f32.mrf.mxu0
    %v4229 = vpop.f32.mrf.mxu0
    %v4230 = vpop.f32.mrf.mxu0
    %4231 = vdwg.mxu0
    %v4232 = vpack.c.bf16 %v4227, %v4227
    %4234 = vrot.lane.b32.xlu0 %v4124, 96
    %v4235 = vpop.permute.xlu0 %4234
    %4237 = vrot.lane.b32.xlu0 %v4125, 96
    %v4238 = vpop.permute.xlu0 %4237
    %v4240 = vsel %vm581, %v4235, 0
    %v4243 = vsel %vm581, %v4238, 0
    %4245 = vmatprep.subr.bf16.mxu0 0
    %4246 = vmatpush1.bf16.xpose.msra.mxu0 0
    %4247 = vmatprep.subr.bf16.mxu0 0
    %4248 = vmatpush1.bf16.xpose.msra.mxu0 0
    %4249 = vmatprep.subr.bf16.mxu0 0
    %4250 = vmatpush1.bf16.xpose.msra.mxu0 0
    %4251 = vmatprep.subr.bf16.mxu0 0
    %4252 = vmatpush1.bf16.xpose.msra.mxu0 0
    %4253 = vmatprep.subr.bf16.mxu0 0
    %4254 = vmatpush1.bf16.xpose.msra.mxu0 0
    %4255 = vmatprep.subr.bf16.mxu0 0
    %4256 = vmatpush1.bf16.xpose.msra.mxu0 0
    %4257 = vmatprep.subr.bf16.mxu0 0
    %4258 = vmatpush1.bf16.xpose.msra.mxu0 0
    %4259 = vmatprep.subr.bf16.mxu0 0
    %4260 = vmatpush1.bf16.xpose.msra.mxu0 %v4243
    %4261 = vmatprep.subr.bf16.mxu0 0
    %4262 = vmatpush2.bf16.xpose.msra.mxu0 0
    %4263 = vmatprep.subr.bf16.mxu0 0
    %4264 = vmatpush2.bf16.xpose.msra.mxu0 0
    %4265 = vmatprep.subr.bf16.mxu0 0
    %4266 = vmatpush2.bf16.xpose.msra.mxu0 0
    %4267 = vmatprep.subr.bf16.mxu0 0
    %4268 = vmatpush2.bf16.xpose.msra.mxu0 0
    %4269 = vmatprep.subr.bf16.mxu0 0
    %4270 = vmatpush2.bf16.xpose.msra.mxu0 0
    %4271 = vmatprep.subr.bf16.mxu0 0
    %4272 = vmatpush2.bf16.xpose.msra.mxu0 0
    %4273 = vmatprep.subr.bf16.mxu0 0
    %4274 = vmatpush2.bf16.xpose.msra.mxu0 0
    %4275 = vmatprep.subr.bf16.mxu0 0
    %4276 = vmatpush2.bf16.xpose.msra.mxu0 0
    %4277 = vmatprep.mubr.bf16.mxu0 0
    %4278 = vmatmul.mubr.bf16.gmra.mxu0 %v4240
    %v4279 = vpop.f32.mrf.mxu0
    %v4280 = vadd.f32 0.0, %v4279
    %v4281 = vpop.f32.mrf.mxu0
    %v4282 = vpop.f32.mrf.mxu0
    %v4283 = vpop.f32.mrf.mxu0
    %4284 = vdwg.mxu0
    %v4285 = vsel %vm4173, %v4280, -inf
    %4286 = vmax.xlane.f32.xlu0 %v4285
    %v4287 = vpop.xlane.xlu0 %4286
    %v4288 = vsub.f32 %v4280, %v4287
    %v4289 = vmul.f32 %v4288, 1.442695
    %v4290 = vpow.pop %v4289
    %v4291 = vsel %vm4173, %v4290, 0.0
    %4292 = vadd.xlane.f32.xlu0 %v4291
    %v4293 = vpop.xlane.xlu0 %4292
    %v4294 = vrcp.pop %v4293
    %v4295 = vmul.f32 %v4290, %v4294
    %v4296 = vpack.c.bf16 %v4295, %v4295
    %4298 = vrot.lane.b32.xlu0 %v4126, 96
    %v4299 = vpop.permute.xlu0 %4298
    %v4301 = vsel %vm629, %v4296, 0
    %v4304 = vsel %vm657, %v4299, 0
    %4306 = vmatprep.subr.bf16.mxu0 0
    %4307 = vmatpush1.bf16.msra.mxu0 0
    %4308 = vmatprep.subr.bf16.mxu0 0
    %4309 = vmatpush1.bf16.msra.mxu0 0
    %4310 = vmatprep.subr.bf16.mxu0 0
    %4311 = vmatpush1.bf16.msra.mxu0 0
    %4312 = vmatprep.subr.bf16.mxu0 0
    %4313 = vmatpush1.bf16.msra.mxu0 0
    %4314 = vmatprep.subr.bf16.mxu0 0
    %4315 = vmatpush1.bf16.msra.mxu0 0
    %4316 = vmatprep.subr.bf16.mxu0 0
    %4317 = vmatpush1.bf16.msra.mxu0 0
    %4318 = vmatprep.subr.bf16.mxu0 0
    %4319 = vmatpush1.bf16.msra.mxu0 0
    %4320 = vmatprep.subr.bf16.mxu0 0
    %4321 = vmatpush1.bf16.msra.mxu0 %v4304
    %4322 = vmatprep.subr.bf16.mxu0 0
    %4323 = vmatpush2.bf16.msra.mxu0 0
    %4324 = vmatprep.subr.bf16.mxu0 0
    %4325 = vmatpush2.bf16.msra.mxu0 0
    %4326 = vmatprep.subr.bf16.mxu0 0
    %4327 = vmatpush2.bf16.msra.mxu0 0
    %4328 = vmatprep.subr.bf16.mxu0 0
    %4329 = vmatpush2.bf16.msra.mxu0 0
    %4330 = vmatprep.subr.bf16.mxu0 0
    %4331 = vmatpush2.bf16.msra.mxu0 0
    %4332 = vmatprep.subr.bf16.mxu0 0
    %4333 = vmatpush2.bf16.msra.mxu0 0
    %4334 = vmatprep.subr.bf16.mxu0 0
    %4335 = vmatpush2.bf16.msra.mxu0 0
    %4336 = vmatprep.subr.bf16.mxu0 0
    %4337 = vmatpush2.bf16.msra.mxu0 0
    %4338 = vmatprep.mubr.bf16.mxu0 0
    %4339 = vmatmul.mubr.bf16.gmra.mxu0 %v4301
    %v4340 = vpop.f32.mrf.mxu0
    %v4341 = vadd.f32 0.0, %v4340
    %v4342 = vpop.f32.mrf.mxu0
    %v4343 = vpop.f32.mrf.mxu0
    %v4344 = vpop.f32.mrf.mxu0
    %4345 = vdwg.mxu0
    %v4346 = vpack.c.bf16 %v4341, %v4341
    %v4348 = vsel %vm581, %v4346, 0
    %4350 = vmatprep.subr.bf16.mxu0 0
    %4351 = vmatpush1.bf16.msra.mxu0 0
    %4352 = vmatprep.subr.bf16.mxu0 0
    %4353 = vmatpush1.bf16.msra.mxu0 0
    %4354 = vmatprep.subr.bf16.mxu0 0
    %4355 = vmatpush1.bf16.msra.mxu0 0
    %4356 = vmatprep.subr.bf16.mxu0 0
    %4357 = vmatpush1.bf16.msra.mxu0 0
    %4358 = vmatprep.subr.bf16.mxu0 0
    %4359 = vmatpush1.bf16.msra.mxu0 0
    %4360 = vmatprep.subr.bf16.mxu0 0
    %4361 = vmatpush1.bf16.msra.mxu0 0
    %4362 = vmatprep.subr.bf16.mxu0 0
    %4363 = vmatpush1.bf16.msra.mxu0 %v4119
    %4364 = vmatprep.subr.bf16.mxu0 0
    %4365 = vmatpush1.bf16.msra.mxu0 %v4118
    %4366 = vmatprep.subr.bf16.mxu0 0
    %4367 = vmatpush2.bf16.msra.mxu0 0
    %4368 = vmatprep.subr.bf16.mxu0 0
    %4369 = vmatpush2.bf16.msra.mxu0 0
    %4370 = vmatprep.subr.bf16.mxu0 0
    %4371 = vmatpush2.bf16.msra.mxu0 0
    %4372 = vmatprep.subr.bf16.mxu0 0
    %4373 = vmatpush2.bf16.msra.mxu0 0
    %4374 = vmatprep.subr.bf16.mxu0 0
    %4375 = vmatpush2.bf16.msra.mxu0 0
    %4376 = vmatprep.subr.bf16.mxu0 0
    %4377 = vmatpush2.bf16.msra.mxu0 0
    %4378 = vmatprep.subr.bf16.mxu0 0
    %4379 = vmatpush2.bf16.msra.mxu0 0
    %4380 = vmatprep.subr.bf16.mxu0 0
    %4381 = vmatpush2.bf16.msra.mxu0 0
    %4382 = vmatprep.mubr.bf16.mxu0 0
    %4383 = vmatmul.mubr.bf16.gmra.mxu0 %v4348
    %v4384 = vpop.f32.mrf.mxu0
    %v4385 = vadd.f32 0.0, %v4384
    %v4386 = vpop.f32.mrf.mxu0
    %v4387 = vpop.f32.mrf.mxu0
    %v4388 = vpop.f32.mrf.mxu0
    %4389 = vdwg.mxu0
    %v4391 = vsel %vm581, %v4232, 0
    %4393 = vmatprep.subr.bf16.mxu0 0
    %4394 = vmatpush1.bf16.msra.mxu0 0
    %4395 = vmatprep.subr.bf16.mxu0 0
    %4396 = vmatpush1.bf16.msra.mxu0 0
    %4397 = vmatprep.subr.bf16.mxu0 0
    %4398 = vmatpush1.bf16.msra.mxu0 0
    %4399 = vmatprep.subr.bf16.mxu0 0
    %4400 = vmatpush1.bf16.msra.mxu0 0
    %4401 = vmatprep.subr.bf16.mxu0 0
    %4402 = vmatpush1.bf16.msra.mxu0 0
    %4403 = vmatprep.subr.bf16.mxu0 0
    %4404 = vmatpush1.bf16.msra.mxu0 0
    %4405 = vmatprep.subr.bf16.mxu0 0
    %4406 = vmatpush1.bf16.msra.mxu0 %v4117
    %4407 = vmatprep.subr.bf16.mxu0 0
    %4408 = vmatpush1.bf16.msra.mxu0 %v4116
    %4409 = vmatprep.subr.bf16.mxu0 0
    %4410 = vmatpush2.bf16.msra.mxu0 0
    %4411 = vmatprep.subr.bf16.mxu0 0
    %4412 = vmatpush2.bf16.msra.mxu0 0
    %4413 = vmatprep.subr.bf16.mxu0 0
    %4414 = vmatpush2.bf16.msra.mxu0 0
    %4415 = vmatprep.subr.bf16.mxu0 0
    %4416 = vmatpush2.bf16.msra.mxu0 0
    %4417 = vmatprep.subr.bf16.mxu0 0
    %4418 = vmatpush2.bf16.msra.mxu0 0
    %4419 = vmatprep.subr.bf16.mxu0 0
    %4420 = vmatpush2.bf16.msra.mxu0 0
    %4421 = vmatprep.subr.bf16.mxu0 0
    %4422 = vmatpush2.bf16.msra.mxu0 0
    %4423 = vmatprep.subr.bf16.mxu0 0
    %4424 = vmatpush2.bf16.msra.mxu0 0
    %4425 = vmatprep.mubr.bf16.mxu0 0
    %4426 = vmatmul.mubr.bf16.gmra.mxu0 %v4391
    %v4427 = vpop.f32.mrf.mxu0
    %v4428 = vadd.f32 %v4385, %v4427
    %v4429 = vpop.f32.mrf.mxu0
    %v4430 = vpop.f32.mrf.mxu0
    %v4431 = vpop.f32.mrf.mxu0
    %4432 = vdwg.mxu0
    %4433 = vrot.lane.b32.xlu0 %v4124, 64
    %v4434 = vpop.permute.xlu0 %4433
    %4435 = vrot.lane.b32.xlu0 %v4125, 64
    %v4436 = vpop.permute.xlu0 %4435
    %v4438 = vsel %vm581, %v4434, 0
    %v4441 = vsel %vm581, %v4436, 0
    %4443 = vmatprep.subr.bf16.mxu0 0
    %4444 = vmatpush1.bf16.xpose.msra.mxu0 0
    %4445 = vmatprep.subr.bf16.mxu0 0
    %4446 = vmatpush1.bf16.xpose.msra.mxu0 0
    %4447 = vmatprep.subr.bf16.mxu0 0
    %4448 = vmatpush1.bf16.xpose.msra.mxu0 0
    %4449 = vmatprep.subr.bf16.mxu0 0
    %4450 = vmatpush1.bf16.xpose.msra.mxu0 0
    %4451 = vmatprep.subr.bf16.mxu0 0
    %4452 = vmatpush1.bf16.xpose.msra.mxu0 0
    %4453 = vmatprep.subr.bf16.mxu0 0
    %4454 = vmatpush1.bf16.xpose.msra.mxu0 0
    %4455 = vmatprep.subr.bf16.mxu0 0
    %4456 = vmatpush1.bf16.xpose.msra.mxu0 0
    %4457 = vmatprep.subr.bf16.mxu0 0
    %4458 = vmatpush1.bf16.xpose.msra.mxu0 %v4441
    %4459 = vmatprep.subr.bf16.mxu0 0
    %4460 = vmatpush2.bf16.xpose.msra.mxu0 0
    %4461 = vmatprep.subr.bf16.mxu0 0
    %4462 = vmatpush2.bf16.xpose.msra.mxu0 0
    %4463 = vmatprep.subr.bf16.mxu0 0
    %4464 = vmatpush2.bf16.xpose.msra.mxu0 0
    %4465 = vmatprep.subr.bf16.mxu0 0
    %4466 = vmatpush2.bf16.xpose.msra.mxu0 0
    %4467 = vmatprep.subr.bf16.mxu0 0
    %4468 = vmatpush2.bf16.xpose.msra.mxu0 0
    %4469 = vmatprep.subr.bf16.mxu0 0
    %4470 = vmatpush2.bf16.xpose.msra.mxu0 0
    %4471 = vmatprep.subr.bf16.mxu0 0
    %4472 = vmatpush2.bf16.xpose.msra.mxu0 0
    %4473 = vmatprep.subr.bf16.mxu0 0
    %4474 = vmatpush2.bf16.xpose.msra.mxu0 0
    %4475 = vmatprep.mubr.bf16.mxu0 0
    %4476 = vmatmul.mubr.bf16.gmra.mxu0 %v4438
    %v4477 = vpop.f32.mrf.mxu0
    %v4478 = vadd.f32 0.0, %v4477
    %v4479 = vpop.f32.mrf.mxu0
    %v4480 = vpop.f32.mrf.mxu0
    %v4481 = vpop.f32.mrf.mxu0
    %4482 = vdwg.mxu0
    %v4483 = vsel %vm4173, %v4478, -inf
    %4484 = vmax.xlane.f32.xlu0 %v4483
    %v4485 = vpop.xlane.xlu0 %4484
    %v4486 = vsub.f32 %v4478, %v4485
    %v4487 = vmul.f32 %v4486, 1.442695
    %v4488 = vpow.pop %v4487
    %v4489 = vsel %vm4173, %v4488, 0.0
    %4490 = vadd.xlane.f32.xlu0 %v4489
    %v4491 = vpop.xlane.xlu0 %4490
    %v4492 = vrcp.pop %v4491
    %v4493 = vmul.f32 %v4488, %v4492
    %v4494 = vpack.c.bf16 %v4493, %v4493
    %4495 = vrot.lane.b32.xlu0 %v4126, 64
    %v4496 = vpop.permute.xlu0 %4495
    %v4498 = vsel %vm629, %v4494, 0
    %v4501 = vsel %vm657, %v4496, 0
    %4503 = vmatprep.subr.bf16.mxu0 0
    %4504 = vmatpush1.bf16.msra.mxu0 0
    %4505 = vmatprep.subr.bf16.mxu0 0
    %4506 = vmatpush1.bf16.msra.mxu0 0
    %4507 = vmatprep.subr.bf16.mxu0 0
    %4508 = vmatpush1.bf16.msra.mxu0 0
    %4509 = vmatprep.subr.bf16.mxu0 0
    %4510 = vmatpush1.bf16.msra.mxu0 0
    %4511 = vmatprep.subr.bf16.mxu0 0
    %4512 = vmatpush1.bf16.msra.mxu0 0
    %4513 = vmatprep.subr.bf16.mxu0 0
    %4514 = vmatpush1.bf16.msra.mxu0 0
    %4515 = vmatprep.subr.bf16.mxu0 0
    %4516 = vmatpush1.bf16.msra.mxu0 0
    %4517 = vmatprep.subr.bf16.mxu0 0
    %4518 = vmatpush1.bf16.msra.mxu0 %v4501
    %4519 = vmatprep.subr.bf16.mxu0 0
    %4520 = vmatpush2.bf16.msra.mxu0 0
    %4521 = vmatprep.subr.bf16.mxu0 0
    %4522 = vmatpush2.bf16.msra.mxu0 0
    %4523 = vmatprep.subr.bf16.mxu0 0
    %4524 = vmatpush2.bf16.msra.mxu0 0
    %4525 = vmatprep.subr.bf16.mxu0 0
    %4526 = vmatpush2.bf16.msra.mxu0 0
    %4527 = vmatprep.subr.bf16.mxu0 0
    %4528 = vmatpush2.bf16.msra.mxu0 0
    %4529 = vmatprep.subr.bf16.mxu0 0
    %4530 = vmatpush2.bf16.msra.mxu0 0
    %4531 = vmatprep.subr.bf16.mxu0 0
    %4532 = vmatpush2.bf16.msra.mxu0 0
    %4533 = vmatprep.subr.bf16.mxu0 0
    %4534 = vmatpush2.bf16.msra.mxu0 0
    %4535 = vmatprep.mubr.bf16.mxu0 0
    %4536 = vmatmul.mubr.bf16.gmra.mxu0 %v4498
    %v4537 = vpop.f32.mrf.mxu0
    %v4538 = vadd.f32 0.0, %v4537
    %v4539 = vpop.f32.mrf.mxu0
    %v4540 = vpop.f32.mrf.mxu0
    %v4541 = vpop.f32.mrf.mxu0
    %4542 = vdwg.mxu0
    %v4543 = vpack.c.bf16 %v4538, %v4538
    %v4545 = vsel %vm581, %v4543, 0
    %4547 = vmatprep.subr.bf16.mxu0 0
    %4548 = vmatpush1.bf16.msra.mxu0 0
    %4549 = vmatprep.subr.bf16.mxu0 0
    %4550 = vmatpush1.bf16.msra.mxu0 0
    %4551 = vmatprep.subr.bf16.mxu0 0
    %4552 = vmatpush1.bf16.msra.mxu0 0
    %4553 = vmatprep.subr.bf16.mxu0 0
    %4554 = vmatpush1.bf16.msra.mxu0 0
    %4555 = vmatprep.subr.bf16.mxu0 0
    %4556 = vmatpush1.bf16.msra.mxu0 0
    %4557 = vmatprep.subr.bf16.mxu0 0
    %4558 = vmatpush1.bf16.msra.mxu0 0
    %4559 = vmatprep.subr.bf16.mxu0 0
    %4560 = vmatpush1.bf16.msra.mxu0 %v4121
    %4561 = vmatprep.subr.bf16.mxu0 0
    %4562 = vmatpush1.bf16.msra.mxu0 %v4120
    %4563 = vmatprep.subr.bf16.mxu0 0
    %4564 = vmatpush2.bf16.msra.mxu0 0
    %4565 = vmatprep.subr.bf16.mxu0 0
    %4566 = vmatpush2.bf16.msra.mxu0 0
    %4567 = vmatprep.subr.bf16.mxu0 0
    %4568 = vmatpush2.bf16.msra.mxu0 0
    %4569 = vmatprep.subr.bf16.mxu0 0
    %4570 = vmatpush2.bf16.msra.mxu0 0
    %4571 = vmatprep.subr.bf16.mxu0 0
    %4572 = vmatpush2.bf16.msra.mxu0 0
    %4573 = vmatprep.subr.bf16.mxu0 0
    %4574 = vmatpush2.bf16.msra.mxu0 0
    %4575 = vmatprep.subr.bf16.mxu0 0
    %4576 = vmatpush2.bf16.msra.mxu0 0
    %4577 = vmatprep.subr.bf16.mxu0 0
    %4578 = vmatpush2.bf16.msra.mxu0 0
    %4579 = vmatprep.mubr.bf16.mxu0 0
    %4580 = vmatmul.mubr.bf16.gmra.mxu0 %v4545
    %v4581 = vpop.f32.mrf.mxu0
    %v4582 = vadd.f32 0.0, %v4581
    %v4583 = vpop.f32.mrf.mxu0
    %v4584 = vpop.f32.mrf.mxu0
    %v4585 = vpop.f32.mrf.mxu0
    %4586 = vdwg.mxu0
    %v4587 = vadd.f32 %v4428, %v4582
    %4588 = vrot.lane.b32.xlu0 %v4124, 32
    %v4589 = vpop.permute.xlu0 %4588
    %4590 = vrot.lane.b32.xlu0 %v4125, 32
    %v4591 = vpop.permute.xlu0 %4590
    %v4593 = vsel %vm581, %v4589, 0
    %v4596 = vsel %vm581, %v4591, 0
    %4598 = vmatprep.subr.bf16.mxu0 0
    %4599 = vmatpush1.bf16.xpose.msra.mxu0 0
    %4600 = vmatprep.subr.bf16.mxu0 0
    %4601 = vmatpush1.bf16.xpose.msra.mxu0 0
    %4602 = vmatprep.subr.bf16.mxu0 0
    %4603 = vmatpush1.bf16.xpose.msra.mxu0 0
    %4604 = vmatprep.subr.bf16.mxu0 0
    %4605 = vmatpush1.bf16.xpose.msra.mxu0 0
    %4606 = vmatprep.subr.bf16.mxu0 0
    %4607 = vmatpush1.bf16.xpose.msra.mxu0 0
    %4608 = vmatprep.subr.bf16.mxu0 0
    %4609 = vmatpush1.bf16.xpose.msra.mxu0 0
    %4610 = vmatprep.subr.bf16.mxu0 0
    %4611 = vmatpush1.bf16.xpose.msra.mxu0 0
    %4612 = vmatprep.subr.bf16.mxu0 0
    %4613 = vmatpush1.bf16.xpose.msra.mxu0 %v4596
    %4614 = vmatprep.subr.bf16.mxu0 0
    %4615 = vmatpush2.bf16.xpose.msra.mxu0 0
    %4616 = vmatprep.subr.bf16.mxu0 0
    %4617 = vmatpush2.bf16.xpose.msra.mxu0 0
    %4618 = vmatprep.subr.bf16.mxu0 0
    %4619 = vmatpush2.bf16.xpose.msra.mxu0 0
    %4620 = vmatprep.subr.bf16.mxu0 0
    %4621 = vmatpush2.bf16.xpose.msra.mxu0 0
    %4622 = vmatprep.subr.bf16.mxu0 0
    %4623 = vmatpush2.bf16.xpose.msra.mxu0 0
    %4624 = vmatprep.subr.bf16.mxu0 0
    %4625 = vmatpush2.bf16.xpose.msra.mxu0 0
    %4626 = vmatprep.subr.bf16.mxu0 0
    %4627 = vmatpush2.bf16.xpose.msra.mxu0 0
    %4628 = vmatprep.subr.bf16.mxu0 0
    %4629 = vmatpush2.bf16.xpose.msra.mxu0 0
    %4630 = vmatprep.mubr.bf16.mxu0 0
    %4631 = vmatmul.mubr.bf16.gmra.mxu0 %v4593
    %v4632 = vpop.f32.mrf.mxu0
    %v4633 = vadd.f32 0.0, %v4632
    %v4634 = vpop.f32.mrf.mxu0
    %v4635 = vpop.f32.mrf.mxu0
    %v4636 = vpop.f32.mrf.mxu0
    %4637 = vdwg.mxu0
    %v4638 = vsel %vm4173, %v4633, -inf
    %4639 = vmax.xlane.f32.xlu0 %v4638
    %v4640 = vpop.xlane.xlu0 %4639
    %v4641 = vsub.f32 %v4633, %v4640
    %v4642 = vmul.f32 %v4641, 1.442695
    %v4643 = vpow.pop %v4642
    %v4644 = vsel %vm4173, %v4643, 0.0
    %4645 = vadd.xlane.f32.xlu0 %v4644
    %v4646 = vpop.xlane.xlu0 %4645
    %v4647 = vrcp.pop %v4646
    %v4648 = vmul.f32 %v4643, %v4647
    %v4649 = vpack.c.bf16 %v4648, %v4648
    %4650 = vrot.lane.b32.xlu0 %v4126, 32
    %v4651 = vpop.permute.xlu0 %4650
    %v4653 = vsel %vm629, %v4649, 0
    %v4656 = vsel %vm657, %v4651, 0
    %4658 = vmatprep.subr.bf16.mxu0 0
    %4659 = vmatpush1.bf16.msra.mxu0 0
    %4660 = vmatprep.subr.bf16.mxu0 0
    %4661 = vmatpush1.bf16.msra.mxu0 0
    %4662 = vmatprep.subr.bf16.mxu0 0
    %4663 = vmatpush1.bf16.msra.mxu0 0
    %4664 = vmatprep.subr.bf16.mxu0 0
    %4665 = vmatpush1.bf16.msra.mxu0 0
    %4666 = vmatprep.subr.bf16.mxu0 0
    %4667 = vmatpush1.bf16.msra.mxu0 0
    %4668 = vmatprep.subr.bf16.mxu0 0
    %4669 = vmatpush1.bf16.msra.mxu0 0
    %4670 = vmatprep.subr.bf16.mxu0 0
    %4671 = vmatpush1.bf16.msra.mxu0 0
    %4672 = vmatprep.subr.bf16.mxu0 0
    %4673 = vmatpush1.bf16.msra.mxu0 %v4656
    %4674 = vmatprep.subr.bf16.mxu0 0
    %4675 = vmatpush2.bf16.msra.mxu0 0
    %4676 = vmatprep.subr.bf16.mxu0 0
    %4677 = vmatpush2.bf16.msra.mxu0 0
    %4678 = vmatprep.subr.bf16.mxu0 0
    %4679 = vmatpush2.bf16.msra.mxu0 0
    %4680 = vmatprep.subr.bf16.mxu0 0
    %4681 = vmatpush2.bf16.msra.mxu0 0
    %4682 = vmatprep.subr.bf16.mxu0 0
    %4683 = vmatpush2.bf16.msra.mxu0 0
    %4684 = vmatprep.subr.bf16.mxu0 0
    %4685 = vmatpush2.bf16.msra.mxu0 0
    %4686 = vmatprep.subr.bf16.mxu0 0
    %4687 = vmatpush2.bf16.msra.mxu0 0
    %4688 = vmatprep.subr.bf16.mxu0 0
    %4689 = vmatpush2.bf16.msra.mxu0 0
    %4690 = vmatprep.mubr.bf16.mxu0 0
    %4691 = vmatmul.mubr.bf16.gmra.mxu0 %v4653
    %v4692 = vpop.f32.mrf.mxu0
    %v4693 = vadd.f32 0.0, %v4692
    %v4694 = vpop.f32.mrf.mxu0
    %v4695 = vpop.f32.mrf.mxu0
    %v4696 = vpop.f32.mrf.mxu0
    %4697 = vdwg.mxu0
    %v4698 = vpack.c.bf16 %v4693, %v4693
    %v4700 = vsel %vm581, %v4698, 0
    %4702 = vmatprep.subr.bf16.mxu0 0
    %4703 = vmatpush1.bf16.msra.mxu0 0
    %4704 = vmatprep.subr.bf16.mxu0 0
    %4705 = vmatpush1.bf16.msra.mxu0 0
    %4706 = vmatprep.subr.bf16.mxu0 0
    %4707 = vmatpush1.bf16.msra.mxu0 0
    %4708 = vmatprep.subr.bf16.mxu0 0
    %4709 = vmatpush1.bf16.msra.mxu0 0
    %4710 = vmatprep.subr.bf16.mxu0 0
    %4711 = vmatpush1.bf16.msra.mxu0 0
    %4712 = vmatprep.subr.bf16.mxu0 0
    %4713 = vmatpush1.bf16.msra.mxu0 0
    %4714 = vmatprep.subr.bf16.mxu0 0
    %4715 = vmatpush1.bf16.msra.mxu0 %v4123
    %4716 = vmatprep.subr.bf16.mxu0 0
    %4717 = vmatpush1.bf16.msra.mxu0 %v4122
    %4718 = vmatprep.subr.bf16.mxu0 0
    %4719 = vmatpush2.bf16.msra.mxu0 0
    %4720 = vmatprep.subr.bf16.mxu0 0
    %4721 = vmatpush2.bf16.msra.mxu0 0
    %4722 = vmatprep.subr.bf16.mxu0 0
    %4723 = vmatpush2.bf16.msra.mxu0 0
    %4724 = vmatprep.subr.bf16.mxu0 0
    %4725 = vmatpush2.bf16.msra.mxu0 0
    %4726 = vmatprep.subr.bf16.mxu0 0
    %4727 = vmatpush2.bf16.msra.mxu0 0
    %4728 = vmatprep.subr.bf16.mxu0 0
    %4729 = vmatpush2.bf16.msra.mxu0 0
    %4730 = vmatprep.subr.bf16.mxu0 0
    %4731 = vmatpush2.bf16.msra.mxu0 0
    %4732 = vmatprep.subr.bf16.mxu0 0
    %4733 = vmatpush2.bf16.msra.mxu0 0
    %4734 = vmatprep.mubr.bf16.mxu0 0
    %4735 = vmatmul.mubr.bf16.gmra.mxu0 %v4700
    %v4736 = vpop.f32.mrf.mxu0
    %v4737 = vadd.f32 0.0, %v4736
    %v4738 = vpop.f32.mrf.mxu0
    %v4739 = vpop.f32.mrf.mxu0
    %v4740 = vpop.f32.mrf.mxu0
    %4741 = vdwg.mxu0
    %v4742 = vadd.f32 %v4587, %v4737
    %v4743 = vpack.c.bf16 %v4094, %v4088
    %v4744 = vpack.c.bf16 %v4096, %v4090
    %v4745 = vshrl.u32 %v4124, 16
    %v4747 = vrot.slane %v4745, 1
    %v4748 = vshll.u32 %v4124, 16
    %v4750 = vrot.slane %v4748, 2
    %v4751 = vor.u32 %v4747, %v4750
    %v4753 = vrot.slane %v4743, 1
    %v4755 = vsel %vm581, %v4751, 0
    %v4758 = vsel %vm581, %v4753, 0
    %4760 = vmatprep.subr.bf16.mxu0 0
    %4761 = vmatpush1.bf16.xpose.msra.mxu0 0
    %4762 = vmatprep.subr.bf16.mxu0 0
    %4763 = vmatpush1.bf16.xpose.msra.mxu0 0
    %4764 = vmatprep.subr.bf16.mxu0 0
    %4765 = vmatpush1.bf16.xpose.msra.mxu0 0
    %4766 = vmatprep.subr.bf16.mxu0 0
    %4767 = vmatpush1.bf16.xpose.msra.mxu0 0
    %4768 = vmatprep.subr.bf16.mxu0 0
    %4769 = vmatpush1.bf16.xpose.msra.mxu0 0
    %4770 = vmatprep.subr.bf16.mxu0 0
    %4771 = vmatpush1.bf16.xpose.msra.mxu0 0
    %4772 = vmatprep.subr.bf16.mxu0 0
    %4773 = vmatpush1.bf16.xpose.msra.mxu0 0
    %4774 = vmatprep.subr.bf16.mxu0 0
    %4775 = vmatpush1.bf16.xpose.msra.mxu0 %v4758
    %4776 = vmatprep.subr.bf16.mxu0 0
    %4777 = vmatpush2.bf16.xpose.msra.mxu0 0
    %4778 = vmatprep.subr.bf16.mxu0 0
    %4779 = vmatpush2.bf16.xpose.msra.mxu0 0
    %4780 = vmatprep.subr.bf16.mxu0 0
    %4781 = vmatpush2.bf16.xpose.msra.mxu0 0
    %4782 = vmatprep.subr.bf16.mxu0 0
    %4783 = vmatpush2.bf16.xpose.msra.mxu0 0
    %4784 = vmatprep.subr.bf16.mxu0 0
    %4785 = vmatpush2.bf16.xpose.msra.mxu0 0
    %4786 = vmatprep.subr.bf16.mxu0 0
    %4787 = vmatpush2.bf16.xpose.msra.mxu0 0
    %4788 = vmatprep.subr.bf16.mxu0 0
    %4789 = vmatpush2.bf16.xpose.msra.mxu0 0
    %4790 = vmatprep.subr.bf16.mxu0 0
    %4791 = vmatpush2.bf16.xpose.msra.mxu0 0
    %4792 = vmatprep.mubr.bf16.mxu0 0
    %4793 = vmatmul.mubr.bf16.gmra.mxu0 %v4755
    %v4794 = vpop.f32.mrf.mxu0
    %v4795 = vadd.f32 0.0, %v4794
    %v4796 = vpop.f32.mrf.mxu0
    %v4797 = vpop.f32.mrf.mxu0
    %v4798 = vpop.f32.mrf.mxu0
    %4799 = vdwg.mxu0
    %v4800 = vsel %vm4173, %v4795, -inf
    %4801 = vmax.xlane.f32.xlu0 %v4800
    %v4802 = vpop.xlane.xlu0 %4801
    %v4803 = vsub.f32 %v4795, %v4802
    %v4804 = vmul.f32 %v4803, 1.442695
    %v4805 = vpow.pop %v4804
    %v4806 = vsel %vm4173, %v4805, 0.0
    %4807 = vadd.xlane.f32.xlu0 %v4806
    %v4808 = vpop.xlane.xlu0 %4807
    %v4809 = vrcp.pop %v4808
    %v4810 = vmul.f32 %v4805, %v4809
    %v4811 = vpack.c.bf16 %v4810, %v4810
    %v4813 = vrot.slane %v4744, 1
    %v4815 = vsel %vm629, %v4811, 0
    %v4818 = vsel %vm657, %v4813, 0
    %4820 = vmatprep.subr.bf16.mxu0 0
    %4821 = vmatpush1.bf16.msra.mxu0 0
    %4822 = vmatprep.subr.bf16.mxu0 0
    %4823 = vmatpush1.bf16.msra.mxu0 0
    %4824 = vmatprep.subr.bf16.mxu0 0
    %4825 = vmatpush1.bf16.msra.mxu0 0
    %4826 = vmatprep.subr.bf16.mxu0 0
    %4827 = vmatpush1.bf16.msra.mxu0 0
    %4828 = vmatprep.subr.bf16.mxu0 0
    %4829 = vmatpush1.bf16.msra.mxu0 0
    %4830 = vmatprep.subr.bf16.mxu0 0
    %4831 = vmatpush1.bf16.msra.mxu0 0
    %4832 = vmatprep.subr.bf16.mxu0 0
    %4833 = vmatpush1.bf16.msra.mxu0 0
    %4834 = vmatprep.subr.bf16.mxu0 0
    %4835 = vmatpush1.bf16.msra.mxu0 %v4818
    %4836 = vmatprep.subr.bf16.mxu0 0
    %4837 = vmatpush2.bf16.msra.mxu0 0
    %4838 = vmatprep.subr.bf16.mxu0 0
    %4839 = vmatpush2.bf16.msra.mxu0 0
    %4840 = vmatprep.subr.bf16.mxu0 0
    %4841 = vmatpush2.bf16.msra.mxu0 0
    %4842 = vmatprep.subr.bf16.mxu0 0
    %4843 = vmatpush2.bf16.msra.mxu0 0
    %4844 = vmatprep.subr.bf16.mxu0 0
    %4845 = vmatpush2.bf16.msra.mxu0 0
    %4846 = vmatprep.subr.bf16.mxu0 0
    %4847 = vmatpush2.bf16.msra.mxu0 0
    %4848 = vmatprep.subr.bf16.mxu0 0
    %4849 = vmatpush2.bf16.msra.mxu0 0
    %4850 = vmatprep.subr.bf16.mxu0 0
    %4851 = vmatpush2.bf16.msra.mxu0 0
    %4852 = vmatprep.mubr.bf16.mxu0 0
    %4853 = vmatmul.mubr.bf16.gmra.mxu0 %v4815
    %v4854 = vpop.f32.mrf.mxu0
    %v4855 = vadd.f32 0.0, %v4854
    %v4856 = vpop.f32.mrf.mxu0
    %v4857 = vpop.f32.mrf.mxu0
    %v4858 = vpop.f32.mrf.mxu0
    %4859 = vdwg.mxu0
    %v4860 = vpack.c.bf16 %v4855, %v4855
    %4861 = vrot.lane.b32.xlu0 %v4751, 96
    %v4862 = vpop.permute.xlu0 %4861
    %4863 = vrot.lane.b32.xlu0 %v4753, 96
    %v4864 = vpop.permute.xlu0 %4863
    %v4866 = vsel %vm581, %v4862, 0
    %v4869 = vsel %vm581, %v4864, 0
    %4871 = vmatprep.subr.bf16.mxu0 0
    %4872 = vmatpush1.bf16.xpose.msra.mxu0 0
    %4873 = vmatprep.subr.bf16.mxu0 0
    %4874 = vmatpush1.bf16.xpose.msra.mxu0 0
    %4875 = vmatprep.subr.bf16.mxu0 0
    %4876 = vmatpush1.bf16.xpose.msra.mxu0 0
    %4877 = vmatprep.subr.bf16.mxu0 0
    %4878 = vmatpush1.bf16.xpose.msra.mxu0 0
    %4879 = vmatprep.subr.bf16.mxu0 0
    %4880 = vmatpush1.bf16.xpose.msra.mxu0 0
    %4881 = vmatprep.subr.bf16.mxu0 0
    %4882 = vmatpush1.bf16.xpose.msra.mxu0 0
    %4883 = vmatprep.subr.bf16.mxu0 0
    %4884 = vmatpush1.bf16.xpose.msra.mxu0 0
    %4885 = vmatprep.subr.bf16.mxu0 0
    %4886 = vmatpush1.bf16.xpose.msra.mxu0 %v4869
    %4887 = vmatprep.subr.bf16.mxu0 0
    %4888 = vmatpush2.bf16.xpose.msra.mxu0 0
    %4889 = vmatprep.subr.bf16.mxu0 0
    %4890 = vmatpush2.bf16.xpose.msra.mxu0 0
    %4891 = vmatprep.subr.bf16.mxu0 0
    %4892 = vmatpush2.bf16.xpose.msra.mxu0 0
    %4893 = vmatprep.subr.bf16.mxu0 0
    %4894 = vmatpush2.bf16.xpose.msra.mxu0 0
    %4895 = vmatprep.subr.bf16.mxu0 0
    %4896 = vmatpush2.bf16.xpose.msra.mxu0 0
    %4897 = vmatprep.subr.bf16.mxu0 0
    %4898 = vmatpush2.bf16.xpose.msra.mxu0 0
    %4899 = vmatprep.subr.bf16.mxu0 0
    %4900 = vmatpush2.bf16.xpose.msra.mxu0 0
    %4901 = vmatprep.subr.bf16.mxu0 0
    %4902 = vmatpush2.bf16.xpose.msra.mxu0 0
    %4903 = vmatprep.mubr.bf16.mxu0 0
    %4904 = vmatmul.mubr.bf16.gmra.mxu0 %v4866
    %v4905 = vpop.f32.mrf.mxu0
    %v4906 = vadd.f32 0.0, %v4905
    %v4907 = vpop.f32.mrf.mxu0
    %v4908 = vpop.f32.mrf.mxu0
    %v4909 = vpop.f32.mrf.mxu0
    %4910 = vdwg.mxu0
    %v4911 = vsel %vm4173, %v4906, -inf
    %4912 = vmax.xlane.f32.xlu0 %v4911
    %v4913 = vpop.xlane.xlu0 %4912
    %v4914 = vsub.f32 %v4906, %v4913
    %v4915 = vmul.f32 %v4914, 1.442695
    %v4916 = vpow.pop %v4915
    %v4917 = vsel %vm4173, %v4916, 0.0
    %4918 = vadd.xlane.f32.xlu0 %v4917
    %v4919 = vpop.xlane.xlu0 %4918
    %v4920 = vrcp.pop %v4919
    %v4921 = vmul.f32 %v4916, %v4920
    %v4922 = vpack.c.bf16 %v4921, %v4921
    %4923 = vrot.lane.b32.xlu0 %v4813, 96
    %v4924 = vpop.permute.xlu0 %4923
    %v4926 = vsel %vm629, %v4922, 0
    %v4929 = vsel %vm657, %v4924, 0
    %4931 = vmatprep.subr.bf16.mxu0 0
    %4932 = vmatpush1.bf16.msra.mxu0 0
    %4933 = vmatprep.subr.bf16.mxu0 0
    %4934 = vmatpush1.bf16.msra.mxu0 0
    %4935 = vmatprep.subr.bf16.mxu0 0
    %4936 = vmatpush1.bf16.msra.mxu0 0
    %4937 = vmatprep.subr.bf16.mxu0 0
    %4938 = vmatpush1.bf16.msra.mxu0 0
    %4939 = vmatprep.subr.bf16.mxu0 0
    %4940 = vmatpush1.bf16.msra.mxu0 0
    %4941 = vmatprep.subr.bf16.mxu0 0
    %4942 = vmatpush1.bf16.msra.mxu0 0
    %4943 = vmatprep.subr.bf16.mxu0 0
    %4944 = vmatpush1.bf16.msra.mxu0 0
    %4945 = vmatprep.subr.bf16.mxu0 0
    %4946 = vmatpush1.bf16.msra.mxu0 %v4929
    %4947 = vmatprep.subr.bf16.mxu0 0
    %4948 = vmatpush2.bf16.msra.mxu0 0
    %4949 = vmatprep.subr.bf16.mxu0 0
    %4950 = vmatpush2.bf16.msra.mxu0 0
    %4951 = vmatprep.subr.bf16.mxu0 0
    %4952 = vmatpush2.bf16.msra.mxu0 0
    %4953 = vmatprep.subr.bf16.mxu0 0
    %4954 = vmatpush2.bf16.msra.mxu0 0
    %4955 = vmatprep.subr.bf16.mxu0 0
    %4956 = vmatpush2.bf16.msra.mxu0 0
    %4957 = vmatprep.subr.bf16.mxu0 0
    %4958 = vmatpush2.bf16.msra.mxu0 0
    %4959 = vmatprep.subr.bf16.mxu0 0
    %4960 = vmatpush2.bf16.msra.mxu0 0
    %4961 = vmatprep.subr.bf16.mxu0 0
    %4962 = vmatpush2.bf16.msra.mxu0 0
    %4963 = vmatprep.mubr.bf16.mxu0 0
    %4964 = vmatmul.mubr.bf16.gmra.mxu0 %v4926
    %v4965 = vpop.f32.mrf.mxu0
    %v4966 = vadd.f32 0.0, %v4965
    %v4967 = vpop.f32.mrf.mxu0
    %v4968 = vpop.f32.mrf.mxu0
    %v4969 = vpop.f32.mrf.mxu0
    %4970 = vdwg.mxu0
    %v4971 = vpack.c.bf16 %v4966, %v4966
    %v4973 = vsel %vm581, %v4971, 0
    %4975 = vmatprep.subr.bf16.mxu0 0
    %4976 = vmatpush1.bf16.msra.mxu0 0
    %4977 = vmatprep.subr.bf16.mxu0 0
    %4978 = vmatpush1.bf16.msra.mxu0 0
    %4979 = vmatprep.subr.bf16.mxu0 0
    %4980 = vmatpush1.bf16.msra.mxu0 0
    %4981 = vmatprep.subr.bf16.mxu0 0
    %4982 = vmatpush1.bf16.msra.mxu0 0
    %4983 = vmatprep.subr.bf16.mxu0 0
    %4984 = vmatpush1.bf16.msra.mxu0 0
    %4985 = vmatprep.subr.bf16.mxu0 0
    %4986 = vmatpush1.bf16.msra.mxu0 0
    %4987 = vmatprep.subr.bf16.mxu0 0
    %4988 = vmatpush1.bf16.msra.mxu0 %v4119
    %4989 = vmatprep.subr.bf16.mxu0 0
    %4990 = vmatpush1.bf16.msra.mxu0 %v4118
    %4991 = vmatprep.subr.bf16.mxu0 0
    %4992 = vmatpush2.bf16.msra.mxu0 0
    %4993 = vmatprep.subr.bf16.mxu0 0
    %4994 = vmatpush2.bf16.msra.mxu0 0
    %4995 = vmatprep.subr.bf16.mxu0 0
    %4996 = vmatpush2.bf16.msra.mxu0 0
    %4997 = vmatprep.subr.bf16.mxu0 0
    %4998 = vmatpush2.bf16.msra.mxu0 0
    %4999 = vmatprep.subr.bf16.mxu0 0
    %5000 = vmatpush2.bf16.msra.mxu0 0
    %5001 = vmatprep.subr.bf16.mxu0 0
    %5002 = vmatpush2.bf16.msra.mxu0 0
    %5003 = vmatprep.subr.bf16.mxu0 0
    %5004 = vmatpush2.bf16.msra.mxu0 0
    %5005 = vmatprep.subr.bf16.mxu0 0
    %5006 = vmatpush2.bf16.msra.mxu0 0
    %5007 = vmatprep.mubr.bf16.mxu0 0
    %5008 = vmatmul.mubr.bf16.gmra.mxu0 %v4973
    %v5009 = vpop.f32.mrf.mxu0
    %v5010 = vadd.f32 0.0, %v5009
    %v5011 = vpop.f32.mrf.mxu0
    %v5012 = vpop.f32.mrf.mxu0
    %v5013 = vpop.f32.mrf.mxu0
    %5014 = vdwg.mxu0
    %v5016 = vsel %vm581, %v4860, 0
    %5018 = vmatprep.subr.bf16.mxu0 0
    %5019 = vmatpush1.bf16.msra.mxu0 0
    %5020 = vmatprep.subr.bf16.mxu0 0
    %5021 = vmatpush1.bf16.msra.mxu0 0
    %5022 = vmatprep.subr.bf16.mxu0 0
    %5023 = vmatpush1.bf16.msra.mxu0 0
    %5024 = vmatprep.subr.bf16.mxu0 0
    %5025 = vmatpush1.bf16.msra.mxu0 0
    %5026 = vmatprep.subr.bf16.mxu0 0
    %5027 = vmatpush1.bf16.msra.mxu0 0
    %5028 = vmatprep.subr.bf16.mxu0 0
    %5029 = vmatpush1.bf16.msra.mxu0 0
    %5030 = vmatprep.subr.bf16.mxu0 0
    %5031 = vmatpush1.bf16.msra.mxu0 %v4117
    %5032 = vmatprep.subr.bf16.mxu0 0
    %5033 = vmatpush1.bf16.msra.mxu0 %v4116
    %5034 = vmatprep.subr.bf16.mxu0 0
    %5035 = vmatpush2.bf16.msra.mxu0 0
    %5036 = vmatprep.subr.bf16.mxu0 0
    %5037 = vmatpush2.bf16.msra.mxu0 0
    %5038 = vmatprep.subr.bf16.mxu0 0
    %5039 = vmatpush2.bf16.msra.mxu0 0
    %5040 = vmatprep.subr.bf16.mxu0 0
    %5041 = vmatpush2.bf16.msra.mxu0 0
    %5042 = vmatprep.subr.bf16.mxu0 0
    %5043 = vmatpush2.bf16.msra.mxu0 0
    %5044 = vmatprep.subr.bf16.mxu0 0
    %5045 = vmatpush2.bf16.msra.mxu0 0
    %5046 = vmatprep.subr.bf16.mxu0 0
    %5047 = vmatpush2.bf16.msra.mxu0 0
    %5048 = vmatprep.subr.bf16.mxu0 0
    %5049 = vmatpush2.bf16.msra.mxu0 0
    %5050 = vmatprep.mubr.bf16.mxu0 0
    %5051 = vmatmul.mubr.bf16.gmra.mxu0 %v5016
    %v5052 = vpop.f32.mrf.mxu0
    %v5053 = vadd.f32 %v5010, %v5052
    %v5054 = vpop.f32.mrf.mxu0
    %v5055 = vpop.f32.mrf.mxu0
    %v5056 = vpop.f32.mrf.mxu0
    %5057 = vdwg.mxu0
    %5058 = vrot.lane.b32.xlu0 %v4751, 64
    %v5059 = vpop.permute.xlu0 %5058
    %5060 = vrot.lane.b32.xlu0 %v4753, 64
    %v5061 = vpop.permute.xlu0 %5060
    %v5063 = vsel %vm581, %v5059, 0
    %v5066 = vsel %vm581, %v5061, 0
    %5068 = vmatprep.subr.bf16.mxu0 0
    %5069 = vmatpush1.bf16.xpose.msra.mxu0 0
    %5070 = vmatprep.subr.bf16.mxu0 0
    %5071 = vmatpush1.bf16.xpose.msra.mxu0 0
    %5072 = vmatprep.subr.bf16.mxu0 0
    %5073 = vmatpush1.bf16.xpose.msra.mxu0 0
    %5074 = vmatprep.subr.bf16.mxu0 0
    %5075 = vmatpush1.bf16.xpose.msra.mxu0 0
    %5076 = vmatprep.subr.bf16.mxu0 0
    %5077 = vmatpush1.bf16.xpose.msra.mxu0 0
    %5078 = vmatprep.subr.bf16.mxu0 0
    %5079 = vmatpush1.bf16.xpose.msra.mxu0 0
    %5080 = vmatprep.subr.bf16.mxu0 0
    %5081 = vmatpush1.bf16.xpose.msra.mxu0 0
    %5082 = vmatprep.subr.bf16.mxu0 0
    %5083 = vmatpush1.bf16.xpose.msra.mxu0 %v5066
    %5084 = vmatprep.subr.bf16.mxu0 0
    %5085 = vmatpush2.bf16.xpose.msra.mxu0 0
    %5086 = vmatprep.subr.bf16.mxu0 0
    %5087 = vmatpush2.bf16.xpose.msra.mxu0 0
    %5088 = vmatprep.subr.bf16.mxu0 0
    %5089 = vmatpush2.bf16.xpose.msra.mxu0 0
    %5090 = vmatprep.subr.bf16.mxu0 0
    %5091 = vmatpush2.bf16.xpose.msra.mxu0 0
    %5092 = vmatprep.subr.bf16.mxu0 0
    %5093 = vmatpush2.bf16.xpose.msra.mxu0 0
    %5094 = vmatprep.subr.bf16.mxu0 0
    %5095 = vmatpush2.bf16.xpose.msra.mxu0 0
    %5096 = vmatprep.subr.bf16.mxu0 0
    %5097 = vmatpush2.bf16.xpose.msra.mxu0 0
    %5098 = vmatprep.subr.bf16.mxu0 0
    %5099 = vmatpush2.bf16.xpose.msra.mxu0 0
    %5100 = vmatprep.mubr.bf16.mxu0 0
    %5101 = vmatmul.mubr.bf16.gmra.mxu0 %v5063
    %v5102 = vpop.f32.mrf.mxu0
    %v5103 = vadd.f32 0.0, %v5102
    %v5104 = vpop.f32.mrf.mxu0
    %v5105 = vpop.f32.mrf.mxu0
    %v5106 = vpop.f32.mrf.mxu0
    %5107 = vdwg.mxu0
    %v5108 = vsel %vm4173, %v5103, -inf
    %5109 = vmax.xlane.f32.xlu0 %v5108
    %v5110 = vpop.xlane.xlu0 %5109
    %v5111 = vsub.f32 %v5103, %v5110
    %v5112 = vmul.f32 %v5111, 1.442695
    %v5113 = vpow.pop %v5112
    %v5114 = vsel %vm4173, %v5113, 0.0
    %5115 = vadd.xlane.f32.xlu0 %v5114
    %v5116 = vpop.xlane.xlu0 %5115
    %v5117 = vrcp.pop %v5116
    %v5118 = vmul.f32 %v5113, %v5117
    %v5119 = vpack.c.bf16 %v5118, %v5118
    %5120 = vrot.lane.b32.xlu0 %v4813, 64
    %v5121 = vpop.permute.xlu0 %5120
    %v5123 = vsel %vm629, %v5119, 0
    %v5126 = vsel %vm657, %v5121, 0
    %5128 = vmatprep.subr.bf16.mxu0 0
    %5129 = vmatpush1.bf16.msra.mxu0 0
    %5130 = vmatprep.subr.bf16.mxu0 0
    %5131 = vmatpush1.bf16.msra.mxu0 0
    %5132 = vmatprep.subr.bf16.mxu0 0
    %5133 = vmatpush1.bf16.msra.mxu0 0
    %5134 = vmatprep.subr.bf16.mxu0 0
    %5135 = vmatpush1.bf16.msra.mxu0 0
    %5136 = vmatprep.subr.bf16.mxu0 0
    %5137 = vmatpush1.bf16.msra.mxu0 0
    %5138 = vmatprep.subr.bf16.mxu0 0
    %5139 = vmatpush1.bf16.msra.mxu0 0
    %5140 = vmatprep.subr.bf16.mxu0 0
    %5141 = vmatpush1.bf16.msra.mxu0 0
    %5142 = vmatprep.subr.bf16.mxu0 0
    %5143 = vmatpush1.bf16.msra.mxu0 %v5126
    %5144 = vmatprep.subr.bf16.mxu0 0
    %5145 = vmatpush2.bf16.msra.mxu0 0
    %5146 = vmatprep.subr.bf16.mxu0 0
    %5147 = vmatpush2.bf16.msra.mxu0 0
    %5148 = vmatprep.subr.bf16.mxu0 0
    %5149 = vmatpush2.bf16.msra.mxu0 0
    %5150 = vmatprep.subr.bf16.mxu0 0
    %5151 = vmatpush2.bf16.msra.mxu0 0
    %5152 = vmatprep.subr.bf16.mxu0 0
    %5153 = vmatpush2.bf16.msra.mxu0 0
    %5154 = vmatprep.subr.bf16.mxu0 0
    %5155 = vmatpush2.bf16.msra.mxu0 0
    %5156 = vmatprep.subr.bf16.mxu0 0
    %5157 = vmatpush2.bf16.msra.mxu0 0
    %5158 = vmatprep.subr.bf16.mxu0 0
    %5159 = vmatpush2.bf16.msra.mxu0 0
    %5160 = vmatprep.mubr.bf16.mxu0 0
    %5161 = vmatmul.mubr.bf16.gmra.mxu0 %v5123
    %v5162 = vpop.f32.mrf.mxu0
    %v5163 = vadd.f32 0.0, %v5162
    %v5164 = vpop.f32.mrf.mxu0
    %v5165 = vpop.f32.mrf.mxu0
    %v5166 = vpop.f32.mrf.mxu0
    %5167 = vdwg.mxu0
    %v5168 = vpack.c.bf16 %v5163, %v5163
    %v5170 = vsel %vm581, %v5168, 0
    %5172 = vmatprep.subr.bf16.mxu0 0
    %5173 = vmatpush1.bf16.msra.mxu0 0
    %5174 = vmatprep.subr.bf16.mxu0 0
    %5175 = vmatpush1.bf16.msra.mxu0 0
    %5176 = vmatprep.subr.bf16.mxu0 0
    %5177 = vmatpush1.bf16.msra.mxu0 0
    %5178 = vmatprep.subr.bf16.mxu0 0
    %5179 = vmatpush1.bf16.msra.mxu0 0
    %5180 = vmatprep.subr.bf16.mxu0 0
    %5181 = vmatpush1.bf16.msra.mxu0 0
    %5182 = vmatprep.subr.bf16.mxu0 0
    %5183 = vmatpush1.bf16.msra.mxu0 0
    %5184 = vmatprep.subr.bf16.mxu0 0
    %5185 = vmatpush1.bf16.msra.mxu0 %v4121
    %5186 = vmatprep.subr.bf16.mxu0 0
    %5187 = vmatpush1.bf16.msra.mxu0 %v4120
    %5188 = vmatprep.subr.bf16.mxu0 0
    %5189 = vmatpush2.bf16.msra.mxu0 0
    %5190 = vmatprep.subr.bf16.mxu0 0
    %5191 = vmatpush2.bf16.msra.mxu0 0
    %5192 = vmatprep.subr.bf16.mxu0 0
    %5193 = vmatpush2.bf16.msra.mxu0 0
    %5194 = vmatprep.subr.bf16.mxu0 0
    %5195 = vmatpush2.bf16.msra.mxu0 0
    %5196 = vmatprep.subr.bf16.mxu0 0
    %5197 = vmatpush2.bf16.msra.mxu0 0
    %5198 = vmatprep.subr.bf16.mxu0 0
    %5199 = vmatpush2.bf16.msra.mxu0 0
    %5200 = vmatprep.subr.bf16.mxu0 0
    %5201 = vmatpush2.bf16.msra.mxu0 0
    %5202 = vmatprep.subr.bf16.mxu0 0
    %5203 = vmatpush2.bf16.msra.mxu0 0
    %5204 = vmatprep.mubr.bf16.mxu0 0
    %5205 = vmatmul.mubr.bf16.gmra.mxu0 %v5170
    %v5206 = vpop.f32.mrf.mxu0
    %v5207 = vadd.f32 0.0, %v5206
    %v5208 = vpop.f32.mrf.mxu0
    %v5209 = vpop.f32.mrf.mxu0
    %v5210 = vpop.f32.mrf.mxu0
    %5211 = vdwg.mxu0
    %v5212 = vadd.f32 %v5053, %v5207
    %5213 = vrot.lane.b32.xlu0 %v4751, 32
    %v5214 = vpop.permute.xlu0 %5213
    %5215 = vrot.lane.b32.xlu0 %v4753, 32
    %v5216 = vpop.permute.xlu0 %5215
    %v5218 = vsel %vm581, %v5214, 0
    %v5221 = vsel %vm581, %v5216, 0
    %5223 = vmatprep.subr.bf16.mxu0 0
    %5224 = vmatpush1.bf16.xpose.msra.mxu0 0
    %5225 = vmatprep.subr.bf16.mxu0 0
    %5226 = vmatpush1.bf16.xpose.msra.mxu0 0
    %5227 = vmatprep.subr.bf16.mxu0 0
    %5228 = vmatpush1.bf16.xpose.msra.mxu0 0
    %5229 = vmatprep.subr.bf16.mxu0 0
    %5230 = vmatpush1.bf16.xpose.msra.mxu0 0
    %5231 = vmatprep.subr.bf16.mxu0 0
    %5232 = vmatpush1.bf16.xpose.msra.mxu0 0
    %5233 = vmatprep.subr.bf16.mxu0 0
    %5234 = vmatpush1.bf16.xpose.msra.mxu0 0
    %5235 = vmatprep.subr.bf16.mxu0 0
    %5236 = vmatpush1.bf16.xpose.msra.mxu0 0
    %5237 = vmatprep.subr.bf16.mxu0 0
    %5238 = vmatpush1.bf16.xpose.msra.mxu0 %v5221
    %5239 = vmatprep.subr.bf16.mxu0 0
    %5240 = vmatpush2.bf16.xpose.msra.mxu0 0
    %5241 = vmatprep.subr.bf16.mxu0 0
    %5242 = vmatpush2.bf16.xpose.msra.mxu0 0
    %5243 = vmatprep.subr.bf16.mxu0 0
    %5244 = vmatpush2.bf16.xpose.msra.mxu0 0
    %5245 = vmatprep.subr.bf16.mxu0 0
    %5246 = vmatpush2.bf16.xpose.msra.mxu0 0
    %5247 = vmatprep.subr.bf16.mxu0 0
    %5248 = vmatpush2.bf16.xpose.msra.mxu0 0
    %5249 = vmatprep.subr.bf16.mxu0 0
    %5250 = vmatpush2.bf16.xpose.msra.mxu0 0
    %5251 = vmatprep.subr.bf16.mxu0 0
    %5252 = vmatpush2.bf16.xpose.msra.mxu0 0
    %5253 = vmatprep.subr.bf16.mxu0 0
    %5254 = vmatpush2.bf16.xpose.msra.mxu0 0
    %5255 = vmatprep.mubr.bf16.mxu0 0
    %5256 = vmatmul.mubr.bf16.gmra.mxu0 %v5218
    %v5257 = vpop.f32.mrf.mxu0
    %v5258 = vadd.f32 0.0, %v5257
    %v5259 = vpop.f32.mrf.mxu0
    %v5260 = vpop.f32.mrf.mxu0
    %v5261 = vpop.f32.mrf.mxu0
    %5262 = vdwg.mxu0
    %v5263 = vsel %vm4173, %v5258, -inf
    %5264 = vmax.xlane.f32.xlu0 %v5263
    %v5265 = vpop.xlane.xlu0 %5264
    %v5266 = vsub.f32 %v5258, %v5265
    %v5267 = vmul.f32 %v5266, 1.442695
    %v5268 = vpow.pop %v5267
    %v5269 = vsel %vm4173, %v5268, 0.0
    %5270 = vadd.xlane.f32.xlu0 %v5269
    %v5271 = vpop.xlane.xlu0 %5270
    %v5272 = vrcp.pop %v5271
    %v5273 = vmul.f32 %v5268, %v5272
    %v5274 = vpack.c.bf16 %v5273, %v5273
    %5275 = vrot.lane.b32.xlu0 %v4813, 32
    %v5276 = vpop.permute.xlu0 %5275
    %v5278 = vsel %vm629, %v5274, 0
    %v5281 = vsel %vm657, %v5276, 0
    %5283 = vmatprep.subr.bf16.mxu0 0
    %5284 = vmatpush1.bf16.msra.mxu0 0
    %5285 = vmatprep.subr.bf16.mxu0 0
    %5286 = vmatpush1.bf16.msra.mxu0 0
    %5287 = vmatprep.subr.bf16.mxu0 0
    %5288 = vmatpush1.bf16.msra.mxu0 0
    %5289 = vmatprep.subr.bf16.mxu0 0
    %5290 = vmatpush1.bf16.msra.mxu0 0
    %5291 = vmatprep.subr.bf16.mxu0 0
    %5292 = vmatpush1.bf16.msra.mxu0 0
    %5293 = vmatprep.subr.bf16.mxu0 0
    %5294 = vmatpush1.bf16.msra.mxu0 0
    %5295 = vmatprep.subr.bf16.mxu0 0
    %5296 = vmatpush1.bf16.msra.mxu0 0
    %5297 = vmatprep.subr.bf16.mxu0 0
    %5298 = vmatpush1.bf16.msra.mxu0 %v5281
    %5299 = vmatprep.subr.bf16.mxu0 0
    %5300 = vmatpush2.bf16.msra.mxu0 0
    %5301 = vmatprep.subr.bf16.mxu0 0
    %5302 = vmatpush2.bf16.msra.mxu0 0
    %5303 = vmatprep.subr.bf16.mxu0 0
    %5304 = vmatpush2.bf16.msra.mxu0 0
    %5305 = vmatprep.subr.bf16.mxu0 0
    %5306 = vmatpush2.bf16.msra.mxu0 0
    %5307 = vmatprep.subr.bf16.mxu0 0
    %5308 = vmatpush2.bf16.msra.mxu0 0
    %5309 = vmatprep.subr.bf16.mxu0 0
    %5310 = vmatpush2.bf16.msra.mxu0 0
    %5311 = vmatprep.subr.bf16.mxu0 0
    %5312 = vmatpush2.bf16.msra.mxu0 0
    %5313 = vmatprep.subr.bf16.mxu0 0
    %5314 = vmatpush2.bf16.msra.mxu0 0
    %5315 = vmatprep.mubr.bf16.mxu0 0
    %5316 = vmatmul.mubr.bf16.gmra.mxu0 %v5278
    %v5317 = vpop.f32.mrf.mxu0
    %v5318 = vadd.f32 0.0, %v5317
    %v5319 = vpop.f32.mrf.mxu0
    %v5320 = vpop.f32.mrf.mxu0
    %v5321 = vpop.f32.mrf.mxu0
    %5322 = vdwg.mxu0
    %v5323 = vpack.c.bf16 %v5318, %v5318
    %v5325 = vsel %vm581, %v5323, 0
    %5327 = vmatprep.subr.bf16.mxu0 0
    %5328 = vmatpush1.bf16.msra.mxu0 0
    %5329 = vmatprep.subr.bf16.mxu0 0
    %5330 = vmatpush1.bf16.msra.mxu0 0
    %5331 = vmatprep.subr.bf16.mxu0 0
    %5332 = vmatpush1.bf16.msra.mxu0 0
    %5333 = vmatprep.subr.bf16.mxu0 0
    %5334 = vmatpush1.bf16.msra.mxu0 0
    %5335 = vmatprep.subr.bf16.mxu0 0
    %5336 = vmatpush1.bf16.msra.mxu0 0
    %5337 = vmatprep.subr.bf16.mxu0 0
    %5338 = vmatpush1.bf16.msra.mxu0 0
    %5339 = vmatprep.subr.bf16.mxu0 0
    %5340 = vmatpush1.bf16.msra.mxu0 %v4123
    %5341 = vmatprep.subr.bf16.mxu0 0
    %5342 = vmatpush1.bf16.msra.mxu0 %v4122
    %5343 = vmatprep.subr.bf16.mxu0 0
    %5344 = vmatpush2.bf16.msra.mxu0 0
    %5345 = vmatprep.subr.bf16.mxu0 0
    %5346 = vmatpush2.bf16.msra.mxu0 0
    %5347 = vmatprep.subr.bf16.mxu0 0
    %5348 = vmatpush2.bf16.msra.mxu0 0
    %5349 = vmatprep.subr.bf16.mxu0 0
    %5350 = vmatpush2.bf16.msra.mxu0 0
    %5351 = vmatprep.subr.bf16.mxu0 0
    %5352 = vmatpush2.bf16.msra.mxu0 0
    %5353 = vmatprep.subr.bf16.mxu0 0
    %5354 = vmatpush2.bf16.msra.mxu0 0
    %5355 = vmatprep.subr.bf16.mxu0 0
    %5356 = vmatpush2.bf16.msra.mxu0 0
    %5357 = vmatprep.subr.bf16.mxu0 0
    %5358 = vmatpush2.bf16.msra.mxu0 0
    %5359 = vmatprep.mubr.bf16.mxu0 0
    %5360 = vmatmul.mubr.bf16.gmra.mxu0 %v5325
    %v5361 = vpop.f32.mrf.mxu0
    %v5362 = vadd.f32 0.0, %v5361
    %v5363 = vpop.f32.mrf.mxu0
    %v5364 = vpop.f32.mrf.mxu0
    %v5365 = vpop.f32.mrf.mxu0
    %5366 = vdwg.mxu0
    %v5367 = vadd.f32 %v5212, %v5362
    %v5369 = vrot.slane %v5367, 5
    %v5371 = vsel %vm2387, %v4742, %v5369
    %v5372 = vld [vmem:[#allocation4 + $0x518] sm:$0x1]
    %v5373 = vlaneseq
    %v5374 = vshrl.u32 %v5373, 7
    %v5375 = vsub.s32 0, %v5374
    %v5376 = vrot.slane %v5372, %v5375
    %v5377 = vadd.f32 %v5371, %v5376
    %v5378 = vadd.f32 %v3915, %v5377
    %v5379 = vsel %vm2397, %v5378, 0.0
    %5380 = vadd.xlane.f32.xlu0 %v5379
    %v5381 = vpop.xlane.xlu0 %5380
    %v5382 = vmul.f32 %v5381, %v318
    %v5383 = vsub.f32 %v5378, %v5382
    %v5384 = vmul.f32 %v5383, %v5383
    %v5385 = vsel %vm2397, %v5384, 0.0
    %5386 = vadd.xlane.f32.xlu0 %v5385
    %v5387 = vpop.xlane.xlu0 %5386
    %v5388 = vmul.f32 %v5387, %v318
    %v5389 = vadd.f32 %v5388, 1e-05
    %v5390 = vrsqrt.pop %v5389
    %v5391 = vmul.f32 %v5383, %v5390
    %v5392 = vld [vmem:[#allocation4 + $0x520] sm:$0x1]
    %v5393 = vlaneseq
    %v5394 = vshrl.u32 %v5393, 7
    %v5395 = vsub.s32 0, %v5394
    %v5396 = vrot.slane %v5392, %v5395
    %v5397 = vmul.f32 %v5391, %v5396
    %v5398 = vld [vmem:[#allocation4 + $0x528] sm:$0x1]
    %v5399 = vlaneseq
    %v5400 = vshrl.u32 %v5399, 7
    %v5401 = vsub.s32 0, %v5400
    %v5402 = vrot.slane %v5398, %v5401
    %v5403 = vadd.f32 %v5397, %v5402
    %v5404 = vpack.c.bf16 %v5403, %v5403
    %v5405 = vld [vmem:[#allocation6 + $0x330] sm:$0xff]
    %v5406 = vld [vmem:[#allocation6 + $0x338] sm:$0xff]
    %v5407 = vld [vmem:[#allocation6 + $0x340] sm:$0xff]
    %v5408 = vld [vmem:[#allocation6 + $0x348] sm:$0xff]
    %v5409 = vld [vmem:[#allocation6 + $0x350] sm:$0xff]
    %v5410 = vld [vmem:[#allocation6 + $0x358] sm:$0xff]
    %v5411 = vld [vmem:[#allocation6 + $0x360] sm:$0xff]
    %v5412 = vld [vmem:[#allocation6 + $0x368] sm:$0xff]
    %v5413 = vld [vmem:[#allocation6 + $0x370] sm:$0xff]
    %v5414 = vld [vmem:[#allocation6 + $0x378] sm:$0xff]
    %v5415 = vld [vmem:[#allocation6 + $0x380] sm:$0xff]
    %v5416 = vld [vmem:[#allocation6 + $0x388] sm:$0xff]
    %v5417 = vld [vmem:[#allocation6 + $0x390] sm:$0xff]
    %v5418 = vld [vmem:[#allocation6 + $0x398] sm:$0xff]
    %v5419 = vld [vmem:[#allocation6 + $0x3a0] sm:$0xff]
    %v5420 = vld [vmem:[#allocation6 + $0x3a8] sm:$0xff]
    %v5421 = vld [vmem:[#allocation6 + $0x3b0] sm:$0xff]
    %v5422 = vld [vmem:[#allocation6 + $0x3b8] sm:$0xff]
    %v5423 = vld [vmem:[#allocation6 + $0x3c0] sm:$0xff]
    %v5424 = vld [vmem:[#allocation6 + $0x3c8] sm:$0xff]
    %v5425 = vld [vmem:[#allocation6 + $0x3d0] sm:$0xff]
    %v5426 = vld [vmem:[#allocation6 + $0x3d8] sm:$0xff]
    %v5427 = vld [vmem:[#allocation6 + $0x3e0] sm:$0xff]
    %v5428 = vld [vmem:[#allocation6 + $0x3e8] sm:$0xff]
    %v5429 = vld [vmem:[#allocation6 + $0x3f0] sm:$0xff]
    %v5430 = vld [vmem:[#allocation6 + $0x3f8] sm:$0xff]
    %v5431 = vld [vmem:[#allocation6 + $0x400] sm:$0xff]
    %v5432 = vld [vmem:[#allocation6 + $0x408] sm:$0xff]
    %v5433 = vld [vmem:[#allocation6 + $0x410] sm:$0xff]
    %v5434 = vld [vmem:[#allocation6 + $0x418] sm:$0xff]
    %v5435 = vld [vmem:[#allocation6 + $0x420] sm:$0xff]
    %v5436 = vld [vmem:[#allocation6 + $0x428] sm:$0xff]
    %v5437 = vpack.c.bf16 %v5407, %v5405
    %v5438 = vpack.c.bf16 %v5408, %v5406
    %v5439 = vpack.c.bf16 %v5411, %v5409
    %v5440 = vpack.c.bf16 %v5412, %v5410
    %v5441 = vpack.c.bf16 %v5415, %v5413
    %v5442 = vpack.c.bf16 %v5416, %v5414
    %v5443 = vpack.c.bf16 %v5419, %v5417
    %v5444 = vpack.c.bf16 %v5420, %v5418
    %v5445 = vpack.c.bf16 %v5423, %v5421
    %v5446 = vpack.c.bf16 %v5424, %v5422
    %v5447 = vpack.c.bf16 %v5427, %v5425
    %v5448 = vpack.c.bf16 %v5428, %v5426
    %v5449 = vpack.c.bf16 %v5431, %v5429
    %v5450 = vpack.c.bf16 %v5432, %v5430
    %v5451 = vpack.c.bf16 %v5435, %v5433
    %v5452 = vpack.c.bf16 %v5436, %v5434
    %s5453 = scalar_lea.vmem [#allocation6], 1072
    %v5454 = vld [vmem:[%s5453] ss:$8 sm:$0x3]
    %v5456 = vlaneseq
    %v5457 = vshrl.u32 %v5456, 7
    %v5458 = vsub.s32 0, %v5457
    %v5459 = vrot.slane %v5454, %v5458
    %v5460 = vlaneseq
    %v5461 = vshrl.u32 %v5460, 7
    %v5462 = vsub.s32 1, %v5461
    %v5463 = vrot.slane %v5454, %v5462
    %5466 = vmatprep.subr.bf16.mxu0 %v5452
    %5467 = vmatpush1.bf16.msra.mxu0 %v5451
    %5468 = vmatprep.subr.bf16.mxu0 %v5450
    %5469 = vmatpush1.bf16.msra.mxu0 %v5449
    %5470 = vmatprep.subr.bf16.mxu0 %v5448
    %5471 = vmatpush1.bf16.msra.mxu0 %v5447
    %5472 = vmatprep.subr.bf16.mxu0 %v5446
    %5473 = vmatpush1.bf16.msra.mxu0 %v5445
    %5474 = vmatprep.subr.bf16.mxu0 %v5444
    %5475 = vmatpush1.bf16.msra.mxu0 %v5443
    %5476 = vmatprep.subr.bf16.mxu0 %v5442
    %5477 = vmatpush1.bf16.msra.mxu0 %v5441
    %5478 = vmatprep.subr.bf16.mxu0 %v5440
    %5479 = vmatpush1.bf16.msra.mxu0 %v5439
    %5480 = vmatprep.subr.bf16.mxu0 %v5438
    %5481 = vmatpush1.bf16.msra.mxu0 %v5437
    %5482 = vmatprep.subr.bf16.mxu0 0
    %5483 = vmatpush2.bf16.msra.mxu0 0
    %5484 = vmatprep.subr.bf16.mxu0 0
    %5485 = vmatpush2.bf16.msra.mxu0 0
    %5486 = vmatprep.subr.bf16.mxu0 0
    %5487 = vmatpush2.bf16.msra.mxu0 0
    %5488 = vmatprep.subr.bf16.mxu0 0
    %5489 = vmatpush2.bf16.msra.mxu0 0
    %5490 = vmatprep.subr.bf16.mxu0 0
    %5491 = vmatpush2.bf16.msra.mxu0 0
    %5492 = vmatprep.subr.bf16.mxu0 0
    %5493 = vmatpush2.bf16.msra.mxu0 0
    %5494 = vmatprep.subr.bf16.mxu0 0
    %5495 = vmatpush2.bf16.msra.mxu0 0
    %5496 = vmatprep.subr.bf16.mxu0 0
    %5497 = vmatpush2.bf16.msra.mxu0 0
    %5498 = vmatprep.mubr.bf16.mxu0 0
    %5499 = vmatmul.mubr.bf16.gmra.mxu0 %v5404
    %v5500 = vpop.f32.mrf.mxu0
    %v5501 = vadd.f32 %v5459, %v5500
    %v5502 = vpop.f32.mrf.mxu0
    %v5503 = vadd.f32 %v5463, %v5502
    %v5504 = vpop.f32.mrf.mxu0
    %v5505 = vpop.f32.mrf.mxu0
    %5506 = vdwg.mxu0
    %v5507 = vmul.f32 %v5501, %v5501
    %v5508 = vmul.f32 %v5503, %v5503
    %v5509 = vmul.f32 %v5501, %v5507
    %v5510 = vmul.f32 %v5503, %v5508
    %v5511 = vmul.f32 %v5509, 0.044715
    %v5512 = vmul.f32 %v5510, 0.044715
    %v5513 = vadd.f32 %v5501, %v5511
    %v5514 = vadd.f32 %v5503, %v5512
    %v5515 = vmul.f32 %v5513, 0.7978846
    %v5516 = vmul.f32 %v5514, 0.7978846
    %v5517 = vtanh.pop %v5515
    %v5518 = vtanh.pop %v5516
    %v5519 = vadd.f32 %v5517, 1.0
    %v5520 = vadd.f32 %v5518, 1.0
    %v5521 = vmul.f32 %v5519, 0.5
    %v5522 = vmul.f32 %v5520, 0.5
    %v5523 = vmul.f32 %v5501, %v5521
    %v5524 = vmul.f32 %v5503, %v5522
    %v5525 = vpack.c.bf16 %v5523, %v5523
    %v5526 = vpack.c.bf16 %v5524, %v5524
    %v5527 = vld [vmem:[#allocation4 + $0x530] sm:$0xff]
    %v5528 = vld [vmem:[#allocation4 + $0x538] sm:$0xff]
    %v5529 = vld [vmem:[#allocation4 + $0x540] sm:$0xff]
    %v5530 = vld [vmem:[#allocation4 + $0x548] sm:$0xff]
    %v5531 = vld [vmem:[#allocation4 + $0x550] sm:$0xff]
    %v5532 = vld [vmem:[#allocation4 + $0x558] sm:$0xff]
    %v5533 = vld [vmem:[#allocation4 + $0x560] sm:$0xff]
    %v5534 = vld [vmem:[#allocation4 + $0x568] sm:$0xff]
    %v5535 = vld [vmem:[#allocation4 + $0x570] sm:$0xff]
    %v5536 = vld [vmem:[#allocation4 + $0x578] sm:$0xff]
    %v5537 = vld [vmem:[#allocation4 + $0x580] sm:$0xff]
    %v5538 = vld [vmem:[#allocation4 + $0x588] sm:$0xff]
    %v5539 = vld [vmem:[#allocation4 + $0x590] sm:$0xff]
    %v5540 = vld [vmem:[#allocation4 + $0x598] sm:$0xff]
    %v5541 = vld [vmem:[#allocation4 + $0x5a0] sm:$0xff]
    %v5542 = vld [vmem:[#allocation4 + $0x5a8] sm:$0xff]
    %v5543 = vld [vmem:[#allocation4 + $0x5b0] sm:$0xff]
    %v5544 = vld [vmem:[#allocation4 + $0x5b8] sm:$0xff]
    %v5545 = vld [vmem:[#allocation4 + $0x5c0] sm:$0xff]
    %v5546 = vld [vmem:[#allocation4 + $0x5c8] sm:$0xff]
    %v5547 = vld [vmem:[#allocation4 + $0x5d0] sm:$0xff]
    %v5548 = vld [vmem:[#allocation4 + $0x5d8] sm:$0xff]
    %v5549 = vld [vmem:[#allocation4 + $0x5e0] sm:$0xff]
    %v5550 = vld [vmem:[#allocation4 + $0x5e8] sm:$0xff]
    %v5551 = vld [vmem:[#allocation4 + $0x5f0] sm:$0xff]
    %v5552 = vld [vmem:[#allocation4 + $0x5f8] sm:$0xff]
    %v5553 = vld [vmem:[#allocation4 + $0x600] sm:$0xff]
    %v5554 = vld [vmem:[#allocation4 + $0x608] sm:$0xff]
    %v5555 = vld [vmem:[#allocation4 + $0x610] sm:$0xff]
    %v5556 = vld [vmem:[#allocation4 + $0x618] sm:$0xff]
    %v5557 = vld [vmem:[#allocation4 + $0x620] sm:$0xff]
    %v5558 = vld [vmem:[#allocation4 + $0x628] sm:$0xff]
    %v5559 = vpack.c.bf16 %v5528, %v5527
    %v5560 = vpack.c.bf16 %v5530, %v5529
    %v5561 = vpack.c.bf16 %v5532, %v5531
    %v5562 = vpack.c.bf16 %v5534, %v5533
    %v5563 = vpack.c.bf16 %v5536, %v5535
    %v5564 = vpack.c.bf16 %v5538, %v5537
    %v5565 = vpack.c.bf16 %v5540, %v5539
    %v5566 = vpack.c.bf16 %v5542, %v5541
    %v5567 = vpack.c.bf16 %v5544, %v5543
    %v5568 = vpack.c.bf16 %v5546, %v5545
    %v5569 = vpack.c.bf16 %v5548, %v5547
    %v5570 = vpack.c.bf16 %v5550, %v5549
    %v5571 = vpack.c.bf16 %v5552, %v5551
    %v5572 = vpack.c.bf16 %v5554, %v5553
    %v5573 = vpack.c.bf16 %v5556, %v5555
    %v5574 = vpack.c.bf16 %v5558, %v5557
    %v5575 = vld [vmem:[#allocation4 + $0x630] sm:$0x1]
    %v5576 = vlaneseq
    %v5577 = vshrl.u32 %v5576, 7
    %v5578 = vsub.s32 0, %v5577
    %v5579 = vrot.slane %v5575, %v5578
    %5580 = vmatprep.subr.bf16.mxu0 0
    %5581 = vmatpush1.bf16.msra.mxu0 %v5566
    %5582 = vmatprep.subr.bf16.mxu0 0
    %5583 = vmatpush1.bf16.msra.mxu0 %v5565
    %5584 = vmatprep.subr.bf16.mxu0 0
    %5585 = vmatpush1.bf16.msra.mxu0 %v5564
    %5586 = vmatprep.subr.bf16.mxu0 0
    %5587 = vmatpush1.bf16.msra.mxu0 %v5563
    %5588 = vmatprep.subr.bf16.mxu0 0
    %5589 = vmatpush1.bf16.msra.mxu0 %v5562
    %5590 = vmatprep.subr.bf16.mxu0 0
    %5591 = vmatpush1.bf16.msra.mxu0 %v5561
    %5592 = vmatprep.subr.bf16.mxu0 0
    %5593 = vmatpush1.bf16.msra.mxu0 %v5560
    %5594 = vmatprep.subr.bf16.mxu0 0
    %5595 = vmatpush1.bf16.msra.mxu0 %v5559
    %5596 = vmatprep.subr.bf16.mxu0 0
    %5597 = vmatpush2.bf16.msra.mxu0 %v5574
    %5598 = vmatprep.subr.bf16.mxu0 0
    %5599 = vmatpush2.bf16.msra.mxu0 %v5573
    %5600 = vmatprep.subr.bf16.mxu0 0
    %5601 = vmatpush2.bf16.msra.mxu0 %v5572
    %5602 = vmatprep.subr.bf16.mxu0 0
    %5603 = vmatpush2.bf16.msra.mxu0 %v5571
    %5604 = vmatprep.subr.bf16.mxu0 0
    %5605 = vmatpush2.bf16.msra.mxu0 %v5570
    %5606 = vmatprep.subr.bf16.mxu0 0
    %5607 = vmatpush2.bf16.msra.mxu0 %v5569
    %5608 = vmatprep.subr.bf16.mxu0 0
    %5609 = vmatpush2.bf16.msra.mxu0 %v5568
    %5610 = vmatprep.subr.bf16.mxu0 0
    %5611 = vmatpush2.bf16.msra.mxu0 %v5567
    %5612 = vmatprep.mubr.bf16.mxu0 %v5526
    %5613 = vmatmul.mubr.bf16.gmra.mxu0 %v5525
    %v5614 = vpop.f32.mrf.mxu0
    %v5615 = vadd.f32 %v5579, %v5614
    %v5616 = vpop.f32.mrf.mxu0
    %v5617 = vpop.f32.mrf.mxu0
    %v5618 = vpop.f32.mrf.mxu0
    %5619 = vdwg.mxu0
    %v5620 = vadd.f32 %v5403, %v5615
    %v5621 = vsel %vm2397, %v5620, 0.0
    %5622 = vadd.xlane.f32.xlu0 %v5621
    %v5623 = vpop.xlane.xlu0 %5622
    %v5624 = vmul.f32 %v5623, %v318
    %v5625 = vsub.f32 %v5620, %v5624
    %v5626 = vmul.f32 %v5625, %v5625
    %v5627 = vsel %vm2397, %v5626, 0.0
    %5628 = vadd.xlane.f32.xlu0 %v5627
    %v5629 = vpop.xlane.xlu0 %5628
    %v5630 = vmul.f32 %v5629, %v318
    %v5631 = vadd.f32 %v5630, 1e-05
    %v5632 = vrsqrt.pop %v5631
    %v5633 = vmul.f32 %v5625, %v5632
    %v5634 = vld [vmem:[#allocation4 + $0x638] sm:$0x1]
    %v5635 = vlaneseq
    %v5636 = vshrl.u32 %v5635, 7
    %v5637 = vsub.s32 0, %v5636
    %v5638 = vrot.slane %v5634, %v5637
    %v5639 = vmul.f32 %v5633, %v5638
    %v5640 = vld [vmem:[#allocation4 + $0x640] sm:$0x1]
    %v5641 = vlaneseq
    %v5642 = vshrl.u32 %v5641, 7
    %v5643 = vsub.s32 0, %v5642
    %v5644 = vrot.slane %v5640, %v5643
    %v5645 = vadd.f32 %v5639, %v5644
    %v5646 = vld [vmem:[#allocation4 + $0x108] sm:$0xff]
    %v5647 = vld [vmem:[#allocation4 + $0x110] sm:$0xff]
    %v5648 = vld [vmem:[#allocation4 + $0x118] sm:$0xff]
    %v5649 = vld [vmem:[#allocation4 + $0x120] sm:$0xff]
    %v5650 = vld [vmem:[#allocation4 + $0x128] sm:$0xff]
    %v5651 = vld [vmem:[#allocation4 + $0x130] sm:$0xff]
    %v5652 = vld [vmem:[#allocation4 + $0x138] sm:$0xff]
    %v5653 = vld [vmem:[#allocation4 + $0x140] sm:$0xff]
    %v5654 = vld [vmem:[#allocation4 + $0x148] sm:$0xff]
    %v5655 = vld [vmem:[#allocation4 + $0x150] sm:$0xff]
    %v5656 = vld [vmem:[#allocation4 + $0x158] sm:$0xff]
    %v5657 = vld [vmem:[#allocation4 + $0x160] sm:$0xff]
    %v5658 = vld [vmem:[#allocation4 + $0x168] sm:$0xff]
    %v5659 = vld [vmem:[#allocation4 + $0x170] sm:$0xff]
    %v5660 = vld [vmem:[#allocation4 + $0x178] sm:$0xff]
    %v5661 = vld [vmem:[#allocation4 + $0x180] sm:$0xff]
    %v5662 = vpack.c.bf16 %v5647, %v5646
    %v5663 = vpack.c.bf16 %v5649, %v5648
    %v5664 = vpack.c.bf16 %v5651, %v5650
    %v5665 = vpack.c.bf16 %v5653, %v5652
    %v5666 = vpack.c.bf16 %v5655, %v5654
    %v5667 = vpack.c.bf16 %v5657, %v5656
    %v5668 = vpack.c.bf16 %v5659, %v5658
    %v5669 = vpack.c.bf16 %v5661, %v5660
    %v5670 = vpack.c.bf16 %v5645, %v5645
    %v5671 = vld [vmem:[#allocation4 + $0x1c0] sm:$0x1]
    %v5672 = vlaneseq
    %v5673 = vshrl.u32 %v5672, 7
    %v5674 = vsub.s32 0, %v5673
    %v5675 = vrot.slane %v5671, %v5674
    %5676 = vmatprep.subr.bf16.mxu0 0
    %5677 = vmatpush1.bf16.xpose.msra.mxu0 %v5669
    %5678 = vmatprep.subr.bf16.mxu0 0
    %5679 = vmatpush1.bf16.xpose.msra.mxu0 %v5668
    %5680 = vmatprep.subr.bf16.mxu0 0
    %5681 = vmatpush1.bf16.xpose.msra.mxu0 %v5667
    %5682 = vmatprep.subr.bf16.mxu0 0
    %5683 = vmatpush1.bf16.xpose.msra.mxu0 %v5666
    %5684 = vmatprep.subr.bf16.mxu0 0
    %5685 = vmatpush1.bf16.xpose.msra.mxu0 %v5665
    %5686 = vmatprep.subr.bf16.mxu0 0
    %5687 = vmatpush1.bf16.xpose.msra.mxu0 %v5664
    %5688 = vmatprep.subr.bf16.mxu0 0
    %5689 = vmatpush1.bf16.xpose.msra.mxu0 %v5663
    %5690 = vmatprep.subr.bf16.mxu0 0
    %5691 = vmatpush1.bf16.xpose.msra.mxu0 %v5662
    %5692 = vmatprep.subr.bf16.mxu0 0
    %5693 = vmatpush2.bf16.xpose.msra.mxu0 0
    %5694 = vmatprep.subr.bf16.mxu0 0
    %5695 = vmatpush2.bf16.xpose.msra.mxu0 0
    %5696 = vmatprep.subr.bf16.mxu0 0
    %5697 = vmatpush2.bf16.xpose.msra.mxu0 0
    %5698 = vmatprep.subr.bf16.mxu0 0
    %5699 = vmatpush2.bf16.xpose.msra.mxu0 0
    %5700 = vmatprep.subr.bf16.mxu0 0
    %5701 = vmatpush2.bf16.xpose.msra.mxu0 0
    %5702 = vmatprep.subr.bf16.mxu0 0
    %5703 = vmatpush2.bf16.xpose.msra.mxu0 0
    %5704 = vmatprep.subr.bf16.mxu0 0
    %5705 = vmatpush2.bf16.xpose.msra.mxu0 0
    %5706 = vmatprep.subr.bf16.mxu0 0
    %5707 = vmatpush2.bf16.xpose.msra.mxu0 0
    %5708 = vmatprep.mubr.bf16.mxu0 0
    %5709 = vmatmul.mubr.bf16.gmra.mxu0 %v5670
    %v5710 = vpop.f32.mrf.mxu0
    %v5711 = vadd.f32 %v5675, %v5710
    %v5712 = vpop.f32.mrf.mxu0
    %v5713 = vpop.f32.mrf.mxu0
    %v5714 = vpop.f32.mrf.mxu0
    %5715 = vdwg.mxu0
    %5716 = vst [vmem:[%s5] sm:$0x3f] %v5711
    // Predicated region
    $region30: #{bart_with_custom_encoder.1} parent=1 // pred_check
      _
    $region31: #{bart_with_custom_encoder.1} parent=1 // pred_check_branch
      %5718 = sbr.rel (0) target = $region33
    $region32: #{bart_with_custom_encoder.1} parent=1 // pred_region
      _
    $region33: #{bart_with_custom_encoder.1} parent=1 // pred_fallthru
      _
    // Predicated region
    $region34: #{bart_with_custom_encoder.1} parent=1 // pred_check
      _
    $region35: #{bart_with_custom_encoder.1} parent=1 // pred_check_branch
      %5720 = sbr.rel (0) target = $region37
    $region36: #{bart_with_custom_encoder.1} parent=1 // pred_region
      _
    $region37: #{bart_with_custom_encoder.1} parent=1 // pred_fallthru
      _
    // Predicated region
    $region38: #{bart_with_custom_encoder.1} parent=1 // pred_check
      _
    $region39: #{bart_with_custom_encoder.1} parent=1 // pred_check_branch
      %5722 = sbr.rel (0) target = $region41
    $region40: #{bart_with_custom_encoder.1} parent=1 // pred_region
      _
    $region41: #{bart_with_custom_encoder.1} parent=1 // pred_fallthru
      _
    // Predicated region
    $region42: #{bart_with_custom_encoder.1} parent=1 // pred_check
      _
    $region43: #{bart_with_custom_encoder.1} parent=1 // pred_check_branch
      %5724 = sbr.rel (0) target = $region45
    $region44: #{bart_with_custom_encoder.1} parent=1 // pred_region
      _
    $region45: #{bart_with_custom_encoder.1} parent=1 // pred_fallthru
      _
    %5725 = vsyncpa [#allocation5], 1
    %5726 = vsyncpa [#allocation7], 1

</llo_original>
